<compile_context>
chip_gen: v6e
topology: v6e:2x2x1
jax: 0.10.0
libtpu: 0.0.40
codegen_flags: <defaults>
</compile_context>

<pallas_src>
import functools

import jax
import jax.numpy as jnp
from jax.experimental import pallas as pl
from jax.experimental.pallas import tpu as pltpu

embedding_dim = 300

TN = 2048       # hidden-dim (4096) tile streamed per grid step -> 2 steps
LANE = 128      # pad fc3 outputs to lane width for dense, unmasked stores
SUBLANE = 16    # pad batch to bf16 sublane packing (16 rows per vreg)


def mlp_kernel(x_ref, w1_ref, b1_ref, w2_ref, b2_ref, w3_ref, b3_ref,
               o_ref, acc_ref):
    j = pl.program_id(0)

    # Seed the fc2 accumulator with the broadcast fc2 bias (f32): the epilogue
    # then needs no extra bias add.
    @pl.when(j == 0)
    def _():
        acc_ref[...] = jnp.broadcast_to(b2_ref[...], acc_ref.shape)

    # fc1 slice: (B, D) @ (D, TN) -> (B, TN), + bias, ReLU  (f32 accumulate)
    h1 = jnp.dot(x_ref[...], w1_ref[...], preferred_element_type=jnp.float32)
    h1 = jnp.maximum(h1 + b1_ref[...], 0.0)

    # partial fc2: (B, TN) @ (TN, 256) -> (B, 256), accumulate in f32
    acc_ref[...] += jnp.dot(h1.astype(w2_ref.dtype), w2_ref[...],
                            preferred_element_type=jnp.float32)

    @pl.when(j == pl.num_programs(0) - 1)
    def _():
        # fc2 ReLU (bias already folded into acc at step 0)
        h2 = jnp.maximum(acc_ref[...], 0.0)
        # fc3 (lane-padded to 128): (B, 256) @ (256, 128) -> (B, 128)
        logits = jnp.dot(h2.astype(w3_ref.dtype), w3_ref[...],
                         preferred_element_type=jnp.float32)
        logits = logits + b3_ref[...]   # padded classes get -1e9 -> exp()==0
        # numerically stable log_softmax over the (padded) class axis
        m = jnp.max(logits, axis=-1, keepdims=True)
        shifted = logits - m
        lse = jnp.log(jnp.sum(jnp.exp(shifted), axis=-1, keepdims=True))
        o_ref[...] = shifted - lse


def prepare_params(params, classes):
    """One-time conversion of PyTorch-layout f32 params into kernel format.

    Weights are transposed ONCE to (in, out) layout (canonical MXU orientation,
    no per-step XLU transposes) and cast to bf16; biases become (1, out) f32.
    fc3 is padded to LANE outputs with zero weights and a -1e9 bias so the
    padded logits vanish under log_softmax.
    """
    assert classes <= LANE, f"classes={classes} must be <= {LANE}"
    w1, b1, w2, b2, w3, b3 = params
    w3p = jnp.zeros((LANE, w3.shape[1]), jnp.float32).at[:classes].set(w3)
    b3p = jnp.full((LANE,), -1e9, jnp.float32).at[:classes].set(b3)
    return (
        w1.T.astype(jnp.bfloat16),                  # (D, 4096)
        b1.reshape(1, -1).astype(jnp.float32),      # (1, 4096)
        w2.T.astype(jnp.bfloat16),                  # (4096, 256)
        b2.reshape(1, -1).astype(jnp.float32),      # (1, 256)
        w3p.T.astype(jnp.bfloat16),                 # (256, 128)
        b3p.reshape(1, -1).astype(jnp.float32),     # (1, 128)
    )


@functools.partial(jax.jit, static_argnames=("classes",))
def mlp_forward(x, kparams, classes=8):
    """x: (B, input_dim, embedding_dim) float32. Returns (B, classes) log-probs."""
    w1t, b1, w2t, b2, w3t, b3 = kparams
    D, H = w1t.shape           # (input_dim*embedding_dim, 4096)
    H2 = w2t.shape[1]          # 256
    Cp = w3t.shape[1]          # 128 (lane-padded classes)
    B = x.shape[0]
    Bp = ((B + SUBLANE - 1) // SUBLANE) * SUBLANE

    x2d = x.reshape((B, D)).astype(jnp.bfloat16)
    x2d = jnp.pad(x2d, ((0, Bp - B), (0, 0)))

    weight_bytes = (w1t.size + w2t.size + w3t.size) * 2          # bf16
    bias_bytes = (b1.size + b2.size + b3.size) * 4               # f32
    cost = pl.CostEstimate(
        flops=2 * Bp * (D * H + H * H2 + H2 * Cp),
        transcendentals=Bp * (Cp + 1),                           # exp + log
        bytes_accessed=weight_bytes + bias_bytes
        + x2d.size * 2 + Bp * Cp * 4,
    )

    out = pl.pallas_call(
        mlp_kernel,
        out_shape=jax.ShapeDtypeStruct((Bp, Cp), jnp.float32),
        grid=(H // TN,),
        in_specs=[
            pl.BlockSpec((Bp, D), lambda j: (0, 0)),     # x        (resident)
            pl.BlockSpec((D, TN), lambda j: (0, j)),     # w1 slab  (streamed)
            pl.BlockSpec((1, TN), lambda j: (0, j)),     # b1 slab
            pl.BlockSpec((TN, H2), lambda j: (j, 0)),    # w2 slab  (streamed)
            pl.BlockSpec((1, H2), lambda j: (0, 0)),     # b2       (resident)
            pl.BlockSpec((H2, Cp), lambda j: (0, 0)),    # w3 pad   (resident)
            pl.BlockSpec((1, Cp), lambda j: (0, 0)),     # b3 pad   (resident)
        ],
        out_specs=pl.BlockSpec((Bp, Cp), lambda j: (0, 0)),
        scratch_shapes=[pltpu.VMEM((Bp, H2), jnp.float32)],
        compiler_params=pltpu.CompilerParams(
            dimension_semantics=("arbitrary",),
            vmem_limit_bytes=32 << 20,   # safe on v7x (64 MiB physical VMEM)
        ),
        cost_estimate=cost,
    )(x2d, w1t, b1, w2t, b2, w3t, b3)
    return out[:B, :classes]


def init_params(key, input_dim, classes):
    """Deterministic init mirroring nn.Linear shapes: W is (out, in), b is (out,)."""
    dim = input_dim * embedding_dim
    sizes = [(4096, dim), (256, 4096), (classes, 256)]
    params = []
    for out_f, in_f in sizes:
        key, kw, kb = jax.random.split(key, 3)
        bound = 1.0 / jnp.sqrt(in_f)
        w = jax.random.uniform(kw, (out_f, in_f), jnp.float32, -bound, bound)
        b = jax.random.uniform(kb, (out_f,), jnp.float32, -bound, bound)
        params += [w, b]
    return tuple(params)


def mlp_reference(x, params):
    w1, b1, w2, b2, w3, b3 = params
    B = x.shape[0]
    h = x.reshape((B, -1))
    h = jnp.maximum(h @ w1.T + b1, 0.0)
    h = jnp.maximum(h @ w2.T + b2, 0.0)
    logits = h @ w3.T + b3
    return jax.nn.log_softmax(logits, axis=1)


if __name__ == "__main__":
    # small but faithful shapes: input_dim=4 -> dim = 4 * 300 = 1200
    input_dim = 4
    classes = 8
    batch = 2

    key = jax.random.PRNGKey(0)
    kx, kp = jax.random.split(key)
    x = jax.random.normal(kx, (batch, input_dim, embedding_dim), jnp.float32)
    params = init_params(kp, input_dim, classes)
    kparams = prepare_params(params, classes)   # one-time bf16 / transposed / padded prep

    out = mlp_forward(x, kparams, classes=classes)
    out = jax.block_until_ready(out)

    ref = mlp_reference(x, params)              # full-f32 reference
    assert out.shape == (batch, classes)
    # valid log-probabilities: rows exponentiate and sum to 1
    assert jnp.allclose(jnp.sum(jnp.exp(out), axis=1), 1.0, atol=1e-4)
    # bf16 weights/activations -> tolerance loosened vs the f32 reference
    assert jnp.allclose(out, ref, atol=5e-2, rtol=5e-2), "mismatch vs reference"
    assert jnp.array_equal(jnp.argmax(out, axis=1), jnp.argmax(ref, axis=1))

    print("KERNEL_OK")
</pallas_src>

<mosaic_0001>
module attributes {stable_mosaic.version = 11 : i64} {
  func.func @mlp_kernel(%arg0: i32, %arg1: memref<16x1200xbf16, #tpu.memory_space<vmem>>, %arg2: memref<1200x2048xbf16, #tpu.memory_space<vmem>>, %arg3: memref<1x2048xf32, #tpu.memory_space<vmem>>, %arg4: memref<2048x256xbf16, #tpu.memory_space<vmem>>, %arg5: memref<1x256xf32, #tpu.memory_space<vmem>>, %arg6: memref<256x128xbf16, #tpu.memory_space<vmem>>, %arg7: memref<1x128xf32, #tpu.memory_space<vmem>>, %arg8: memref<16x128xf32, #tpu.memory_space<vmem>>, %arg9: memref<16x256xf32, #tpu.memory_space<vmem>>) attributes {dimension_semantics = [#tpu.dimension_semantics<arbitrary>], iteration_bounds = array<i64: 2>, scalar_prefetch = 0 : i64, scratch_operands = 1 : i64, tpu.core_type = #tpu.core_type<tc>, window_params = [{pipeline_mode = #tpu.pipeline_mode<synchronous>, transform_indices = @transform_0, window_bounds = array<i64: 16, 1200>}, {transform_indices = @transform_1, window_bounds = array<i64: 1200, 2048>}, {transform_indices = @transform_2, window_bounds = array<i64: 1, 2048>}, {transform_indices = @transform_3, window_bounds = array<i64: 2048, 256>}, {pipeline_mode = #tpu.pipeline_mode<synchronous>, transform_indices = @transform_4, window_bounds = array<i64: 1, 256>}, {pipeline_mode = #tpu.pipeline_mode<synchronous>, transform_indices = @transform_5, window_bounds = array<i64: 256, 128>}, {pipeline_mode = #tpu.pipeline_mode<synchronous>, transform_indices = @transform_6, window_bounds = array<i64: 1, 128>}, {pipeline_mode = #tpu.pipeline_mode<synchronous>, transform_indices = @transform_7, window_bounds = array<i64: 16, 128>}]} {
    %c0_i32 = arith.constant 0 : i32
    %0 = arith.cmpi eq, %arg0, %c0_i32 : i32
    %1 = arith.extui %0 : i1 to i32
    %c0_i32_0 = arith.constant 0 : i32
    %2 = arith.cmpi ne, %1, %c0_i32_0 : i32
    scf.if %2 {
      %c0_15 = arith.constant 0 : index
      %c0_16 = arith.constant 0 : index
      %20 = vector.load %arg5[%c0_15, %c0_16] : memref<1x256xf32, #tpu.memory_space<vmem>>, vector<1x256xf32>
      %21 = vector.shape_cast %20 : vector<1x256xf32> to vector<1x256xf32>
      %22 = vector.broadcast %21 : vector<1x256xf32> to vector<16x256xf32>
      %c0_17 = arith.constant 0 : index
      %c0_18 = arith.constant 0 : index
      %23 = vector.load %arg9[%c0_17, %c0_18] : memref<16x256xf32, #tpu.memory_space<vmem>>, vector<16x256xf32>
      tpu.vector_store %arg9[%c0_17, %c0_18], %22 {strides = array<i32>} : memref<16x256xf32, #tpu.memory_space<vmem>>, vector<16x256xf32>,
    } else {
    }
    %c0 = arith.constant 0 : index
    %c0_1 = arith.constant 0 : index
    %3 = vector.load %arg1[%c0, %c0_1] : memref<16x1200xbf16, #tpu.memory_space<vmem>>, vector<16x1200xbf16>
    %c0_2 = arith.constant 0 : index
    %c0_3 = arith.constant 0 : index
    %4 = vector.load %arg2[%c0_2, %c0_3] : memref<1200x2048xbf16, #tpu.memory_space<vmem>>, vector<1200x2048xbf16>
    %cst = arith.constant dense<0.000000e+00> : vector<16x2048xf32>
    %5 = tpu.matmul %3, %4, %cst {dimension_numbers = #tpu.dot_dimension_numbers<[1], [0], [0], [1], [0, 0, 1, 1], [], []>} : vector<16x1200xbf16>, vector<1200x2048xbf16>, vector<16x2048xf32> -> vector<16x2048xf32>
    %c0_4 = arith.constant 0 : index
    %c0_5 = arith.constant 0 : index
    %6 = vector.load %arg3[%c0_4, %c0_5] : memref<1x2048xf32, #tpu.memory_space<vmem>>, vector<1x2048xf32>
    %7 = vector.broadcast %6 : vector<1x2048xf32> to vector<16x2048xf32>
    %8 = arith.addf %5, %7 : vector<16x2048xf32>
    %cst_6 = arith.constant 0.000000e+00 : f32
    %9 = vector.broadcast %cst_6 : f32 to vector<16x2048xf32>
    %10 = arith.maximumf %8, %9 : vector<16x2048xf32>
    %c0_7 = arith.constant 0 : index
    %c0_8 = arith.constant 0 : index
    %11 = vector.load %arg9[%c0_7, %c0_8] : memref<16x256xf32, #tpu.memory_space<vmem>>, vector<16x256xf32>
    %12 = arith.truncf %10 : vector<16x2048xf32> to vector<16x2048xbf16>
    %c0_9 = arith.constant 0 : index
    %c0_10 = arith.constant 0 : index
    %13 = vector.load %arg4[%c0_9, %c0_10] : memref<2048x256xbf16, #tpu.memory_space<vmem>>, vector<2048x256xbf16>
    %cst_11 = arith.constant dense<0.000000e+00> : vector<16x256xf32>
    %14 = tpu.matmul %12, %13, %cst_11 {dimension_numbers = #tpu.dot_dimension_numbers<[1], [0], [0], [1], [0, 0, 1, 1], [], []>} : vector<16x2048xbf16>, vector<2048x256xbf16>, vector<16x256xf32> -> vector<16x256xf32>
    %15 = arith.addf %11, %14 : vector<16x256xf32>
    %c0_12 = arith.constant 0 : index
    %c0_13 = arith.constant 0 : index
    %16 = vector.load %arg9[%c0_12, %c0_13] : memref<16x256xf32, #tpu.memory_space<vmem>>, vector<16x256xf32>
    tpu.vector_store %arg9[%c0_12, %c0_13], %15 {strides = array<i32>} : memref<16x256xf32, #tpu.memory_space<vmem>>, vector<16x256xf32>,
    %c1_i32 = arith.constant 1 : i32
    %17 = arith.cmpi eq, %arg0, %c1_i32 : i32
    %18 = arith.extui %17 : i1 to i32
    %c0_i32_14 = arith.constant 0 : i32
    %19 = arith.cmpi ne, %18, %c0_i32_14 : i32
    scf.if %19 {
      %c0_15 = arith.constant 0 : index
      %c0_16 = arith.constant 0 : index
      %20 = vector.load %arg9[%c0_15, %c0_16] : memref<16x256xf32, #tpu.memory_space<vmem>>, vector<16x256xf32>
      %cst_17 = arith.constant 0.000000e+00 : f32
      %21 = vector.broadcast %cst_17 : f32 to vector<16x256xf32>
      %22 = arith.maximumf %20, %21 : vector<16x256xf32>
      %23 = arith.truncf %22 : vector<16x256xf32> to vector<16x256xbf16>
      %c0_18 = arith.constant 0 : index
      %c0_19 = arith.constant 0 : index
      %24 = vector.load %arg6[%c0_18, %c0_19] : memref<256x128xbf16, #tpu.memory_space<vmem>>, vector<256x128xbf16>
      %cst_20 = arith.constant dense<0.000000e+00> : vector<16x128xf32>
      %25 = tpu.matmul %23, %24, %cst_20 {dimension_numbers = #tpu.dot_dimension_numbers<[1], [0], [0], [1], [0, 0, 1, 1], [], []>} : vector<16x256xbf16>, vector<256x128xbf16>, vector<16x128xf32> -> vector<16x128xf32>
      %c0_21 = arith.constant 0 : index
      %c0_22 = arith.constant 0 : index
      %26 = vector.load %arg7[%c0_21, %c0_22] : memref<1x128xf32, #tpu.memory_space<vmem>>, vector<1x128xf32>
      %27 = vector.broadcast %26 : vector<1x128xf32> to vector<16x128xf32>
      %28 = arith.addf %25, %27 : vector<16x128xf32>
      %cst_23 = arith.constant dense<0xFF800000> : vector<16xf32>
      %29 = vector.multi_reduction <maximumf>, %28, %cst_23 [1] : vector<16x128xf32> to vector<16xf32>
      %30 = vector.shape_cast %29 : vector<16xf32> to vector<16x1xf32>
      %31 = vector.broadcast %30 : vector<16x1xf32> to vector<16x128xf32>
      %32 = arith.subf %28, %31 : vector<16x128xf32>
      %33 = math.exp %32 : vector<16x128xf32>
      %cst_24 = arith.constant dense<0.000000e+00> : vector<16xf32>
      %34 = vector.multi_reduction <add>, %33, %cst_24 [1] : vector<16x128xf32> to vector<16xf32>
      %35 = vector.shape_cast %34 : vector<16xf32> to vector<16x1xf32>
      %36 = math.log %35 : vector<16x1xf32>
      %37 = vector.broadcast %36 : vector<16x1xf32> to vector<16x128xf32>
      %38 = arith.subf %32, %37 : vector<16x128xf32>
      %c0_25 = arith.constant 0 : index
      %c0_26 = arith.constant 0 : index
      %39 = vector.load %arg8[%c0_25, %c0_26] : memref<16x128xf32, #tpu.memory_space<vmem>>, vector<16x128xf32>
      tpu.vector_store %arg8[%c0_25, %c0_26], %38 {strides = array<i32>} : memref<16x128xf32, #tpu.memory_space<vmem>>, vector<16x128xf32>,
    } else {
    }
    return
  }
  func.func @transform_0(%arg0: i32) -> (i32, i32) {
    %c0_i32 = arith.constant 0 : i32
    %c0_i32_0 = arith.constant 0 : i32
    %c0_i32_1 = arith.constant 0 : i32
    return %c0_i32, %c0_i32_0 : i32, i32
  }
  func.func @transform_1(%arg0: i32) -> (i32, i32) {
    %c0_i32 = arith.constant 0 : i32
    %c0_i32_0 = arith.constant 0 : i32
    return %c0_i32, %arg0 : i32, i32
  }
  func.func @transform_2(%arg0: i32) -> (i32, i32) {
    %c0_i32 = arith.constant 0 : i32
    %c0_i32_0 = arith.constant 0 : i32
    return %c0_i32, %arg0 : i32, i32
  }
  func.func @transform_3(%arg0: i32) -> (i32, i32) {
    %c0_i32 = arith.constant 0 : i32
    %c0_i32_0 = arith.constant 0 : i32
    return %arg0, %c0_i32 : i32, i32
  }
  func.func @transform_4(%arg0: i32) -> (i32, i32) {
    %c0_i32 = arith.constant 0 : i32
    %c0_i32_0 = arith.constant 0 : i32
    %c0_i32_1 = arith.constant 0 : i32
    return %c0_i32, %c0_i32_0 : i32, i32
  }
  func.func @transform_5(%arg0: i32) -> (i32, i32) {
    %c0_i32 = arith.constant 0 : i32
    %c0_i32_0 = arith.constant 0 : i32
    %c0_i32_1 = arith.constant 0 : i32
    return %c0_i32, %c0_i32_0 : i32, i32
  }
  func.func @transform_6(%arg0: i32) -> (i32, i32) {
    %c0_i32 = arith.constant 0 : i32
    %c0_i32_0 = arith.constant 0 : i32
    %c0_i32_1 = arith.constant 0 : i32
    return %c0_i32, %c0_i32_0 : i32, i32
  }
  func.func @transform_7(%arg0: i32) -> (i32, i32) {
    %c0_i32 = arith.constant 0 : i32
    %c0_i32_0 = arith.constant 0 : i32
    %c0_i32_1 = arith.constant 0 : i32
    return %c0_i32, %c0_i32_0 : i32, i32
  }
}

</mosaic_0001>

<llo_original>
// kernel: mlp_forward.1
$region0: #{mlp_forward.1}
  #allocation0 [shape = 'u32[]', space=smem, size = 0x4, offset = 0x4, fixed_abs, tag = 'smem constant byte address 0x4 - core index']
  #allocation1 [shape = 'u32[144,128]{1,0:T(1,128)}', space=vmem, size = 0x12000, scoped, tag = 'internal scratch']
  #allocation2 [shape = 'f32[16,256]{1,0:T(8,128)}', space=vmem, size = 0x4000, scoped, tag = 'scratch operand']
  %s0 = inlined_call_operand.vmem [shape: bf16[16,1200], index: 0, kind: input, shape index: {}]
  %s1 = inlined_call_operand.hbm [shape: bf16[1200,4096], index: 1, kind: input, shape index: {}]
  %s2 = inlined_call_operand.hbm [shape: f32[1,4096], index: 2, kind: input, shape index: {}]
  %s3 = inlined_call_operand.hbm [shape: bf16[4096,256], index: 3, kind: input, shape index: {}]
  %s4 = inlined_call_operand.hbm [shape: f32[1,256], index: 4, kind: input, shape index: {}]
  %s5 = inlined_call_operand.hbm [shape: bf16[256,128], index: 5, kind: input, shape index: {}]
  %s6 = inlined_call_operand.hbm [shape: f32[1,128], index: 6, kind: input, shape index: {}]
  %s7 = inlined_call_operand.vmem [shape: f32[16,128], index: 7, kind: output, shape index: {}]
  %s8 = sld [smem:[#allocation0]]
  $region93: #{mlp_forward.1} parent=0
    _
  %s10 = ssub.s32 1, %s8
  %s11 = scalar_select 0, %s10, %s8
  $region1: #{mlp_forward.1} parent=0
    #allocation3 [shape = 'u8[9830400]{0}', space=vmem, size = 0x960000, scoped, tag = 'input window, operand 1']
    #allocation4 [shape = 's32[2]{0}', space=sflag, size = 0x8, scoped, tag = 'scoped memory for mlp_forward.1']
    #allocation5 [shape = 'u8[16384]{0}', space=vmem, size = 0x4000, scoped, tag = 'input window, operand 2']
    #allocation6 [shape = 's32[2]{0}', space=sflag, size = 0x8, scoped, tag = 'scoped memory for mlp_forward.1']
    #allocation7 [shape = 'u8[2097152]{0}', space=vmem, size = 0x200000, scoped, tag = 'input window, operand 3']
    #allocation8 [shape = 'u8[1024]{0}', space=vmem, size = 0x400, scoped, tag = 'input window, operand 4, single buffered']
    #allocation9 [shape = 's32[1]{0}', space=sflag, size = 0x4, scoped, tag = 'scoped memory for mlp_forward.1']
    #allocation10 [shape = 'u8[65536]{0}', space=vmem, size = 0x10000, scoped, tag = 'input window, operand 5, single buffered']
    #allocation11 [shape = 'u8[512]{0}', space=vmem, size = 0x400, scoped, tag = 'input window, operand 6, single buffered']
    #allocation12 [shape = 's32[1]{0}', space=sflag, size = 0x4, scoped, tag = 'scoped memory for mlp_forward.1']
    %12 = vsyncpa [#allocation4], 0
    %s13 = scalar_lea.sflag [#allocation4], 1
    %14 = vsyncpa %s13, 0
    %15 = vsyncpa [#allocation6], 0
    %s16 = scalar_lea.sflag [#allocation6], 1
    %17 = vsyncpa %s16, 0
    %18 = vsyncpa [#allocation9], 0
    %19 = vsyncpa [#allocation12], 0
    loop: start=0, step=1, limit=4
    $region2: #{mlp_forward.1} parent=1 // loop_pre_header
      _
    $region3: #{mlp_forward.1} parent=1 // loop_header
      %s21 = sphi 0, %s25
      %p22 = scmp.ge.s32.totalorder %s21, 4
      %s29 = sphi 0, %s29
      %s31 = sphi 0, %s29
      %s32 = sphi 0, %s31
      %s46 = sphi 0, %s32
      %s52 = sphi 0, %s54
      %s55 = sphi 0, %s52
      %s56 = sphi 0, %s55
      %s72 = sphi 0, %s56
      %s78 = sphi 0, %s80
      %s81 = sphi 0, %s78
      %s82 = sphi 0, %s81
      %s98 = sphi 0, %s82
      %s104 = sphi 0, %s106
      %s107 = sphi 0, %s104
      %s108 = sphi 0, %s107
      %s124 = sphi 0, %s108
      %s128 = sphi 0, %s128
      %s130 = sphi 0, %s128
      %s131 = sphi 0, %s130
      %s145 = sphi 0, %s131
      %s149 = sphi 0, %s149
      %s151 = sphi 0, %s149
      %s152 = sphi 0, %s151
      %s166 = sphi 0, %s152
      %s170 = sphi 0, %s170
      %s172 = sphi 0, %s170
      %s173 = sphi 0, %s172
      %s187 = sphi 0, %s173
      %s191 = sphi 0, %s191
      %s193 = sphi 0, %s191
      %s194 = sphi 0, %s193
      %s208 = sphi 0, %s194
    $region4: #{mlp_forward.1} parent=1 // loop_header_branch
      %24 = sbr.rel (%p22) target = $region8
    $region5: #{mlp_forward.1} parent=1 // loop_body
      %s26 = ssub.s32 %s21, 1
      %s27 = ssub.s32 %s21, 2
      %s28 = sadd.s32 %s21, 1
      %s30 = sadd.s32 %s29, 1
      %p33 = scmp.eq.s32.totalorder %s21, 1
      %p34 = scmp.ne.s32.totalorder %s29, %s31
      %p35 = scmp.eq.s32.totalorder %s21, 0
      %p36 = por %p34, %p35
      %p37 = scmp.ne.s32.totalorder %s29, %s31
      %p38 = scmp.eq.s32.totalorder %s26, 1
      %p39 = por %p37, %p38
      %p40 = scmp.ne.s32.totalorder %s31, %s32
      %p41 = scmp.eq.s32.totalorder %s26, 0
      %p42 = por %p40, %p41
      %p43 = scmp.ne.s32.totalorder %s31, %s32
      %p44 = scmp.eq.s32.totalorder %s27, 1
      %p45 = por %p43, %p44
      %p47 = scmp.ne.s32.totalorder %s32, %s46
      %p48 = scmp.eq.s32.totalorder %s27, 0
      %p49 = por %p47, %p48
      %s50 = ssub.s32 %s21, %s28
      %p51 = scmp.eq.s32.totalorder %s50, 0
      %s53 = sadd.s32 %s52, 1
      %s54 = scalar_select %p51, %s52, %s53
      %p57 = pneg %p51
      %p58 = scmp.eq.s32.totalorder %s21, 1
      %p59 = por %p57, %p58
      %p60 = scmp.ne.s32.totalorder %s52, %s55
      %p61 = scmp.eq.s32.totalorder %s21, 0
      %p62 = por %p60, %p61
      %p63 = scmp.ne.s32.totalorder %s52, %s55
      %p64 = scmp.eq.s32.totalorder %s26, 1
      %p65 = por %p63, %p64
      %p66 = scmp.ne.s32.totalorder %s55, %s56
      %p67 = scmp.eq.s32.totalorder %s26, 0
      %p68 = por %p66, %p67
      %p69 = scmp.ne.s32.totalorder %s55, %s56
      %p70 = scmp.eq.s32.totalorder %s27, 1
      %p71 = por %p69, %p70
      %p73 = scmp.ne.s32.totalorder %s56, %s72
      %p74 = scmp.eq.s32.totalorder %s27, 0
      %p75 = por %p73, %p74
      %s76 = ssub.s32 %s21, %s28
      %p77 = scmp.eq.s32.totalorder %s76, 0
      %s79 = sadd.s32 %s78, 1
      %s80 = scalar_select %p77, %s78, %s79
      %p83 = pneg %p77
      %p84 = scmp.eq.s32.totalorder %s21, 1
      %p85 = por %p83, %p84
      %p86 = scmp.ne.s32.totalorder %s78, %s81
      %p87 = scmp.eq.s32.totalorder %s21, 0
      %p88 = por %p86, %p87
      %p89 = scmp.ne.s32.totalorder %s78, %s81
      %p90 = scmp.eq.s32.totalorder %s26, 1
      %p91 = por %p89, %p90
      %p92 = scmp.ne.s32.totalorder %s81, %s82
      %p93 = scmp.eq.s32.totalorder %s26, 0
      %p94 = por %p92, %p93
      %p95 = scmp.ne.s32.totalorder %s81, %s82
      %p96 = scmp.eq.s32.totalorder %s27, 1
      %p97 = por %p95, %p96
      %p99 = scmp.ne.s32.totalorder %s82, %s98
      %p100 = scmp.eq.s32.totalorder %s27, 0
      %p101 = por %p99, %p100
      %s102 = ssub.s32 %s21, %s28
      %p103 = scmp.eq.s32.totalorder %s102, 0
      %s105 = sadd.s32 %s104, 1
      %s106 = scalar_select %p103, %s104, %s105
      %p109 = pneg %p103
      %p110 = scmp.eq.s32.totalorder %s21, 1
      %p111 = por %p109, %p110
      %p112 = scmp.ne.s32.totalorder %s104, %s107
      %p113 = scmp.eq.s32.totalorder %s21, 0
      %p114 = por %p112, %p113
      %p115 = scmp.ne.s32.totalorder %s104, %s107
      %p116 = scmp.eq.s32.totalorder %s26, 1
      %p117 = por %p115, %p116
      %p118 = scmp.ne.s32.totalorder %s107, %s108
      %p119 = scmp.eq.s32.totalorder %s26, 0
      %p120 = por %p118, %p119
      %p121 = scmp.ne.s32.totalorder %s107, %s108
      %p122 = scmp.eq.s32.totalorder %s27, 1
      %p123 = por %p121, %p122
      %p125 = scmp.ne.s32.totalorder %s108, %s124
      %p126 = scmp.eq.s32.totalorder %s27, 0
      %p127 = por %p125, %p126
      %s129 = sadd.s32 %s128, 1
      %p132 = scmp.eq.s32.totalorder %s21, 1
      %p133 = scmp.ne.s32.totalorder %s128, %s130
      %p134 = scmp.eq.s32.totalorder %s21, 0
      %p135 = por %p133, %p134
      %p136 = scmp.ne.s32.totalorder %s128, %s130
      %p137 = scmp.eq.s32.totalorder %s26, 1
      %p138 = por %p136, %p137
      %p139 = scmp.ne.s32.totalorder %s130, %s131
      %p140 = scmp.eq.s32.totalorder %s26, 0
      %p141 = por %p139, %p140
      %p142 = scmp.ne.s32.totalorder %s130, %s131
      %p143 = scmp.eq.s32.totalorder %s27, 1
      %p144 = por %p142, %p143
      %p146 = scmp.ne.s32.totalorder %s131, %s145
      %p147 = scmp.eq.s32.totalorder %s27, 0
      %p148 = por %p146, %p147
      %s150 = sadd.s32 %s149, 1
      %p153 = scmp.eq.s32.totalorder %s21, 1
      %p154 = scmp.ne.s32.totalorder %s149, %s151
      %p155 = scmp.eq.s32.totalorder %s21, 0
      %p156 = por %p154, %p155
      %p157 = scmp.ne.s32.totalorder %s149, %s151
      %p158 = scmp.eq.s32.totalorder %s26, 1
      %p159 = por %p157, %p158
      %p160 = scmp.ne.s32.totalorder %s151, %s152
      %p161 = scmp.eq.s32.totalorder %s26, 0
      %p162 = por %p160, %p161
      %p163 = scmp.ne.s32.totalorder %s151, %s152
      %p164 = scmp.eq.s32.totalorder %s27, 1
      %p165 = por %p163, %p164
      %p167 = scmp.ne.s32.totalorder %s152, %s166
      %p168 = scmp.eq.s32.totalorder %s27, 0
      %p169 = por %p167, %p168
      %s171 = sadd.s32 %s170, 1
      %p174 = scmp.eq.s32.totalorder %s21, 1
      %p175 = scmp.ne.s32.totalorder %s170, %s172
      %p176 = scmp.eq.s32.totalorder %s21, 0
      %p177 = por %p175, %p176
      %p178 = scmp.ne.s32.totalorder %s170, %s172
      %p179 = scmp.eq.s32.totalorder %s26, 1
      %p180 = por %p178, %p179
      %p181 = scmp.ne.s32.totalorder %s172, %s173
      %p182 = scmp.eq.s32.totalorder %s26, 0
      %p183 = por %p181, %p182
      %p184 = scmp.ne.s32.totalorder %s172, %s173
      %p185 = scmp.eq.s32.totalorder %s27, 1
      %p186 = por %p184, %p185
      %p188 = scmp.ne.s32.totalorder %s173, %s187
      %p189 = scmp.eq.s32.totalorder %s27, 0
      %p190 = por %p188, %p189
      %s192 = sadd.s32 %s191, 1
      %p195 = scmp.eq.s32.totalorder %s21, 1
      %p196 = scmp.ne.s32.totalorder %s191, %s193
      %p197 = scmp.eq.s32.totalorder %s21, 0
      %p198 = por %p196, %p197
      %p199 = scmp.ne.s32.totalorder %s191, %s193
      %p200 = scmp.eq.s32.totalorder %s26, 1
      %p201 = por %p199, %p200
      %p202 = scmp.ne.s32.totalorder %s193, %s194
      %p203 = scmp.eq.s32.totalorder %s26, 0
      %p204 = por %p202, %p203
      %p205 = scmp.ne.s32.totalorder %s193, %s194
      %p206 = scmp.eq.s32.totalorder %s27, 1
      %p207 = por %p205, %p206
      %p209 = scmp.ne.s32.totalorder %s194, %s208
      %p210 = scmp.eq.s32.totalorder %s27, 0
      %p211 = por %p209, %p210
      %p212 = scmp.le.s32.totalorder 1, %s21
      %p213 = scmp.lt.s32.totalorder %s21, 3
      %p214 = pnand %p212, %p213
      %p215 = pneg %p214
      // Predicated region
      $region9: #{mlp_forward.1} parent=5 // pred_check
        _
      $region10: #{mlp_forward.1} parent=5 // pred_check_branch
        %217 = sbr.rel (%p214) target = $region12
      $region11: #{mlp_forward.1} parent=5 // pred_region
        %s218 = ssub.s32 %s21, 1
        // Predicated region
        $region13: #{mlp_forward.1} parent=11 // pred_check
          %p219 = pneg %p42
        $region14: #{mlp_forward.1} parent=11 // pred_check_branch
          %221 = sbr.rel (%p219) target = $region16
        $region15: #{mlp_forward.1} parent=11 // pred_region
          _
        $region16: #{mlp_forward.1} parent=11 // pred_fallthru
          _
        // Predicated region
        $region17: #{mlp_forward.1} parent=11 // pred_check
          %p222 = pneg %p141
        $region18: #{mlp_forward.1} parent=11 // pred_check_branch
          %224 = sbr.rel (%p222) target = $region20
        $region19: #{mlp_forward.1} parent=11 // pred_region
          %s226 = ssub.s32 32, 32
          %227 = vsyncadd [#allocation9], %s226
          %s229 = sshll.u32 [#allocation8], 4
          %s230 = int_to_ptr.vmem [resolvable:$true] %s229
          %232 = dma.hbm_to_vmem [thread:$0]  %s4, 32, %s230, [#allocation9]
        $region20: #{mlp_forward.1} parent=11 // pred_fallthru
          _
        // Predicated region
        $region21: #{mlp_forward.1} parent=11 // pred_check
          %p233 = pneg %p162
        $region22: #{mlp_forward.1} parent=11 // pred_check_branch
          %235 = sbr.rel (%p233) target = $region24
        $region23: #{mlp_forward.1} parent=11 // pred_region
          %s237 = ssub.s32 2048, 2048
          %238 = vsyncadd [#allocation9], %s237
          %s239 = sshll.u32 [#allocation10], 4
          %s240 = int_to_ptr.vmem [resolvable:$true] %s239
          %245 = dma.hbm_to_vmem [thread:$0]  %s5, 2048, %s240, [#allocation9], 64, 64, 4
        $region24: #{mlp_forward.1} parent=11 // pred_fallthru
          _
        // Predicated region
        $region25: #{mlp_forward.1} parent=11 // pred_check
          %p246 = pneg %p183
        $region26: #{mlp_forward.1} parent=11 // pred_check_branch
          %248 = sbr.rel (%p246) target = $region28
        $region27: #{mlp_forward.1} parent=11 // pred_region
          %s250 = ssub.s32 16, 16
          %251 = vsyncadd [#allocation12], %s250
          %s253 = sshll.u32 [#allocation11], 4
          %s254 = int_to_ptr.vmem [resolvable:$true] %s253
          %256 = dma.hbm_to_vmem [thread:$0]  %s6, 16, %s254, [#allocation12]
        $region28: #{mlp_forward.1} parent=11 // pred_fallthru
          _
      $region12: #{mlp_forward.1} parent=5 // pred_fallthru
        _
      %p257 = scmp.lt.s32.totalorder %s21, 2
      // Predicated region
      $region29: #{mlp_forward.1} parent=5 // pred_check
        %p258 = pneg %p257
      $region30: #{mlp_forward.1} parent=5 // pred_check_branch
        %260 = sbr.rel (%p258) target = $region32
      $region31: #{mlp_forward.1} parent=5 // pred_region
        // Predicated region
        $region33: #{mlp_forward.1} parent=31 // pred_check
          %p261 = pneg %p62
        $region34: #{mlp_forward.1} parent=31 // pred_check_branch
          %263 = sbr.rel (%p261) target = $region36
        $region35: #{mlp_forward.1} parent=31 // pred_region
          %s264 = sand.u32 %s52, 1
          %s265 = scalar_lea.sflag [#allocation4], %s264
          %s266 = sand.u32 %s52, 1
          %s267 = smul.addr %s266, 9600
          %s268 = scalar_lea.vmem [#allocation3], %s267
          %s269 = smul.u32 16, %s21
          %s271 = ssub.s32 153600, 153600
          %272 = vsyncadd %s265, %s271
          %s273 = smul.addr %s269, 64
          %s274 = scalar_lea.hbm %s1, %s273
          %s275 = sshll.u32 %s268, 4
          %s276 = int_to_ptr.vmem [resolvable:$true] %s275
          %281 = dma.hbm_to_vmem [thread:$0]  %s274, 153600, %s276, %s265, 2048, 1024, 64
        $region36: #{mlp_forward.1} parent=31 // pred_fallthru
          _
        // Predicated region
        $region37: #{mlp_forward.1} parent=31 // pred_check
          %p282 = pneg %p88
        $region38: #{mlp_forward.1} parent=31 // pred_check_branch
          %284 = sbr.rel (%p282) target = $region40
        $region39: #{mlp_forward.1} parent=31 // pred_region
          %s285 = sand.u32 %s21, 1
          %s286 = scalar_lea.sflag [#allocation6], %s285
          %s287 = sand.u32 %s78, 1
          %s288 = smul.addr %s287, 16
          %s289 = scalar_lea.vmem [#allocation5], %s288
          %s290 = smul.u32 16, %s21
          %s292 = ssub.s32 256, 256
          %293 = vsyncadd %s286, %s292
          %s294 = smul.addr %s290, 16
          %s295 = scalar_lea.hbm %s2, %s294
          %s297 = sshll.u32 %s289, 4
          %s298 = int_to_ptr.vmem [resolvable:$true] %s297
          %300 = dma.hbm_to_vmem [thread:$0]  %s295, 256, %s298, %s286
        $region40: #{mlp_forward.1} parent=31 // pred_fallthru
          _
        // Predicated region
        $region41: #{mlp_forward.1} parent=31 // pred_check
          %p301 = pneg %p114
        $region42: #{mlp_forward.1} parent=31 // pred_check_branch
          %303 = sbr.rel (%p301) target = $region44
        $region43: #{mlp_forward.1} parent=31 // pred_region
          %s304 = sand.u32 %s21, 1
          %s305 = scalar_lea.sflag [#allocation6], %s304
          %s306 = sand.u32 %s104, 1
          %s307 = smul.addr %s306, 2048
          %s308 = scalar_lea.vmem [#allocation7], %s307
          %s309 = smul.u32 256, %s21
          %s311 = ssub.s32 32768, 32768
          %312 = vsyncadd %s305, %s311
          %s313 = smul.addr %s309, 2
          %s314 = smul.addr %s313, 64
          %s315 = scalar_lea.hbm %s3, %s314
          %s316 = sshll.u32 %s308, 4
          %s317 = int_to_ptr.vmem [resolvable:$true] %s316
          %322 = dma.hbm_to_vmem [thread:$0]  %s315, 32768, %s317, %s305, 128, 128, 8
        $region44: #{mlp_forward.1} parent=31 // pred_fallthru
          _
      $region32: #{mlp_forward.1} parent=5 // pred_fallthru
        _
      %p323 = scmp.le.s32.totalorder 1, %s21
      %p324 = scmp.lt.s32.totalorder %s21, 3
      %p325 = pnand %p323, %p324
      %p326 = pneg %p325
      // Predicated region
      $region45: #{mlp_forward.1} parent=5 // pred_check
        _
      $region46: #{mlp_forward.1} parent=5 // pred_check_branch
        %328 = sbr.rel (%p325) target = $region48
      $region47: #{mlp_forward.1} parent=5 // pred_region
        %s329 = ssub.s32 %s21, 1
        %s330 = sand.u32 %s55, 1
        %s331 = scalar_lea.sflag [#allocation4], %s330
        %s332 = sand.u32 %s55, 1
        %s333 = smul.addr %s332, 9600
        %s334 = scalar_lea.vmem [#allocation3], %s333
        // Predicated region
        $region49: #{mlp_forward.1} parent=47 // pred_check
          %p335 = pneg %p68
        $region50: #{mlp_forward.1} parent=47 // pred_check_branch
          %337 = sbr.rel (%p335) target = $region52
        $region51: #{mlp_forward.1} parent=47 // pred_region
          %338 = dma.done %s331, 153600
        $region52: #{mlp_forward.1} parent=47 // pred_fallthru
          _
        %s339 = sand.u32 %s26, 1
        %s340 = scalar_lea.sflag [#allocation6], %s339
        %s341 = sand.u32 %s81, 1
        %s342 = smul.addr %s341, 16
        %s343 = scalar_lea.vmem [#allocation5], %s342
        // Predicated region
        $region53: #{mlp_forward.1} parent=47 // pred_check
          %p344 = pneg %p94
        $region54: #{mlp_forward.1} parent=47 // pred_check_branch
          %346 = sbr.rel (%p344) target = $region56
        $region55: #{mlp_forward.1} parent=47 // pred_region
          %347 = dma.done %s340, 256
        $region56: #{mlp_forward.1} parent=47 // pred_fallthru
          _
        %s348 = sand.u32 %s26, 1
        %s349 = scalar_lea.sflag [#allocation6], %s348
        %s350 = sand.u32 %s107, 1
        %s351 = smul.addr %s350, 2048
        %s352 = scalar_lea.vmem [#allocation7], %s351
        // Predicated region
        $region57: #{mlp_forward.1} parent=47 // pred_check
          %p353 = pneg %p120
        $region58: #{mlp_forward.1} parent=47 // pred_check_branch
          %355 = sbr.rel (%p353) target = $region60
        $region59: #{mlp_forward.1} parent=47 // pred_region
          %356 = dma.done %s349, 32768
        $region60: #{mlp_forward.1} parent=47 // pred_fallthru
          _
        // Predicated region
        $region61: #{mlp_forward.1} parent=47 // pred_check
          %p357 = pneg %p141
        $region62: #{mlp_forward.1} parent=47 // pred_check_branch
          %359 = sbr.rel (%p357) target = $region64
        $region63: #{mlp_forward.1} parent=47 // pred_region
          %360 = dma.done [#allocation9], 32
        $region64: #{mlp_forward.1} parent=47 // pred_fallthru
          _
        // Predicated region
        $region65: #{mlp_forward.1} parent=47 // pred_check
          %p361 = pneg %p162
        $region66: #{mlp_forward.1} parent=47 // pred_check_branch
          %363 = sbr.rel (%p361) target = $region68
        $region67: #{mlp_forward.1} parent=47 // pred_region
          %364 = dma.done [#allocation9], 2048
        $region68: #{mlp_forward.1} parent=47 // pred_fallthru
          _
        // Predicated region
        $region69: #{mlp_forward.1} parent=47 // pred_check
          %p365 = pneg %p183
        $region70: #{mlp_forward.1} parent=47 // pred_check_branch
          %367 = sbr.rel (%p365) target = $region72
        $region71: #{mlp_forward.1} parent=47 // pred_region
          %368 = dma.done [#allocation12], 16
        $region72: #{mlp_forward.1} parent=47 // pred_fallthru
          _
        %p369 = pneg %p42
        %p370 = pneg %p39
        %s371 = sand.u32 %s55, 1
        %s372 = scalar_lea.sflag [#allocation4], %s371
        %s373 = sand.u32 %s55, 1
        %s374 = smul.addr %s373, 9600
        %s375 = scalar_lea.vmem [#allocation3], %s374
        %p376 = pneg %p68
        %p377 = pneg %p65
        %s378 = sand.u32 %s26, 1
        %s379 = scalar_lea.sflag [#allocation6], %s378
        %s380 = sand.u32 %s81, 1
        %s381 = smul.addr %s380, 16
        %s382 = scalar_lea.vmem [#allocation5], %s381
        %p383 = pneg %p94
        %p384 = pneg %p91
        %s385 = sand.u32 %s26, 1
        %s386 = scalar_lea.sflag [#allocation6], %s385
        %s387 = sand.u32 %s107, 1
        %s388 = smul.addr %s387, 2048
        %s389 = scalar_lea.vmem [#allocation7], %s388
        %p390 = pneg %p120
        %p391 = pneg %p117
        %p392 = pneg %p141
        %p393 = pneg %p138
        %p394 = pneg %p162
        %p395 = pneg %p159
        %p396 = pneg %p183
        %p397 = pneg %p180
        %p398 = pneg %p204
        %p399 = pneg %p201
        %s400 = smul.u32 16, %s26
        %s401 = smul.u32 16, %s26
        %s402 = smul.u32 256, %s26
        %p404 = scmp.eq.s32.totalorder %s26, 0
        // Predicated region
        $region73: #{mlp_forward.1} parent=47 // pred_check
          %p405 = pneg %p404
        $region74: #{mlp_forward.1} parent=47 // pred_check_branch
          %407 = sbr.rel (%p405) target = $region76
        $region75: #{mlp_forward.1} parent=47 // pred_region
          %v408 = vld [vmem:[#allocation8] sm:$0x3]
          %v410 = vlaneseq
          %v411 = vshrl.u32 %v410, 7
          %v412 = vsub.s32 0, %v411
          %v413 = vrot.slane %v408, %v412
          %v414 = vlaneseq
          %v415 = vshrl.u32 %v414, 7
          %v416 = vsub.s32 1, %v415
          %v417 = vrot.slane %v408, %v416
          %420 = vst [vmem:[#allocation2] sm:$0xff] %v413
          %421 = vst [vmem:[#allocation2 + $0x8] sm:$0xff] %v417
          %422 = vst [vmem:[#allocation2 + $0x10] sm:$0xff] %v413
          %423 = vst [vmem:[#allocation2 + $0x18] sm:$0xff] %v417
        $region76: #{mlp_forward.1} parent=47 // pred_fallthru
          _
        %v424 = vld [vmem:[%s0] sm:$0xff]
        %v425 = vld [vmem:[%s0 + $0x8] sm:$0xff]
        %v426 = vld [vmem:[%s0 + $0x10] sm:$0xff]
        %v427 = vld [vmem:[%s0 + $0x18] sm:$0xff]
        %v428 = vld [vmem:[%s0 + $0x20] sm:$0xff]
        %v429 = vld [vmem:[%s0 + $0x28] sm:$0xff]
        %v430 = vld [vmem:[%s0 + $0x30] sm:$0xff]
        %v431 = vld [vmem:[%s0 + $0x38] sm:$0xff]
        %v432 = vld [vmem:[%s0 + $0x40] sm:$0xff]
        %v433 = vld [vmem:[%s0 + $0x48] sm:$0xff]
        %v434 = vld [vmem:[%s334] sm:$0xff]
        %v435 = vld [vmem:[%s334 + $0x8] sm:$0xff]
        %v436 = vld [vmem:[%s334 + $0x10] sm:$0xff]
        %v437 = vld [vmem:[%s334 + $0x18] sm:$0xff]
        %v438 = vld [vmem:[%s334 + $0x20] sm:$0xff]
        %v439 = vld [vmem:[%s334 + $0x28] sm:$0xff]
        %v440 = vld [vmem:[%s334 + $0x30] sm:$0xff]
        %v441 = vld [vmem:[%s334 + $0x38] sm:$0xff]
        %v442 = vld [vmem:[%s334 + $0x40] sm:$0xff]
        %v443 = vld [vmem:[%s334 + $0x48] sm:$0xff]
        %v444 = vld [vmem:[%s334 + $0x50] sm:$0xff]
        %v445 = vld [vmem:[%s334 + $0x58] sm:$0xff]
        %v446 = vld [vmem:[%s334 + $0x60] sm:$0xff]
        %v447 = vld [vmem:[%s334 + $0x68] sm:$0xff]
        %v448 = vld [vmem:[%s334 + $0x70] sm:$0xff]
        %v449 = vld [vmem:[%s334 + $0x78] sm:$0xff]
        %v450 = vld [vmem:[%s334 + $0x80] sm:$0xff]
        %v451 = vld [vmem:[%s334 + $0x88] sm:$0xff]
        %v452 = vld [vmem:[%s334 + $0x90] sm:$0xff]
        %v453 = vld [vmem:[%s334 + $0x98] sm:$0xff]
        %v454 = vld [vmem:[%s334 + $0xa0] sm:$0xff]
        %v455 = vld [vmem:[%s334 + $0xa8] sm:$0xff]
        %v456 = vld [vmem:[%s334 + $0xb0] sm:$0xff]
        %v457 = vld [vmem:[%s334 + $0xb8] sm:$0xff]
        %v458 = vld [vmem:[%s334 + $0xc0] sm:$0xff]
        %v459 = vld [vmem:[%s334 + $0xc8] sm:$0xff]
        %v460 = vld [vmem:[%s334 + $0xd0] sm:$0xff]
        %v461 = vld [vmem:[%s334 + $0xd8] sm:$0xff]
        %v462 = vld [vmem:[%s334 + $0xe0] sm:$0xff]
        %v463 = vld [vmem:[%s334 + $0xe8] sm:$0xff]
        %v464 = vld [vmem:[%s334 + $0xf0] sm:$0xff]
        %v465 = vld [vmem:[%s334 + $0xf8] sm:$0xff]
        %v466 = vld [vmem:[%s334 + $0x100] sm:$0xff]
        %v467 = vld [vmem:[%s334 + $0x108] sm:$0xff]
        %v468 = vld [vmem:[%s334 + $0x110] sm:$0xff]
        %v469 = vld [vmem:[%s334 + $0x118] sm:$0xff]
        %v470 = vld [vmem:[%s334 + $0x120] sm:$0xff]
        %v471 = vld [vmem:[%s334 + $0x128] sm:$0xff]
        %v472 = vld [vmem:[%s334 + $0x130] sm:$0xff]
        %v473 = vld [vmem:[%s334 + $0x138] sm:$0xff]
        %v474 = vld [vmem:[%s334 + $0x140] sm:$0xff]
        %v475 = vld [vmem:[%s334 + $0x148] sm:$0xff]
        %v476 = vld [vmem:[%s334 + $0x150] sm:$0xff]
        %v477 = vld [vmem:[%s334 + $0x158] sm:$0xff]
        %v478 = vld [vmem:[%s334 + $0x160] sm:$0xff]
        %v479 = vld [vmem:[%s334 + $0x168] sm:$0xff]
        %v480 = vld [vmem:[%s334 + $0x170] sm:$0xff]
        %v481 = vld [vmem:[%s334 + $0x178] sm:$0xff]
        %v482 = vld [vmem:[%s334 + $0x180] sm:$0xff]
        %v483 = vld [vmem:[%s334 + $0x188] sm:$0xff]
        %v484 = vld [vmem:[%s334 + $0x190] sm:$0xff]
        %v485 = vld [vmem:[%s334 + $0x198] sm:$0xff]
        %v486 = vld [vmem:[%s334 + $0x1a0] sm:$0xff]
        %v487 = vld [vmem:[%s334 + $0x1a8] sm:$0xff]
        %v488 = vld [vmem:[%s334 + $0x1b0] sm:$0xff]
        %v489 = vld [vmem:[%s334 + $0x1b8] sm:$0xff]
        %v490 = vld [vmem:[%s334 + $0x1c0] sm:$0xff]
        %v491 = vld [vmem:[%s334 + $0x1c8] sm:$0xff]
        %v492 = vld [vmem:[%s334 + $0x1d0] sm:$0xff]
        %v493 = vld [vmem:[%s334 + $0x1d8] sm:$0xff]
        %v494 = vld [vmem:[%s334 + $0x1e0] sm:$0xff]
        %v495 = vld [vmem:[%s334 + $0x1e8] sm:$0xff]
        %v496 = vld [vmem:[%s334 + $0x1f0] sm:$0xff]
        %v497 = vld [vmem:[%s334 + $0x1f8] sm:$0xff]
        %v498 = vld [vmem:[%s334 + $0x200] sm:$0xff]
        %v499 = vld [vmem:[%s334 + $0x208] sm:$0xff]
        %v500 = vld [vmem:[%s334 + $0x210] sm:$0xff]
        %v501 = vld [vmem:[%s334 + $0x218] sm:$0xff]
        %v502 = vld [vmem:[%s334 + $0x220] sm:$0xff]
        %v503 = vld [vmem:[%s334 + $0x228] sm:$0xff]
        %v504 = vld [vmem:[%s334 + $0x230] sm:$0xff]
        %v505 = vld [vmem:[%s334 + $0x238] sm:$0xff]
        %v506 = vld [vmem:[%s334 + $0x240] sm:$0xff]
        %v507 = vld [vmem:[%s334 + $0x248] sm:$0xff]
        %v508 = vld [vmem:[%s334 + $0x250] sm:$0xff]
        %v509 = vld [vmem:[%s334 + $0x258] sm:$0xff]
        %v510 = vld [vmem:[%s334 + $0x260] sm:$0xff]
        %v511 = vld [vmem:[%s334 + $0x268] sm:$0xff]
        %v512 = vld [vmem:[%s334 + $0x270] sm:$0xff]
        %v513 = vld [vmem:[%s334 + $0x278] sm:$0xff]
        %v514 = vld [vmem:[%s334 + $0x280] sm:$0xff]
        %v515 = vld [vmem:[%s334 + $0x288] sm:$0xff]
        %v516 = vld [vmem:[%s334 + $0x290] sm:$0xff]
        %v517 = vld [vmem:[%s334 + $0x298] sm:$0xff]
        %v518 = vld [vmem:[%s334 + $0x2a0] sm:$0xff]
        %v519 = vld [vmem:[%s334 + $0x2a8] sm:$0xff]
        %v520 = vld [vmem:[%s334 + $0x2b0] sm:$0xff]
        %v521 = vld [vmem:[%s334 + $0x2b8] sm:$0xff]
        %v522 = vld [vmem:[%s334 + $0x2c0] sm:$0xff]
        %v523 = vld [vmem:[%s334 + $0x2c8] sm:$0xff]
        %v524 = vld [vmem:[%s334 + $0x2d0] sm:$0xff]
        %v525 = vld [vmem:[%s334 + $0x2d8] sm:$0xff]
        %v526 = vld [vmem:[%s334 + $0x2e0] sm:$0xff]
        %v527 = vld [vmem:[%s334 + $0x2e8] sm:$0xff]
        %v528 = vld [vmem:[%s334 + $0x2f0] sm:$0xff]
        %v529 = vld [vmem:[%s334 + $0x2f8] sm:$0xff]
        %v530 = vld [vmem:[%s334 + $0x300] sm:$0xff]
        %v531 = vld [vmem:[%s334 + $0x308] sm:$0xff]
        %v532 = vld [vmem:[%s334 + $0x310] sm:$0xff]
        %v533 = vld [vmem:[%s334 + $0x318] sm:$0xff]
        %v534 = vld [vmem:[%s334 + $0x320] sm:$0xff]
        %v535 = vld [vmem:[%s334 + $0x328] sm:$0xff]
        %v536 = vld [vmem:[%s334 + $0x330] sm:$0xff]
        %v537 = vld [vmem:[%s334 + $0x338] sm:$0xff]
        %v538 = vld [vmem:[%s334 + $0x340] sm:$0xff]
        %v539 = vld [vmem:[%s334 + $0x348] sm:$0xff]
        %v540 = vld [vmem:[%s334 + $0x350] sm:$0xff]
        %v541 = vld [vmem:[%s334 + $0x358] sm:$0xff]
        %v542 = vld [vmem:[%s334 + $0x360] sm:$0xff]
        %v543 = vld [vmem:[%s334 + $0x368] sm:$0xff]
        %v544 = vld [vmem:[%s334 + $0x370] sm:$0xff]
        %v545 = vld [vmem:[%s334 + $0x378] sm:$0xff]
        %v546 = vld [vmem:[%s334 + $0x380] sm:$0xff]
        %v547 = vld [vmem:[%s334 + $0x388] sm:$0xff]
        %v548 = vld [vmem:[%s334 + $0x390] sm:$0xff]
        %v549 = vld [vmem:[%s334 + $0x398] sm:$0xff]
        %v550 = vld [vmem:[%s334 + $0x3a0] sm:$0xff]
        %v551 = vld [vmem:[%s334 + $0x3a8] sm:$0xff]
        %v552 = vld [vmem:[%s334 + $0x3b0] sm:$0xff]
        %v553 = vld [vmem:[%s334 + $0x3b8] sm:$0xff]
        %v554 = vld [vmem:[%s334 + $0x3c0] sm:$0xff]
        %v555 = vld [vmem:[%s334 + $0x3c8] sm:$0xff]
        %v556 = vld [vmem:[%s334 + $0x3d0] sm:$0xff]
        %v557 = vld [vmem:[%s334 + $0x3d8] sm:$0xff]
        %v558 = vld [vmem:[%s334 + $0x3e0] sm:$0xff]
        %v559 = vld [vmem:[%s334 + $0x3e8] sm:$0xff]
        %v560 = vld [vmem:[%s334 + $0x3f0] sm:$0xff]
        %v561 = vld [vmem:[%s334 + $0x3f8] sm:$0xff]
        %v562 = vld [vmem:[%s334 + $0x400] sm:$0xff]
        %v563 = vld [vmem:[%s334 + $0x408] sm:$0xff]
        %v564 = vld [vmem:[%s334 + $0x410] sm:$0xff]
        %v565 = vld [vmem:[%s334 + $0x418] sm:$0xff]
        %v566 = vld [vmem:[%s334 + $0x420] sm:$0xff]
        %v567 = vld [vmem:[%s334 + $0x428] sm:$0xff]
        %v568 = vld [vmem:[%s334 + $0x430] sm:$0xff]
        %v569 = vld [vmem:[%s334 + $0x438] sm:$0xff]
        %v570 = vld [vmem:[%s334 + $0x440] sm:$0xff]
        %v571 = vld [vmem:[%s334 + $0x448] sm:$0xff]
        %v572 = vld [vmem:[%s334 + $0x450] sm:$0xff]
        %v573 = vld [vmem:[%s334 + $0x458] sm:$0xff]
        %v574 = vld [vmem:[%s334 + $0x460] sm:$0xff]
        %v575 = vld [vmem:[%s334 + $0x468] sm:$0xff]
        %v576 = vld [vmem:[%s334 + $0x470] sm:$0xff]
        %v577 = vld [vmem:[%s334 + $0x478] sm:$0xff]
        %v578 = vld [vmem:[%s334 + $0x480] sm:$0xff]
        %v579 = vld [vmem:[%s334 + $0x488] sm:$0xff]
        %v580 = vld [vmem:[%s334 + $0x490] sm:$0xff]
        %v581 = vld [vmem:[%s334 + $0x498] sm:$0xff]
        %v582 = vld [vmem:[%s334 + $0x4a0] sm:$0xff]
        %v583 = vld [vmem:[%s334 + $0x4a8] sm:$0xff]
        %v584 = vld [vmem:[%s334 + $0x4b0] sm:$0xff]
        %v585 = vld [vmem:[%s334 + $0x4b8] sm:$0xff]
        %v586 = vld [vmem:[%s334 + $0x4c0] sm:$0xff]
        %v587 = vld [vmem:[%s334 + $0x4c8] sm:$0xff]
        %v588 = vld [vmem:[%s334 + $0x4d0] sm:$0xff]
        %v589 = vld [vmem:[%s334 + $0x4d8] sm:$0xff]
        %v590 = vld [vmem:[%s334 + $0x4e0] sm:$0xff]
        %v591 = vld [vmem:[%s334 + $0x4e8] sm:$0xff]
        %v592 = vld [vmem:[%s334 + $0x4f0] sm:$0xff]
        %v593 = vld [vmem:[%s334 + $0x4f8] sm:$0xff]
        %v594 = vld [vmem:[%s334 + $0x500] sm:$0xff]
        %v595 = vld [vmem:[%s334 + $0x508] sm:$0xff]
        %v596 = vld [vmem:[%s334 + $0x510] sm:$0xff]
        %v597 = vld [vmem:[%s334 + $0x518] sm:$0xff]
        %v598 = vld [vmem:[%s334 + $0x520] sm:$0xff]
        %v599 = vld [vmem:[%s334 + $0x528] sm:$0xff]
        %v600 = vld [vmem:[%s334 + $0x530] sm:$0xff]
        %v601 = vld [vmem:[%s334 + $0x538] sm:$0xff]
        %v602 = vld [vmem:[%s334 + $0x540] sm:$0xff]
        %v603 = vld [vmem:[%s334 + $0x548] sm:$0xff]
        %v604 = vld [vmem:[%s334 + $0x550] sm:$0xff]
        %v605 = vld [vmem:[%s334 + $0x558] sm:$0xff]
        %v606 = vld [vmem:[%s334 + $0x560] sm:$0xff]
        %v607 = vld [vmem:[%s334 + $0x568] sm:$0xff]
        %v608 = vld [vmem:[%s334 + $0x570] sm:$0xff]
        %v609 = vld [vmem:[%s334 + $0x578] sm:$0xff]
        %v610 = vld [vmem:[%s334 + $0x580] sm:$0xff]
        %v611 = vld [vmem:[%s334 + $0x588] sm:$0xff]
        %v612 = vld [vmem:[%s334 + $0x590] sm:$0xff]
        %v613 = vld [vmem:[%s334 + $0x598] sm:$0xff]
        %v614 = vld [vmem:[%s334 + $0x5a0] sm:$0xff]
        %v615 = vld [vmem:[%s334 + $0x5a8] sm:$0xff]
        %v616 = vld [vmem:[%s334 + $0x5b0] sm:$0xff]
        %v617 = vld [vmem:[%s334 + $0x5b8] sm:$0xff]
        %v618 = vld [vmem:[%s334 + $0x5c0] sm:$0xff]
        %v619 = vld [vmem:[%s334 + $0x5c8] sm:$0xff]
        %v620 = vld [vmem:[%s334 + $0x5d0] sm:$0xff]
        %v621 = vld [vmem:[%s334 + $0x5d8] sm:$0xff]
        %v622 = vld [vmem:[%s334 + $0x5e0] sm:$0xff]
        %v623 = vld [vmem:[%s334 + $0x5e8] sm:$0xff]
        %v624 = vld [vmem:[%s334 + $0x5f0] sm:$0xff]
        %v625 = vld [vmem:[%s334 + $0x5f8] sm:$0xff]
        %v626 = vld [vmem:[%s334 + $0x600] sm:$0xff]
        %v627 = vld [vmem:[%s334 + $0x608] sm:$0xff]
        %v628 = vld [vmem:[%s334 + $0x610] sm:$0xff]
        %v629 = vld [vmem:[%s334 + $0x618] sm:$0xff]
        %v630 = vld [vmem:[%s334 + $0x620] sm:$0xff]
        %v631 = vld [vmem:[%s334 + $0x628] sm:$0xff]
        %v632 = vld [vmem:[%s334 + $0x630] sm:$0xff]
        %v633 = vld [vmem:[%s334 + $0x638] sm:$0xff]
        %v634 = vld [vmem:[%s334 + $0x640] sm:$0xff]
        %v635 = vld [vmem:[%s334 + $0x648] sm:$0xff]
        %v636 = vld [vmem:[%s334 + $0x650] sm:$0xff]
        %v637 = vld [vmem:[%s334 + $0x658] sm:$0xff]
        %v638 = vld [vmem:[%s334 + $0x660] sm:$0xff]
        %v639 = vld [vmem:[%s334 + $0x668] sm:$0xff]
        %v640 = vld [vmem:[%s334 + $0x670] sm:$0xff]
        %v641 = vld [vmem:[%s334 + $0x678] sm:$0xff]
        %v642 = vld [vmem:[%s334 + $0x680] sm:$0xff]
        %v643 = vld [vmem:[%s334 + $0x688] sm:$0xff]
        %v644 = vld [vmem:[%s334 + $0x690] sm:$0xff]
        %v645 = vld [vmem:[%s334 + $0x698] sm:$0xff]
        %v646 = vld [vmem:[%s334 + $0x6a0] sm:$0xff]
        %v647 = vld [vmem:[%s334 + $0x6a8] sm:$0xff]
        %v648 = vld [vmem:[%s334 + $0x6b0] sm:$0xff]
        %v649 = vld [vmem:[%s334 + $0x6b8] sm:$0xff]
        %v650 = vld [vmem:[%s334 + $0x6c0] sm:$0xff]
        %v651 = vld [vmem:[%s334 + $0x6c8] sm:$0xff]
        %v652 = vld [vmem:[%s334 + $0x6d0] sm:$0xff]
        %v653 = vld [vmem:[%s334 + $0x6d8] sm:$0xff]
        %v654 = vld [vmem:[%s334 + $0x6e0] sm:$0xff]
        %v655 = vld [vmem:[%s334 + $0x6e8] sm:$0xff]
        %v656 = vld [vmem:[%s334 + $0x6f0] sm:$0xff]
        %v657 = vld [vmem:[%s334 + $0x6f8] sm:$0xff]
        %v658 = vld [vmem:[%s334 + $0x700] sm:$0xff]
        %v659 = vld [vmem:[%s334 + $0x708] sm:$0xff]
        %v660 = vld [vmem:[%s334 + $0x710] sm:$0xff]
        %v661 = vld [vmem:[%s334 + $0x718] sm:$0xff]
        %v662 = vld [vmem:[%s334 + $0x720] sm:$0xff]
        %v663 = vld [vmem:[%s334 + $0x728] sm:$0xff]
        %v664 = vld [vmem:[%s334 + $0x730] sm:$0xff]
        %v665 = vld [vmem:[%s334 + $0x738] sm:$0xff]
        %v666 = vld [vmem:[%s334 + $0x740] sm:$0xff]
        %v667 = vld [vmem:[%s334 + $0x748] sm:$0xff]
        %v668 = vld [vmem:[%s334 + $0x750] sm:$0xff]
        %v669 = vld [vmem:[%s334 + $0x758] sm:$0xff]
        %v670 = vld [vmem:[%s334 + $0x760] sm:$0xff]
        %v671 = vld [vmem:[%s334 + $0x768] sm:$0xff]
        %v672 = vld [vmem:[%s334 + $0x770] sm:$0xff]
        %v673 = vld [vmem:[%s334 + $0x778] sm:$0xff]
        %v674 = vld [vmem:[%s334 + $0x780] sm:$0xff]
        %v675 = vld [vmem:[%s334 + $0x788] sm:$0xff]
        %v676 = vld [vmem:[%s334 + $0x790] sm:$0xff]
        %v677 = vld [vmem:[%s334 + $0x798] sm:$0xff]
        %v678 = vld [vmem:[%s334 + $0x7a0] sm:$0xff]
        %v679 = vld [vmem:[%s334 + $0x7a8] sm:$0xff]
        %v680 = vld [vmem:[%s334 + $0x7b0] sm:$0xff]
        %v681 = vld [vmem:[%s334 + $0x7b8] sm:$0xff]
        %v682 = vld [vmem:[%s334 + $0x7c0] sm:$0xff]
        %v683 = vld [vmem:[%s334 + $0x7c8] sm:$0xff]
        %v684 = vld [vmem:[%s334 + $0x7d0] sm:$0xff]
        %v685 = vld [vmem:[%s334 + $0x7d8] sm:$0xff]
        %v686 = vld [vmem:[%s334 + $0x7e0] sm:$0xff]
        %v687 = vld [vmem:[%s334 + $0x7e8] sm:$0xff]
        %v688 = vld [vmem:[%s334 + $0x7f0] sm:$0xff]
        %v689 = vld [vmem:[%s334 + $0x7f8] sm:$0xff]
        %v690 = vld [vmem:[%s334 + $0x800] sm:$0xff]
        %v691 = vld [vmem:[%s334 + $0x808] sm:$0xff]
        %v692 = vld [vmem:[%s334 + $0x810] sm:$0xff]
        %v693 = vld [vmem:[%s334 + $0x818] sm:$0xff]
        %v694 = vld [vmem:[%s334 + $0x820] sm:$0xff]
        %v695 = vld [vmem:[%s334 + $0x828] sm:$0xff]
        %v696 = vld [vmem:[%s334 + $0x830] sm:$0xff]
        %v697 = vld [vmem:[%s334 + $0x838] sm:$0xff]
        %v698 = vld [vmem:[%s334 + $0x840] sm:$0xff]
        %v699 = vld [vmem:[%s334 + $0x848] sm:$0xff]
        %v700 = vld [vmem:[%s334 + $0x850] sm:$0xff]
        %v701 = vld [vmem:[%s334 + $0x858] sm:$0xff]
        %v702 = vld [vmem:[%s334 + $0x860] sm:$0xff]
        %v703 = vld [vmem:[%s334 + $0x868] sm:$0xff]
        %v704 = vld [vmem:[%s334 + $0x870] sm:$0xff]
        %v705 = vld [vmem:[%s334 + $0x878] sm:$0xff]
        %v706 = vld [vmem:[%s334 + $0x880] sm:$0xff]
        %v707 = vld [vmem:[%s334 + $0x888] sm:$0xff]
        %v708 = vld [vmem:[%s334 + $0x890] sm:$0xff]
        %v709 = vld [vmem:[%s334 + $0x898] sm:$0xff]
        %v710 = vld [vmem:[%s334 + $0x8a0] sm:$0xff]
        %v711 = vld [vmem:[%s334 + $0x8a8] sm:$0xff]
        %v712 = vld [vmem:[%s334 + $0x8b0] sm:$0xff]
        %v713 = vld [vmem:[%s334 + $0x8b8] sm:$0xff]
        %v714 = vld [vmem:[%s334 + $0x8c0] sm:$0xff]
        %v715 = vld [vmem:[%s334 + $0x8c8] sm:$0xff]
        %v716 = vld [vmem:[%s334 + $0x8d0] sm:$0xff]
        %v717 = vld [vmem:[%s334 + $0x8d8] sm:$0xff]
        %v718 = vld [vmem:[%s334 + $0x8e0] sm:$0xff]
        %v719 = vld [vmem:[%s334 + $0x8e8] sm:$0xff]
        %v720 = vld [vmem:[%s334 + $0x8f0] sm:$0xff]
        %v721 = vld [vmem:[%s334 + $0x8f8] sm:$0xff]
        %v722 = vld [vmem:[%s334 + $0x900] sm:$0xff]
        %v723 = vld [vmem:[%s334 + $0x908] sm:$0xff]
        %v724 = vld [vmem:[%s334 + $0x910] sm:$0xff]
        %v725 = vld [vmem:[%s334 + $0x918] sm:$0xff]
        %v726 = vld [vmem:[%s334 + $0x920] sm:$0xff]
        %v727 = vld [vmem:[%s334 + $0x928] sm:$0xff]
        %v728 = vld [vmem:[%s334 + $0x930] sm:$0xff]
        %v729 = vld [vmem:[%s334 + $0x938] sm:$0xff]
        %v730 = vld [vmem:[%s334 + $0x940] sm:$0xff]
        %v731 = vld [vmem:[%s334 + $0x948] sm:$0xff]
        %v732 = vld [vmem:[%s334 + $0x950] sm:$0xff]
        %v733 = vld [vmem:[%s334 + $0x958] sm:$0xff]
        %v734 = vld [vmem:[%s334 + $0x960] sm:$0xff]
        %v735 = vld [vmem:[%s334 + $0x968] sm:$0xff]
        %v736 = vld [vmem:[%s334 + $0x970] sm:$0xff]
        %v737 = vld [vmem:[%s334 + $0x978] sm:$0xff]
        %v738 = vld [vmem:[%s334 + $0x980] sm:$0xff]
        %v739 = vld [vmem:[%s334 + $0x988] sm:$0xff]
        %v740 = vld [vmem:[%s334 + $0x990] sm:$0xff]
        %v741 = vld [vmem:[%s334 + $0x998] sm:$0xff]
        %v742 = vld [vmem:[%s334 + $0x9a0] sm:$0xff]
        %v743 = vld [vmem:[%s334 + $0x9a8] sm:$0xff]
        %v744 = vld [vmem:[%s334 + $0x9b0] sm:$0xff]
        %v745 = vld [vmem:[%s334 + $0x9b8] sm:$0xff]
        %v746 = vld [vmem:[%s334 + $0x9c0] sm:$0xff]
        %v747 = vld [vmem:[%s334 + $0x9c8] sm:$0xff]
        %v748 = vld [vmem:[%s334 + $0x9d0] sm:$0xff]
        %v749 = vld [vmem:[%s334 + $0x9d8] sm:$0xff]
        %v750 = vld [vmem:[%s334 + $0x9e0] sm:$0xff]
        %v751 = vld [vmem:[%s334 + $0x9e8] sm:$0xff]
        %v752 = vld [vmem:[%s334 + $0x9f0] sm:$0xff]
        %v753 = vld [vmem:[%s334 + $0x9f8] sm:$0xff]
        %v754 = vld [vmem:[%s334 + $0xa00] sm:$0xff]
        %v755 = vld [vmem:[%s334 + $0xa08] sm:$0xff]
        %v756 = vld [vmem:[%s334 + $0xa10] sm:$0xff]
        %v757 = vld [vmem:[%s334 + $0xa18] sm:$0xff]
        %v758 = vld [vmem:[%s334 + $0xa20] sm:$0xff]
        %v759 = vld [vmem:[%s334 + $0xa28] sm:$0xff]
        %v760 = vld [vmem:[%s334 + $0xa30] sm:$0xff]
        %v761 = vld [vmem:[%s334 + $0xa38] sm:$0xff]
        %v762 = vld [vmem:[%s334 + $0xa40] sm:$0xff]
        %v763 = vld [vmem:[%s334 + $0xa48] sm:$0xff]
        %v764 = vld [vmem:[%s334 + $0xa50] sm:$0xff]
        %v765 = vld [vmem:[%s334 + $0xa58] sm:$0xff]
        %v766 = vld [vmem:[%s334 + $0xa60] sm:$0xff]
        %v767 = vld [vmem:[%s334 + $0xa68] sm:$0xff]
        %v768 = vld [vmem:[%s334 + $0xa70] sm:$0xff]
        %v769 = vld [vmem:[%s334 + $0xa78] sm:$0xff]
        %v770 = vld [vmem:[%s334 + $0xa80] sm:$0xff]
        %v771 = vld [vmem:[%s334 + $0xa88] sm:$0xff]
        %v772 = vld [vmem:[%s334 + $0xa90] sm:$0xff]
        %v773 = vld [vmem:[%s334 + $0xa98] sm:$0xff]
        %v774 = vld [vmem:[%s334 + $0xaa0] sm:$0xff]
        %v775 = vld [vmem:[%s334 + $0xaa8] sm:$0xff]
        %v776 = vld [vmem:[%s334 + $0xab0] sm:$0xff]
        %v777 = vld [vmem:[%s334 + $0xab8] sm:$0xff]
        %v778 = vld [vmem:[%s334 + $0xac0] sm:$0xff]
        %v779 = vld [vmem:[%s334 + $0xac8] sm:$0xff]
        %v780 = vld [vmem:[%s334 + $0xad0] sm:$0xff]
        %v781 = vld [vmem:[%s334 + $0xad8] sm:$0xff]
        %v782 = vld [vmem:[%s334 + $0xae0] sm:$0xff]
        %v783 = vld [vmem:[%s334 + $0xae8] sm:$0xff]
        %v784 = vld [vmem:[%s334 + $0xaf0] sm:$0xff]
        %v785 = vld [vmem:[%s334 + $0xaf8] sm:$0xff]
        %v786 = vld [vmem:[%s334 + $0xb00] sm:$0xff]
        %v787 = vld [vmem:[%s334 + $0xb08] sm:$0xff]
        %v788 = vld [vmem:[%s334 + $0xb10] sm:$0xff]
        %v789 = vld [vmem:[%s334 + $0xb18] sm:$0xff]
        %v790 = vld [vmem:[%s334 + $0xb20] sm:$0xff]
        %v791 = vld [vmem:[%s334 + $0xb28] sm:$0xff]
        %v792 = vld [vmem:[%s334 + $0xb30] sm:$0xff]
        %v793 = vld [vmem:[%s334 + $0xb38] sm:$0xff]
        %v794 = vld [vmem:[%s334 + $0xb40] sm:$0xff]
        %v795 = vld [vmem:[%s334 + $0xb48] sm:$0xff]
        %v796 = vld [vmem:[%s334 + $0xb50] sm:$0xff]
        %v797 = vld [vmem:[%s334 + $0xb58] sm:$0xff]
        %v798 = vld [vmem:[%s334 + $0xb60] sm:$0xff]
        %v799 = vld [vmem:[%s334 + $0xb68] sm:$0xff]
        %v800 = vld [vmem:[%s334 + $0xb70] sm:$0xff]
        %v801 = vld [vmem:[%s334 + $0xb78] sm:$0xff]
        %v802 = vld [vmem:[%s334 + $0xb80] sm:$0xff]
        %v803 = vld [vmem:[%s334 + $0xb88] sm:$0xff]
        %v804 = vld [vmem:[%s334 + $0xb90] sm:$0xff]
        %v805 = vld [vmem:[%s334 + $0xb98] sm:$0xff]
        %v806 = vld [vmem:[%s334 + $0xba0] sm:$0xff]
        %v807 = vld [vmem:[%s334 + $0xba8] sm:$0xff]
        %v808 = vld [vmem:[%s334 + $0xbb0] sm:$0xff]
        %v809 = vld [vmem:[%s334 + $0xbb8] sm:$0xff]
        %v810 = vld [vmem:[%s334 + $0xbc0] sm:$0xff]
        %v811 = vld [vmem:[%s334 + $0xbc8] sm:$0xff]
        %v812 = vld [vmem:[%s334 + $0xbd0] sm:$0xff]
        %v813 = vld [vmem:[%s334 + $0xbd8] sm:$0xff]
        %v814 = vld [vmem:[%s334 + $0xbe0] sm:$0xff]
        %v815 = vld [vmem:[%s334 + $0xbe8] sm:$0xff]
        %v816 = vld [vmem:[%s334 + $0xbf0] sm:$0xff]
        %v817 = vld [vmem:[%s334 + $0xbf8] sm:$0xff]
        %v818 = vld [vmem:[%s334 + $0xc00] sm:$0xff]
        %v819 = vld [vmem:[%s334 + $0xc08] sm:$0xff]
        %v820 = vld [vmem:[%s334 + $0xc10] sm:$0xff]
        %v821 = vld [vmem:[%s334 + $0xc18] sm:$0xff]
        %v822 = vld [vmem:[%s334 + $0xc20] sm:$0xff]
        %v823 = vld [vmem:[%s334 + $0xc28] sm:$0xff]
        %v824 = vld [vmem:[%s334 + $0xc30] sm:$0xff]
        %v825 = vld [vmem:[%s334 + $0xc38] sm:$0xff]
        %v826 = vld [vmem:[%s334 + $0xc40] sm:$0xff]
        %v827 = vld [vmem:[%s334 + $0xc48] sm:$0xff]
        %v828 = vld [vmem:[%s334 + $0xc50] sm:$0xff]
        %v829 = vld [vmem:[%s334 + $0xc58] sm:$0xff]
        %v830 = vld [vmem:[%s334 + $0xc60] sm:$0xff]
        %v831 = vld [vmem:[%s334 + $0xc68] sm:$0xff]
        %v832 = vld [vmem:[%s334 + $0xc70] sm:$0xff]
        %v833 = vld [vmem:[%s334 + $0xc78] sm:$0xff]
        %v834 = vld [vmem:[%s334 + $0xc80] sm:$0xff]
        %v835 = vld [vmem:[%s334 + $0xc88] sm:$0xff]
        %v836 = vld [vmem:[%s334 + $0xc90] sm:$0xff]
        %v837 = vld [vmem:[%s334 + $0xc98] sm:$0xff]
        %v838 = vld [vmem:[%s334 + $0xca0] sm:$0xff]
        %v839 = vld [vmem:[%s334 + $0xca8] sm:$0xff]
        %v840 = vld [vmem:[%s334 + $0xcb0] sm:$0xff]
        %v841 = vld [vmem:[%s334 + $0xcb8] sm:$0xff]
        %v842 = vld [vmem:[%s334 + $0xcc0] sm:$0xff]
        %v843 = vld [vmem:[%s334 + $0xcc8] sm:$0xff]
        %v844 = vld [vmem:[%s334 + $0xcd0] sm:$0xff]
        %v845 = vld [vmem:[%s334 + $0xcd8] sm:$0xff]
        %v846 = vld [vmem:[%s334 + $0xce0] sm:$0xff]
        %v847 = vld [vmem:[%s334 + $0xce8] sm:$0xff]
        %v848 = vld [vmem:[%s334 + $0xcf0] sm:$0xff]
        %v849 = vld [vmem:[%s334 + $0xcf8] sm:$0xff]
        %v850 = vld [vmem:[%s334 + $0xd00] sm:$0xff]
        %v851 = vld [vmem:[%s334 + $0xd08] sm:$0xff]
        %v852 = vld [vmem:[%s334 + $0xd10] sm:$0xff]
        %v853 = vld [vmem:[%s334 + $0xd18] sm:$0xff]
        %v854 = vld [vmem:[%s334 + $0xd20] sm:$0xff]
        %v855 = vld [vmem:[%s334 + $0xd28] sm:$0xff]
        %v856 = vld [vmem:[%s334 + $0xd30] sm:$0xff]
        %v857 = vld [vmem:[%s334 + $0xd38] sm:$0xff]
        %v858 = vld [vmem:[%s334 + $0xd40] sm:$0xff]
        %v859 = vld [vmem:[%s334 + $0xd48] sm:$0xff]
        %v860 = vld [vmem:[%s334 + $0xd50] sm:$0xff]
        %v861 = vld [vmem:[%s334 + $0xd58] sm:$0xff]
        %v862 = vld [vmem:[%s334 + $0xd60] sm:$0xff]
        %v863 = vld [vmem:[%s334 + $0xd68] sm:$0xff]
        %v864 = vld [vmem:[%s334 + $0xd70] sm:$0xff]
        %v865 = vld [vmem:[%s334 + $0xd78] sm:$0xff]
        %v866 = vld [vmem:[%s334 + $0xd80] sm:$0xff]
        %v867 = vld [vmem:[%s334 + $0xd88] sm:$0xff]
        %v868 = vld [vmem:[%s334 + $0xd90] sm:$0xff]
        %v869 = vld [vmem:[%s334 + $0xd98] sm:$0xff]
        %v870 = vld [vmem:[%s334 + $0xda0] sm:$0xff]
        %v871 = vld [vmem:[%s334 + $0xda8] sm:$0xff]
        %v872 = vld [vmem:[%s334 + $0xdb0] sm:$0xff]
        %v873 = vld [vmem:[%s334 + $0xdb8] sm:$0xff]
        %v874 = vld [vmem:[%s334 + $0xdc0] sm:$0xff]
        %v875 = vld [vmem:[%s334 + $0xdc8] sm:$0xff]
        %v876 = vld [vmem:[%s334 + $0xdd0] sm:$0xff]
        %v877 = vld [vmem:[%s334 + $0xdd8] sm:$0xff]
        %v878 = vld [vmem:[%s334 + $0xde0] sm:$0xff]
        %v879 = vld [vmem:[%s334 + $0xde8] sm:$0xff]
        %v880 = vld [vmem:[%s334 + $0xdf0] sm:$0xff]
        %v881 = vld [vmem:[%s334 + $0xdf8] sm:$0xff]
        %v882 = vld [vmem:[%s334 + $0xe00] sm:$0xff]
        %v883 = vld [vmem:[%s334 + $0xe08] sm:$0xff]
        %v884 = vld [vmem:[%s334 + $0xe10] sm:$0xff]
        %v885 = vld [vmem:[%s334 + $0xe18] sm:$0xff]
        %v886 = vld [vmem:[%s334 + $0xe20] sm:$0xff]
        %v887 = vld [vmem:[%s334 + $0xe28] sm:$0xff]
        %v888 = vld [vmem:[%s334 + $0xe30] sm:$0xff]
        %v889 = vld [vmem:[%s334 + $0xe38] sm:$0xff]
        %v890 = vld [vmem:[%s334 + $0xe40] sm:$0xff]
        %v891 = vld [vmem:[%s334 + $0xe48] sm:$0xff]
        %v892 = vld [vmem:[%s334 + $0xe50] sm:$0xff]
        %v893 = vld [vmem:[%s334 + $0xe58] sm:$0xff]
        %v894 = vld [vmem:[%s334 + $0xe60] sm:$0xff]
        %v895 = vld [vmem:[%s334 + $0xe68] sm:$0xff]
        %v896 = vld [vmem:[%s334 + $0xe70] sm:$0xff]
        %v897 = vld [vmem:[%s334 + $0xe78] sm:$0xff]
        %v898 = vld [vmem:[%s334 + $0xe80] sm:$0xff]
        %v899 = vld [vmem:[%s334 + $0xe88] sm:$0xff]
        %v900 = vld [vmem:[%s334 + $0xe90] sm:$0xff]
        %v901 = vld [vmem:[%s334 + $0xe98] sm:$0xff]
        %v902 = vld [vmem:[%s334 + $0xea0] sm:$0xff]
        %v903 = vld [vmem:[%s334 + $0xea8] sm:$0xff]
        %v904 = vld [vmem:[%s334 + $0xeb0] sm:$0xff]
        %v905 = vld [vmem:[%s334 + $0xeb8] sm:$0xff]
        %v906 = vld [vmem:[%s334 + $0xec0] sm:$0xff]
        %v907 = vld [vmem:[%s334 + $0xec8] sm:$0xff]
        %v908 = vld [vmem:[%s334 + $0xed0] sm:$0xff]
        %v909 = vld [vmem:[%s334 + $0xed8] sm:$0xff]
        %v910 = vld [vmem:[%s334 + $0xee0] sm:$0xff]
        %v911 = vld [vmem:[%s334 + $0xee8] sm:$0xff]
        %v912 = vld [vmem:[%s334 + $0xef0] sm:$0xff]
        %v913 = vld [vmem:[%s334 + $0xef8] sm:$0xff]
        %v914 = vld [vmem:[%s334 + $0xf00] sm:$0xff]
        %v915 = vld [vmem:[%s334 + $0xf08] sm:$0xff]
        %v916 = vld [vmem:[%s334 + $0xf10] sm:$0xff]
        %v917 = vld [vmem:[%s334 + $0xf18] sm:$0xff]
        %v918 = vld [vmem:[%s334 + $0xf20] sm:$0xff]
        %v919 = vld [vmem:[%s334 + $0xf28] sm:$0xff]
        %v920 = vld [vmem:[%s334 + $0xf30] sm:$0xff]
        %v921 = vld [vmem:[%s334 + $0xf38] sm:$0xff]
        %v922 = vld [vmem:[%s334 + $0xf40] sm:$0xff]
        %v923 = vld [vmem:[%s334 + $0xf48] sm:$0xff]
        %v924 = vld [vmem:[%s334 + $0xf50] sm:$0xff]
        %v925 = vld [vmem:[%s334 + $0xf58] sm:$0xff]
        %v926 = vld [vmem:[%s334 + $0xf60] sm:$0xff]
        %v927 = vld [vmem:[%s334 + $0xf68] sm:$0xff]
        %v928 = vld [vmem:[%s334 + $0xf70] sm:$0xff]
        %v929 = vld [vmem:[%s334 + $0xf78] sm:$0xff]
        %v930 = vld [vmem:[%s334 + $0xf80] sm:$0xff]
        %v931 = vld [vmem:[%s334 + $0xf88] sm:$0xff]
        %v932 = vld [vmem:[%s334 + $0xf90] sm:$0xff]
        %v933 = vld [vmem:[%s334 + $0xf98] sm:$0xff]
        %v934 = vld [vmem:[%s334 + $0xfa0] sm:$0xff]
        %v935 = vld [vmem:[%s334 + $0xfa8] sm:$0xff]
        %v936 = vld [vmem:[%s334 + $0xfb0] sm:$0xff]
        %v937 = vld [vmem:[%s334 + $0xfb8] sm:$0xff]
        %v938 = vld [vmem:[%s334 + $0xfc0] sm:$0xff]
        %v939 = vld [vmem:[%s334 + $0xfc8] sm:$0xff]
        %v940 = vld [vmem:[%s334 + $0xfd0] sm:$0xff]
        %v941 = vld [vmem:[%s334 + $0xfd8] sm:$0xff]
        %v942 = vld [vmem:[%s334 + $0xfe0] sm:$0xff]
        %v943 = vld [vmem:[%s334 + $0xfe8] sm:$0xff]
        %v944 = vld [vmem:[%s334 + $0xff0] sm:$0xff]
        %v945 = vld [vmem:[%s334 + $0xff8] sm:$0xff]
        %v946 = vld [vmem:[%s334 + $0x1000] sm:$0xff]
        %v947 = vld [vmem:[%s334 + $0x1008] sm:$0xff]
        %v948 = vld [vmem:[%s334 + $0x1010] sm:$0xff]
        %v949 = vld [vmem:[%s334 + $0x1018] sm:$0xff]
        %v950 = vld [vmem:[%s334 + $0x1020] sm:$0xff]
        %v951 = vld [vmem:[%s334 + $0x1028] sm:$0xff]
        %v952 = vld [vmem:[%s334 + $0x1030] sm:$0xff]
        %v953 = vld [vmem:[%s334 + $0x1038] sm:$0xff]
        %v954 = vld [vmem:[%s334 + $0x1040] sm:$0xff]
        %v955 = vld [vmem:[%s334 + $0x1048] sm:$0xff]
        %v956 = vld [vmem:[%s334 + $0x1050] sm:$0xff]
        %v957 = vld [vmem:[%s334 + $0x1058] sm:$0xff]
        %v958 = vld [vmem:[%s334 + $0x1060] sm:$0xff]
        %v959 = vld [vmem:[%s334 + $0x1068] sm:$0xff]
        %v960 = vld [vmem:[%s334 + $0x1070] sm:$0xff]
        %v961 = vld [vmem:[%s334 + $0x1078] sm:$0xff]
        %v962 = vld [vmem:[%s334 + $0x1080] sm:$0xff]
        %v963 = vld [vmem:[%s334 + $0x1088] sm:$0xff]
        %v964 = vld [vmem:[%s334 + $0x1090] sm:$0xff]
        %v965 = vld [vmem:[%s334 + $0x1098] sm:$0xff]
        %v966 = vld [vmem:[%s334 + $0x10a0] sm:$0xff]
        %v967 = vld [vmem:[%s334 + $0x10a8] sm:$0xff]
        %v968 = vld [vmem:[%s334 + $0x10b0] sm:$0xff]
        %v969 = vld [vmem:[%s334 + $0x10b8] sm:$0xff]
        %v970 = vld [vmem:[%s334 + $0x10c0] sm:$0xff]
        %v971 = vld [vmem:[%s334 + $0x10c8] sm:$0xff]
        %v972 = vld [vmem:[%s334 + $0x10d0] sm:$0xff]
        %v973 = vld [vmem:[%s334 + $0x10d8] sm:$0xff]
        %v974 = vld [vmem:[%s334 + $0x10e0] sm:$0xff]
        %v975 = vld [vmem:[%s334 + $0x10e8] sm:$0xff]
        %v976 = vld [vmem:[%s334 + $0x10f0] sm:$0xff]
        %v977 = vld [vmem:[%s334 + $0x10f8] sm:$0xff]
        %v978 = vld [vmem:[%s334 + $0x1100] sm:$0xff]
        %v979 = vld [vmem:[%s334 + $0x1108] sm:$0xff]
        %v980 = vld [vmem:[%s334 + $0x1110] sm:$0xff]
        %v981 = vld [vmem:[%s334 + $0x1118] sm:$0xff]
        %v982 = vld [vmem:[%s334 + $0x1120] sm:$0xff]
        %v983 = vld [vmem:[%s334 + $0x1128] sm:$0xff]
        %v984 = vld [vmem:[%s334 + $0x1130] sm:$0xff]
        %v985 = vld [vmem:[%s334 + $0x1138] sm:$0xff]
        %v986 = vld [vmem:[%s334 + $0x1140] sm:$0xff]
        %v987 = vld [vmem:[%s334 + $0x1148] sm:$0xff]
        %v988 = vld [vmem:[%s334 + $0x1150] sm:$0xff]
        %v989 = vld [vmem:[%s334 + $0x1158] sm:$0xff]
        %v990 = vld [vmem:[%s334 + $0x1160] sm:$0xff]
        %v991 = vld [vmem:[%s334 + $0x1168] sm:$0xff]
        %v992 = vld [vmem:[%s334 + $0x1170] sm:$0xff]
        %v993 = vld [vmem:[%s334 + $0x1178] sm:$0xff]
        %v994 = vld [vmem:[%s334 + $0x1180] sm:$0xff]
        %v995 = vld [vmem:[%s334 + $0x1188] sm:$0xff]
        %v996 = vld [vmem:[%s334 + $0x1190] sm:$0xff]
        %v997 = vld [vmem:[%s334 + $0x1198] sm:$0xff]
        %v998 = vld [vmem:[%s334 + $0x11a0] sm:$0xff]
        %v999 = vld [vmem:[%s334 + $0x11a8] sm:$0xff]
        %v1000 = vld [vmem:[%s334 + $0x11b0] sm:$0xff]
        %v1001 = vld [vmem:[%s334 + $0x11b8] sm:$0xff]
        %v1002 = vld [vmem:[%s334 + $0x11c0] sm:$0xff]
        %v1003 = vld [vmem:[%s334 + $0x11c8] sm:$0xff]
        %v1004 = vld [vmem:[%s334 + $0x11d0] sm:$0xff]
        %v1005 = vld [vmem:[%s334 + $0x11d8] sm:$0xff]
        %v1006 = vld [vmem:[%s334 + $0x11e0] sm:$0xff]
        %v1007 = vld [vmem:[%s334 + $0x11e8] sm:$0xff]
        %v1008 = vld [vmem:[%s334 + $0x11f0] sm:$0xff]
        %v1009 = vld [vmem:[%s334 + $0x11f8] sm:$0xff]
        %v1010 = vld [vmem:[%s334 + $0x1200] sm:$0xff]
        %v1011 = vld [vmem:[%s334 + $0x1208] sm:$0xff]
        %v1012 = vld [vmem:[%s334 + $0x1210] sm:$0xff]
        %v1013 = vld [vmem:[%s334 + $0x1218] sm:$0xff]
        %v1014 = vld [vmem:[%s334 + $0x1220] sm:$0xff]
        %v1015 = vld [vmem:[%s334 + $0x1228] sm:$0xff]
        %v1016 = vld [vmem:[%s334 + $0x1230] sm:$0xff]
        %v1017 = vld [vmem:[%s334 + $0x1238] sm:$0xff]
        %v1018 = vld [vmem:[%s334 + $0x1240] sm:$0xff]
        %v1019 = vld [vmem:[%s334 + $0x1248] sm:$0xff]
        %v1020 = vld [vmem:[%s334 + $0x1250] sm:$0xff]
        %v1021 = vld [vmem:[%s334 + $0x1258] sm:$0xff]
        %v1022 = vld [vmem:[%s334 + $0x1260] sm:$0xff]
        %v1023 = vld [vmem:[%s334 + $0x1268] sm:$0xff]
        %v1024 = vld [vmem:[%s334 + $0x1270] sm:$0xff]
        %v1025 = vld [vmem:[%s334 + $0x1278] sm:$0xff]
        %v1026 = vld [vmem:[%s334 + $0x1280] sm:$0xff]
        %v1027 = vld [vmem:[%s334 + $0x1288] sm:$0xff]
        %v1028 = vld [vmem:[%s334 + $0x1290] sm:$0xff]
        %v1029 = vld [vmem:[%s334 + $0x1298] sm:$0xff]
        %v1030 = vld [vmem:[%s334 + $0x12a0] sm:$0xff]
        %v1031 = vld [vmem:[%s334 + $0x12a8] sm:$0xff]
        %v1032 = vld [vmem:[%s334 + $0x12b0] sm:$0xff]
        %v1033 = vld [vmem:[%s334 + $0x12b8] sm:$0xff]
        %v1034 = vld [vmem:[%s334 + $0x12c0] sm:$0xff]
        %v1035 = vld [vmem:[%s334 + $0x12c8] sm:$0xff]
        %v1036 = vld [vmem:[%s334 + $0x12d0] sm:$0xff]
        %v1037 = vld [vmem:[%s334 + $0x12d8] sm:$0xff]
        %v1038 = vld [vmem:[%s334 + $0x12e0] sm:$0xff]
        %v1039 = vld [vmem:[%s334 + $0x12e8] sm:$0xff]
        %v1040 = vld [vmem:[%s334 + $0x12f0] sm:$0xff]
        %v1041 = vld [vmem:[%s334 + $0x12f8] sm:$0xff]
        %v1042 = vld [vmem:[%s334 + $0x1300] sm:$0xff]
        %v1043 = vld [vmem:[%s334 + $0x1308] sm:$0xff]
        %v1044 = vld [vmem:[%s334 + $0x1310] sm:$0xff]
        %v1045 = vld [vmem:[%s334 + $0x1318] sm:$0xff]
        %v1046 = vld [vmem:[%s334 + $0x1320] sm:$0xff]
        %v1047 = vld [vmem:[%s334 + $0x1328] sm:$0xff]
        %v1048 = vld [vmem:[%s334 + $0x1330] sm:$0xff]
        %v1049 = vld [vmem:[%s334 + $0x1338] sm:$0xff]
        %v1050 = vld [vmem:[%s334 + $0x1340] sm:$0xff]
        %v1051 = vld [vmem:[%s334 + $0x1348] sm:$0xff]
        %v1052 = vld [vmem:[%s334 + $0x1350] sm:$0xff]
        %v1053 = vld [vmem:[%s334 + $0x1358] sm:$0xff]
        %v1054 = vld [vmem:[%s334 + $0x1360] sm:$0xff]
        %v1055 = vld [vmem:[%s334 + $0x1368] sm:$0xff]
        %v1056 = vld [vmem:[%s334 + $0x1370] sm:$0xff]
        %v1057 = vld [vmem:[%s334 + $0x1378] sm:$0xff]
        %v1058 = vld [vmem:[%s334 + $0x1380] sm:$0xff]
        %v1059 = vld [vmem:[%s334 + $0x1388] sm:$0xff]
        %v1060 = vld [vmem:[%s334 + $0x1390] sm:$0xff]
        %v1061 = vld [vmem:[%s334 + $0x1398] sm:$0xff]
        %v1062 = vld [vmem:[%s334 + $0x13a0] sm:$0xff]
        %v1063 = vld [vmem:[%s334 + $0x13a8] sm:$0xff]
        %v1064 = vld [vmem:[%s334 + $0x13b0] sm:$0xff]
        %v1065 = vld [vmem:[%s334 + $0x13b8] sm:$0xff]
        %v1066 = vld [vmem:[%s334 + $0x13c0] sm:$0xff]
        %v1067 = vld [vmem:[%s334 + $0x13c8] sm:$0xff]
        %v1068 = vld [vmem:[%s334 + $0x13d0] sm:$0xff]
        %v1069 = vld [vmem:[%s334 + $0x13d8] sm:$0xff]
        %v1070 = vld [vmem:[%s334 + $0x13e0] sm:$0xff]
        %v1071 = vld [vmem:[%s334 + $0x13e8] sm:$0xff]
        %v1072 = vld [vmem:[%s334 + $0x13f0] sm:$0xff]
        %v1073 = vld [vmem:[%s334 + $0x13f8] sm:$0xff]
        %v1074 = vld [vmem:[%s334 + $0x1400] sm:$0xff]
        %v1075 = vld [vmem:[%s334 + $0x1408] sm:$0xff]
        %v1076 = vld [vmem:[%s334 + $0x1410] sm:$0xff]
        %v1077 = vld [vmem:[%s334 + $0x1418] sm:$0xff]
        %v1078 = vld [vmem:[%s334 + $0x1420] sm:$0xff]
        %v1079 = vld [vmem:[%s334 + $0x1428] sm:$0xff]
        %v1080 = vld [vmem:[%s334 + $0x1430] sm:$0xff]
        %v1081 = vld [vmem:[%s334 + $0x1438] sm:$0xff]
        %v1082 = vld [vmem:[%s334 + $0x1440] sm:$0xff]
        %v1083 = vld [vmem:[%s334 + $0x1448] sm:$0xff]
        %v1084 = vld [vmem:[%s334 + $0x1450] sm:$0xff]
        %v1085 = vld [vmem:[%s334 + $0x1458] sm:$0xff]
        %v1086 = vld [vmem:[%s334 + $0x1460] sm:$0xff]
        %v1087 = vld [vmem:[%s334 + $0x1468] sm:$0xff]
        %v1088 = vld [vmem:[%s334 + $0x1470] sm:$0xff]
        %v1089 = vld [vmem:[%s334 + $0x1478] sm:$0xff]
        %v1090 = vld [vmem:[%s334 + $0x1480] sm:$0xff]
        %v1091 = vld [vmem:[%s334 + $0x1488] sm:$0xff]
        %v1092 = vld [vmem:[%s334 + $0x1490] sm:$0xff]
        %v1093 = vld [vmem:[%s334 + $0x1498] sm:$0xff]
        %v1094 = vld [vmem:[%s334 + $0x14a0] sm:$0xff]
        %v1095 = vld [vmem:[%s334 + $0x14a8] sm:$0xff]
        %v1096 = vld [vmem:[%s334 + $0x14b0] sm:$0xff]
        %v1097 = vld [vmem:[%s334 + $0x14b8] sm:$0xff]
        %v1098 = vld [vmem:[%s334 + $0x14c0] sm:$0xff]
        %v1099 = vld [vmem:[%s334 + $0x14c8] sm:$0xff]
        %v1100 = vld [vmem:[%s334 + $0x14d0] sm:$0xff]
        %v1101 = vld [vmem:[%s334 + $0x14d8] sm:$0xff]
        %v1102 = vld [vmem:[%s334 + $0x14e0] sm:$0xff]
        %v1103 = vld [vmem:[%s334 + $0x14e8] sm:$0xff]
        %v1104 = vld [vmem:[%s334 + $0x14f0] sm:$0xff]
        %v1105 = vld [vmem:[%s334 + $0x14f8] sm:$0xff]
        %v1106 = vld [vmem:[%s334 + $0x1500] sm:$0xff]
        %v1107 = vld [vmem:[%s334 + $0x1508] sm:$0xff]
        %v1108 = vld [vmem:[%s334 + $0x1510] sm:$0xff]
        %v1109 = vld [vmem:[%s334 + $0x1518] sm:$0xff]
        %v1110 = vld [vmem:[%s334 + $0x1520] sm:$0xff]
        %v1111 = vld [vmem:[%s334 + $0x1528] sm:$0xff]
        %v1112 = vld [vmem:[%s334 + $0x1530] sm:$0xff]
        %v1113 = vld [vmem:[%s334 + $0x1538] sm:$0xff]
        %v1114 = vld [vmem:[%s334 + $0x1540] sm:$0xff]
        %v1115 = vld [vmem:[%s334 + $0x1548] sm:$0xff]
        %v1116 = vld [vmem:[%s334 + $0x1550] sm:$0xff]
        %v1117 = vld [vmem:[%s334 + $0x1558] sm:$0xff]
        %v1118 = vld [vmem:[%s334 + $0x1560] sm:$0xff]
        %v1119 = vld [vmem:[%s334 + $0x1568] sm:$0xff]
        %v1120 = vld [vmem:[%s334 + $0x1570] sm:$0xff]
        %v1121 = vld [vmem:[%s334 + $0x1578] sm:$0xff]
        %v1122 = vld [vmem:[%s334 + $0x1580] sm:$0xff]
        %v1123 = vld [vmem:[%s334 + $0x1588] sm:$0xff]
        %v1124 = vld [vmem:[%s334 + $0x1590] sm:$0xff]
        %v1125 = vld [vmem:[%s334 + $0x1598] sm:$0xff]
        %v1126 = vld [vmem:[%s334 + $0x15a0] sm:$0xff]
        %v1127 = vld [vmem:[%s334 + $0x15a8] sm:$0xff]
        %v1128 = vld [vmem:[%s334 + $0x15b0] sm:$0xff]
        %v1129 = vld [vmem:[%s334 + $0x15b8] sm:$0xff]
        %v1130 = vld [vmem:[%s334 + $0x15c0] sm:$0xff]
        %v1131 = vld [vmem:[%s334 + $0x15c8] sm:$0xff]
        %v1132 = vld [vmem:[%s334 + $0x15d0] sm:$0xff]
        %v1133 = vld [vmem:[%s334 + $0x15d8] sm:$0xff]
        %v1134 = vld [vmem:[%s334 + $0x15e0] sm:$0xff]
        %v1135 = vld [vmem:[%s334 + $0x15e8] sm:$0xff]
        %v1136 = vld [vmem:[%s334 + $0x15f0] sm:$0xff]
        %v1137 = vld [vmem:[%s334 + $0x15f8] sm:$0xff]
        %v1138 = vld [vmem:[%s334 + $0x1600] sm:$0xff]
        %v1139 = vld [vmem:[%s334 + $0x1608] sm:$0xff]
        %v1140 = vld [vmem:[%s334 + $0x1610] sm:$0xff]
        %v1141 = vld [vmem:[%s334 + $0x1618] sm:$0xff]
        %v1142 = vld [vmem:[%s334 + $0x1620] sm:$0xff]
        %v1143 = vld [vmem:[%s334 + $0x1628] sm:$0xff]
        %v1144 = vld [vmem:[%s334 + $0x1630] sm:$0xff]
        %v1145 = vld [vmem:[%s334 + $0x1638] sm:$0xff]
        %v1146 = vld [vmem:[%s334 + $0x1640] sm:$0xff]
        %v1147 = vld [vmem:[%s334 + $0x1648] sm:$0xff]
        %v1148 = vld [vmem:[%s334 + $0x1650] sm:$0xff]
        %v1149 = vld [vmem:[%s334 + $0x1658] sm:$0xff]
        %v1150 = vld [vmem:[%s334 + $0x1660] sm:$0xff]
        %v1151 = vld [vmem:[%s334 + $0x1668] sm:$0xff]
        %v1152 = vld [vmem:[%s334 + $0x1670] sm:$0xff]
        %v1153 = vld [vmem:[%s334 + $0x1678] sm:$0xff]
        %v1154 = vld [vmem:[%s334 + $0x1680] sm:$0xff]
        %v1155 = vld [vmem:[%s334 + $0x1688] sm:$0xff]
        %v1156 = vld [vmem:[%s334 + $0x1690] sm:$0xff]
        %v1157 = vld [vmem:[%s334 + $0x1698] sm:$0xff]
        %v1158 = vld [vmem:[%s334 + $0x16a0] sm:$0xff]
        %v1159 = vld [vmem:[%s334 + $0x16a8] sm:$0xff]
        %v1160 = vld [vmem:[%s334 + $0x16b0] sm:$0xff]
        %v1161 = vld [vmem:[%s334 + $0x16b8] sm:$0xff]
        %v1162 = vld [vmem:[%s334 + $0x16c0] sm:$0xff]
        %v1163 = vld [vmem:[%s334 + $0x16c8] sm:$0xff]
        %v1164 = vld [vmem:[%s334 + $0x16d0] sm:$0xff]
        %v1165 = vld [vmem:[%s334 + $0x16d8] sm:$0xff]
        %v1166 = vld [vmem:[%s334 + $0x16e0] sm:$0xff]
        %v1167 = vld [vmem:[%s334 + $0x16e8] sm:$0xff]
        %v1168 = vld [vmem:[%s334 + $0x16f0] sm:$0xff]
        %v1169 = vld [vmem:[%s334 + $0x16f8] sm:$0xff]
        %v1170 = vld [vmem:[%s334 + $0x1700] sm:$0xff]
        %v1171 = vld [vmem:[%s334 + $0x1708] sm:$0xff]
        %v1172 = vld [vmem:[%s334 + $0x1710] sm:$0xff]
        %v1173 = vld [vmem:[%s334 + $0x1718] sm:$0xff]
        %v1174 = vld [vmem:[%s334 + $0x1720] sm:$0xff]
        %v1175 = vld [vmem:[%s334 + $0x1728] sm:$0xff]
        %v1176 = vld [vmem:[%s334 + $0x1730] sm:$0xff]
        %v1177 = vld [vmem:[%s334 + $0x1738] sm:$0xff]
        %v1178 = vld [vmem:[%s334 + $0x1740] sm:$0xff]
        %v1179 = vld [vmem:[%s334 + $0x1748] sm:$0xff]
        %v1180 = vld [vmem:[%s334 + $0x1750] sm:$0xff]
        %v1181 = vld [vmem:[%s334 + $0x1758] sm:$0xff]
        %v1182 = vld [vmem:[%s334 + $0x1760] sm:$0xff]
        %v1183 = vld [vmem:[%s334 + $0x1768] sm:$0xff]
        %v1184 = vld [vmem:[%s334 + $0x1770] sm:$0xff]
        %v1185 = vld [vmem:[%s334 + $0x1778] sm:$0xff]
        %v1186 = vld [vmem:[%s334 + $0x1780] sm:$0xff]
        %v1187 = vld [vmem:[%s334 + $0x1788] sm:$0xff]
        %v1188 = vld [vmem:[%s334 + $0x1790] sm:$0xff]
        %v1189 = vld [vmem:[%s334 + $0x1798] sm:$0xff]
        %v1190 = vld [vmem:[%s334 + $0x17a0] sm:$0xff]
        %v1191 = vld [vmem:[%s334 + $0x17a8] sm:$0xff]
        %v1192 = vld [vmem:[%s334 + $0x17b0] sm:$0xff]
        %v1193 = vld [vmem:[%s334 + $0x17b8] sm:$0xff]
        %v1194 = vld [vmem:[%s334 + $0x17c0] sm:$0xff]
        %v1195 = vld [vmem:[%s334 + $0x17c8] sm:$0xff]
        %v1196 = vld [vmem:[%s334 + $0x17d0] sm:$0xff]
        %v1197 = vld [vmem:[%s334 + $0x17d8] sm:$0xff]
        %v1198 = vld [vmem:[%s334 + $0x17e0] sm:$0xff]
        %v1199 = vld [vmem:[%s334 + $0x17e8] sm:$0xff]
        %v1200 = vld [vmem:[%s334 + $0x17f0] sm:$0xff]
        %v1201 = vld [vmem:[%s334 + $0x17f8] sm:$0xff]
        %v1202 = vld [vmem:[%s334 + $0x1800] sm:$0xff]
        %v1203 = vld [vmem:[%s334 + $0x1808] sm:$0xff]
        %v1204 = vld [vmem:[%s334 + $0x1810] sm:$0xff]
        %v1205 = vld [vmem:[%s334 + $0x1818] sm:$0xff]
        %v1206 = vld [vmem:[%s334 + $0x1820] sm:$0xff]
        %v1207 = vld [vmem:[%s334 + $0x1828] sm:$0xff]
        %v1208 = vld [vmem:[%s334 + $0x1830] sm:$0xff]
        %v1209 = vld [vmem:[%s334 + $0x1838] sm:$0xff]
        %v1210 = vld [vmem:[%s334 + $0x1840] sm:$0xff]
        %v1211 = vld [vmem:[%s334 + $0x1848] sm:$0xff]
        %v1212 = vld [vmem:[%s334 + $0x1850] sm:$0xff]
        %v1213 = vld [vmem:[%s334 + $0x1858] sm:$0xff]
        %v1214 = vld [vmem:[%s334 + $0x1860] sm:$0xff]
        %v1215 = vld [vmem:[%s334 + $0x1868] sm:$0xff]
        %v1216 = vld [vmem:[%s334 + $0x1870] sm:$0xff]
        %v1217 = vld [vmem:[%s334 + $0x1878] sm:$0xff]
        %v1218 = vld [vmem:[%s334 + $0x1880] sm:$0xff]
        %v1219 = vld [vmem:[%s334 + $0x1888] sm:$0xff]
        %v1220 = vld [vmem:[%s334 + $0x1890] sm:$0xff]
        %v1221 = vld [vmem:[%s334 + $0x1898] sm:$0xff]
        %v1222 = vld [vmem:[%s334 + $0x18a0] sm:$0xff]
        %v1223 = vld [vmem:[%s334 + $0x18a8] sm:$0xff]
        %v1224 = vld [vmem:[%s334 + $0x18b0] sm:$0xff]
        %v1225 = vld [vmem:[%s334 + $0x18b8] sm:$0xff]
        %v1226 = vld [vmem:[%s334 + $0x18c0] sm:$0xff]
        %v1227 = vld [vmem:[%s334 + $0x18c8] sm:$0xff]
        %v1228 = vld [vmem:[%s334 + $0x18d0] sm:$0xff]
        %v1229 = vld [vmem:[%s334 + $0x18d8] sm:$0xff]
        %v1230 = vld [vmem:[%s334 + $0x18e0] sm:$0xff]
        %v1231 = vld [vmem:[%s334 + $0x18e8] sm:$0xff]
        %v1232 = vld [vmem:[%s334 + $0x18f0] sm:$0xff]
        %v1233 = vld [vmem:[%s334 + $0x18f8] sm:$0xff]
        %v1234 = vld [vmem:[%s334 + $0x1900] sm:$0xff]
        %v1235 = vld [vmem:[%s334 + $0x1908] sm:$0xff]
        %v1236 = vld [vmem:[%s334 + $0x1910] sm:$0xff]
        %v1237 = vld [vmem:[%s334 + $0x1918] sm:$0xff]
        %v1238 = vld [vmem:[%s334 + $0x1920] sm:$0xff]
        %v1239 = vld [vmem:[%s334 + $0x1928] sm:$0xff]
        %v1240 = vld [vmem:[%s334 + $0x1930] sm:$0xff]
        %v1241 = vld [vmem:[%s334 + $0x1938] sm:$0xff]
        %v1242 = vld [vmem:[%s334 + $0x1940] sm:$0xff]
        %v1243 = vld [vmem:[%s334 + $0x1948] sm:$0xff]
        %v1244 = vld [vmem:[%s334 + $0x1950] sm:$0xff]
        %v1245 = vld [vmem:[%s334 + $0x1958] sm:$0xff]
        %v1246 = vld [vmem:[%s334 + $0x1960] sm:$0xff]
        %v1247 = vld [vmem:[%s334 + $0x1968] sm:$0xff]
        %v1248 = vld [vmem:[%s334 + $0x1970] sm:$0xff]
        %v1249 = vld [vmem:[%s334 + $0x1978] sm:$0xff]
        %v1250 = vld [vmem:[%s334 + $0x1980] sm:$0xff]
        %v1251 = vld [vmem:[%s334 + $0x1988] sm:$0xff]
        %v1252 = vld [vmem:[%s334 + $0x1990] sm:$0xff]
        %v1253 = vld [vmem:[%s334 + $0x1998] sm:$0xff]
        %v1254 = vld [vmem:[%s334 + $0x19a0] sm:$0xff]
        %v1255 = vld [vmem:[%s334 + $0x19a8] sm:$0xff]
        %v1256 = vld [vmem:[%s334 + $0x19b0] sm:$0xff]
        %v1257 = vld [vmem:[%s334 + $0x19b8] sm:$0xff]
        %v1258 = vld [vmem:[%s334 + $0x19c0] sm:$0xff]
        %v1259 = vld [vmem:[%s334 + $0x19c8] sm:$0xff]
        %v1260 = vld [vmem:[%s334 + $0x19d0] sm:$0xff]
        %v1261 = vld [vmem:[%s334 + $0x19d8] sm:$0xff]
        %v1262 = vld [vmem:[%s334 + $0x19e0] sm:$0xff]
        %v1263 = vld [vmem:[%s334 + $0x19e8] sm:$0xff]
        %v1264 = vld [vmem:[%s334 + $0x19f0] sm:$0xff]
        %v1265 = vld [vmem:[%s334 + $0x19f8] sm:$0xff]
        %v1266 = vld [vmem:[%s334 + $0x1a00] sm:$0xff]
        %v1267 = vld [vmem:[%s334 + $0x1a08] sm:$0xff]
        %v1268 = vld [vmem:[%s334 + $0x1a10] sm:$0xff]
        %v1269 = vld [vmem:[%s334 + $0x1a18] sm:$0xff]
        %v1270 = vld [vmem:[%s334 + $0x1a20] sm:$0xff]
        %v1271 = vld [vmem:[%s334 + $0x1a28] sm:$0xff]
        %v1272 = vld [vmem:[%s334 + $0x1a30] sm:$0xff]
        %v1273 = vld [vmem:[%s334 + $0x1a38] sm:$0xff]
        %v1274 = vld [vmem:[%s334 + $0x1a40] sm:$0xff]
        %v1275 = vld [vmem:[%s334 + $0x1a48] sm:$0xff]
        %v1276 = vld [vmem:[%s334 + $0x1a50] sm:$0xff]
        %v1277 = vld [vmem:[%s334 + $0x1a58] sm:$0xff]
        %v1278 = vld [vmem:[%s334 + $0x1a60] sm:$0xff]
        %v1279 = vld [vmem:[%s334 + $0x1a68] sm:$0xff]
        %v1280 = vld [vmem:[%s334 + $0x1a70] sm:$0xff]
        %v1281 = vld [vmem:[%s334 + $0x1a78] sm:$0xff]
        %v1282 = vld [vmem:[%s334 + $0x1a80] sm:$0xff]
        %v1283 = vld [vmem:[%s334 + $0x1a88] sm:$0xff]
        %v1284 = vld [vmem:[%s334 + $0x1a90] sm:$0xff]
        %v1285 = vld [vmem:[%s334 + $0x1a98] sm:$0xff]
        %v1286 = vld [vmem:[%s334 + $0x1aa0] sm:$0xff]
        %v1287 = vld [vmem:[%s334 + $0x1aa8] sm:$0xff]
        %v1288 = vld [vmem:[%s334 + $0x1ab0] sm:$0xff]
        %v1289 = vld [vmem:[%s334 + $0x1ab8] sm:$0xff]
        %v1290 = vld [vmem:[%s334 + $0x1ac0] sm:$0xff]
        %v1291 = vld [vmem:[%s334 + $0x1ac8] sm:$0xff]
        %v1292 = vld [vmem:[%s334 + $0x1ad0] sm:$0xff]
        %v1293 = vld [vmem:[%s334 + $0x1ad8] sm:$0xff]
        %v1294 = vld [vmem:[%s334 + $0x1ae0] sm:$0xff]
        %v1295 = vld [vmem:[%s334 + $0x1ae8] sm:$0xff]
        %v1296 = vld [vmem:[%s334 + $0x1af0] sm:$0xff]
        %v1297 = vld [vmem:[%s334 + $0x1af8] sm:$0xff]
        %v1298 = vld [vmem:[%s334 + $0x1b00] sm:$0xff]
        %v1299 = vld [vmem:[%s334 + $0x1b08] sm:$0xff]
        %v1300 = vld [vmem:[%s334 + $0x1b10] sm:$0xff]
        %v1301 = vld [vmem:[%s334 + $0x1b18] sm:$0xff]
        %v1302 = vld [vmem:[%s334 + $0x1b20] sm:$0xff]
        %v1303 = vld [vmem:[%s334 + $0x1b28] sm:$0xff]
        %v1304 = vld [vmem:[%s334 + $0x1b30] sm:$0xff]
        %v1305 = vld [vmem:[%s334 + $0x1b38] sm:$0xff]
        %v1306 = vld [vmem:[%s334 + $0x1b40] sm:$0xff]
        %v1307 = vld [vmem:[%s334 + $0x1b48] sm:$0xff]
        %v1308 = vld [vmem:[%s334 + $0x1b50] sm:$0xff]
        %v1309 = vld [vmem:[%s334 + $0x1b58] sm:$0xff]
        %v1310 = vld [vmem:[%s334 + $0x1b60] sm:$0xff]
        %v1311 = vld [vmem:[%s334 + $0x1b68] sm:$0xff]
        %v1312 = vld [vmem:[%s334 + $0x1b70] sm:$0xff]
        %v1313 = vld [vmem:[%s334 + $0x1b78] sm:$0xff]
        %v1314 = vld [vmem:[%s334 + $0x1b80] sm:$0xff]
        %v1315 = vld [vmem:[%s334 + $0x1b88] sm:$0xff]
        %v1316 = vld [vmem:[%s334 + $0x1b90] sm:$0xff]
        %v1317 = vld [vmem:[%s334 + $0x1b98] sm:$0xff]
        %v1318 = vld [vmem:[%s334 + $0x1ba0] sm:$0xff]
        %v1319 = vld [vmem:[%s334 + $0x1ba8] sm:$0xff]
        %v1320 = vld [vmem:[%s334 + $0x1bb0] sm:$0xff]
        %v1321 = vld [vmem:[%s334 + $0x1bb8] sm:$0xff]
        %v1322 = vld [vmem:[%s334 + $0x1bc0] sm:$0xff]
        %v1323 = vld [vmem:[%s334 + $0x1bc8] sm:$0xff]
        %v1324 = vld [vmem:[%s334 + $0x1bd0] sm:$0xff]
        %v1325 = vld [vmem:[%s334 + $0x1bd8] sm:$0xff]
        %v1326 = vld [vmem:[%s334 + $0x1be0] sm:$0xff]
        %v1327 = vld [vmem:[%s334 + $0x1be8] sm:$0xff]
        %v1328 = vld [vmem:[%s334 + $0x1bf0] sm:$0xff]
        %v1329 = vld [vmem:[%s334 + $0x1bf8] sm:$0xff]
        %v1330 = vld [vmem:[%s334 + $0x1c00] sm:$0xff]
        %v1331 = vld [vmem:[%s334 + $0x1c08] sm:$0xff]
        %v1332 = vld [vmem:[%s334 + $0x1c10] sm:$0xff]
        %v1333 = vld [vmem:[%s334 + $0x1c18] sm:$0xff]
        %v1334 = vld [vmem:[%s334 + $0x1c20] sm:$0xff]
        %v1335 = vld [vmem:[%s334 + $0x1c28] sm:$0xff]
        %v1336 = vld [vmem:[%s334 + $0x1c30] sm:$0xff]
        %v1337 = vld [vmem:[%s334 + $0x1c38] sm:$0xff]
        %v1338 = vld [vmem:[%s334 + $0x1c40] sm:$0xff]
        %v1339 = vld [vmem:[%s334 + $0x1c48] sm:$0xff]
        %v1340 = vld [vmem:[%s334 + $0x1c50] sm:$0xff]
        %v1341 = vld [vmem:[%s334 + $0x1c58] sm:$0xff]
        %v1342 = vld [vmem:[%s334 + $0x1c60] sm:$0xff]
        %v1343 = vld [vmem:[%s334 + $0x1c68] sm:$0xff]
        %v1344 = vld [vmem:[%s334 + $0x1c70] sm:$0xff]
        %v1345 = vld [vmem:[%s334 + $0x1c78] sm:$0xff]
        %v1346 = vld [vmem:[%s334 + $0x1c80] sm:$0xff]
        %v1347 = vld [vmem:[%s334 + $0x1c88] sm:$0xff]
        %v1348 = vld [vmem:[%s334 + $0x1c90] sm:$0xff]
        %v1349 = vld [vmem:[%s334 + $0x1c98] sm:$0xff]
        %v1350 = vld [vmem:[%s334 + $0x1ca0] sm:$0xff]
        %v1351 = vld [vmem:[%s334 + $0x1ca8] sm:$0xff]
        %v1352 = vld [vmem:[%s334 + $0x1cb0] sm:$0xff]
        %v1353 = vld [vmem:[%s334 + $0x1cb8] sm:$0xff]
        %v1354 = vld [vmem:[%s334 + $0x1cc0] sm:$0xff]
        %v1355 = vld [vmem:[%s334 + $0x1cc8] sm:$0xff]
        %v1356 = vld [vmem:[%s334 + $0x1cd0] sm:$0xff]
        %v1357 = vld [vmem:[%s334 + $0x1cd8] sm:$0xff]
        %v1358 = vld [vmem:[%s334 + $0x1ce0] sm:$0xff]
        %v1359 = vld [vmem:[%s334 + $0x1ce8] sm:$0xff]
        %v1360 = vld [vmem:[%s334 + $0x1cf0] sm:$0xff]
        %v1361 = vld [vmem:[%s334 + $0x1cf8] sm:$0xff]
        %v1362 = vld [vmem:[%s334 + $0x1d00] sm:$0xff]
        %v1363 = vld [vmem:[%s334 + $0x1d08] sm:$0xff]
        %v1364 = vld [vmem:[%s334 + $0x1d10] sm:$0xff]
        %v1365 = vld [vmem:[%s334 + $0x1d18] sm:$0xff]
        %v1366 = vld [vmem:[%s334 + $0x1d20] sm:$0xff]
        %v1367 = vld [vmem:[%s334 + $0x1d28] sm:$0xff]
        %v1368 = vld [vmem:[%s334 + $0x1d30] sm:$0xff]
        %v1369 = vld [vmem:[%s334 + $0x1d38] sm:$0xff]
        %v1370 = vld [vmem:[%s334 + $0x1d40] sm:$0xff]
        %v1371 = vld [vmem:[%s334 + $0x1d48] sm:$0xff]
        %v1372 = vld [vmem:[%s334 + $0x1d50] sm:$0xff]
        %v1373 = vld [vmem:[%s334 + $0x1d58] sm:$0xff]
        %v1374 = vld [vmem:[%s334 + $0x1d60] sm:$0xff]
        %v1375 = vld [vmem:[%s334 + $0x1d68] sm:$0xff]
        %v1376 = vld [vmem:[%s334 + $0x1d70] sm:$0xff]
        %v1377 = vld [vmem:[%s334 + $0x1d78] sm:$0xff]
        %v1378 = vld [vmem:[%s334 + $0x1d80] sm:$0xff]
        %v1379 = vld [vmem:[%s334 + $0x1d88] sm:$0xff]
        %v1380 = vld [vmem:[%s334 + $0x1d90] sm:$0xff]
        %v1381 = vld [vmem:[%s334 + $0x1d98] sm:$0xff]
        %v1382 = vld [vmem:[%s334 + $0x1da0] sm:$0xff]
        %v1383 = vld [vmem:[%s334 + $0x1da8] sm:$0xff]
        %v1384 = vld [vmem:[%s334 + $0x1db0] sm:$0xff]
        %v1385 = vld [vmem:[%s334 + $0x1db8] sm:$0xff]
        %v1386 = vld [vmem:[%s334 + $0x1dc0] sm:$0xff]
        %v1387 = vld [vmem:[%s334 + $0x1dc8] sm:$0xff]
        %v1388 = vld [vmem:[%s334 + $0x1dd0] sm:$0xff]
        %v1389 = vld [vmem:[%s334 + $0x1dd8] sm:$0xff]
        %v1390 = vld [vmem:[%s334 + $0x1de0] sm:$0xff]
        %v1391 = vld [vmem:[%s334 + $0x1de8] sm:$0xff]
        %v1392 = vld [vmem:[%s334 + $0x1df0] sm:$0xff]
        %v1393 = vld [vmem:[%s334 + $0x1df8] sm:$0xff]
        %v1394 = vld [vmem:[%s334 + $0x1e00] sm:$0xff]
        %v1395 = vld [vmem:[%s334 + $0x1e08] sm:$0xff]
        %v1396 = vld [vmem:[%s334 + $0x1e10] sm:$0xff]
        %v1397 = vld [vmem:[%s334 + $0x1e18] sm:$0xff]
        %v1398 = vld [vmem:[%s334 + $0x1e20] sm:$0xff]
        %v1399 = vld [vmem:[%s334 + $0x1e28] sm:$0xff]
        %v1400 = vld [vmem:[%s334 + $0x1e30] sm:$0xff]
        %v1401 = vld [vmem:[%s334 + $0x1e38] sm:$0xff]
        %v1402 = vld [vmem:[%s334 + $0x1e40] sm:$0xff]
        %v1403 = vld [vmem:[%s334 + $0x1e48] sm:$0xff]
        %v1404 = vld [vmem:[%s334 + $0x1e50] sm:$0xff]
        %v1405 = vld [vmem:[%s334 + $0x1e58] sm:$0xff]
        %v1406 = vld [vmem:[%s334 + $0x1e60] sm:$0xff]
        %v1407 = vld [vmem:[%s334 + $0x1e68] sm:$0xff]
        %v1408 = vld [vmem:[%s334 + $0x1e70] sm:$0xff]
        %v1409 = vld [vmem:[%s334 + $0x1e78] sm:$0xff]
        %v1410 = vld [vmem:[%s334 + $0x1e80] sm:$0xff]
        %v1411 = vld [vmem:[%s334 + $0x1e88] sm:$0xff]
        %v1412 = vld [vmem:[%s334 + $0x1e90] sm:$0xff]
        %v1413 = vld [vmem:[%s334 + $0x1e98] sm:$0xff]
        %v1414 = vld [vmem:[%s334 + $0x1ea0] sm:$0xff]
        %v1415 = vld [vmem:[%s334 + $0x1ea8] sm:$0xff]
        %v1416 = vld [vmem:[%s334 + $0x1eb0] sm:$0xff]
        %v1417 = vld [vmem:[%s334 + $0x1eb8] sm:$0xff]
        %v1418 = vld [vmem:[%s334 + $0x1ec0] sm:$0xff]
        %v1419 = vld [vmem:[%s334 + $0x1ec8] sm:$0xff]
        %v1420 = vld [vmem:[%s334 + $0x1ed0] sm:$0xff]
        %v1421 = vld [vmem:[%s334 + $0x1ed8] sm:$0xff]
        %v1422 = vld [vmem:[%s334 + $0x1ee0] sm:$0xff]
        %v1423 = vld [vmem:[%s334 + $0x1ee8] sm:$0xff]
        %v1424 = vld [vmem:[%s334 + $0x1ef0] sm:$0xff]
        %v1425 = vld [vmem:[%s334 + $0x1ef8] sm:$0xff]
        %v1426 = vld [vmem:[%s334 + $0x1f00] sm:$0xff]
        %v1427 = vld [vmem:[%s334 + $0x1f08] sm:$0xff]
        %v1428 = vld [vmem:[%s334 + $0x1f10] sm:$0xff]
        %v1429 = vld [vmem:[%s334 + $0x1f18] sm:$0xff]
        %v1430 = vld [vmem:[%s334 + $0x1f20] sm:$0xff]
        %v1431 = vld [vmem:[%s334 + $0x1f28] sm:$0xff]
        %v1432 = vld [vmem:[%s334 + $0x1f30] sm:$0xff]
        %v1433 = vld [vmem:[%s334 + $0x1f38] sm:$0xff]
        %v1434 = vld [vmem:[%s334 + $0x1f40] sm:$0xff]
        %v1435 = vld [vmem:[%s334 + $0x1f48] sm:$0xff]
        %v1436 = vld [vmem:[%s334 + $0x1f50] sm:$0xff]
        %v1437 = vld [vmem:[%s334 + $0x1f58] sm:$0xff]
        %v1438 = vld [vmem:[%s334 + $0x1f60] sm:$0xff]
        %v1439 = vld [vmem:[%s334 + $0x1f68] sm:$0xff]
        %v1440 = vld [vmem:[%s334 + $0x1f70] sm:$0xff]
        %v1441 = vld [vmem:[%s334 + $0x1f78] sm:$0xff]
        %v1442 = vld [vmem:[%s334 + $0x1f80] sm:$0xff]
        %v1443 = vld [vmem:[%s334 + $0x1f88] sm:$0xff]
        %v1444 = vld [vmem:[%s334 + $0x1f90] sm:$0xff]
        %v1445 = vld [vmem:[%s334 + $0x1f98] sm:$0xff]
        %v1446 = vld [vmem:[%s334 + $0x1fa0] sm:$0xff]
        %v1447 = vld [vmem:[%s334 + $0x1fa8] sm:$0xff]
        %v1448 = vld [vmem:[%s334 + $0x1fb0] sm:$0xff]
        %v1449 = vld [vmem:[%s334 + $0x1fb8] sm:$0xff]
        %v1450 = vld [vmem:[%s334 + $0x1fc0] sm:$0xff]
        %v1451 = vld [vmem:[%s334 + $0x1fc8] sm:$0xff]
        %v1452 = vld [vmem:[%s334 + $0x1fd0] sm:$0xff]
        %v1453 = vld [vmem:[%s334 + $0x1fd8] sm:$0xff]
        %v1454 = vld [vmem:[%s334 + $0x1fe0] sm:$0xff]
        %v1455 = vld [vmem:[%s334 + $0x1fe8] sm:$0xff]
        %v1456 = vld [vmem:[%s334 + $0x1ff0] sm:$0xff]
        %v1457 = vld [vmem:[%s334 + $0x1ff8] sm:$0xff]
        %v1458 = vld [vmem:[%s334 + $0x2000] sm:$0xff]
        %v1459 = vld [vmem:[%s334 + $0x2008] sm:$0xff]
        %v1460 = vld [vmem:[%s334 + $0x2010] sm:$0xff]
        %v1461 = vld [vmem:[%s334 + $0x2018] sm:$0xff]
        %v1462 = vld [vmem:[%s334 + $0x2020] sm:$0xff]
        %v1463 = vld [vmem:[%s334 + $0x2028] sm:$0xff]
        %v1464 = vld [vmem:[%s334 + $0x2030] sm:$0xff]
        %v1465 = vld [vmem:[%s334 + $0x2038] sm:$0xff]
        %v1466 = vld [vmem:[%s334 + $0x2040] sm:$0xff]
        %v1467 = vld [vmem:[%s334 + $0x2048] sm:$0xff]
        %v1468 = vld [vmem:[%s334 + $0x2050] sm:$0xff]
        %v1469 = vld [vmem:[%s334 + $0x2058] sm:$0xff]
        %v1470 = vld [vmem:[%s334 + $0x2060] sm:$0xff]
        %v1471 = vld [vmem:[%s334 + $0x2068] sm:$0xff]
        %v1472 = vld [vmem:[%s334 + $0x2070] sm:$0xff]
        %v1473 = vld [vmem:[%s334 + $0x2078] sm:$0xff]
        %v1474 = vld [vmem:[%s334 + $0x2080] sm:$0xff]
        %v1475 = vld [vmem:[%s334 + $0x2088] sm:$0xff]
        %v1476 = vld [vmem:[%s334 + $0x2090] sm:$0xff]
        %v1477 = vld [vmem:[%s334 + $0x2098] sm:$0xff]
        %v1478 = vld [vmem:[%s334 + $0x20a0] sm:$0xff]
        %v1479 = vld [vmem:[%s334 + $0x20a8] sm:$0xff]
        %v1480 = vld [vmem:[%s334 + $0x20b0] sm:$0xff]
        %v1481 = vld [vmem:[%s334 + $0x20b8] sm:$0xff]
        %v1482 = vld [vmem:[%s334 + $0x20c0] sm:$0xff]
        %v1483 = vld [vmem:[%s334 + $0x20c8] sm:$0xff]
        %v1484 = vld [vmem:[%s334 + $0x20d0] sm:$0xff]
        %v1485 = vld [vmem:[%s334 + $0x20d8] sm:$0xff]
        %v1486 = vld [vmem:[%s334 + $0x20e0] sm:$0xff]
        %v1487 = vld [vmem:[%s334 + $0x20e8] sm:$0xff]
        %v1488 = vld [vmem:[%s334 + $0x20f0] sm:$0xff]
        %v1489 = vld [vmem:[%s334 + $0x20f8] sm:$0xff]
        %v1490 = vld [vmem:[%s334 + $0x2100] sm:$0xff]
        %v1491 = vld [vmem:[%s334 + $0x2108] sm:$0xff]
        %v1492 = vld [vmem:[%s334 + $0x2110] sm:$0xff]
        %v1493 = vld [vmem:[%s334 + $0x2118] sm:$0xff]
        %v1494 = vld [vmem:[%s334 + $0x2120] sm:$0xff]
        %v1495 = vld [vmem:[%s334 + $0x2128] sm:$0xff]
        %v1496 = vld [vmem:[%s334 + $0x2130] sm:$0xff]
        %v1497 = vld [vmem:[%s334 + $0x2138] sm:$0xff]
        %v1498 = vld [vmem:[%s334 + $0x2140] sm:$0xff]
        %v1499 = vld [vmem:[%s334 + $0x2148] sm:$0xff]
        %v1500 = vld [vmem:[%s334 + $0x2150] sm:$0xff]
        %v1501 = vld [vmem:[%s334 + $0x2158] sm:$0xff]
        %v1502 = vld [vmem:[%s334 + $0x2160] sm:$0xff]
        %v1503 = vld [vmem:[%s334 + $0x2168] sm:$0xff]
        %v1504 = vld [vmem:[%s334 + $0x2170] sm:$0xff]
        %v1505 = vld [vmem:[%s334 + $0x2178] sm:$0xff]
        %v1506 = vld [vmem:[%s334 + $0x2180] sm:$0xff]
        %v1507 = vld [vmem:[%s334 + $0x2188] sm:$0xff]
        %v1508 = vld [vmem:[%s334 + $0x2190] sm:$0xff]
        %v1509 = vld [vmem:[%s334 + $0x2198] sm:$0xff]
        %v1510 = vld [vmem:[%s334 + $0x21a0] sm:$0xff]
        %v1511 = vld [vmem:[%s334 + $0x21a8] sm:$0xff]
        %v1512 = vld [vmem:[%s334 + $0x21b0] sm:$0xff]
        %v1513 = vld [vmem:[%s334 + $0x21b8] sm:$0xff]
        %v1514 = vld [vmem:[%s334 + $0x21c0] sm:$0xff]
        %v1515 = vld [vmem:[%s334 + $0x21c8] sm:$0xff]
        %v1516 = vld [vmem:[%s334 + $0x21d0] sm:$0xff]
        %v1517 = vld [vmem:[%s334 + $0x21d8] sm:$0xff]
        %v1518 = vld [vmem:[%s334 + $0x21e0] sm:$0xff]
        %v1519 = vld [vmem:[%s334 + $0x21e8] sm:$0xff]
        %v1520 = vld [vmem:[%s334 + $0x21f0] sm:$0xff]
        %v1521 = vld [vmem:[%s334 + $0x21f8] sm:$0xff]
        %v1522 = vld [vmem:[%s334 + $0x2200] sm:$0xff]
        %v1523 = vld [vmem:[%s334 + $0x2208] sm:$0xff]
        %v1524 = vld [vmem:[%s334 + $0x2210] sm:$0xff]
        %v1525 = vld [vmem:[%s334 + $0x2218] sm:$0xff]
        %v1526 = vld [vmem:[%s334 + $0x2220] sm:$0xff]
        %v1527 = vld [vmem:[%s334 + $0x2228] sm:$0xff]
        %v1528 = vld [vmem:[%s334 + $0x2230] sm:$0xff]
        %v1529 = vld [vmem:[%s334 + $0x2238] sm:$0xff]
        %v1530 = vld [vmem:[%s334 + $0x2240] sm:$0xff]
        %v1531 = vld [vmem:[%s334 + $0x2248] sm:$0xff]
        %v1532 = vld [vmem:[%s334 + $0x2250] sm:$0xff]
        %v1533 = vld [vmem:[%s334 + $0x2258] sm:$0xff]
        %v1534 = vld [vmem:[%s334 + $0x2260] sm:$0xff]
        %v1535 = vld [vmem:[%s334 + $0x2268] sm:$0xff]
        %v1536 = vld [vmem:[%s334 + $0x2270] sm:$0xff]
        %v1537 = vld [vmem:[%s334 + $0x2278] sm:$0xff]
        %v1538 = vld [vmem:[%s334 + $0x2280] sm:$0xff]
        %v1539 = vld [vmem:[%s334 + $0x2288] sm:$0xff]
        %v1540 = vld [vmem:[%s334 + $0x2290] sm:$0xff]
        %v1541 = vld [vmem:[%s334 + $0x2298] sm:$0xff]
        %v1542 = vld [vmem:[%s334 + $0x22a0] sm:$0xff]
        %v1543 = vld [vmem:[%s334 + $0x22a8] sm:$0xff]
        %v1544 = vld [vmem:[%s334 + $0x22b0] sm:$0xff]
        %v1545 = vld [vmem:[%s334 + $0x22b8] sm:$0xff]
        %v1546 = vld [vmem:[%s334 + $0x22c0] sm:$0xff]
        %v1547 = vld [vmem:[%s334 + $0x22c8] sm:$0xff]
        %v1548 = vld [vmem:[%s334 + $0x22d0] sm:$0xff]
        %v1549 = vld [vmem:[%s334 + $0x22d8] sm:$0xff]
        %v1550 = vld [vmem:[%s334 + $0x22e0] sm:$0xff]
        %v1551 = vld [vmem:[%s334 + $0x22e8] sm:$0xff]
        %v1552 = vld [vmem:[%s334 + $0x22f0] sm:$0xff]
        %v1553 = vld [vmem:[%s334 + $0x22f8] sm:$0xff]
        %v1554 = vld [vmem:[%s334 + $0x2300] sm:$0xff]
        %v1555 = vld [vmem:[%s334 + $0x2308] sm:$0xff]
        %v1556 = vld [vmem:[%s334 + $0x2310] sm:$0xff]
        %v1557 = vld [vmem:[%s334 + $0x2318] sm:$0xff]
        %v1558 = vld [vmem:[%s334 + $0x2320] sm:$0xff]
        %v1559 = vld [vmem:[%s334 + $0x2328] sm:$0xff]
        %v1560 = vld [vmem:[%s334 + $0x2330] sm:$0xff]
        %v1561 = vld [vmem:[%s334 + $0x2338] sm:$0xff]
        %v1562 = vld [vmem:[%s334 + $0x2340] sm:$0xff]
        %v1563 = vld [vmem:[%s334 + $0x2348] sm:$0xff]
        %v1564 = vld [vmem:[%s334 + $0x2350] sm:$0xff]
        %v1565 = vld [vmem:[%s334 + $0x2358] sm:$0xff]
        %v1566 = vld [vmem:[%s334 + $0x2360] sm:$0xff]
        %v1567 = vld [vmem:[%s334 + $0x2368] sm:$0xff]
        %v1568 = vld [vmem:[%s334 + $0x2370] sm:$0xff]
        %v1569 = vld [vmem:[%s334 + $0x2378] sm:$0xff]
        %v1570 = vld [vmem:[%s334 + $0x2380] sm:$0xff]
        %v1571 = vld [vmem:[%s334 + $0x2388] sm:$0xff]
        %v1572 = vld [vmem:[%s334 + $0x2390] sm:$0xff]
        %v1573 = vld [vmem:[%s334 + $0x2398] sm:$0xff]
        %v1574 = vld [vmem:[%s334 + $0x23a0] sm:$0xff]
        %v1575 = vld [vmem:[%s334 + $0x23a8] sm:$0xff]
        %v1576 = vld [vmem:[%s334 + $0x23b0] sm:$0xff]
        %v1577 = vld [vmem:[%s334 + $0x23b8] sm:$0xff]
        %v1578 = vld [vmem:[%s334 + $0x23c0] sm:$0xff]
        %v1579 = vld [vmem:[%s334 + $0x23c8] sm:$0xff]
        %v1580 = vld [vmem:[%s334 + $0x23d0] sm:$0xff]
        %v1581 = vld [vmem:[%s334 + $0x23d8] sm:$0xff]
        %v1582 = vld [vmem:[%s334 + $0x23e0] sm:$0xff]
        %v1583 = vld [vmem:[%s334 + $0x23e8] sm:$0xff]
        %v1584 = vld [vmem:[%s334 + $0x23f0] sm:$0xff]
        %v1585 = vld [vmem:[%s334 + $0x23f8] sm:$0xff]
        %v1586 = vld [vmem:[%s334 + $0x2400] sm:$0xff]
        %v1587 = vld [vmem:[%s334 + $0x2408] sm:$0xff]
        %v1588 = vld [vmem:[%s334 + $0x2410] sm:$0xff]
        %v1589 = vld [vmem:[%s334 + $0x2418] sm:$0xff]
        %v1590 = vld [vmem:[%s334 + $0x2420] sm:$0xff]
        %v1591 = vld [vmem:[%s334 + $0x2428] sm:$0xff]
        %v1592 = vld [vmem:[%s334 + $0x2430] sm:$0xff]
        %v1593 = vld [vmem:[%s334 + $0x2438] sm:$0xff]
        %v1594 = vld [vmem:[%s334 + $0x2440] sm:$0xff]
        %v1595 = vld [vmem:[%s334 + $0x2448] sm:$0xff]
        %v1596 = vld [vmem:[%s334 + $0x2450] sm:$0xff]
        %v1597 = vld [vmem:[%s334 + $0x2458] sm:$0xff]
        %v1598 = vld [vmem:[%s334 + $0x2460] sm:$0xff]
        %v1599 = vld [vmem:[%s334 + $0x2468] sm:$0xff]
        %v1600 = vld [vmem:[%s334 + $0x2470] sm:$0xff]
        %v1601 = vld [vmem:[%s334 + $0x2478] sm:$0xff]
        %v1602 = vld [vmem:[%s334 + $0x2480] sm:$0xff]
        %v1603 = vld [vmem:[%s334 + $0x2488] sm:$0xff]
        %v1604 = vld [vmem:[%s334 + $0x2490] sm:$0xff]
        %v1605 = vld [vmem:[%s334 + $0x2498] sm:$0xff]
        %v1606 = vld [vmem:[%s334 + $0x24a0] sm:$0xff]
        %v1607 = vld [vmem:[%s334 + $0x24a8] sm:$0xff]
        %v1608 = vld [vmem:[%s334 + $0x24b0] sm:$0xff]
        %v1609 = vld [vmem:[%s334 + $0x24b8] sm:$0xff]
        %v1610 = vld [vmem:[%s334 + $0x24c0] sm:$0xff]
        %v1611 = vld [vmem:[%s334 + $0x24c8] sm:$0xff]
        %v1612 = vld [vmem:[%s334 + $0x24d0] sm:$0xff]
        %v1613 = vld [vmem:[%s334 + $0x24d8] sm:$0xff]
        %v1614 = vld [vmem:[%s334 + $0x24e0] sm:$0xff]
        %v1615 = vld [vmem:[%s334 + $0x24e8] sm:$0xff]
        %v1616 = vld [vmem:[%s334 + $0x24f0] sm:$0xff]
        %v1617 = vld [vmem:[%s334 + $0x24f8] sm:$0xff]
        %v1618 = vld [vmem:[%s334 + $0x2500] sm:$0xff]
        %v1619 = vld [vmem:[%s334 + $0x2508] sm:$0xff]
        %v1620 = vld [vmem:[%s334 + $0x2510] sm:$0xff]
        %v1621 = vld [vmem:[%s334 + $0x2518] sm:$0xff]
        %v1622 = vld [vmem:[%s334 + $0x2520] sm:$0xff]
        %v1623 = vld [vmem:[%s334 + $0x2528] sm:$0xff]
        %v1624 = vld [vmem:[%s334 + $0x2530] sm:$0xff]
        %v1625 = vld [vmem:[%s334 + $0x2538] sm:$0xff]
        %v1626 = vld [vmem:[%s334 + $0x2540] sm:$0xff]
        %v1627 = vld [vmem:[%s334 + $0x2548] sm:$0xff]
        %v1628 = vld [vmem:[%s334 + $0x2550] sm:$0xff]
        %v1629 = vld [vmem:[%s334 + $0x2558] sm:$0xff]
        %v1630 = vld [vmem:[%s334 + $0x2560] sm:$0xff]
        %v1631 = vld [vmem:[%s334 + $0x2568] sm:$0xff]
        %v1632 = vld [vmem:[%s334 + $0x2570] sm:$0xff]
        %v1633 = vld [vmem:[%s334 + $0x2578] sm:$0xff]
        %v1634 = vld [vmem:[%s343] sm:$0xff]
        %v1635 = vld [vmem:[%s343 + $0x8] sm:$0xff]
        %v1638 = vlaneseq
        %v1639 = vshrl.u32 %v1638, 7
        %v1640 = vsub.s32 0, %v1639
        %v1641 = vrot.slane %v1634, %v1640
        %v1642 = vlaneseq
        %v1643 = vshrl.u32 %v1642, 7
        %v1644 = vsub.s32 1, %v1643
        %v1645 = vrot.slane %v1634, %v1644
        %v1646 = vlaneseq
        %v1647 = vshrl.u32 %v1646, 7
        %v1648 = vsub.s32 2, %v1647
        %v1649 = vrot.slane %v1634, %v1648
        %v1650 = vlaneseq
        %v1651 = vshrl.u32 %v1650, 7
        %v1652 = vsub.s32 3, %v1651
        %v1653 = vrot.slane %v1634, %v1652
        %v1654 = vlaneseq
        %v1655 = vshrl.u32 %v1654, 7
        %v1656 = vsub.s32 4, %v1655
        %v1657 = vrot.slane %v1634, %v1656
        %v1658 = vlaneseq
        %v1659 = vshrl.u32 %v1658, 7
        %v1660 = vsub.s32 5, %v1659
        %v1661 = vrot.slane %v1634, %v1660
        %v1662 = vlaneseq
        %v1663 = vshrl.u32 %v1662, 7
        %v1664 = vsub.s32 6, %v1663
        %v1665 = vrot.slane %v1634, %v1664
        %v1666 = vlaneseq
        %v1667 = vshrl.u32 %v1666, 7
        %v1668 = vsub.s32 7, %v1667
        %v1669 = vrot.slane %v1634, %v1668
        %v1670 = vlaneseq
        %v1671 = vshrl.u32 %v1670, 7
        %v1672 = vsub.s32 0, %v1671
        %v1673 = vrot.slane %v1635, %v1672
        %v1674 = vlaneseq
        %v1675 = vshrl.u32 %v1674, 7
        %v1676 = vsub.s32 1, %v1675
        %v1677 = vrot.slane %v1635, %v1676
        %v1678 = vlaneseq
        %v1679 = vshrl.u32 %v1678, 7
        %v1680 = vsub.s32 2, %v1679
        %v1681 = vrot.slane %v1635, %v1680
        %v1682 = vlaneseq
        %v1683 = vshrl.u32 %v1682, 7
        %v1684 = vsub.s32 3, %v1683
        %v1685 = vrot.slane %v1635, %v1684
        %v1686 = vlaneseq
        %v1687 = vshrl.u32 %v1686, 7
        %v1688 = vsub.s32 4, %v1687
        %v1689 = vrot.slane %v1635, %v1688
        %v1690 = vlaneseq
        %v1691 = vshrl.u32 %v1690, 7
        %v1692 = vsub.s32 5, %v1691
        %v1693 = vrot.slane %v1635, %v1692
        %v1694 = vlaneseq
        %v1695 = vshrl.u32 %v1694, 7
        %v1696 = vsub.s32 6, %v1695
        %v1697 = vrot.slane %v1635, %v1696
        %v1698 = vlaneseq
        %v1699 = vshrl.u32 %v1698, 7
        %v1700 = vsub.s32 7, %v1699
        %v1701 = vrot.slane %v1635, %v1700
        %v1728 = vunpack.c.l.b16 %v424
        %v1729 = vunpack.c.h.b16 %v424
        %v1730 = vunpack.c.l.b16 %v425
        %v1731 = vunpack.c.h.b16 %v425
        %v1732 = vunpack.c.l.b16 %v426
        %v1733 = vunpack.c.h.b16 %v426
        %v1734 = vunpack.c.l.b16 %v427
        %v1735 = vunpack.c.h.b16 %v427
        %v1736 = vunpack.c.l.b16 %v428
        %v1737 = vunpack.c.h.b16 %v428
        %v1738 = vunpack.c.l.b16 %v429
        %v1739 = vunpack.c.h.b16 %v429
        %v1740 = vunpack.c.l.b16 %v430
        %v1741 = vunpack.c.h.b16 %v430
        %v1742 = vunpack.c.l.b16 %v431
        %v1743 = vunpack.c.h.b16 %v431
        %v1744 = vunpack.c.l.b16 %v432
        %v1745 = vunpack.c.h.b16 %v432
        %v1746 = vunpack.c.l.b16 %v433
        %v1747 = vunpack.c.h.b16 %v433
        %v1748 = vpack.c.b16 %v1738, %v1728
        %v1749 = vpack.c.b16 %v1739, %v1729
        %v1750 = vpack.c.b16 %v1740, %v1730
        %v1751 = vpack.c.b16 %v1741, %v1731
        %v1752 = vpack.c.b16 %v1742, %v1732
        %v1753 = vpack.c.b16 %v1743, %v1733
        %v1754 = vpack.c.b16 %v1744, %v1734
        %v1755 = vpack.c.b16 %v1745, %v1735
        %v1756 = vpack.c.b16 %v1746, %v1736
        %v1757 = vpack.c.b16 %v1747, %v1737
        %v2967 = vunpack.c.l.b16 %v434
        %v2968 = vunpack.c.h.b16 %v434
        %v2969 = vunpack.c.l.b16 %v435
        %v2970 = vunpack.c.h.b16 %v435
        %v2971 = vunpack.c.l.b16 %v436
        %v2972 = vunpack.c.h.b16 %v436
        %v2973 = vunpack.c.l.b16 %v437
        %v2974 = vunpack.c.h.b16 %v437
        %v2975 = vunpack.c.l.b16 %v438
        %v2976 = vunpack.c.h.b16 %v438
        %v2977 = vunpack.c.l.b16 %v439
        %v2978 = vunpack.c.h.b16 %v439
        %v2979 = vunpack.c.l.b16 %v440
        %v2980 = vunpack.c.h.b16 %v440
        %v2981 = vunpack.c.l.b16 %v441
        %v2982 = vunpack.c.h.b16 %v441
        %v2983 = vunpack.c.l.b16 %v442
        %v2984 = vunpack.c.h.b16 %v442
        %v2985 = vunpack.c.l.b16 %v443
        %v2986 = vunpack.c.h.b16 %v443
        %v2987 = vunpack.c.l.b16 %v444
        %v2988 = vunpack.c.h.b16 %v444
        %v2989 = vunpack.c.l.b16 %v445
        %v2990 = vunpack.c.h.b16 %v445
        %v2991 = vunpack.c.l.b16 %v446
        %v2992 = vunpack.c.h.b16 %v446
        %v2993 = vunpack.c.l.b16 %v447
        %v2994 = vunpack.c.h.b16 %v447
        %v2995 = vunpack.c.l.b16 %v448
        %v2996 = vunpack.c.h.b16 %v448
        %v2997 = vunpack.c.l.b16 %v449
        %v2998 = vunpack.c.h.b16 %v449
        %v2999 = vunpack.c.l.b16 %v450
        %v3000 = vunpack.c.h.b16 %v450
        %v3001 = vunpack.c.l.b16 %v451
        %v3002 = vunpack.c.h.b16 %v451
        %v3003 = vunpack.c.l.b16 %v452
        %v3004 = vunpack.c.h.b16 %v452
        %v3005 = vunpack.c.l.b16 %v453
        %v3006 = vunpack.c.h.b16 %v453
        %v3007 = vunpack.c.l.b16 %v454
        %v3008 = vunpack.c.h.b16 %v454
        %v3009 = vunpack.c.l.b16 %v455
        %v3010 = vunpack.c.h.b16 %v455
        %v3011 = vunpack.c.l.b16 %v456
        %v3012 = vunpack.c.h.b16 %v456
        %v3013 = vunpack.c.l.b16 %v457
        %v3014 = vunpack.c.h.b16 %v457
        %v3015 = vunpack.c.l.b16 %v458
        %v3016 = vunpack.c.h.b16 %v458
        %v3017 = vunpack.c.l.b16 %v459
        %v3018 = vunpack.c.h.b16 %v459
        %v3019 = vunpack.c.l.b16 %v460
        %v3020 = vunpack.c.h.b16 %v460
        %v3021 = vunpack.c.l.b16 %v461
        %v3022 = vunpack.c.h.b16 %v461
        %v3023 = vunpack.c.l.b16 %v462
        %v3024 = vunpack.c.h.b16 %v462
        %v3025 = vunpack.c.l.b16 %v463
        %v3026 = vunpack.c.h.b16 %v463
        %v3027 = vunpack.c.l.b16 %v464
        %v3028 = vunpack.c.h.b16 %v464
        %v3029 = vunpack.c.l.b16 %v465
        %v3030 = vunpack.c.h.b16 %v465
        %v3031 = vunpack.c.l.b16 %v466
        %v3032 = vunpack.c.h.b16 %v466
        %v3033 = vunpack.c.l.b16 %v467
        %v3034 = vunpack.c.h.b16 %v467
        %v3035 = vunpack.c.l.b16 %v468
        %v3036 = vunpack.c.h.b16 %v468
        %v3037 = vunpack.c.l.b16 %v469
        %v3038 = vunpack.c.h.b16 %v469
        %v3039 = vunpack.c.l.b16 %v470
        %v3040 = vunpack.c.h.b16 %v470
        %v3041 = vunpack.c.l.b16 %v471
        %v3042 = vunpack.c.h.b16 %v471
        %v3043 = vunpack.c.l.b16 %v472
        %v3044 = vunpack.c.h.b16 %v472
        %v3045 = vunpack.c.l.b16 %v473
        %v3046 = vunpack.c.h.b16 %v473
        %v3047 = vunpack.c.l.b16 %v474
        %v3048 = vunpack.c.h.b16 %v474
        %v3049 = vunpack.c.l.b16 %v475
        %v3050 = vunpack.c.h.b16 %v475
        %v3051 = vunpack.c.l.b16 %v476
        %v3052 = vunpack.c.h.b16 %v476
        %v3053 = vunpack.c.l.b16 %v477
        %v3054 = vunpack.c.h.b16 %v477
        %v3055 = vunpack.c.l.b16 %v478
        %v3056 = vunpack.c.h.b16 %v478
        %v3057 = vunpack.c.l.b16 %v479
        %v3058 = vunpack.c.h.b16 %v479
        %v3059 = vunpack.c.l.b16 %v480
        %v3060 = vunpack.c.h.b16 %v480
        %v3061 = vunpack.c.l.b16 %v481
        %v3062 = vunpack.c.h.b16 %v481
        %v3063 = vunpack.c.l.b16 %v482
        %v3064 = vunpack.c.h.b16 %v482
        %v3065 = vunpack.c.l.b16 %v483
        %v3066 = vunpack.c.h.b16 %v483
        %v3067 = vunpack.c.l.b16 %v484
        %v3068 = vunpack.c.h.b16 %v484
        %v3069 = vunpack.c.l.b16 %v485
        %v3070 = vunpack.c.h.b16 %v485
        %v3071 = vunpack.c.l.b16 %v486
        %v3072 = vunpack.c.h.b16 %v486
        %v3073 = vunpack.c.l.b16 %v487
        %v3074 = vunpack.c.h.b16 %v487
        %v3075 = vunpack.c.l.b16 %v488
        %v3076 = vunpack.c.h.b16 %v488
        %v3077 = vunpack.c.l.b16 %v489
        %v3078 = vunpack.c.h.b16 %v489
        %v3079 = vunpack.c.l.b16 %v490
        %v3080 = vunpack.c.h.b16 %v490
        %v3081 = vunpack.c.l.b16 %v491
        %v3082 = vunpack.c.h.b16 %v491
        %v3083 = vunpack.c.l.b16 %v492
        %v3084 = vunpack.c.h.b16 %v492
        %v3085 = vunpack.c.l.b16 %v493
        %v3086 = vunpack.c.h.b16 %v493
        %v3087 = vunpack.c.l.b16 %v494
        %v3088 = vunpack.c.h.b16 %v494
        %v3089 = vunpack.c.l.b16 %v495
        %v3090 = vunpack.c.h.b16 %v495
        %v3091 = vunpack.c.l.b16 %v496
        %v3092 = vunpack.c.h.b16 %v496
        %v3093 = vunpack.c.l.b16 %v497
        %v3094 = vunpack.c.h.b16 %v497
        %v3095 = vunpack.c.l.b16 %v498
        %v3096 = vunpack.c.h.b16 %v498
        %v3097 = vunpack.c.l.b16 %v499
        %v3098 = vunpack.c.h.b16 %v499
        %v3099 = vunpack.c.l.b16 %v500
        %v3100 = vunpack.c.h.b16 %v500
        %v3101 = vunpack.c.l.b16 %v501
        %v3102 = vunpack.c.h.b16 %v501
        %v3103 = vunpack.c.l.b16 %v502
        %v3104 = vunpack.c.h.b16 %v502
        %v3105 = vunpack.c.l.b16 %v503
        %v3106 = vunpack.c.h.b16 %v503
        %v3107 = vunpack.c.l.b16 %v504
        %v3108 = vunpack.c.h.b16 %v504
        %v3109 = vunpack.c.l.b16 %v505
        %v3110 = vunpack.c.h.b16 %v505
        %v3111 = vunpack.c.l.b16 %v506
        %v3112 = vunpack.c.h.b16 %v506
        %v3113 = vunpack.c.l.b16 %v507
        %v3114 = vunpack.c.h.b16 %v507
        %v3115 = vunpack.c.l.b16 %v508
        %v3116 = vunpack.c.h.b16 %v508
        %v3117 = vunpack.c.l.b16 %v509
        %v3118 = vunpack.c.h.b16 %v509
        %v3119 = vunpack.c.l.b16 %v510
        %v3120 = vunpack.c.h.b16 %v510
        %v3121 = vunpack.c.l.b16 %v511
        %v3122 = vunpack.c.h.b16 %v511
        %v3123 = vunpack.c.l.b16 %v512
        %v3124 = vunpack.c.h.b16 %v512
        %v3125 = vunpack.c.l.b16 %v513
        %v3126 = vunpack.c.h.b16 %v513
        %v3127 = vunpack.c.l.b16 %v514
        %v3128 = vunpack.c.h.b16 %v514
        %v3129 = vunpack.c.l.b16 %v515
        %v3130 = vunpack.c.h.b16 %v515
        %v3131 = vunpack.c.l.b16 %v516
        %v3132 = vunpack.c.h.b16 %v516
        %v3133 = vunpack.c.l.b16 %v517
        %v3134 = vunpack.c.h.b16 %v517
        %v3135 = vunpack.c.l.b16 %v518
        %v3136 = vunpack.c.h.b16 %v518
        %v3137 = vunpack.c.l.b16 %v519
        %v3138 = vunpack.c.h.b16 %v519
        %v3139 = vunpack.c.l.b16 %v520
        %v3140 = vunpack.c.h.b16 %v520
        %v3141 = vunpack.c.l.b16 %v521
        %v3142 = vunpack.c.h.b16 %v521
        %v3143 = vunpack.c.l.b16 %v522
        %v3144 = vunpack.c.h.b16 %v522
        %v3145 = vunpack.c.l.b16 %v523
        %v3146 = vunpack.c.h.b16 %v523
        %v3147 = vunpack.c.l.b16 %v524
        %v3148 = vunpack.c.h.b16 %v524
        %v3149 = vunpack.c.l.b16 %v525
        %v3150 = vunpack.c.h.b16 %v525
        %v3151 = vunpack.c.l.b16 %v526
        %v3152 = vunpack.c.h.b16 %v526
        %v3153 = vunpack.c.l.b16 %v527
        %v3154 = vunpack.c.h.b16 %v527
        %v3155 = vunpack.c.l.b16 %v528
        %v3156 = vunpack.c.h.b16 %v528
        %v3157 = vunpack.c.l.b16 %v529
        %v3158 = vunpack.c.h.b16 %v529
        %v3159 = vunpack.c.l.b16 %v530
        %v3160 = vunpack.c.h.b16 %v530
        %v3161 = vunpack.c.l.b16 %v531
        %v3162 = vunpack.c.h.b16 %v531
        %v3163 = vunpack.c.l.b16 %v532
        %v3164 = vunpack.c.h.b16 %v532
        %v3165 = vunpack.c.l.b16 %v533
        %v3166 = vunpack.c.h.b16 %v533
        %v3167 = vunpack.c.l.b16 %v534
        %v3168 = vunpack.c.h.b16 %v534
        %v3169 = vunpack.c.l.b16 %v535
        %v3170 = vunpack.c.h.b16 %v535
        %v3171 = vunpack.c.l.b16 %v536
        %v3172 = vunpack.c.h.b16 %v536
        %v3173 = vunpack.c.l.b16 %v537
        %v3174 = vunpack.c.h.b16 %v537
        %v3175 = vunpack.c.l.b16 %v538
        %v3176 = vunpack.c.h.b16 %v538
        %v3177 = vunpack.c.l.b16 %v539
        %v3178 = vunpack.c.h.b16 %v539
        %v3179 = vunpack.c.l.b16 %v540
        %v3180 = vunpack.c.h.b16 %v540
        %v3181 = vunpack.c.l.b16 %v541
        %v3182 = vunpack.c.h.b16 %v541
        %v3183 = vunpack.c.l.b16 %v542
        %v3184 = vunpack.c.h.b16 %v542
        %v3185 = vunpack.c.l.b16 %v543
        %v3186 = vunpack.c.h.b16 %v543
        %v3187 = vunpack.c.l.b16 %v544
        %v3188 = vunpack.c.h.b16 %v544
        %v3189 = vunpack.c.l.b16 %v545
        %v3190 = vunpack.c.h.b16 %v545
        %v3191 = vunpack.c.l.b16 %v546
        %v3192 = vunpack.c.h.b16 %v546
        %v3193 = vunpack.c.l.b16 %v547
        %v3194 = vunpack.c.h.b16 %v547
        %v3195 = vunpack.c.l.b16 %v548
        %v3196 = vunpack.c.h.b16 %v548
        %v3197 = vunpack.c.l.b16 %v549
        %v3198 = vunpack.c.h.b16 %v549
        %v3199 = vunpack.c.l.b16 %v550
        %v3200 = vunpack.c.h.b16 %v550
        %v3201 = vunpack.c.l.b16 %v551
        %v3202 = vunpack.c.h.b16 %v551
        %v3203 = vunpack.c.l.b16 %v552
        %v3204 = vunpack.c.h.b16 %v552
        %v3205 = vunpack.c.l.b16 %v553
        %v3206 = vunpack.c.h.b16 %v553
        %v3207 = vunpack.c.l.b16 %v554
        %v3208 = vunpack.c.h.b16 %v554
        %v3209 = vunpack.c.l.b16 %v555
        %v3210 = vunpack.c.h.b16 %v555
        %v3211 = vunpack.c.l.b16 %v556
        %v3212 = vunpack.c.h.b16 %v556
        %v3213 = vunpack.c.l.b16 %v557
        %v3214 = vunpack.c.h.b16 %v557
        %v3215 = vunpack.c.l.b16 %v558
        %v3216 = vunpack.c.h.b16 %v558
        %v3217 = vunpack.c.l.b16 %v559
        %v3218 = vunpack.c.h.b16 %v559
        %v3219 = vunpack.c.l.b16 %v560
        %v3220 = vunpack.c.h.b16 %v560
        %v3221 = vunpack.c.l.b16 %v561
        %v3222 = vunpack.c.h.b16 %v561
        %v3223 = vunpack.c.l.b16 %v562
        %v3224 = vunpack.c.h.b16 %v562
        %v3225 = vunpack.c.l.b16 %v563
        %v3226 = vunpack.c.h.b16 %v563
        %v3227 = vunpack.c.l.b16 %v564
        %v3228 = vunpack.c.h.b16 %v564
        %v3229 = vunpack.c.l.b16 %v565
        %v3230 = vunpack.c.h.b16 %v565
        %v3231 = vunpack.c.l.b16 %v566
        %v3232 = vunpack.c.h.b16 %v566
        %v3233 = vunpack.c.l.b16 %v567
        %v3234 = vunpack.c.h.b16 %v567
        %v3235 = vunpack.c.l.b16 %v568
        %v3236 = vunpack.c.h.b16 %v568
        %v3237 = vunpack.c.l.b16 %v569
        %v3238 = vunpack.c.h.b16 %v569
        %v3239 = vunpack.c.l.b16 %v570
        %v3240 = vunpack.c.h.b16 %v570
        %v3241 = vunpack.c.l.b16 %v571
        %v3242 = vunpack.c.h.b16 %v571
        %v3243 = vunpack.c.l.b16 %v572
        %v3244 = vunpack.c.h.b16 %v572
        %v3245 = vunpack.c.l.b16 %v573
        %v3246 = vunpack.c.h.b16 %v573
        %v3247 = vunpack.c.l.b16 %v574
        %v3248 = vunpack.c.h.b16 %v574
        %v3249 = vunpack.c.l.b16 %v575
        %v3250 = vunpack.c.h.b16 %v575
        %v3251 = vunpack.c.l.b16 %v576
        %v3252 = vunpack.c.h.b16 %v576
        %v3253 = vunpack.c.l.b16 %v577
        %v3254 = vunpack.c.h.b16 %v577
        %v3255 = vunpack.c.l.b16 %v578
        %v3256 = vunpack.c.h.b16 %v578
        %v3257 = vunpack.c.l.b16 %v579
        %v3258 = vunpack.c.h.b16 %v579
        %v3259 = vunpack.c.l.b16 %v580
        %v3260 = vunpack.c.h.b16 %v580
        %v3261 = vunpack.c.l.b16 %v581
        %v3262 = vunpack.c.h.b16 %v581
        %v3263 = vunpack.c.l.b16 %v582
        %v3264 = vunpack.c.h.b16 %v582
        %v3265 = vunpack.c.l.b16 %v583
        %v3266 = vunpack.c.h.b16 %v583
        %v3267 = vunpack.c.l.b16 %v584
        %v3268 = vunpack.c.h.b16 %v584
        %v3269 = vunpack.c.l.b16 %v585
        %v3270 = vunpack.c.h.b16 %v585
        %v3271 = vunpack.c.l.b16 %v586
        %v3272 = vunpack.c.h.b16 %v586
        %v3273 = vunpack.c.l.b16 %v587
        %v3274 = vunpack.c.h.b16 %v587
        %v3275 = vunpack.c.l.b16 %v588
        %v3276 = vunpack.c.h.b16 %v588
        %v3277 = vunpack.c.l.b16 %v589
        %v3278 = vunpack.c.h.b16 %v589
        %v3279 = vunpack.c.l.b16 %v590
        %v3280 = vunpack.c.h.b16 %v590
        %v3281 = vunpack.c.l.b16 %v591
        %v3282 = vunpack.c.h.b16 %v591
        %v3283 = vunpack.c.l.b16 %v592
        %v3284 = vunpack.c.h.b16 %v592
        %v3285 = vunpack.c.l.b16 %v593
        %v3286 = vunpack.c.h.b16 %v593
        %v3287 = vunpack.c.l.b16 %v594
        %v3288 = vunpack.c.h.b16 %v594
        %v3289 = vunpack.c.l.b16 %v595
        %v3290 = vunpack.c.h.b16 %v595
        %v3291 = vunpack.c.l.b16 %v596
        %v3292 = vunpack.c.h.b16 %v596
        %v3293 = vunpack.c.l.b16 %v597
        %v3294 = vunpack.c.h.b16 %v597
        %v3295 = vunpack.c.l.b16 %v598
        %v3296 = vunpack.c.h.b16 %v598
        %v3297 = vunpack.c.l.b16 %v599
        %v3298 = vunpack.c.h.b16 %v599
        %v3299 = vunpack.c.l.b16 %v600
        %v3300 = vunpack.c.h.b16 %v600
        %v3301 = vunpack.c.l.b16 %v601
        %v3302 = vunpack.c.h.b16 %v601
        %v3303 = vunpack.c.l.b16 %v602
        %v3304 = vunpack.c.h.b16 %v602
        %v3305 = vunpack.c.l.b16 %v603
        %v3306 = vunpack.c.h.b16 %v603
        %v3307 = vunpack.c.l.b16 %v604
        %v3308 = vunpack.c.h.b16 %v604
        %v3309 = vunpack.c.l.b16 %v605
        %v3310 = vunpack.c.h.b16 %v605
        %v3311 = vunpack.c.l.b16 %v606
        %v3312 = vunpack.c.h.b16 %v606
        %v3313 = vunpack.c.l.b16 %v607
        %v3314 = vunpack.c.h.b16 %v607
        %v3315 = vunpack.c.l.b16 %v608
        %v3316 = vunpack.c.h.b16 %v608
        %v3317 = vunpack.c.l.b16 %v609
        %v3318 = vunpack.c.h.b16 %v609
        %v3319 = vunpack.c.l.b16 %v610
        %v3320 = vunpack.c.h.b16 %v610
        %v3321 = vunpack.c.l.b16 %v611
        %v3322 = vunpack.c.h.b16 %v611
        %v3323 = vunpack.c.l.b16 %v612
        %v3324 = vunpack.c.h.b16 %v612
        %v3325 = vunpack.c.l.b16 %v613
        %v3326 = vunpack.c.h.b16 %v613
        %v3327 = vunpack.c.l.b16 %v614
        %v3328 = vunpack.c.h.b16 %v614
        %v3329 = vunpack.c.l.b16 %v615
        %v3330 = vunpack.c.h.b16 %v615
        %v3331 = vunpack.c.l.b16 %v616
        %v3332 = vunpack.c.h.b16 %v616
        %v3333 = vunpack.c.l.b16 %v617
        %v3334 = vunpack.c.h.b16 %v617
        %v3335 = vunpack.c.l.b16 %v618
        %v3336 = vunpack.c.h.b16 %v618
        %v3337 = vunpack.c.l.b16 %v619
        %v3338 = vunpack.c.h.b16 %v619
        %v3339 = vunpack.c.l.b16 %v620
        %v3340 = vunpack.c.h.b16 %v620
        %v3341 = vunpack.c.l.b16 %v621
        %v3342 = vunpack.c.h.b16 %v621
        %v3343 = vunpack.c.l.b16 %v622
        %v3344 = vunpack.c.h.b16 %v622
        %v3345 = vunpack.c.l.b16 %v623
        %v3346 = vunpack.c.h.b16 %v623
        %v3347 = vunpack.c.l.b16 %v624
        %v3348 = vunpack.c.h.b16 %v624
        %v3349 = vunpack.c.l.b16 %v625
        %v3350 = vunpack.c.h.b16 %v625
        %v3351 = vunpack.c.l.b16 %v626
        %v3352 = vunpack.c.h.b16 %v626
        %v3353 = vunpack.c.l.b16 %v627
        %v3354 = vunpack.c.h.b16 %v627
        %v3355 = vunpack.c.l.b16 %v628
        %v3356 = vunpack.c.h.b16 %v628
        %v3357 = vunpack.c.l.b16 %v629
        %v3358 = vunpack.c.h.b16 %v629
        %v3359 = vunpack.c.l.b16 %v630
        %v3360 = vunpack.c.h.b16 %v630
        %v3361 = vunpack.c.l.b16 %v631
        %v3362 = vunpack.c.h.b16 %v631
        %v3363 = vunpack.c.l.b16 %v632
        %v3364 = vunpack.c.h.b16 %v632
        %v3365 = vunpack.c.l.b16 %v633
        %v3366 = vunpack.c.h.b16 %v633
        %v3367 = vunpack.c.l.b16 %v634
        %v3368 = vunpack.c.h.b16 %v634
        %v3369 = vunpack.c.l.b16 %v635
        %v3370 = vunpack.c.h.b16 %v635
        %v3371 = vunpack.c.l.b16 %v636
        %v3372 = vunpack.c.h.b16 %v636
        %v3373 = vunpack.c.l.b16 %v637
        %v3374 = vunpack.c.h.b16 %v637
        %v3375 = vunpack.c.l.b16 %v638
        %v3376 = vunpack.c.h.b16 %v638
        %v3377 = vunpack.c.l.b16 %v639
        %v3378 = vunpack.c.h.b16 %v639
        %v3379 = vunpack.c.l.b16 %v640
        %v3380 = vunpack.c.h.b16 %v640
        %v3381 = vunpack.c.l.b16 %v641
        %v3382 = vunpack.c.h.b16 %v641
        %v3383 = vunpack.c.l.b16 %v642
        %v3384 = vunpack.c.h.b16 %v642
        %v3385 = vunpack.c.l.b16 %v643
        %v3386 = vunpack.c.h.b16 %v643
        %v3387 = vunpack.c.l.b16 %v644
        %v3388 = vunpack.c.h.b16 %v644
        %v3389 = vunpack.c.l.b16 %v645
        %v3390 = vunpack.c.h.b16 %v645
        %v3391 = vunpack.c.l.b16 %v646
        %v3392 = vunpack.c.h.b16 %v646
        %v3393 = vunpack.c.l.b16 %v647
        %v3394 = vunpack.c.h.b16 %v647
        %v3395 = vunpack.c.l.b16 %v648
        %v3396 = vunpack.c.h.b16 %v648
        %v3397 = vunpack.c.l.b16 %v649
        %v3398 = vunpack.c.h.b16 %v649
        %v3399 = vunpack.c.l.b16 %v650
        %v3400 = vunpack.c.h.b16 %v650
        %v3401 = vunpack.c.l.b16 %v651
        %v3402 = vunpack.c.h.b16 %v651
        %v3403 = vunpack.c.l.b16 %v652
        %v3404 = vunpack.c.h.b16 %v652
        %v3405 = vunpack.c.l.b16 %v653
        %v3406 = vunpack.c.h.b16 %v653
        %v3407 = vunpack.c.l.b16 %v654
        %v3408 = vunpack.c.h.b16 %v654
        %v3409 = vunpack.c.l.b16 %v655
        %v3410 = vunpack.c.h.b16 %v655
        %v3411 = vunpack.c.l.b16 %v656
        %v3412 = vunpack.c.h.b16 %v656
        %v3413 = vunpack.c.l.b16 %v657
        %v3414 = vunpack.c.h.b16 %v657
        %v3415 = vunpack.c.l.b16 %v658
        %v3416 = vunpack.c.h.b16 %v658
        %v3417 = vunpack.c.l.b16 %v659
        %v3418 = vunpack.c.h.b16 %v659
        %v3419 = vunpack.c.l.b16 %v660
        %v3420 = vunpack.c.h.b16 %v660
        %v3421 = vunpack.c.l.b16 %v661
        %v3422 = vunpack.c.h.b16 %v661
        %v3423 = vunpack.c.l.b16 %v662
        %v3424 = vunpack.c.h.b16 %v662
        %v3425 = vunpack.c.l.b16 %v663
        %v3426 = vunpack.c.h.b16 %v663
        %v3427 = vunpack.c.l.b16 %v664
        %v3428 = vunpack.c.h.b16 %v664
        %v3429 = vunpack.c.l.b16 %v665
        %v3430 = vunpack.c.h.b16 %v665
        %v3431 = vunpack.c.l.b16 %v666
        %v3432 = vunpack.c.h.b16 %v666
        %v3433 = vunpack.c.l.b16 %v667
        %v3434 = vunpack.c.h.b16 %v667
        %v3435 = vunpack.c.l.b16 %v668
        %v3436 = vunpack.c.h.b16 %v668
        %v3437 = vunpack.c.l.b16 %v669
        %v3438 = vunpack.c.h.b16 %v669
        %v3439 = vunpack.c.l.b16 %v670
        %v3440 = vunpack.c.h.b16 %v670
        %v3441 = vunpack.c.l.b16 %v671
        %v3442 = vunpack.c.h.b16 %v671
        %v3443 = vunpack.c.l.b16 %v672
        %v3444 = vunpack.c.h.b16 %v672
        %v3445 = vunpack.c.l.b16 %v673
        %v3446 = vunpack.c.h.b16 %v673
        %v3447 = vunpack.c.l.b16 %v674
        %v3448 = vunpack.c.h.b16 %v674
        %v3449 = vunpack.c.l.b16 %v675
        %v3450 = vunpack.c.h.b16 %v675
        %v3451 = vunpack.c.l.b16 %v676
        %v3452 = vunpack.c.h.b16 %v676
        %v3453 = vunpack.c.l.b16 %v677
        %v3454 = vunpack.c.h.b16 %v677
        %v3455 = vunpack.c.l.b16 %v678
        %v3456 = vunpack.c.h.b16 %v678
        %v3457 = vunpack.c.l.b16 %v679
        %v3458 = vunpack.c.h.b16 %v679
        %v3459 = vunpack.c.l.b16 %v680
        %v3460 = vunpack.c.h.b16 %v680
        %v3461 = vunpack.c.l.b16 %v681
        %v3462 = vunpack.c.h.b16 %v681
        %v3463 = vunpack.c.l.b16 %v682
        %v3464 = vunpack.c.h.b16 %v682
        %v3465 = vunpack.c.l.b16 %v683
        %v3466 = vunpack.c.h.b16 %v683
        %v3467 = vunpack.c.l.b16 %v684
        %v3468 = vunpack.c.h.b16 %v684
        %v3469 = vunpack.c.l.b16 %v685
        %v3470 = vunpack.c.h.b16 %v685
        %v3471 = vunpack.c.l.b16 %v686
        %v3472 = vunpack.c.h.b16 %v686
        %v3473 = vunpack.c.l.b16 %v687
        %v3474 = vunpack.c.h.b16 %v687
        %v3475 = vunpack.c.l.b16 %v688
        %v3476 = vunpack.c.h.b16 %v688
        %v3477 = vunpack.c.l.b16 %v689
        %v3478 = vunpack.c.h.b16 %v689
        %v3479 = vunpack.c.l.b16 %v690
        %v3480 = vunpack.c.h.b16 %v690
        %v3481 = vunpack.c.l.b16 %v691
        %v3482 = vunpack.c.h.b16 %v691
        %v3483 = vunpack.c.l.b16 %v692
        %v3484 = vunpack.c.h.b16 %v692
        %v3485 = vunpack.c.l.b16 %v693
        %v3486 = vunpack.c.h.b16 %v693
        %v3487 = vunpack.c.l.b16 %v694
        %v3488 = vunpack.c.h.b16 %v694
        %v3489 = vunpack.c.l.b16 %v695
        %v3490 = vunpack.c.h.b16 %v695
        %v3491 = vunpack.c.l.b16 %v696
        %v3492 = vunpack.c.h.b16 %v696
        %v3493 = vunpack.c.l.b16 %v697
        %v3494 = vunpack.c.h.b16 %v697
        %v3495 = vunpack.c.l.b16 %v698
        %v3496 = vunpack.c.h.b16 %v698
        %v3497 = vunpack.c.l.b16 %v699
        %v3498 = vunpack.c.h.b16 %v699
        %v3499 = vunpack.c.l.b16 %v700
        %v3500 = vunpack.c.h.b16 %v700
        %v3501 = vunpack.c.l.b16 %v701
        %v3502 = vunpack.c.h.b16 %v701
        %v3503 = vunpack.c.l.b16 %v702
        %v3504 = vunpack.c.h.b16 %v702
        %v3505 = vunpack.c.l.b16 %v703
        %v3506 = vunpack.c.h.b16 %v703
        %v3507 = vunpack.c.l.b16 %v704
        %v3508 = vunpack.c.h.b16 %v704
        %v3509 = vunpack.c.l.b16 %v705
        %v3510 = vunpack.c.h.b16 %v705
        %v3511 = vunpack.c.l.b16 %v706
        %v3512 = vunpack.c.h.b16 %v706
        %v3513 = vunpack.c.l.b16 %v707
        %v3514 = vunpack.c.h.b16 %v707
        %v3515 = vunpack.c.l.b16 %v708
        %v3516 = vunpack.c.h.b16 %v708
        %v3517 = vunpack.c.l.b16 %v709
        %v3518 = vunpack.c.h.b16 %v709
        %v3519 = vunpack.c.l.b16 %v710
        %v3520 = vunpack.c.h.b16 %v710
        %v3521 = vunpack.c.l.b16 %v711
        %v3522 = vunpack.c.h.b16 %v711
        %v3523 = vunpack.c.l.b16 %v712
        %v3524 = vunpack.c.h.b16 %v712
        %v3525 = vunpack.c.l.b16 %v713
        %v3526 = vunpack.c.h.b16 %v713
        %v3527 = vunpack.c.l.b16 %v714
        %v3528 = vunpack.c.h.b16 %v714
        %v3529 = vunpack.c.l.b16 %v715
        %v3530 = vunpack.c.h.b16 %v715
        %v3531 = vunpack.c.l.b16 %v716
        %v3532 = vunpack.c.h.b16 %v716
        %v3533 = vunpack.c.l.b16 %v717
        %v3534 = vunpack.c.h.b16 %v717
        %v3535 = vunpack.c.l.b16 %v718
        %v3536 = vunpack.c.h.b16 %v718
        %v3537 = vunpack.c.l.b16 %v719
        %v3538 = vunpack.c.h.b16 %v719
        %v3539 = vunpack.c.l.b16 %v720
        %v3540 = vunpack.c.h.b16 %v720
        %v3541 = vunpack.c.l.b16 %v721
        %v3542 = vunpack.c.h.b16 %v721
        %v3543 = vunpack.c.l.b16 %v722
        %v3544 = vunpack.c.h.b16 %v722
        %v3545 = vunpack.c.l.b16 %v723
        %v3546 = vunpack.c.h.b16 %v723
        %v3547 = vunpack.c.l.b16 %v724
        %v3548 = vunpack.c.h.b16 %v724
        %v3549 = vunpack.c.l.b16 %v725
        %v3550 = vunpack.c.h.b16 %v725
        %v3551 = vunpack.c.l.b16 %v726
        %v3552 = vunpack.c.h.b16 %v726
        %v3553 = vunpack.c.l.b16 %v727
        %v3554 = vunpack.c.h.b16 %v727
        %v3555 = vunpack.c.l.b16 %v728
        %v3556 = vunpack.c.h.b16 %v728
        %v3557 = vunpack.c.l.b16 %v729
        %v3558 = vunpack.c.h.b16 %v729
        %v3559 = vunpack.c.l.b16 %v730
        %v3560 = vunpack.c.h.b16 %v730
        %v3561 = vunpack.c.l.b16 %v731
        %v3562 = vunpack.c.h.b16 %v731
        %v3563 = vunpack.c.l.b16 %v732
        %v3564 = vunpack.c.h.b16 %v732
        %v3565 = vunpack.c.l.b16 %v733
        %v3566 = vunpack.c.h.b16 %v733
        %v3567 = vunpack.c.l.b16 %v734
        %v3568 = vunpack.c.h.b16 %v734
        %v3569 = vunpack.c.l.b16 %v735
        %v3570 = vunpack.c.h.b16 %v735
        %v3571 = vunpack.c.l.b16 %v736
        %v3572 = vunpack.c.h.b16 %v736
        %v3573 = vunpack.c.l.b16 %v737
        %v3574 = vunpack.c.h.b16 %v737
        %v3575 = vunpack.c.l.b16 %v738
        %v3576 = vunpack.c.h.b16 %v738
        %v3577 = vunpack.c.l.b16 %v739
        %v3578 = vunpack.c.h.b16 %v739
        %v3579 = vunpack.c.l.b16 %v740
        %v3580 = vunpack.c.h.b16 %v740
        %v3581 = vunpack.c.l.b16 %v741
        %v3582 = vunpack.c.h.b16 %v741
        %v3583 = vunpack.c.l.b16 %v742
        %v3584 = vunpack.c.h.b16 %v742
        %v3585 = vunpack.c.l.b16 %v743
        %v3586 = vunpack.c.h.b16 %v743
        %v3587 = vunpack.c.l.b16 %v744
        %v3588 = vunpack.c.h.b16 %v744
        %v3589 = vunpack.c.l.b16 %v745
        %v3590 = vunpack.c.h.b16 %v745
        %v3591 = vunpack.c.l.b16 %v746
        %v3592 = vunpack.c.h.b16 %v746
        %v3593 = vunpack.c.l.b16 %v747
        %v3594 = vunpack.c.h.b16 %v747
        %v3595 = vunpack.c.l.b16 %v748
        %v3596 = vunpack.c.h.b16 %v748
        %v3597 = vunpack.c.l.b16 %v749
        %v3598 = vunpack.c.h.b16 %v749
        %v3599 = vunpack.c.l.b16 %v750
        %v3600 = vunpack.c.h.b16 %v750
        %v3601 = vunpack.c.l.b16 %v751
        %v3602 = vunpack.c.h.b16 %v751
        %v3603 = vunpack.c.l.b16 %v752
        %v3604 = vunpack.c.h.b16 %v752
        %v3605 = vunpack.c.l.b16 %v753
        %v3606 = vunpack.c.h.b16 %v753
        %v3607 = vunpack.c.l.b16 %v754
        %v3608 = vunpack.c.h.b16 %v754
        %v3609 = vunpack.c.l.b16 %v755
        %v3610 = vunpack.c.h.b16 %v755
        %v3611 = vunpack.c.l.b16 %v756
        %v3612 = vunpack.c.h.b16 %v756
        %v3613 = vunpack.c.l.b16 %v757
        %v3614 = vunpack.c.h.b16 %v757
        %v3615 = vunpack.c.l.b16 %v758
        %v3616 = vunpack.c.h.b16 %v758
        %v3617 = vunpack.c.l.b16 %v759
        %v3618 = vunpack.c.h.b16 %v759
        %v3619 = vunpack.c.l.b16 %v760
        %v3620 = vunpack.c.h.b16 %v760
        %v3621 = vunpack.c.l.b16 %v761
        %v3622 = vunpack.c.h.b16 %v761
        %v3623 = vunpack.c.l.b16 %v762
        %v3624 = vunpack.c.h.b16 %v762
        %v3625 = vunpack.c.l.b16 %v763
        %v3626 = vunpack.c.h.b16 %v763
        %v3627 = vunpack.c.l.b16 %v764
        %v3628 = vunpack.c.h.b16 %v764
        %v3629 = vunpack.c.l.b16 %v765
        %v3630 = vunpack.c.h.b16 %v765
        %v3631 = vunpack.c.l.b16 %v766
        %v3632 = vunpack.c.h.b16 %v766
        %v3633 = vunpack.c.l.b16 %v767
        %v3634 = vunpack.c.h.b16 %v767
        %v3635 = vunpack.c.l.b16 %v768
        %v3636 = vunpack.c.h.b16 %v768
        %v3637 = vunpack.c.l.b16 %v769
        %v3638 = vunpack.c.h.b16 %v769
        %v3639 = vunpack.c.l.b16 %v770
        %v3640 = vunpack.c.h.b16 %v770
        %v3641 = vunpack.c.l.b16 %v771
        %v3642 = vunpack.c.h.b16 %v771
        %v3643 = vunpack.c.l.b16 %v772
        %v3644 = vunpack.c.h.b16 %v772
        %v3645 = vunpack.c.l.b16 %v773
        %v3646 = vunpack.c.h.b16 %v773
        %v3647 = vunpack.c.l.b16 %v774
        %v3648 = vunpack.c.h.b16 %v774
        %v3649 = vunpack.c.l.b16 %v775
        %v3650 = vunpack.c.h.b16 %v775
        %v3651 = vunpack.c.l.b16 %v776
        %v3652 = vunpack.c.h.b16 %v776
        %v3653 = vunpack.c.l.b16 %v777
        %v3654 = vunpack.c.h.b16 %v777
        %v3655 = vunpack.c.l.b16 %v778
        %v3656 = vunpack.c.h.b16 %v778
        %v3657 = vunpack.c.l.b16 %v779
        %v3658 = vunpack.c.h.b16 %v779
        %v3659 = vunpack.c.l.b16 %v780
        %v3660 = vunpack.c.h.b16 %v780
        %v3661 = vunpack.c.l.b16 %v781
        %v3662 = vunpack.c.h.b16 %v781
        %v3663 = vunpack.c.l.b16 %v782
        %v3664 = vunpack.c.h.b16 %v782
        %v3665 = vunpack.c.l.b16 %v783
        %v3666 = vunpack.c.h.b16 %v783
        %v3667 = vunpack.c.l.b16 %v784
        %v3668 = vunpack.c.h.b16 %v784
        %v3669 = vunpack.c.l.b16 %v785
        %v3670 = vunpack.c.h.b16 %v785
        %v3671 = vunpack.c.l.b16 %v786
        %v3672 = vunpack.c.h.b16 %v786
        %v3673 = vunpack.c.l.b16 %v787
        %v3674 = vunpack.c.h.b16 %v787
        %v3675 = vunpack.c.l.b16 %v788
        %v3676 = vunpack.c.h.b16 %v788
        %v3677 = vunpack.c.l.b16 %v789
        %v3678 = vunpack.c.h.b16 %v789
        %v3679 = vunpack.c.l.b16 %v790
        %v3680 = vunpack.c.h.b16 %v790
        %v3681 = vunpack.c.l.b16 %v791
        %v3682 = vunpack.c.h.b16 %v791
        %v3683 = vunpack.c.l.b16 %v792
        %v3684 = vunpack.c.h.b16 %v792
        %v3685 = vunpack.c.l.b16 %v793
        %v3686 = vunpack.c.h.b16 %v793
        %v3687 = vunpack.c.l.b16 %v794
        %v3688 = vunpack.c.h.b16 %v794
        %v3689 = vunpack.c.l.b16 %v795
        %v3690 = vunpack.c.h.b16 %v795
        %v3691 = vunpack.c.l.b16 %v796
        %v3692 = vunpack.c.h.b16 %v796
        %v3693 = vunpack.c.l.b16 %v797
        %v3694 = vunpack.c.h.b16 %v797
        %v3695 = vunpack.c.l.b16 %v798
        %v3696 = vunpack.c.h.b16 %v798
        %v3697 = vunpack.c.l.b16 %v799
        %v3698 = vunpack.c.h.b16 %v799
        %v3699 = vunpack.c.l.b16 %v800
        %v3700 = vunpack.c.h.b16 %v800
        %v3701 = vunpack.c.l.b16 %v801
        %v3702 = vunpack.c.h.b16 %v801
        %v3703 = vunpack.c.l.b16 %v802
        %v3704 = vunpack.c.h.b16 %v802
        %v3705 = vunpack.c.l.b16 %v803
        %v3706 = vunpack.c.h.b16 %v803
        %v3707 = vunpack.c.l.b16 %v804
        %v3708 = vunpack.c.h.b16 %v804
        %v3709 = vunpack.c.l.b16 %v805
        %v3710 = vunpack.c.h.b16 %v805
        %v3711 = vunpack.c.l.b16 %v806
        %v3712 = vunpack.c.h.b16 %v806
        %v3713 = vunpack.c.l.b16 %v807
        %v3714 = vunpack.c.h.b16 %v807
        %v3715 = vunpack.c.l.b16 %v808
        %v3716 = vunpack.c.h.b16 %v808
        %v3717 = vunpack.c.l.b16 %v809
        %v3718 = vunpack.c.h.b16 %v809
        %v3719 = vunpack.c.l.b16 %v810
        %v3720 = vunpack.c.h.b16 %v810
        %v3721 = vunpack.c.l.b16 %v811
        %v3722 = vunpack.c.h.b16 %v811
        %v3723 = vunpack.c.l.b16 %v812
        %v3724 = vunpack.c.h.b16 %v812
        %v3725 = vunpack.c.l.b16 %v813
        %v3726 = vunpack.c.h.b16 %v813
        %v3727 = vunpack.c.l.b16 %v814
        %v3728 = vunpack.c.h.b16 %v814
        %v3729 = vunpack.c.l.b16 %v815
        %v3730 = vunpack.c.h.b16 %v815
        %v3731 = vunpack.c.l.b16 %v816
        %v3732 = vunpack.c.h.b16 %v816
        %v3733 = vunpack.c.l.b16 %v817
        %v3734 = vunpack.c.h.b16 %v817
        %v3735 = vunpack.c.l.b16 %v818
        %v3736 = vunpack.c.h.b16 %v818
        %v3737 = vunpack.c.l.b16 %v819
        %v3738 = vunpack.c.h.b16 %v819
        %v3739 = vunpack.c.l.b16 %v820
        %v3740 = vunpack.c.h.b16 %v820
        %v3741 = vunpack.c.l.b16 %v821
        %v3742 = vunpack.c.h.b16 %v821
        %v3743 = vunpack.c.l.b16 %v822
        %v3744 = vunpack.c.h.b16 %v822
        %v3745 = vunpack.c.l.b16 %v823
        %v3746 = vunpack.c.h.b16 %v823
        %v3747 = vunpack.c.l.b16 %v824
        %v3748 = vunpack.c.h.b16 %v824
        %v3749 = vunpack.c.l.b16 %v825
        %v3750 = vunpack.c.h.b16 %v825
        %v3751 = vunpack.c.l.b16 %v826
        %v3752 = vunpack.c.h.b16 %v826
        %v3753 = vunpack.c.l.b16 %v827
        %v3754 = vunpack.c.h.b16 %v827
        %v3755 = vunpack.c.l.b16 %v828
        %v3756 = vunpack.c.h.b16 %v828
        %v3757 = vunpack.c.l.b16 %v829
        %v3758 = vunpack.c.h.b16 %v829
        %v3759 = vunpack.c.l.b16 %v830
        %v3760 = vunpack.c.h.b16 %v830
        %v3761 = vunpack.c.l.b16 %v831
        %v3762 = vunpack.c.h.b16 %v831
        %v3763 = vunpack.c.l.b16 %v832
        %v3764 = vunpack.c.h.b16 %v832
        %v3765 = vunpack.c.l.b16 %v833
        %v3766 = vunpack.c.h.b16 %v833
        %v3767 = vunpack.c.l.b16 %v834
        %v3768 = vunpack.c.h.b16 %v834
        %v3769 = vunpack.c.l.b16 %v835
        %v3770 = vunpack.c.h.b16 %v835
        %v3771 = vunpack.c.l.b16 %v836
        %v3772 = vunpack.c.h.b16 %v836
        %v3773 = vunpack.c.l.b16 %v837
        %v3774 = vunpack.c.h.b16 %v837
        %v3775 = vunpack.c.l.b16 %v838
        %v3776 = vunpack.c.h.b16 %v838
        %v3777 = vunpack.c.l.b16 %v839
        %v3778 = vunpack.c.h.b16 %v839
        %v3779 = vunpack.c.l.b16 %v840
        %v3780 = vunpack.c.h.b16 %v840
        %v3781 = vunpack.c.l.b16 %v841
        %v3782 = vunpack.c.h.b16 %v841
        %v3783 = vunpack.c.l.b16 %v842
        %v3784 = vunpack.c.h.b16 %v842
        %v3785 = vunpack.c.l.b16 %v843
        %v3786 = vunpack.c.h.b16 %v843
        %v3787 = vunpack.c.l.b16 %v844
        %v3788 = vunpack.c.h.b16 %v844
        %v3789 = vunpack.c.l.b16 %v845
        %v3790 = vunpack.c.h.b16 %v845
        %v3791 = vunpack.c.l.b16 %v846
        %v3792 = vunpack.c.h.b16 %v846
        %v3793 = vunpack.c.l.b16 %v847
        %v3794 = vunpack.c.h.b16 %v847
        %v3795 = vunpack.c.l.b16 %v848
        %v3796 = vunpack.c.h.b16 %v848
        %v3797 = vunpack.c.l.b16 %v849
        %v3798 = vunpack.c.h.b16 %v849
        %v3799 = vunpack.c.l.b16 %v850
        %v3800 = vunpack.c.h.b16 %v850
        %v3801 = vunpack.c.l.b16 %v851
        %v3802 = vunpack.c.h.b16 %v851
        %v3803 = vunpack.c.l.b16 %v852
        %v3804 = vunpack.c.h.b16 %v852
        %v3805 = vunpack.c.l.b16 %v853
        %v3806 = vunpack.c.h.b16 %v853
        %v3807 = vunpack.c.l.b16 %v854
        %v3808 = vunpack.c.h.b16 %v854
        %v3809 = vunpack.c.l.b16 %v855
        %v3810 = vunpack.c.h.b16 %v855
        %v3811 = vunpack.c.l.b16 %v856
        %v3812 = vunpack.c.h.b16 %v856
        %v3813 = vunpack.c.l.b16 %v857
        %v3814 = vunpack.c.h.b16 %v857
        %v3815 = vunpack.c.l.b16 %v858
        %v3816 = vunpack.c.h.b16 %v858
        %v3817 = vunpack.c.l.b16 %v859
        %v3818 = vunpack.c.h.b16 %v859
        %v3819 = vunpack.c.l.b16 %v860
        %v3820 = vunpack.c.h.b16 %v860
        %v3821 = vunpack.c.l.b16 %v861
        %v3822 = vunpack.c.h.b16 %v861
        %v3823 = vunpack.c.l.b16 %v862
        %v3824 = vunpack.c.h.b16 %v862
        %v3825 = vunpack.c.l.b16 %v863
        %v3826 = vunpack.c.h.b16 %v863
        %v3827 = vunpack.c.l.b16 %v864
        %v3828 = vunpack.c.h.b16 %v864
        %v3829 = vunpack.c.l.b16 %v865
        %v3830 = vunpack.c.h.b16 %v865
        %v3831 = vunpack.c.l.b16 %v866
        %v3832 = vunpack.c.h.b16 %v866
        %v3833 = vunpack.c.l.b16 %v867
        %v3834 = vunpack.c.h.b16 %v867
        %v3835 = vunpack.c.l.b16 %v868
        %v3836 = vunpack.c.h.b16 %v868
        %v3837 = vunpack.c.l.b16 %v869
        %v3838 = vunpack.c.h.b16 %v869
        %v3839 = vunpack.c.l.b16 %v870
        %v3840 = vunpack.c.h.b16 %v870
        %v3841 = vunpack.c.l.b16 %v871
        %v3842 = vunpack.c.h.b16 %v871
        %v3843 = vunpack.c.l.b16 %v872
        %v3844 = vunpack.c.h.b16 %v872
        %v3845 = vunpack.c.l.b16 %v873
        %v3846 = vunpack.c.h.b16 %v873
        %v3847 = vunpack.c.l.b16 %v874
        %v3848 = vunpack.c.h.b16 %v874
        %v3849 = vunpack.c.l.b16 %v875
        %v3850 = vunpack.c.h.b16 %v875
        %v3851 = vunpack.c.l.b16 %v876
        %v3852 = vunpack.c.h.b16 %v876
        %v3853 = vunpack.c.l.b16 %v877
        %v3854 = vunpack.c.h.b16 %v877
        %v3855 = vunpack.c.l.b16 %v878
        %v3856 = vunpack.c.h.b16 %v878
        %v3857 = vunpack.c.l.b16 %v879
        %v3858 = vunpack.c.h.b16 %v879
        %v3859 = vunpack.c.l.b16 %v880
        %v3860 = vunpack.c.h.b16 %v880
        %v3861 = vunpack.c.l.b16 %v881
        %v3862 = vunpack.c.h.b16 %v881
        %v3863 = vunpack.c.l.b16 %v882
        %v3864 = vunpack.c.h.b16 %v882
        %v3865 = vunpack.c.l.b16 %v883
        %v3866 = vunpack.c.h.b16 %v883
        %v3867 = vunpack.c.l.b16 %v884
        %v3868 = vunpack.c.h.b16 %v884
        %v3869 = vunpack.c.l.b16 %v885
        %v3870 = vunpack.c.h.b16 %v885
        %v3871 = vunpack.c.l.b16 %v886
        %v3872 = vunpack.c.h.b16 %v886
        %v3873 = vunpack.c.l.b16 %v887
        %v3874 = vunpack.c.h.b16 %v887
        %v3875 = vunpack.c.l.b16 %v888
        %v3876 = vunpack.c.h.b16 %v888
        %v3877 = vunpack.c.l.b16 %v889
        %v3878 = vunpack.c.h.b16 %v889
        %v3879 = vunpack.c.l.b16 %v890
        %v3880 = vunpack.c.h.b16 %v890
        %v3881 = vunpack.c.l.b16 %v891
        %v3882 = vunpack.c.h.b16 %v891
        %v3883 = vunpack.c.l.b16 %v892
        %v3884 = vunpack.c.h.b16 %v892
        %v3885 = vunpack.c.l.b16 %v893
        %v3886 = vunpack.c.h.b16 %v893
        %v3887 = vunpack.c.l.b16 %v894
        %v3888 = vunpack.c.h.b16 %v894
        %v3889 = vunpack.c.l.b16 %v895
        %v3890 = vunpack.c.h.b16 %v895
        %v3891 = vunpack.c.l.b16 %v896
        %v3892 = vunpack.c.h.b16 %v896
        %v3893 = vunpack.c.l.b16 %v897
        %v3894 = vunpack.c.h.b16 %v897
        %v3895 = vunpack.c.l.b16 %v898
        %v3896 = vunpack.c.h.b16 %v898
        %v3897 = vunpack.c.l.b16 %v899
        %v3898 = vunpack.c.h.b16 %v899
        %v3899 = vunpack.c.l.b16 %v900
        %v3900 = vunpack.c.h.b16 %v900
        %v3901 = vunpack.c.l.b16 %v901
        %v3902 = vunpack.c.h.b16 %v901
        %v3903 = vunpack.c.l.b16 %v902
        %v3904 = vunpack.c.h.b16 %v902
        %v3905 = vunpack.c.l.b16 %v903
        %v3906 = vunpack.c.h.b16 %v903
        %v3907 = vunpack.c.l.b16 %v904
        %v3908 = vunpack.c.h.b16 %v904
        %v3909 = vunpack.c.l.b16 %v905
        %v3910 = vunpack.c.h.b16 %v905
        %v3911 = vunpack.c.l.b16 %v906
        %v3912 = vunpack.c.h.b16 %v906
        %v3913 = vunpack.c.l.b16 %v907
        %v3914 = vunpack.c.h.b16 %v907
        %v3915 = vunpack.c.l.b16 %v908
        %v3916 = vunpack.c.h.b16 %v908
        %v3917 = vunpack.c.l.b16 %v909
        %v3918 = vunpack.c.h.b16 %v909
        %v3919 = vunpack.c.l.b16 %v910
        %v3920 = vunpack.c.h.b16 %v910
        %v3921 = vunpack.c.l.b16 %v911
        %v3922 = vunpack.c.h.b16 %v911
        %v3923 = vunpack.c.l.b16 %v912
        %v3924 = vunpack.c.h.b16 %v912
        %v3925 = vunpack.c.l.b16 %v913
        %v3926 = vunpack.c.h.b16 %v913
        %v3927 = vunpack.c.l.b16 %v914
        %v3928 = vunpack.c.h.b16 %v914
        %v3929 = vunpack.c.l.b16 %v915
        %v3930 = vunpack.c.h.b16 %v915
        %v3931 = vunpack.c.l.b16 %v916
        %v3932 = vunpack.c.h.b16 %v916
        %v3933 = vunpack.c.l.b16 %v917
        %v3934 = vunpack.c.h.b16 %v917
        %v3935 = vunpack.c.l.b16 %v918
        %v3936 = vunpack.c.h.b16 %v918
        %v3937 = vunpack.c.l.b16 %v919
        %v3938 = vunpack.c.h.b16 %v919
        %v3939 = vunpack.c.l.b16 %v920
        %v3940 = vunpack.c.h.b16 %v920
        %v3941 = vunpack.c.l.b16 %v921
        %v3942 = vunpack.c.h.b16 %v921
        %v3943 = vunpack.c.l.b16 %v922
        %v3944 = vunpack.c.h.b16 %v922
        %v3945 = vunpack.c.l.b16 %v923
        %v3946 = vunpack.c.h.b16 %v923
        %v3947 = vunpack.c.l.b16 %v924
        %v3948 = vunpack.c.h.b16 %v924
        %v3949 = vunpack.c.l.b16 %v925
        %v3950 = vunpack.c.h.b16 %v925
        %v3951 = vunpack.c.l.b16 %v926
        %v3952 = vunpack.c.h.b16 %v926
        %v3953 = vunpack.c.l.b16 %v927
        %v3954 = vunpack.c.h.b16 %v927
        %v3955 = vunpack.c.l.b16 %v928
        %v3956 = vunpack.c.h.b16 %v928
        %v3957 = vunpack.c.l.b16 %v929
        %v3958 = vunpack.c.h.b16 %v929
        %v3959 = vunpack.c.l.b16 %v930
        %v3960 = vunpack.c.h.b16 %v930
        %v3961 = vunpack.c.l.b16 %v931
        %v3962 = vunpack.c.h.b16 %v931
        %v3963 = vunpack.c.l.b16 %v932
        %v3964 = vunpack.c.h.b16 %v932
        %v3965 = vunpack.c.l.b16 %v933
        %v3966 = vunpack.c.h.b16 %v933
        %v3967 = vunpack.c.l.b16 %v934
        %v3968 = vunpack.c.h.b16 %v934
        %v3969 = vunpack.c.l.b16 %v935
        %v3970 = vunpack.c.h.b16 %v935
        %v3971 = vunpack.c.l.b16 %v936
        %v3972 = vunpack.c.h.b16 %v936
        %v3973 = vunpack.c.l.b16 %v937
        %v3974 = vunpack.c.h.b16 %v937
        %v3975 = vunpack.c.l.b16 %v938
        %v3976 = vunpack.c.h.b16 %v938
        %v3977 = vunpack.c.l.b16 %v939
        %v3978 = vunpack.c.h.b16 %v939
        %v3979 = vunpack.c.l.b16 %v940
        %v3980 = vunpack.c.h.b16 %v940
        %v3981 = vunpack.c.l.b16 %v941
        %v3982 = vunpack.c.h.b16 %v941
        %v3983 = vunpack.c.l.b16 %v942
        %v3984 = vunpack.c.h.b16 %v942
        %v3985 = vunpack.c.l.b16 %v943
        %v3986 = vunpack.c.h.b16 %v943
        %v3987 = vunpack.c.l.b16 %v944
        %v3988 = vunpack.c.h.b16 %v944
        %v3989 = vunpack.c.l.b16 %v945
        %v3990 = vunpack.c.h.b16 %v945
        %v3991 = vunpack.c.l.b16 %v946
        %v3992 = vunpack.c.h.b16 %v946
        %v3993 = vunpack.c.l.b16 %v947
        %v3994 = vunpack.c.h.b16 %v947
        %v3995 = vunpack.c.l.b16 %v948
        %v3996 = vunpack.c.h.b16 %v948
        %v3997 = vunpack.c.l.b16 %v949
        %v3998 = vunpack.c.h.b16 %v949
        %v3999 = vunpack.c.l.b16 %v950
        %v4000 = vunpack.c.h.b16 %v950
        %v4001 = vunpack.c.l.b16 %v951
        %v4002 = vunpack.c.h.b16 %v951
        %v4003 = vunpack.c.l.b16 %v952
        %v4004 = vunpack.c.h.b16 %v952
        %v4005 = vunpack.c.l.b16 %v953
        %v4006 = vunpack.c.h.b16 %v953
        %v4007 = vunpack.c.l.b16 %v954
        %v4008 = vunpack.c.h.b16 %v954
        %v4009 = vunpack.c.l.b16 %v955
        %v4010 = vunpack.c.h.b16 %v955
        %v4011 = vunpack.c.l.b16 %v956
        %v4012 = vunpack.c.h.b16 %v956
        %v4013 = vunpack.c.l.b16 %v957
        %v4014 = vunpack.c.h.b16 %v957
        %v4015 = vunpack.c.l.b16 %v958
        %v4016 = vunpack.c.h.b16 %v958
        %v4017 = vunpack.c.l.b16 %v959
        %v4018 = vunpack.c.h.b16 %v959
        %v4019 = vunpack.c.l.b16 %v960
        %v4020 = vunpack.c.h.b16 %v960
        %v4021 = vunpack.c.l.b16 %v961
        %v4022 = vunpack.c.h.b16 %v961
        %v4023 = vunpack.c.l.b16 %v962
        %v4024 = vunpack.c.h.b16 %v962
        %v4025 = vunpack.c.l.b16 %v963
        %v4026 = vunpack.c.h.b16 %v963
        %v4027 = vunpack.c.l.b16 %v964
        %v4028 = vunpack.c.h.b16 %v964
        %v4029 = vunpack.c.l.b16 %v965
        %v4030 = vunpack.c.h.b16 %v965
        %v4031 = vunpack.c.l.b16 %v966
        %v4032 = vunpack.c.h.b16 %v966
        %v4033 = vunpack.c.l.b16 %v967
        %v4034 = vunpack.c.h.b16 %v967
        %v4035 = vunpack.c.l.b16 %v968
        %v4036 = vunpack.c.h.b16 %v968
        %v4037 = vunpack.c.l.b16 %v969
        %v4038 = vunpack.c.h.b16 %v969
        %v4039 = vunpack.c.l.b16 %v970
        %v4040 = vunpack.c.h.b16 %v970
        %v4041 = vunpack.c.l.b16 %v971
        %v4042 = vunpack.c.h.b16 %v971
        %v4043 = vunpack.c.l.b16 %v972
        %v4044 = vunpack.c.h.b16 %v972
        %v4045 = vunpack.c.l.b16 %v973
        %v4046 = vunpack.c.h.b16 %v973
        %v4047 = vunpack.c.l.b16 %v974
        %v4048 = vunpack.c.h.b16 %v974
        %v4049 = vunpack.c.l.b16 %v975
        %v4050 = vunpack.c.h.b16 %v975
        %v4051 = vunpack.c.l.b16 %v976
        %v4052 = vunpack.c.h.b16 %v976
        %v4053 = vunpack.c.l.b16 %v977
        %v4054 = vunpack.c.h.b16 %v977
        %v4055 = vunpack.c.l.b16 %v978
        %v4056 = vunpack.c.h.b16 %v978
        %v4057 = vunpack.c.l.b16 %v979
        %v4058 = vunpack.c.h.b16 %v979
        %v4059 = vunpack.c.l.b16 %v980
        %v4060 = vunpack.c.h.b16 %v980
        %v4061 = vunpack.c.l.b16 %v981
        %v4062 = vunpack.c.h.b16 %v981
        %v4063 = vunpack.c.l.b16 %v982
        %v4064 = vunpack.c.h.b16 %v982
        %v4065 = vunpack.c.l.b16 %v983
        %v4066 = vunpack.c.h.b16 %v983
        %v4067 = vunpack.c.l.b16 %v984
        %v4068 = vunpack.c.h.b16 %v984
        %v4069 = vunpack.c.l.b16 %v985
        %v4070 = vunpack.c.h.b16 %v985
        %v4071 = vunpack.c.l.b16 %v986
        %v4072 = vunpack.c.h.b16 %v986
        %v4073 = vunpack.c.l.b16 %v987
        %v4074 = vunpack.c.h.b16 %v987
        %v4075 = vunpack.c.l.b16 %v988
        %v4076 = vunpack.c.h.b16 %v988
        %v4077 = vunpack.c.l.b16 %v989
        %v4078 = vunpack.c.h.b16 %v989
        %v4079 = vunpack.c.l.b16 %v990
        %v4080 = vunpack.c.h.b16 %v990
        %v4081 = vunpack.c.l.b16 %v991
        %v4082 = vunpack.c.h.b16 %v991
        %v4083 = vunpack.c.l.b16 %v992
        %v4084 = vunpack.c.h.b16 %v992
        %v4085 = vunpack.c.l.b16 %v993
        %v4086 = vunpack.c.h.b16 %v993
        %v4087 = vunpack.c.l.b16 %v994
        %v4088 = vunpack.c.h.b16 %v994
        %v4089 = vunpack.c.l.b16 %v995
        %v4090 = vunpack.c.h.b16 %v995
        %v4091 = vunpack.c.l.b16 %v996
        %v4092 = vunpack.c.h.b16 %v996
        %v4093 = vunpack.c.l.b16 %v997
        %v4094 = vunpack.c.h.b16 %v997
        %v4095 = vunpack.c.l.b16 %v998
        %v4096 = vunpack.c.h.b16 %v998
        %v4097 = vunpack.c.l.b16 %v999
        %v4098 = vunpack.c.h.b16 %v999
        %v4099 = vunpack.c.l.b16 %v1000
        %v4100 = vunpack.c.h.b16 %v1000
        %v4101 = vunpack.c.l.b16 %v1001
        %v4102 = vunpack.c.h.b16 %v1001
        %v4103 = vunpack.c.l.b16 %v1002
        %v4104 = vunpack.c.h.b16 %v1002
        %v4105 = vunpack.c.l.b16 %v1003
        %v4106 = vunpack.c.h.b16 %v1003
        %v4107 = vunpack.c.l.b16 %v1004
        %v4108 = vunpack.c.h.b16 %v1004
        %v4109 = vunpack.c.l.b16 %v1005
        %v4110 = vunpack.c.h.b16 %v1005
        %v4111 = vunpack.c.l.b16 %v1006
        %v4112 = vunpack.c.h.b16 %v1006
        %v4113 = vunpack.c.l.b16 %v1007
        %v4114 = vunpack.c.h.b16 %v1007
        %v4115 = vunpack.c.l.b16 %v1008
        %v4116 = vunpack.c.h.b16 %v1008
        %v4117 = vunpack.c.l.b16 %v1009
        %v4118 = vunpack.c.h.b16 %v1009
        %v4119 = vunpack.c.l.b16 %v1010
        %v4120 = vunpack.c.h.b16 %v1010
        %v4121 = vunpack.c.l.b16 %v1011
        %v4122 = vunpack.c.h.b16 %v1011
        %v4123 = vunpack.c.l.b16 %v1012
        %v4124 = vunpack.c.h.b16 %v1012
        %v4125 = vunpack.c.l.b16 %v1013
        %v4126 = vunpack.c.h.b16 %v1013
        %v4127 = vunpack.c.l.b16 %v1014
        %v4128 = vunpack.c.h.b16 %v1014
        %v4129 = vunpack.c.l.b16 %v1015
        %v4130 = vunpack.c.h.b16 %v1015
        %v4131 = vunpack.c.l.b16 %v1016
        %v4132 = vunpack.c.h.b16 %v1016
        %v4133 = vunpack.c.l.b16 %v1017
        %v4134 = vunpack.c.h.b16 %v1017
        %v4135 = vunpack.c.l.b16 %v1018
        %v4136 = vunpack.c.h.b16 %v1018
        %v4137 = vunpack.c.l.b16 %v1019
        %v4138 = vunpack.c.h.b16 %v1019
        %v4139 = vunpack.c.l.b16 %v1020
        %v4140 = vunpack.c.h.b16 %v1020
        %v4141 = vunpack.c.l.b16 %v1021
        %v4142 = vunpack.c.h.b16 %v1021
        %v4143 = vunpack.c.l.b16 %v1022
        %v4144 = vunpack.c.h.b16 %v1022
        %v4145 = vunpack.c.l.b16 %v1023
        %v4146 = vunpack.c.h.b16 %v1023
        %v4147 = vunpack.c.l.b16 %v1024
        %v4148 = vunpack.c.h.b16 %v1024
        %v4149 = vunpack.c.l.b16 %v1025
        %v4150 = vunpack.c.h.b16 %v1025
        %v4151 = vunpack.c.l.b16 %v1026
        %v4152 = vunpack.c.h.b16 %v1026
        %v4153 = vunpack.c.l.b16 %v1027
        %v4154 = vunpack.c.h.b16 %v1027
        %v4155 = vunpack.c.l.b16 %v1028
        %v4156 = vunpack.c.h.b16 %v1028
        %v4157 = vunpack.c.l.b16 %v1029
        %v4158 = vunpack.c.h.b16 %v1029
        %v4159 = vunpack.c.l.b16 %v1030
        %v4160 = vunpack.c.h.b16 %v1030
        %v4161 = vunpack.c.l.b16 %v1031
        %v4162 = vunpack.c.h.b16 %v1031
        %v4163 = vunpack.c.l.b16 %v1032
        %v4164 = vunpack.c.h.b16 %v1032
        %v4165 = vunpack.c.l.b16 %v1033
        %v4166 = vunpack.c.h.b16 %v1033
        %v4167 = vunpack.c.l.b16 %v1034
        %v4168 = vunpack.c.h.b16 %v1034
        %v4169 = vunpack.c.l.b16 %v1035
        %v4170 = vunpack.c.h.b16 %v1035
        %v4171 = vunpack.c.l.b16 %v1036
        %v4172 = vunpack.c.h.b16 %v1036
        %v4173 = vunpack.c.l.b16 %v1037
        %v4174 = vunpack.c.h.b16 %v1037
        %v4175 = vunpack.c.l.b16 %v1038
        %v4176 = vunpack.c.h.b16 %v1038
        %v4177 = vunpack.c.l.b16 %v1039
        %v4178 = vunpack.c.h.b16 %v1039
        %v4179 = vunpack.c.l.b16 %v1040
        %v4180 = vunpack.c.h.b16 %v1040
        %v4181 = vunpack.c.l.b16 %v1041
        %v4182 = vunpack.c.h.b16 %v1041
        %v4183 = vunpack.c.l.b16 %v1042
        %v4184 = vunpack.c.h.b16 %v1042
        %v4185 = vunpack.c.l.b16 %v1043
        %v4186 = vunpack.c.h.b16 %v1043
        %v4187 = vunpack.c.l.b16 %v1044
        %v4188 = vunpack.c.h.b16 %v1044
        %v4189 = vunpack.c.l.b16 %v1045
        %v4190 = vunpack.c.h.b16 %v1045
        %v4191 = vunpack.c.l.b16 %v1046
        %v4192 = vunpack.c.h.b16 %v1046
        %v4193 = vunpack.c.l.b16 %v1047
        %v4194 = vunpack.c.h.b16 %v1047
        %v4195 = vunpack.c.l.b16 %v1048
        %v4196 = vunpack.c.h.b16 %v1048
        %v4197 = vunpack.c.l.b16 %v1049
        %v4198 = vunpack.c.h.b16 %v1049
        %v4199 = vunpack.c.l.b16 %v1050
        %v4200 = vunpack.c.h.b16 %v1050
        %v4201 = vunpack.c.l.b16 %v1051
        %v4202 = vunpack.c.h.b16 %v1051
        %v4203 = vunpack.c.l.b16 %v1052
        %v4204 = vunpack.c.h.b16 %v1052
        %v4205 = vunpack.c.l.b16 %v1053
        %v4206 = vunpack.c.h.b16 %v1053
        %v4207 = vunpack.c.l.b16 %v1054
        %v4208 = vunpack.c.h.b16 %v1054
        %v4209 = vunpack.c.l.b16 %v1055
        %v4210 = vunpack.c.h.b16 %v1055
        %v4211 = vunpack.c.l.b16 %v1056
        %v4212 = vunpack.c.h.b16 %v1056
        %v4213 = vunpack.c.l.b16 %v1057
        %v4214 = vunpack.c.h.b16 %v1057
        %v4215 = vunpack.c.l.b16 %v1058
        %v4216 = vunpack.c.h.b16 %v1058
        %v4217 = vunpack.c.l.b16 %v1059
        %v4218 = vunpack.c.h.b16 %v1059
        %v4219 = vunpack.c.l.b16 %v1060
        %v4220 = vunpack.c.h.b16 %v1060
        %v4221 = vunpack.c.l.b16 %v1061
        %v4222 = vunpack.c.h.b16 %v1061
        %v4223 = vunpack.c.l.b16 %v1062
        %v4224 = vunpack.c.h.b16 %v1062
        %v4225 = vunpack.c.l.b16 %v1063
        %v4226 = vunpack.c.h.b16 %v1063
        %v4227 = vunpack.c.l.b16 %v1064
        %v4228 = vunpack.c.h.b16 %v1064
        %v4229 = vunpack.c.l.b16 %v1065
        %v4230 = vunpack.c.h.b16 %v1065
        %v4231 = vunpack.c.l.b16 %v1066
        %v4232 = vunpack.c.h.b16 %v1066
        %v4233 = vunpack.c.l.b16 %v1067
        %v4234 = vunpack.c.h.b16 %v1067
        %v4235 = vunpack.c.l.b16 %v1068
        %v4236 = vunpack.c.h.b16 %v1068
        %v4237 = vunpack.c.l.b16 %v1069
        %v4238 = vunpack.c.h.b16 %v1069
        %v4239 = vunpack.c.l.b16 %v1070
        %v4240 = vunpack.c.h.b16 %v1070
        %v4241 = vunpack.c.l.b16 %v1071
        %v4242 = vunpack.c.h.b16 %v1071
        %v4243 = vunpack.c.l.b16 %v1072
        %v4244 = vunpack.c.h.b16 %v1072
        %v4245 = vunpack.c.l.b16 %v1073
        %v4246 = vunpack.c.h.b16 %v1073
        %v4247 = vunpack.c.l.b16 %v1074
        %v4248 = vunpack.c.h.b16 %v1074
        %v4249 = vunpack.c.l.b16 %v1075
        %v4250 = vunpack.c.h.b16 %v1075
        %v4251 = vunpack.c.l.b16 %v1076
        %v4252 = vunpack.c.h.b16 %v1076
        %v4253 = vunpack.c.l.b16 %v1077
        %v4254 = vunpack.c.h.b16 %v1077
        %v4255 = vunpack.c.l.b16 %v1078
        %v4256 = vunpack.c.h.b16 %v1078
        %v4257 = vunpack.c.l.b16 %v1079
        %v4258 = vunpack.c.h.b16 %v1079
        %v4259 = vunpack.c.l.b16 %v1080
        %v4260 = vunpack.c.h.b16 %v1080
        %v4261 = vunpack.c.l.b16 %v1081
        %v4262 = vunpack.c.h.b16 %v1081
        %v4263 = vunpack.c.l.b16 %v1082
        %v4264 = vunpack.c.h.b16 %v1082
        %v4265 = vunpack.c.l.b16 %v1083
        %v4266 = vunpack.c.h.b16 %v1083
        %v4267 = vunpack.c.l.b16 %v1084
        %v4268 = vunpack.c.h.b16 %v1084
        %v4269 = vunpack.c.l.b16 %v1085
        %v4270 = vunpack.c.h.b16 %v1085
        %v4271 = vunpack.c.l.b16 %v1086
        %v4272 = vunpack.c.h.b16 %v1086
        %v4273 = vunpack.c.l.b16 %v1087
        %v4274 = vunpack.c.h.b16 %v1087
        %v4275 = vunpack.c.l.b16 %v1088
        %v4276 = vunpack.c.h.b16 %v1088
        %v4277 = vunpack.c.l.b16 %v1089
        %v4278 = vunpack.c.h.b16 %v1089
        %v4279 = vunpack.c.l.b16 %v1090
        %v4280 = vunpack.c.h.b16 %v1090
        %v4281 = vunpack.c.l.b16 %v1091
        %v4282 = vunpack.c.h.b16 %v1091
        %v4283 = vunpack.c.l.b16 %v1092
        %v4284 = vunpack.c.h.b16 %v1092
        %v4285 = vunpack.c.l.b16 %v1093
        %v4286 = vunpack.c.h.b16 %v1093
        %v4287 = vunpack.c.l.b16 %v1094
        %v4288 = vunpack.c.h.b16 %v1094
        %v4289 = vunpack.c.l.b16 %v1095
        %v4290 = vunpack.c.h.b16 %v1095
        %v4291 = vunpack.c.l.b16 %v1096
        %v4292 = vunpack.c.h.b16 %v1096
        %v4293 = vunpack.c.l.b16 %v1097
        %v4294 = vunpack.c.h.b16 %v1097
        %v4295 = vunpack.c.l.b16 %v1098
        %v4296 = vunpack.c.h.b16 %v1098
        %v4297 = vunpack.c.l.b16 %v1099
        %v4298 = vunpack.c.h.b16 %v1099
        %v4299 = vunpack.c.l.b16 %v1100
        %v4300 = vunpack.c.h.b16 %v1100
        %v4301 = vunpack.c.l.b16 %v1101
        %v4302 = vunpack.c.h.b16 %v1101
        %v4303 = vunpack.c.l.b16 %v1102
        %v4304 = vunpack.c.h.b16 %v1102
        %v4305 = vunpack.c.l.b16 %v1103
        %v4306 = vunpack.c.h.b16 %v1103
        %v4307 = vunpack.c.l.b16 %v1104
        %v4308 = vunpack.c.h.b16 %v1104
        %v4309 = vunpack.c.l.b16 %v1105
        %v4310 = vunpack.c.h.b16 %v1105
        %v4311 = vunpack.c.l.b16 %v1106
        %v4312 = vunpack.c.h.b16 %v1106
        %v4313 = vunpack.c.l.b16 %v1107
        %v4314 = vunpack.c.h.b16 %v1107
        %v4315 = vunpack.c.l.b16 %v1108
        %v4316 = vunpack.c.h.b16 %v1108
        %v4317 = vunpack.c.l.b16 %v1109
        %v4318 = vunpack.c.h.b16 %v1109
        %v4319 = vunpack.c.l.b16 %v1110
        %v4320 = vunpack.c.h.b16 %v1110
        %v4321 = vunpack.c.l.b16 %v1111
        %v4322 = vunpack.c.h.b16 %v1111
        %v4323 = vunpack.c.l.b16 %v1112
        %v4324 = vunpack.c.h.b16 %v1112
        %v4325 = vunpack.c.l.b16 %v1113
        %v4326 = vunpack.c.h.b16 %v1113
        %v4327 = vunpack.c.l.b16 %v1114
        %v4328 = vunpack.c.h.b16 %v1114
        %v4329 = vunpack.c.l.b16 %v1115
        %v4330 = vunpack.c.h.b16 %v1115
        %v4331 = vunpack.c.l.b16 %v1116
        %v4332 = vunpack.c.h.b16 %v1116
        %v4333 = vunpack.c.l.b16 %v1117
        %v4334 = vunpack.c.h.b16 %v1117
        %v4335 = vunpack.c.l.b16 %v1118
        %v4336 = vunpack.c.h.b16 %v1118
        %v4337 = vunpack.c.l.b16 %v1119
        %v4338 = vunpack.c.h.b16 %v1119
        %v4339 = vunpack.c.l.b16 %v1120
        %v4340 = vunpack.c.h.b16 %v1120
        %v4341 = vunpack.c.l.b16 %v1121
        %v4342 = vunpack.c.h.b16 %v1121
        %v4343 = vunpack.c.l.b16 %v1122
        %v4344 = vunpack.c.h.b16 %v1122
        %v4345 = vunpack.c.l.b16 %v1123
        %v4346 = vunpack.c.h.b16 %v1123
        %v4347 = vunpack.c.l.b16 %v1124
        %v4348 = vunpack.c.h.b16 %v1124
        %v4349 = vunpack.c.l.b16 %v1125
        %v4350 = vunpack.c.h.b16 %v1125
        %v4351 = vunpack.c.l.b16 %v1126
        %v4352 = vunpack.c.h.b16 %v1126
        %v4353 = vunpack.c.l.b16 %v1127
        %v4354 = vunpack.c.h.b16 %v1127
        %v4355 = vunpack.c.l.b16 %v1128
        %v4356 = vunpack.c.h.b16 %v1128
        %v4357 = vunpack.c.l.b16 %v1129
        %v4358 = vunpack.c.h.b16 %v1129
        %v4359 = vunpack.c.l.b16 %v1130
        %v4360 = vunpack.c.h.b16 %v1130
        %v4361 = vunpack.c.l.b16 %v1131
        %v4362 = vunpack.c.h.b16 %v1131
        %v4363 = vunpack.c.l.b16 %v1132
        %v4364 = vunpack.c.h.b16 %v1132
        %v4365 = vunpack.c.l.b16 %v1133
        %v4366 = vunpack.c.h.b16 %v1133
        %v4367 = vunpack.c.l.b16 %v1134
        %v4368 = vunpack.c.h.b16 %v1134
        %v4369 = vunpack.c.l.b16 %v1135
        %v4370 = vunpack.c.h.b16 %v1135
        %v4371 = vunpack.c.l.b16 %v1136
        %v4372 = vunpack.c.h.b16 %v1136
        %v4373 = vunpack.c.l.b16 %v1137
        %v4374 = vunpack.c.h.b16 %v1137
        %v4375 = vunpack.c.l.b16 %v1138
        %v4376 = vunpack.c.h.b16 %v1138
        %v4377 = vunpack.c.l.b16 %v1139
        %v4378 = vunpack.c.h.b16 %v1139
        %v4379 = vunpack.c.l.b16 %v1140
        %v4380 = vunpack.c.h.b16 %v1140
        %v4381 = vunpack.c.l.b16 %v1141
        %v4382 = vunpack.c.h.b16 %v1141
        %v4383 = vunpack.c.l.b16 %v1142
        %v4384 = vunpack.c.h.b16 %v1142
        %v4385 = vunpack.c.l.b16 %v1143
        %v4386 = vunpack.c.h.b16 %v1143
        %v4387 = vunpack.c.l.b16 %v1144
        %v4388 = vunpack.c.h.b16 %v1144
        %v4389 = vunpack.c.l.b16 %v1145
        %v4390 = vunpack.c.h.b16 %v1145
        %v4391 = vunpack.c.l.b16 %v1146
        %v4392 = vunpack.c.h.b16 %v1146
        %v4393 = vunpack.c.l.b16 %v1147
        %v4394 = vunpack.c.h.b16 %v1147
        %v4395 = vunpack.c.l.b16 %v1148
        %v4396 = vunpack.c.h.b16 %v1148
        %v4397 = vunpack.c.l.b16 %v1149
        %v4398 = vunpack.c.h.b16 %v1149
        %v4399 = vunpack.c.l.b16 %v1150
        %v4400 = vunpack.c.h.b16 %v1150
        %v4401 = vunpack.c.l.b16 %v1151
        %v4402 = vunpack.c.h.b16 %v1151
        %v4403 = vunpack.c.l.b16 %v1152
        %v4404 = vunpack.c.h.b16 %v1152
        %v4405 = vunpack.c.l.b16 %v1153
        %v4406 = vunpack.c.h.b16 %v1153
        %v4407 = vunpack.c.l.b16 %v1154
        %v4408 = vunpack.c.h.b16 %v1154
        %v4409 = vunpack.c.l.b16 %v1155
        %v4410 = vunpack.c.h.b16 %v1155
        %v4411 = vunpack.c.l.b16 %v1156
        %v4412 = vunpack.c.h.b16 %v1156
        %v4413 = vunpack.c.l.b16 %v1157
        %v4414 = vunpack.c.h.b16 %v1157
        %v4415 = vunpack.c.l.b16 %v1158
        %v4416 = vunpack.c.h.b16 %v1158
        %v4417 = vunpack.c.l.b16 %v1159
        %v4418 = vunpack.c.h.b16 %v1159
        %v4419 = vunpack.c.l.b16 %v1160
        %v4420 = vunpack.c.h.b16 %v1160
        %v4421 = vunpack.c.l.b16 %v1161
        %v4422 = vunpack.c.h.b16 %v1161
        %v4423 = vunpack.c.l.b16 %v1162
        %v4424 = vunpack.c.h.b16 %v1162
        %v4425 = vunpack.c.l.b16 %v1163
        %v4426 = vunpack.c.h.b16 %v1163
        %v4427 = vunpack.c.l.b16 %v1164
        %v4428 = vunpack.c.h.b16 %v1164
        %v4429 = vunpack.c.l.b16 %v1165
        %v4430 = vunpack.c.h.b16 %v1165
        %v4431 = vunpack.c.l.b16 %v1166
        %v4432 = vunpack.c.h.b16 %v1166
        %v4433 = vunpack.c.l.b16 %v1167
        %v4434 = vunpack.c.h.b16 %v1167
        %v4435 = vunpack.c.l.b16 %v1168
        %v4436 = vunpack.c.h.b16 %v1168
        %v4437 = vunpack.c.l.b16 %v1169
        %v4438 = vunpack.c.h.b16 %v1169
        %v4439 = vunpack.c.l.b16 %v1170
        %v4440 = vunpack.c.h.b16 %v1170
        %v4441 = vunpack.c.l.b16 %v1171
        %v4442 = vunpack.c.h.b16 %v1171
        %v4443 = vunpack.c.l.b16 %v1172
        %v4444 = vunpack.c.h.b16 %v1172
        %v4445 = vunpack.c.l.b16 %v1173
        %v4446 = vunpack.c.h.b16 %v1173
        %v4447 = vunpack.c.l.b16 %v1174
        %v4448 = vunpack.c.h.b16 %v1174
        %v4449 = vunpack.c.l.b16 %v1175
        %v4450 = vunpack.c.h.b16 %v1175
        %v4451 = vunpack.c.l.b16 %v1176
        %v4452 = vunpack.c.h.b16 %v1176
        %v4453 = vunpack.c.l.b16 %v1177
        %v4454 = vunpack.c.h.b16 %v1177
        %v4455 = vunpack.c.l.b16 %v1178
        %v4456 = vunpack.c.h.b16 %v1178
        %v4457 = vunpack.c.l.b16 %v1179
        %v4458 = vunpack.c.h.b16 %v1179
        %v4459 = vunpack.c.l.b16 %v1180
        %v4460 = vunpack.c.h.b16 %v1180
        %v4461 = vunpack.c.l.b16 %v1181
        %v4462 = vunpack.c.h.b16 %v1181
        %v4463 = vunpack.c.l.b16 %v1182
        %v4464 = vunpack.c.h.b16 %v1182
        %v4465 = vunpack.c.l.b16 %v1183
        %v4466 = vunpack.c.h.b16 %v1183
        %v4467 = vunpack.c.l.b16 %v1184
        %v4468 = vunpack.c.h.b16 %v1184
        %v4469 = vunpack.c.l.b16 %v1185
        %v4470 = vunpack.c.h.b16 %v1185
        %v4471 = vunpack.c.l.b16 %v1186
        %v4472 = vunpack.c.h.b16 %v1186
        %v4473 = vunpack.c.l.b16 %v1187
        %v4474 = vunpack.c.h.b16 %v1187
        %v4475 = vunpack.c.l.b16 %v1188
        %v4476 = vunpack.c.h.b16 %v1188
        %v4477 = vunpack.c.l.b16 %v1189
        %v4478 = vunpack.c.h.b16 %v1189
        %v4479 = vunpack.c.l.b16 %v1190
        %v4480 = vunpack.c.h.b16 %v1190
        %v4481 = vunpack.c.l.b16 %v1191
        %v4482 = vunpack.c.h.b16 %v1191
        %v4483 = vunpack.c.l.b16 %v1192
        %v4484 = vunpack.c.h.b16 %v1192
        %v4485 = vunpack.c.l.b16 %v1193
        %v4486 = vunpack.c.h.b16 %v1193
        %v4487 = vunpack.c.l.b16 %v1194
        %v4488 = vunpack.c.h.b16 %v1194
        %v4489 = vunpack.c.l.b16 %v1195
        %v4490 = vunpack.c.h.b16 %v1195
        %v4491 = vunpack.c.l.b16 %v1196
        %v4492 = vunpack.c.h.b16 %v1196
        %v4493 = vunpack.c.l.b16 %v1197
        %v4494 = vunpack.c.h.b16 %v1197
        %v4495 = vunpack.c.l.b16 %v1198
        %v4496 = vunpack.c.h.b16 %v1198
        %v4497 = vunpack.c.l.b16 %v1199
        %v4498 = vunpack.c.h.b16 %v1199
        %v4499 = vunpack.c.l.b16 %v1200
        %v4500 = vunpack.c.h.b16 %v1200
        %v4501 = vunpack.c.l.b16 %v1201
        %v4502 = vunpack.c.h.b16 %v1201
        %v4503 = vunpack.c.l.b16 %v1202
        %v4504 = vunpack.c.h.b16 %v1202
        %v4505 = vunpack.c.l.b16 %v1203
        %v4506 = vunpack.c.h.b16 %v1203
        %v4507 = vunpack.c.l.b16 %v1204
        %v4508 = vunpack.c.h.b16 %v1204
        %v4509 = vunpack.c.l.b16 %v1205
        %v4510 = vunpack.c.h.b16 %v1205
        %v4511 = vunpack.c.l.b16 %v1206
        %v4512 = vunpack.c.h.b16 %v1206
        %v4513 = vunpack.c.l.b16 %v1207
        %v4514 = vunpack.c.h.b16 %v1207
        %v4515 = vunpack.c.l.b16 %v1208
        %v4516 = vunpack.c.h.b16 %v1208
        %v4517 = vunpack.c.l.b16 %v1209
        %v4518 = vunpack.c.h.b16 %v1209
        %v4519 = vunpack.c.l.b16 %v1210
        %v4520 = vunpack.c.h.b16 %v1210
        %v4521 = vunpack.c.l.b16 %v1211
        %v4522 = vunpack.c.h.b16 %v1211
        %v4523 = vunpack.c.l.b16 %v1212
        %v4524 = vunpack.c.h.b16 %v1212
        %v4525 = vunpack.c.l.b16 %v1213
        %v4526 = vunpack.c.h.b16 %v1213
        %v4527 = vunpack.c.l.b16 %v1214
        %v4528 = vunpack.c.h.b16 %v1214
        %v4529 = vunpack.c.l.b16 %v1215
        %v4530 = vunpack.c.h.b16 %v1215
        %v4531 = vunpack.c.l.b16 %v1216
        %v4532 = vunpack.c.h.b16 %v1216
        %v4533 = vunpack.c.l.b16 %v1217
        %v4534 = vunpack.c.h.b16 %v1217
        %v4535 = vunpack.c.l.b16 %v1218
        %v4536 = vunpack.c.h.b16 %v1218
        %v4537 = vunpack.c.l.b16 %v1219
        %v4538 = vunpack.c.h.b16 %v1219
        %v4539 = vunpack.c.l.b16 %v1220
        %v4540 = vunpack.c.h.b16 %v1220
        %v4541 = vunpack.c.l.b16 %v1221
        %v4542 = vunpack.c.h.b16 %v1221
        %v4543 = vunpack.c.l.b16 %v1222
        %v4544 = vunpack.c.h.b16 %v1222
        %v4545 = vunpack.c.l.b16 %v1223
        %v4546 = vunpack.c.h.b16 %v1223
        %v4547 = vunpack.c.l.b16 %v1224
        %v4548 = vunpack.c.h.b16 %v1224
        %v4549 = vunpack.c.l.b16 %v1225
        %v4550 = vunpack.c.h.b16 %v1225
        %v4551 = vunpack.c.l.b16 %v1226
        %v4552 = vunpack.c.h.b16 %v1226
        %v4553 = vunpack.c.l.b16 %v1227
        %v4554 = vunpack.c.h.b16 %v1227
        %v4555 = vunpack.c.l.b16 %v1228
        %v4556 = vunpack.c.h.b16 %v1228
        %v4557 = vunpack.c.l.b16 %v1229
        %v4558 = vunpack.c.h.b16 %v1229
        %v4559 = vunpack.c.l.b16 %v1230
        %v4560 = vunpack.c.h.b16 %v1230
        %v4561 = vunpack.c.l.b16 %v1231
        %v4562 = vunpack.c.h.b16 %v1231
        %v4563 = vunpack.c.l.b16 %v1232
        %v4564 = vunpack.c.h.b16 %v1232
        %v4565 = vunpack.c.l.b16 %v1233
        %v4566 = vunpack.c.h.b16 %v1233
        %v4567 = vunpack.c.l.b16 %v1234
        %v4568 = vunpack.c.h.b16 %v1234
        %v4569 = vunpack.c.l.b16 %v1235
        %v4570 = vunpack.c.h.b16 %v1235
        %v4571 = vunpack.c.l.b16 %v1236
        %v4572 = vunpack.c.h.b16 %v1236
        %v4573 = vunpack.c.l.b16 %v1237
        %v4574 = vunpack.c.h.b16 %v1237
        %v4575 = vunpack.c.l.b16 %v1238
        %v4576 = vunpack.c.h.b16 %v1238
        %v4577 = vunpack.c.l.b16 %v1239
        %v4578 = vunpack.c.h.b16 %v1239
        %v4579 = vunpack.c.l.b16 %v1240
        %v4580 = vunpack.c.h.b16 %v1240
        %v4581 = vunpack.c.l.b16 %v1241
        %v4582 = vunpack.c.h.b16 %v1241
        %v4583 = vunpack.c.l.b16 %v1242
        %v4584 = vunpack.c.h.b16 %v1242
        %v4585 = vunpack.c.l.b16 %v1243
        %v4586 = vunpack.c.h.b16 %v1243
        %v4587 = vunpack.c.l.b16 %v1244
        %v4588 = vunpack.c.h.b16 %v1244
        %v4589 = vunpack.c.l.b16 %v1245
        %v4590 = vunpack.c.h.b16 %v1245
        %v4591 = vunpack.c.l.b16 %v1246
        %v4592 = vunpack.c.h.b16 %v1246
        %v4593 = vunpack.c.l.b16 %v1247
        %v4594 = vunpack.c.h.b16 %v1247
        %v4595 = vunpack.c.l.b16 %v1248
        %v4596 = vunpack.c.h.b16 %v1248
        %v4597 = vunpack.c.l.b16 %v1249
        %v4598 = vunpack.c.h.b16 %v1249
        %v4599 = vunpack.c.l.b16 %v1250
        %v4600 = vunpack.c.h.b16 %v1250
        %v4601 = vunpack.c.l.b16 %v1251
        %v4602 = vunpack.c.h.b16 %v1251
        %v4603 = vunpack.c.l.b16 %v1252
        %v4604 = vunpack.c.h.b16 %v1252
        %v4605 = vunpack.c.l.b16 %v1253
        %v4606 = vunpack.c.h.b16 %v1253
        %v4607 = vunpack.c.l.b16 %v1254
        %v4608 = vunpack.c.h.b16 %v1254
        %v4609 = vunpack.c.l.b16 %v1255
        %v4610 = vunpack.c.h.b16 %v1255
        %v4611 = vunpack.c.l.b16 %v1256
        %v4612 = vunpack.c.h.b16 %v1256
        %v4613 = vunpack.c.l.b16 %v1257
        %v4614 = vunpack.c.h.b16 %v1257
        %v4615 = vunpack.c.l.b16 %v1258
        %v4616 = vunpack.c.h.b16 %v1258
        %v4617 = vunpack.c.l.b16 %v1259
        %v4618 = vunpack.c.h.b16 %v1259
        %v4619 = vunpack.c.l.b16 %v1260
        %v4620 = vunpack.c.h.b16 %v1260
        %v4621 = vunpack.c.l.b16 %v1261
        %v4622 = vunpack.c.h.b16 %v1261
        %v4623 = vunpack.c.l.b16 %v1262
        %v4624 = vunpack.c.h.b16 %v1262
        %v4625 = vunpack.c.l.b16 %v1263
        %v4626 = vunpack.c.h.b16 %v1263
        %v4627 = vunpack.c.l.b16 %v1264
        %v4628 = vunpack.c.h.b16 %v1264
        %v4629 = vunpack.c.l.b16 %v1265
        %v4630 = vunpack.c.h.b16 %v1265
        %v4631 = vunpack.c.l.b16 %v1266
        %v4632 = vunpack.c.h.b16 %v1266
        %v4633 = vunpack.c.l.b16 %v1267
        %v4634 = vunpack.c.h.b16 %v1267
        %v4635 = vunpack.c.l.b16 %v1268
        %v4636 = vunpack.c.h.b16 %v1268
        %v4637 = vunpack.c.l.b16 %v1269
        %v4638 = vunpack.c.h.b16 %v1269
        %v4639 = vunpack.c.l.b16 %v1270
        %v4640 = vunpack.c.h.b16 %v1270
        %v4641 = vunpack.c.l.b16 %v1271
        %v4642 = vunpack.c.h.b16 %v1271
        %v4643 = vunpack.c.l.b16 %v1272
        %v4644 = vunpack.c.h.b16 %v1272
        %v4645 = vunpack.c.l.b16 %v1273
        %v4646 = vunpack.c.h.b16 %v1273
        %v4647 = vunpack.c.l.b16 %v1274
        %v4648 = vunpack.c.h.b16 %v1274
        %v4649 = vunpack.c.l.b16 %v1275
        %v4650 = vunpack.c.h.b16 %v1275
        %v4651 = vunpack.c.l.b16 %v1276
        %v4652 = vunpack.c.h.b16 %v1276
        %v4653 = vunpack.c.l.b16 %v1277
        %v4654 = vunpack.c.h.b16 %v1277
        %v4655 = vunpack.c.l.b16 %v1278
        %v4656 = vunpack.c.h.b16 %v1278
        %v4657 = vunpack.c.l.b16 %v1279
        %v4658 = vunpack.c.h.b16 %v1279
        %v4659 = vunpack.c.l.b16 %v1280
        %v4660 = vunpack.c.h.b16 %v1280
        %v4661 = vunpack.c.l.b16 %v1281
        %v4662 = vunpack.c.h.b16 %v1281
        %v4663 = vunpack.c.l.b16 %v1282
        %v4664 = vunpack.c.h.b16 %v1282
        %v4665 = vunpack.c.l.b16 %v1283
        %v4666 = vunpack.c.h.b16 %v1283
        %v4667 = vunpack.c.l.b16 %v1284
        %v4668 = vunpack.c.h.b16 %v1284
        %v4669 = vunpack.c.l.b16 %v1285
        %v4670 = vunpack.c.h.b16 %v1285
        %v4671 = vunpack.c.l.b16 %v1286
        %v4672 = vunpack.c.h.b16 %v1286
        %v4673 = vunpack.c.l.b16 %v1287
        %v4674 = vunpack.c.h.b16 %v1287
        %v4675 = vunpack.c.l.b16 %v1288
        %v4676 = vunpack.c.h.b16 %v1288
        %v4677 = vunpack.c.l.b16 %v1289
        %v4678 = vunpack.c.h.b16 %v1289
        %v4679 = vunpack.c.l.b16 %v1290
        %v4680 = vunpack.c.h.b16 %v1290
        %v4681 = vunpack.c.l.b16 %v1291
        %v4682 = vunpack.c.h.b16 %v1291
        %v4683 = vunpack.c.l.b16 %v1292
        %v4684 = vunpack.c.h.b16 %v1292
        %v4685 = vunpack.c.l.b16 %v1293
        %v4686 = vunpack.c.h.b16 %v1293
        %v4687 = vunpack.c.l.b16 %v1294
        %v4688 = vunpack.c.h.b16 %v1294
        %v4689 = vunpack.c.l.b16 %v1295
        %v4690 = vunpack.c.h.b16 %v1295
        %v4691 = vunpack.c.l.b16 %v1296
        %v4692 = vunpack.c.h.b16 %v1296
        %v4693 = vunpack.c.l.b16 %v1297
        %v4694 = vunpack.c.h.b16 %v1297
        %v4695 = vunpack.c.l.b16 %v1298
        %v4696 = vunpack.c.h.b16 %v1298
        %v4697 = vunpack.c.l.b16 %v1299
        %v4698 = vunpack.c.h.b16 %v1299
        %v4699 = vunpack.c.l.b16 %v1300
        %v4700 = vunpack.c.h.b16 %v1300
        %v4701 = vunpack.c.l.b16 %v1301
        %v4702 = vunpack.c.h.b16 %v1301
        %v4703 = vunpack.c.l.b16 %v1302
        %v4704 = vunpack.c.h.b16 %v1302
        %v4705 = vunpack.c.l.b16 %v1303
        %v4706 = vunpack.c.h.b16 %v1303
        %v4707 = vunpack.c.l.b16 %v1304
        %v4708 = vunpack.c.h.b16 %v1304
        %v4709 = vunpack.c.l.b16 %v1305
        %v4710 = vunpack.c.h.b16 %v1305
        %v4711 = vunpack.c.l.b16 %v1306
        %v4712 = vunpack.c.h.b16 %v1306
        %v4713 = vunpack.c.l.b16 %v1307
        %v4714 = vunpack.c.h.b16 %v1307
        %v4715 = vunpack.c.l.b16 %v1308
        %v4716 = vunpack.c.h.b16 %v1308
        %v4717 = vunpack.c.l.b16 %v1309
        %v4718 = vunpack.c.h.b16 %v1309
        %v4719 = vunpack.c.l.b16 %v1310
        %v4720 = vunpack.c.h.b16 %v1310
        %v4721 = vunpack.c.l.b16 %v1311
        %v4722 = vunpack.c.h.b16 %v1311
        %v4723 = vunpack.c.l.b16 %v1312
        %v4724 = vunpack.c.h.b16 %v1312
        %v4725 = vunpack.c.l.b16 %v1313
        %v4726 = vunpack.c.h.b16 %v1313
        %v4727 = vunpack.c.l.b16 %v1314
        %v4728 = vunpack.c.h.b16 %v1314
        %v4729 = vunpack.c.l.b16 %v1315
        %v4730 = vunpack.c.h.b16 %v1315
        %v4731 = vunpack.c.l.b16 %v1316
        %v4732 = vunpack.c.h.b16 %v1316
        %v4733 = vunpack.c.l.b16 %v1317
        %v4734 = vunpack.c.h.b16 %v1317
        %v4735 = vunpack.c.l.b16 %v1318
        %v4736 = vunpack.c.h.b16 %v1318
        %v4737 = vunpack.c.l.b16 %v1319
        %v4738 = vunpack.c.h.b16 %v1319
        %v4739 = vunpack.c.l.b16 %v1320
        %v4740 = vunpack.c.h.b16 %v1320
        %v4741 = vunpack.c.l.b16 %v1321
        %v4742 = vunpack.c.h.b16 %v1321
        %v4743 = vunpack.c.l.b16 %v1322
        %v4744 = vunpack.c.h.b16 %v1322
        %v4745 = vunpack.c.l.b16 %v1323
        %v4746 = vunpack.c.h.b16 %v1323
        %v4747 = vunpack.c.l.b16 %v1324
        %v4748 = vunpack.c.h.b16 %v1324
        %v4749 = vunpack.c.l.b16 %v1325
        %v4750 = vunpack.c.h.b16 %v1325
        %v4751 = vunpack.c.l.b16 %v1326
        %v4752 = vunpack.c.h.b16 %v1326
        %v4753 = vunpack.c.l.b16 %v1327
        %v4754 = vunpack.c.h.b16 %v1327
        %v4755 = vunpack.c.l.b16 %v1328
        %v4756 = vunpack.c.h.b16 %v1328
        %v4757 = vunpack.c.l.b16 %v1329
        %v4758 = vunpack.c.h.b16 %v1329
        %v4759 = vunpack.c.l.b16 %v1330
        %v4760 = vunpack.c.h.b16 %v1330
        %v4761 = vunpack.c.l.b16 %v1331
        %v4762 = vunpack.c.h.b16 %v1331
        %v4763 = vunpack.c.l.b16 %v1332
        %v4764 = vunpack.c.h.b16 %v1332
        %v4765 = vunpack.c.l.b16 %v1333
        %v4766 = vunpack.c.h.b16 %v1333
        %v4767 = vunpack.c.l.b16 %v1334
        %v4768 = vunpack.c.h.b16 %v1334
        %v4769 = vunpack.c.l.b16 %v1335
        %v4770 = vunpack.c.h.b16 %v1335
        %v4771 = vunpack.c.l.b16 %v1336
        %v4772 = vunpack.c.h.b16 %v1336
        %v4773 = vunpack.c.l.b16 %v1337
        %v4774 = vunpack.c.h.b16 %v1337
        %v4775 = vunpack.c.l.b16 %v1338
        %v4776 = vunpack.c.h.b16 %v1338
        %v4777 = vunpack.c.l.b16 %v1339
        %v4778 = vunpack.c.h.b16 %v1339
        %v4779 = vunpack.c.l.b16 %v1340
        %v4780 = vunpack.c.h.b16 %v1340
        %v4781 = vunpack.c.l.b16 %v1341
        %v4782 = vunpack.c.h.b16 %v1341
        %v4783 = vunpack.c.l.b16 %v1342
        %v4784 = vunpack.c.h.b16 %v1342
        %v4785 = vunpack.c.l.b16 %v1343
        %v4786 = vunpack.c.h.b16 %v1343
        %v4787 = vunpack.c.l.b16 %v1344
        %v4788 = vunpack.c.h.b16 %v1344
        %v4789 = vunpack.c.l.b16 %v1345
        %v4790 = vunpack.c.h.b16 %v1345
        %v4791 = vunpack.c.l.b16 %v1346
        %v4792 = vunpack.c.h.b16 %v1346
        %v4793 = vunpack.c.l.b16 %v1347
        %v4794 = vunpack.c.h.b16 %v1347
        %v4795 = vunpack.c.l.b16 %v1348
        %v4796 = vunpack.c.h.b16 %v1348
        %v4797 = vunpack.c.l.b16 %v1349
        %v4798 = vunpack.c.h.b16 %v1349
        %v4799 = vunpack.c.l.b16 %v1350
        %v4800 = vunpack.c.h.b16 %v1350
        %v4801 = vunpack.c.l.b16 %v1351
        %v4802 = vunpack.c.h.b16 %v1351
        %v4803 = vunpack.c.l.b16 %v1352
        %v4804 = vunpack.c.h.b16 %v1352
        %v4805 = vunpack.c.l.b16 %v1353
        %v4806 = vunpack.c.h.b16 %v1353
        %v4807 = vunpack.c.l.b16 %v1354
        %v4808 = vunpack.c.h.b16 %v1354
        %v4809 = vunpack.c.l.b16 %v1355
        %v4810 = vunpack.c.h.b16 %v1355
        %v4811 = vunpack.c.l.b16 %v1356
        %v4812 = vunpack.c.h.b16 %v1356
        %v4813 = vunpack.c.l.b16 %v1357
        %v4814 = vunpack.c.h.b16 %v1357
        %v4815 = vunpack.c.l.b16 %v1358
        %v4816 = vunpack.c.h.b16 %v1358
        %v4817 = vunpack.c.l.b16 %v1359
        %v4818 = vunpack.c.h.b16 %v1359
        %v4819 = vunpack.c.l.b16 %v1360
        %v4820 = vunpack.c.h.b16 %v1360
        %v4821 = vunpack.c.l.b16 %v1361
        %v4822 = vunpack.c.h.b16 %v1361
        %v4823 = vunpack.c.l.b16 %v1362
        %v4824 = vunpack.c.h.b16 %v1362
        %v4825 = vunpack.c.l.b16 %v1363
        %v4826 = vunpack.c.h.b16 %v1363
        %v4827 = vunpack.c.l.b16 %v1364
        %v4828 = vunpack.c.h.b16 %v1364
        %v4829 = vunpack.c.l.b16 %v1365
        %v4830 = vunpack.c.h.b16 %v1365
        %v4831 = vunpack.c.l.b16 %v1366
        %v4832 = vunpack.c.h.b16 %v1366
        %v4833 = vunpack.c.l.b16 %v1367
        %v4834 = vunpack.c.h.b16 %v1367
        %v4835 = vunpack.c.l.b16 %v1368
        %v4836 = vunpack.c.h.b16 %v1368
        %v4837 = vunpack.c.l.b16 %v1369
        %v4838 = vunpack.c.h.b16 %v1369
        %v4839 = vunpack.c.l.b16 %v1370
        %v4840 = vunpack.c.h.b16 %v1370
        %v4841 = vunpack.c.l.b16 %v1371
        %v4842 = vunpack.c.h.b16 %v1371
        %v4843 = vunpack.c.l.b16 %v1372
        %v4844 = vunpack.c.h.b16 %v1372
        %v4845 = vunpack.c.l.b16 %v1373
        %v4846 = vunpack.c.h.b16 %v1373
        %v4847 = vunpack.c.l.b16 %v1374
        %v4848 = vunpack.c.h.b16 %v1374
        %v4849 = vunpack.c.l.b16 %v1375
        %v4850 = vunpack.c.h.b16 %v1375
        %v4851 = vunpack.c.l.b16 %v1376
        %v4852 = vunpack.c.h.b16 %v1376
        %v4853 = vunpack.c.l.b16 %v1377
        %v4854 = vunpack.c.h.b16 %v1377
        %v4855 = vunpack.c.l.b16 %v1378
        %v4856 = vunpack.c.h.b16 %v1378
        %v4857 = vunpack.c.l.b16 %v1379
        %v4858 = vunpack.c.h.b16 %v1379
        %v4859 = vunpack.c.l.b16 %v1380
        %v4860 = vunpack.c.h.b16 %v1380
        %v4861 = vunpack.c.l.b16 %v1381
        %v4862 = vunpack.c.h.b16 %v1381
        %v4863 = vunpack.c.l.b16 %v1382
        %v4864 = vunpack.c.h.b16 %v1382
        %v4865 = vunpack.c.l.b16 %v1383
        %v4866 = vunpack.c.h.b16 %v1383
        %v4867 = vunpack.c.l.b16 %v1384
        %v4868 = vunpack.c.h.b16 %v1384
        %v4869 = vunpack.c.l.b16 %v1385
        %v4870 = vunpack.c.h.b16 %v1385
        %v4871 = vunpack.c.l.b16 %v1386
        %v4872 = vunpack.c.h.b16 %v1386
        %v4873 = vunpack.c.l.b16 %v1387
        %v4874 = vunpack.c.h.b16 %v1387
        %v4875 = vunpack.c.l.b16 %v1388
        %v4876 = vunpack.c.h.b16 %v1388
        %v4877 = vunpack.c.l.b16 %v1389
        %v4878 = vunpack.c.h.b16 %v1389
        %v4879 = vunpack.c.l.b16 %v1390
        %v4880 = vunpack.c.h.b16 %v1390
        %v4881 = vunpack.c.l.b16 %v1391
        %v4882 = vunpack.c.h.b16 %v1391
        %v4883 = vunpack.c.l.b16 %v1392
        %v4884 = vunpack.c.h.b16 %v1392
        %v4885 = vunpack.c.l.b16 %v1393
        %v4886 = vunpack.c.h.b16 %v1393
        %v4887 = vunpack.c.l.b16 %v1394
        %v4888 = vunpack.c.h.b16 %v1394
        %v4889 = vunpack.c.l.b16 %v1395
        %v4890 = vunpack.c.h.b16 %v1395
        %v4891 = vunpack.c.l.b16 %v1396
        %v4892 = vunpack.c.h.b16 %v1396
        %v4893 = vunpack.c.l.b16 %v1397
        %v4894 = vunpack.c.h.b16 %v1397
        %v4895 = vunpack.c.l.b16 %v1398
        %v4896 = vunpack.c.h.b16 %v1398
        %v4897 = vunpack.c.l.b16 %v1399
        %v4898 = vunpack.c.h.b16 %v1399
        %v4899 = vunpack.c.l.b16 %v1400
        %v4900 = vunpack.c.h.b16 %v1400
        %v4901 = vunpack.c.l.b16 %v1401
        %v4902 = vunpack.c.h.b16 %v1401
        %v4903 = vunpack.c.l.b16 %v1402
        %v4904 = vunpack.c.h.b16 %v1402
        %v4905 = vunpack.c.l.b16 %v1403
        %v4906 = vunpack.c.h.b16 %v1403
        %v4907 = vunpack.c.l.b16 %v1404
        %v4908 = vunpack.c.h.b16 %v1404
        %v4909 = vunpack.c.l.b16 %v1405
        %v4910 = vunpack.c.h.b16 %v1405
        %v4911 = vunpack.c.l.b16 %v1406
        %v4912 = vunpack.c.h.b16 %v1406
        %v4913 = vunpack.c.l.b16 %v1407
        %v4914 = vunpack.c.h.b16 %v1407
        %v4915 = vunpack.c.l.b16 %v1408
        %v4916 = vunpack.c.h.b16 %v1408
        %v4917 = vunpack.c.l.b16 %v1409
        %v4918 = vunpack.c.h.b16 %v1409
        %v4919 = vunpack.c.l.b16 %v1410
        %v4920 = vunpack.c.h.b16 %v1410
        %v4921 = vunpack.c.l.b16 %v1411
        %v4922 = vunpack.c.h.b16 %v1411
        %v4923 = vunpack.c.l.b16 %v1412
        %v4924 = vunpack.c.h.b16 %v1412
        %v4925 = vunpack.c.l.b16 %v1413
        %v4926 = vunpack.c.h.b16 %v1413
        %v4927 = vunpack.c.l.b16 %v1414
        %v4928 = vunpack.c.h.b16 %v1414
        %v4929 = vunpack.c.l.b16 %v1415
        %v4930 = vunpack.c.h.b16 %v1415
        %v4931 = vunpack.c.l.b16 %v1416
        %v4932 = vunpack.c.h.b16 %v1416
        %v4933 = vunpack.c.l.b16 %v1417
        %v4934 = vunpack.c.h.b16 %v1417
        %v4935 = vunpack.c.l.b16 %v1418
        %v4936 = vunpack.c.h.b16 %v1418
        %v4937 = vunpack.c.l.b16 %v1419
        %v4938 = vunpack.c.h.b16 %v1419
        %v4939 = vunpack.c.l.b16 %v1420
        %v4940 = vunpack.c.h.b16 %v1420
        %v4941 = vunpack.c.l.b16 %v1421
        %v4942 = vunpack.c.h.b16 %v1421
        %v4943 = vunpack.c.l.b16 %v1422
        %v4944 = vunpack.c.h.b16 %v1422
        %v4945 = vunpack.c.l.b16 %v1423
        %v4946 = vunpack.c.h.b16 %v1423
        %v4947 = vunpack.c.l.b16 %v1424
        %v4948 = vunpack.c.h.b16 %v1424
        %v4949 = vunpack.c.l.b16 %v1425
        %v4950 = vunpack.c.h.b16 %v1425
        %v4951 = vunpack.c.l.b16 %v1426
        %v4952 = vunpack.c.h.b16 %v1426
        %v4953 = vunpack.c.l.b16 %v1427
        %v4954 = vunpack.c.h.b16 %v1427
        %v4955 = vunpack.c.l.b16 %v1428
        %v4956 = vunpack.c.h.b16 %v1428
        %v4957 = vunpack.c.l.b16 %v1429
        %v4958 = vunpack.c.h.b16 %v1429
        %v4959 = vunpack.c.l.b16 %v1430
        %v4960 = vunpack.c.h.b16 %v1430
        %v4961 = vunpack.c.l.b16 %v1431
        %v4962 = vunpack.c.h.b16 %v1431
        %v4963 = vunpack.c.l.b16 %v1432
        %v4964 = vunpack.c.h.b16 %v1432
        %v4965 = vunpack.c.l.b16 %v1433
        %v4966 = vunpack.c.h.b16 %v1433
        %v4967 = vunpack.c.l.b16 %v1434
        %v4968 = vunpack.c.h.b16 %v1434
        %v4969 = vunpack.c.l.b16 %v1435
        %v4970 = vunpack.c.h.b16 %v1435
        %v4971 = vunpack.c.l.b16 %v1436
        %v4972 = vunpack.c.h.b16 %v1436
        %v4973 = vunpack.c.l.b16 %v1437
        %v4974 = vunpack.c.h.b16 %v1437
        %v4975 = vunpack.c.l.b16 %v1438
        %v4976 = vunpack.c.h.b16 %v1438
        %v4977 = vunpack.c.l.b16 %v1439
        %v4978 = vunpack.c.h.b16 %v1439
        %v4979 = vunpack.c.l.b16 %v1440
        %v4980 = vunpack.c.h.b16 %v1440
        %v4981 = vunpack.c.l.b16 %v1441
        %v4982 = vunpack.c.h.b16 %v1441
        %v4983 = vunpack.c.l.b16 %v1442
        %v4984 = vunpack.c.h.b16 %v1442
        %v4985 = vunpack.c.l.b16 %v1443
        %v4986 = vunpack.c.h.b16 %v1443
        %v4987 = vunpack.c.l.b16 %v1444
        %v4988 = vunpack.c.h.b16 %v1444
        %v4989 = vunpack.c.l.b16 %v1445
        %v4990 = vunpack.c.h.b16 %v1445
        %v4991 = vunpack.c.l.b16 %v1446
        %v4992 = vunpack.c.h.b16 %v1446
        %v4993 = vunpack.c.l.b16 %v1447
        %v4994 = vunpack.c.h.b16 %v1447
        %v4995 = vunpack.c.l.b16 %v1448
        %v4996 = vunpack.c.h.b16 %v1448
        %v4997 = vunpack.c.l.b16 %v1449
        %v4998 = vunpack.c.h.b16 %v1449
        %v4999 = vunpack.c.l.b16 %v1450
        %v5000 = vunpack.c.h.b16 %v1450
        %v5001 = vunpack.c.l.b16 %v1451
        %v5002 = vunpack.c.h.b16 %v1451
        %v5003 = vunpack.c.l.b16 %v1452
        %v5004 = vunpack.c.h.b16 %v1452
        %v5005 = vunpack.c.l.b16 %v1453
        %v5006 = vunpack.c.h.b16 %v1453
        %v5007 = vunpack.c.l.b16 %v1454
        %v5008 = vunpack.c.h.b16 %v1454
        %v5009 = vunpack.c.l.b16 %v1455
        %v5010 = vunpack.c.h.b16 %v1455
        %v5011 = vunpack.c.l.b16 %v1456
        %v5012 = vunpack.c.h.b16 %v1456
        %v5013 = vunpack.c.l.b16 %v1457
        %v5014 = vunpack.c.h.b16 %v1457
        %v5015 = vunpack.c.l.b16 %v1458
        %v5016 = vunpack.c.h.b16 %v1458
        %v5017 = vunpack.c.l.b16 %v1459
        %v5018 = vunpack.c.h.b16 %v1459
        %v5019 = vunpack.c.l.b16 %v1460
        %v5020 = vunpack.c.h.b16 %v1460
        %v5021 = vunpack.c.l.b16 %v1461
        %v5022 = vunpack.c.h.b16 %v1461
        %v5023 = vunpack.c.l.b16 %v1462
        %v5024 = vunpack.c.h.b16 %v1462
        %v5025 = vunpack.c.l.b16 %v1463
        %v5026 = vunpack.c.h.b16 %v1463
        %v5027 = vunpack.c.l.b16 %v1464
        %v5028 = vunpack.c.h.b16 %v1464
        %v5029 = vunpack.c.l.b16 %v1465
        %v5030 = vunpack.c.h.b16 %v1465
        %v5031 = vunpack.c.l.b16 %v1466
        %v5032 = vunpack.c.h.b16 %v1466
        %v5033 = vunpack.c.l.b16 %v1467
        %v5034 = vunpack.c.h.b16 %v1467
        %v5035 = vunpack.c.l.b16 %v1468
        %v5036 = vunpack.c.h.b16 %v1468
        %v5037 = vunpack.c.l.b16 %v1469
        %v5038 = vunpack.c.h.b16 %v1469
        %v5039 = vunpack.c.l.b16 %v1470
        %v5040 = vunpack.c.h.b16 %v1470
        %v5041 = vunpack.c.l.b16 %v1471
        %v5042 = vunpack.c.h.b16 %v1471
        %v5043 = vunpack.c.l.b16 %v1472
        %v5044 = vunpack.c.h.b16 %v1472
        %v5045 = vunpack.c.l.b16 %v1473
        %v5046 = vunpack.c.h.b16 %v1473
        %v5047 = vunpack.c.l.b16 %v1474
        %v5048 = vunpack.c.h.b16 %v1474
        %v5049 = vunpack.c.l.b16 %v1475
        %v5050 = vunpack.c.h.b16 %v1475
        %v5051 = vunpack.c.l.b16 %v1476
        %v5052 = vunpack.c.h.b16 %v1476
        %v5053 = vunpack.c.l.b16 %v1477
        %v5054 = vunpack.c.h.b16 %v1477
        %v5055 = vunpack.c.l.b16 %v1478
        %v5056 = vunpack.c.h.b16 %v1478
        %v5057 = vunpack.c.l.b16 %v1479
        %v5058 = vunpack.c.h.b16 %v1479
        %v5059 = vunpack.c.l.b16 %v1480
        %v5060 = vunpack.c.h.b16 %v1480
        %v5061 = vunpack.c.l.b16 %v1481
        %v5062 = vunpack.c.h.b16 %v1481
        %v5063 = vunpack.c.l.b16 %v1482
        %v5064 = vunpack.c.h.b16 %v1482
        %v5065 = vunpack.c.l.b16 %v1483
        %v5066 = vunpack.c.h.b16 %v1483
        %v5067 = vunpack.c.l.b16 %v1484
        %v5068 = vunpack.c.h.b16 %v1484
        %v5069 = vunpack.c.l.b16 %v1485
        %v5070 = vunpack.c.h.b16 %v1485
        %v5071 = vunpack.c.l.b16 %v1486
        %v5072 = vunpack.c.h.b16 %v1486
        %v5073 = vunpack.c.l.b16 %v1487
        %v5074 = vunpack.c.h.b16 %v1487
        %v5075 = vunpack.c.l.b16 %v1488
        %v5076 = vunpack.c.h.b16 %v1488
        %v5077 = vunpack.c.l.b16 %v1489
        %v5078 = vunpack.c.h.b16 %v1489
        %v5079 = vunpack.c.l.b16 %v1490
        %v5080 = vunpack.c.h.b16 %v1490
        %v5081 = vunpack.c.l.b16 %v1491
        %v5082 = vunpack.c.h.b16 %v1491
        %v5083 = vunpack.c.l.b16 %v1492
        %v5084 = vunpack.c.h.b16 %v1492
        %v5085 = vunpack.c.l.b16 %v1493
        %v5086 = vunpack.c.h.b16 %v1493
        %v5087 = vunpack.c.l.b16 %v1494
        %v5088 = vunpack.c.h.b16 %v1494
        %v5089 = vunpack.c.l.b16 %v1495
        %v5090 = vunpack.c.h.b16 %v1495
        %v5091 = vunpack.c.l.b16 %v1496
        %v5092 = vunpack.c.h.b16 %v1496
        %v5093 = vunpack.c.l.b16 %v1497
        %v5094 = vunpack.c.h.b16 %v1497
        %v5095 = vunpack.c.l.b16 %v1498
        %v5096 = vunpack.c.h.b16 %v1498
        %v5097 = vunpack.c.l.b16 %v1499
        %v5098 = vunpack.c.h.b16 %v1499
        %v5099 = vunpack.c.l.b16 %v1500
        %v5100 = vunpack.c.h.b16 %v1500
        %v5101 = vunpack.c.l.b16 %v1501
        %v5102 = vunpack.c.h.b16 %v1501
        %v5103 = vunpack.c.l.b16 %v1502
        %v5104 = vunpack.c.h.b16 %v1502
        %v5105 = vunpack.c.l.b16 %v1503
        %v5106 = vunpack.c.h.b16 %v1503
        %v5107 = vunpack.c.l.b16 %v1504
        %v5108 = vunpack.c.h.b16 %v1504
        %v5109 = vunpack.c.l.b16 %v1505
        %v5110 = vunpack.c.h.b16 %v1505
        %v5111 = vunpack.c.l.b16 %v1506
        %v5112 = vunpack.c.h.b16 %v1506
        %v5113 = vunpack.c.l.b16 %v1507
        %v5114 = vunpack.c.h.b16 %v1507
        %v5115 = vunpack.c.l.b16 %v1508
        %v5116 = vunpack.c.h.b16 %v1508
        %v5117 = vunpack.c.l.b16 %v1509
        %v5118 = vunpack.c.h.b16 %v1509
        %v5119 = vunpack.c.l.b16 %v1510
        %v5120 = vunpack.c.h.b16 %v1510
        %v5121 = vunpack.c.l.b16 %v1511
        %v5122 = vunpack.c.h.b16 %v1511
        %v5123 = vunpack.c.l.b16 %v1512
        %v5124 = vunpack.c.h.b16 %v1512
        %v5125 = vunpack.c.l.b16 %v1513
        %v5126 = vunpack.c.h.b16 %v1513
        %v5127 = vunpack.c.l.b16 %v1514
        %v5128 = vunpack.c.h.b16 %v1514
        %v5129 = vunpack.c.l.b16 %v1515
        %v5130 = vunpack.c.h.b16 %v1515
        %v5131 = vunpack.c.l.b16 %v1516
        %v5132 = vunpack.c.h.b16 %v1516
        %v5133 = vunpack.c.l.b16 %v1517
        %v5134 = vunpack.c.h.b16 %v1517
        %v5135 = vunpack.c.l.b16 %v1518
        %v5136 = vunpack.c.h.b16 %v1518
        %v5137 = vunpack.c.l.b16 %v1519
        %v5138 = vunpack.c.h.b16 %v1519
        %v5139 = vunpack.c.l.b16 %v1520
        %v5140 = vunpack.c.h.b16 %v1520
        %v5141 = vunpack.c.l.b16 %v1521
        %v5142 = vunpack.c.h.b16 %v1521
        %v5143 = vunpack.c.l.b16 %v1522
        %v5144 = vunpack.c.h.b16 %v1522
        %v5145 = vunpack.c.l.b16 %v1523
        %v5146 = vunpack.c.h.b16 %v1523
        %v5147 = vunpack.c.l.b16 %v1524
        %v5148 = vunpack.c.h.b16 %v1524
        %v5149 = vunpack.c.l.b16 %v1525
        %v5150 = vunpack.c.h.b16 %v1525
        %v5151 = vunpack.c.l.b16 %v1526
        %v5152 = vunpack.c.h.b16 %v1526
        %v5153 = vunpack.c.l.b16 %v1527
        %v5154 = vunpack.c.h.b16 %v1527
        %v5155 = vunpack.c.l.b16 %v1528
        %v5156 = vunpack.c.h.b16 %v1528
        %v5157 = vunpack.c.l.b16 %v1529
        %v5158 = vunpack.c.h.b16 %v1529
        %v5159 = vunpack.c.l.b16 %v1530
        %v5160 = vunpack.c.h.b16 %v1530
        %v5161 = vunpack.c.l.b16 %v1531
        %v5162 = vunpack.c.h.b16 %v1531
        %v5163 = vunpack.c.l.b16 %v1532
        %v5164 = vunpack.c.h.b16 %v1532
        %v5165 = vunpack.c.l.b16 %v1533
        %v5166 = vunpack.c.h.b16 %v1533
        %v5167 = vunpack.c.l.b16 %v1534
        %v5168 = vunpack.c.h.b16 %v1534
        %v5169 = vunpack.c.l.b16 %v1535
        %v5170 = vunpack.c.h.b16 %v1535
        %v5171 = vunpack.c.l.b16 %v1536
        %v5172 = vunpack.c.h.b16 %v1536
        %v5173 = vunpack.c.l.b16 %v1537
        %v5174 = vunpack.c.h.b16 %v1537
        %v5175 = vunpack.c.l.b16 %v1538
        %v5176 = vunpack.c.h.b16 %v1538
        %v5177 = vunpack.c.l.b16 %v1539
        %v5178 = vunpack.c.h.b16 %v1539
        %v5179 = vunpack.c.l.b16 %v1540
        %v5180 = vunpack.c.h.b16 %v1540
        %v5181 = vunpack.c.l.b16 %v1541
        %v5182 = vunpack.c.h.b16 %v1541
        %v5183 = vunpack.c.l.b16 %v1542
        %v5184 = vunpack.c.h.b16 %v1542
        %v5185 = vunpack.c.l.b16 %v1543
        %v5186 = vunpack.c.h.b16 %v1543
        %v5187 = vunpack.c.l.b16 %v1544
        %v5188 = vunpack.c.h.b16 %v1544
        %v5189 = vunpack.c.l.b16 %v1545
        %v5190 = vunpack.c.h.b16 %v1545
        %v5191 = vunpack.c.l.b16 %v1546
        %v5192 = vunpack.c.h.b16 %v1546
        %v5193 = vunpack.c.l.b16 %v1547
        %v5194 = vunpack.c.h.b16 %v1547
        %v5195 = vunpack.c.l.b16 %v1548
        %v5196 = vunpack.c.h.b16 %v1548
        %v5197 = vunpack.c.l.b16 %v1549
        %v5198 = vunpack.c.h.b16 %v1549
        %v5199 = vunpack.c.l.b16 %v1550
        %v5200 = vunpack.c.h.b16 %v1550
        %v5201 = vunpack.c.l.b16 %v1551
        %v5202 = vunpack.c.h.b16 %v1551
        %v5203 = vunpack.c.l.b16 %v1552
        %v5204 = vunpack.c.h.b16 %v1552
        %v5205 = vunpack.c.l.b16 %v1553
        %v5206 = vunpack.c.h.b16 %v1553
        %v5207 = vunpack.c.l.b16 %v1554
        %v5208 = vunpack.c.h.b16 %v1554
        %v5209 = vunpack.c.l.b16 %v1555
        %v5210 = vunpack.c.h.b16 %v1555
        %v5211 = vunpack.c.l.b16 %v1556
        %v5212 = vunpack.c.h.b16 %v1556
        %v5213 = vunpack.c.l.b16 %v1557
        %v5214 = vunpack.c.h.b16 %v1557
        %v5215 = vunpack.c.l.b16 %v1558
        %v5216 = vunpack.c.h.b16 %v1558
        %v5217 = vunpack.c.l.b16 %v1559
        %v5218 = vunpack.c.h.b16 %v1559
        %v5219 = vunpack.c.l.b16 %v1560
        %v5220 = vunpack.c.h.b16 %v1560
        %v5221 = vunpack.c.l.b16 %v1561
        %v5222 = vunpack.c.h.b16 %v1561
        %v5223 = vunpack.c.l.b16 %v1562
        %v5224 = vunpack.c.h.b16 %v1562
        %v5225 = vunpack.c.l.b16 %v1563
        %v5226 = vunpack.c.h.b16 %v1563
        %v5227 = vunpack.c.l.b16 %v1564
        %v5228 = vunpack.c.h.b16 %v1564
        %v5229 = vunpack.c.l.b16 %v1565
        %v5230 = vunpack.c.h.b16 %v1565
        %v5231 = vunpack.c.l.b16 %v1566
        %v5232 = vunpack.c.h.b16 %v1566
        %v5233 = vunpack.c.l.b16 %v1567
        %v5234 = vunpack.c.h.b16 %v1567
        %v5235 = vunpack.c.l.b16 %v1568
        %v5236 = vunpack.c.h.b16 %v1568
        %v5237 = vunpack.c.l.b16 %v1569
        %v5238 = vunpack.c.h.b16 %v1569
        %v5239 = vunpack.c.l.b16 %v1570
        %v5240 = vunpack.c.h.b16 %v1570
        %v5241 = vunpack.c.l.b16 %v1571
        %v5242 = vunpack.c.h.b16 %v1571
        %v5243 = vunpack.c.l.b16 %v1572
        %v5244 = vunpack.c.h.b16 %v1572
        %v5245 = vunpack.c.l.b16 %v1573
        %v5246 = vunpack.c.h.b16 %v1573
        %v5247 = vunpack.c.l.b16 %v1574
        %v5248 = vunpack.c.h.b16 %v1574
        %v5249 = vunpack.c.l.b16 %v1575
        %v5250 = vunpack.c.h.b16 %v1575
        %v5251 = vunpack.c.l.b16 %v1576
        %v5252 = vunpack.c.h.b16 %v1576
        %v5253 = vunpack.c.l.b16 %v1577
        %v5254 = vunpack.c.h.b16 %v1577
        %v5255 = vunpack.c.l.b16 %v1578
        %v5256 = vunpack.c.h.b16 %v1578
        %v5257 = vunpack.c.l.b16 %v1579
        %v5258 = vunpack.c.h.b16 %v1579
        %v5259 = vunpack.c.l.b16 %v1580
        %v5260 = vunpack.c.h.b16 %v1580
        %v5261 = vunpack.c.l.b16 %v1581
        %v5262 = vunpack.c.h.b16 %v1581
        %v5263 = vunpack.c.l.b16 %v1582
        %v5264 = vunpack.c.h.b16 %v1582
        %v5265 = vunpack.c.l.b16 %v1583
        %v5266 = vunpack.c.h.b16 %v1583
        %v5267 = vunpack.c.l.b16 %v1584
        %v5268 = vunpack.c.h.b16 %v1584
        %v5269 = vunpack.c.l.b16 %v1585
        %v5270 = vunpack.c.h.b16 %v1585
        %v5271 = vunpack.c.l.b16 %v1586
        %v5272 = vunpack.c.h.b16 %v1586
        %v5273 = vunpack.c.l.b16 %v1587
        %v5274 = vunpack.c.h.b16 %v1587
        %v5275 = vunpack.c.l.b16 %v1588
        %v5276 = vunpack.c.h.b16 %v1588
        %v5277 = vunpack.c.l.b16 %v1589
        %v5278 = vunpack.c.h.b16 %v1589
        %v5279 = vunpack.c.l.b16 %v1590
        %v5280 = vunpack.c.h.b16 %v1590
        %v5281 = vunpack.c.l.b16 %v1591
        %v5282 = vunpack.c.h.b16 %v1591
        %v5283 = vunpack.c.l.b16 %v1592
        %v5284 = vunpack.c.h.b16 %v1592
        %v5285 = vunpack.c.l.b16 %v1593
        %v5286 = vunpack.c.h.b16 %v1593
        %v5287 = vunpack.c.l.b16 %v1594
        %v5288 = vunpack.c.h.b16 %v1594
        %v5289 = vunpack.c.l.b16 %v1595
        %v5290 = vunpack.c.h.b16 %v1595
        %v5291 = vunpack.c.l.b16 %v1596
        %v5292 = vunpack.c.h.b16 %v1596
        %v5293 = vunpack.c.l.b16 %v1597
        %v5294 = vunpack.c.h.b16 %v1597
        %v5295 = vunpack.c.l.b16 %v1598
        %v5296 = vunpack.c.h.b16 %v1598
        %v5297 = vunpack.c.l.b16 %v1599
        %v5298 = vunpack.c.h.b16 %v1599
        %v5299 = vunpack.c.l.b16 %v1600
        %v5300 = vunpack.c.h.b16 %v1600
        %v5301 = vunpack.c.l.b16 %v1601
        %v5302 = vunpack.c.h.b16 %v1601
        %v5303 = vunpack.c.l.b16 %v1602
        %v5304 = vunpack.c.h.b16 %v1602
        %v5305 = vunpack.c.l.b16 %v1603
        %v5306 = vunpack.c.h.b16 %v1603
        %v5307 = vunpack.c.l.b16 %v1604
        %v5308 = vunpack.c.h.b16 %v1604
        %v5309 = vunpack.c.l.b16 %v1605
        %v5310 = vunpack.c.h.b16 %v1605
        %v5311 = vunpack.c.l.b16 %v1606
        %v5312 = vunpack.c.h.b16 %v1606
        %v5313 = vunpack.c.l.b16 %v1607
        %v5314 = vunpack.c.h.b16 %v1607
        %v5315 = vunpack.c.l.b16 %v1608
        %v5316 = vunpack.c.h.b16 %v1608
        %v5317 = vunpack.c.l.b16 %v1609
        %v5318 = vunpack.c.h.b16 %v1609
        %v5319 = vunpack.c.l.b16 %v1610
        %v5320 = vunpack.c.h.b16 %v1610
        %v5321 = vunpack.c.l.b16 %v1611
        %v5322 = vunpack.c.h.b16 %v1611
        %v5323 = vunpack.c.l.b16 %v1612
        %v5324 = vunpack.c.h.b16 %v1612
        %v5325 = vunpack.c.l.b16 %v1613
        %v5326 = vunpack.c.h.b16 %v1613
        %v5327 = vunpack.c.l.b16 %v1614
        %v5328 = vunpack.c.h.b16 %v1614
        %v5329 = vunpack.c.l.b16 %v1615
        %v5330 = vunpack.c.h.b16 %v1615
        %v5331 = vunpack.c.l.b16 %v1616
        %v5332 = vunpack.c.h.b16 %v1616
        %v5333 = vunpack.c.l.b16 %v1617
        %v5334 = vunpack.c.h.b16 %v1617
        %v5335 = vunpack.c.l.b16 %v1618
        %v5336 = vunpack.c.h.b16 %v1618
        %v5337 = vunpack.c.l.b16 %v1619
        %v5338 = vunpack.c.h.b16 %v1619
        %v5339 = vunpack.c.l.b16 %v1620
        %v5340 = vunpack.c.h.b16 %v1620
        %v5341 = vunpack.c.l.b16 %v1621
        %v5342 = vunpack.c.h.b16 %v1621
        %v5343 = vunpack.c.l.b16 %v1622
        %v5344 = vunpack.c.h.b16 %v1622
        %v5345 = vunpack.c.l.b16 %v1623
        %v5346 = vunpack.c.h.b16 %v1623
        %v5347 = vunpack.c.l.b16 %v1624
        %v5348 = vunpack.c.h.b16 %v1624
        %v5349 = vunpack.c.l.b16 %v1625
        %v5350 = vunpack.c.h.b16 %v1625
        %v5351 = vunpack.c.l.b16 %v1626
        %v5352 = vunpack.c.h.b16 %v1626
        %v5353 = vunpack.c.l.b16 %v1627
        %v5354 = vunpack.c.h.b16 %v1627
        %v5355 = vunpack.c.l.b16 %v1628
        %v5356 = vunpack.c.h.b16 %v1628
        %v5357 = vunpack.c.l.b16 %v1629
        %v5358 = vunpack.c.h.b16 %v1629
        %v5359 = vunpack.c.l.b16 %v1630
        %v5360 = vunpack.c.h.b16 %v1630
        %v5361 = vunpack.c.l.b16 %v1631
        %v5362 = vunpack.c.h.b16 %v1631
        %v5363 = vunpack.c.l.b16 %v1632
        %v5364 = vunpack.c.h.b16 %v1632
        %v5365 = vunpack.c.l.b16 %v1633
        %v5366 = vunpack.c.h.b16 %v1633
        %v5367 = vpack.c.b16 %v2983, %v2967
        %v5368 = vpack.c.b16 %v2984, %v2968
        %v5369 = vpack.c.b16 %v2985, %v2969
        %v5370 = vpack.c.b16 %v2986, %v2970
        %v5371 = vpack.c.b16 %v2987, %v2971
        %v5372 = vpack.c.b16 %v2988, %v2972
        %v5373 = vpack.c.b16 %v2989, %v2973
        %v5374 = vpack.c.b16 %v2990, %v2974
        %v5375 = vpack.c.b16 %v2991, %v2975
        %v5376 = vpack.c.b16 %v2992, %v2976
        %v5377 = vpack.c.b16 %v2993, %v2977
        %v5378 = vpack.c.b16 %v2994, %v2978
        %v5379 = vpack.c.b16 %v2995, %v2979
        %v5380 = vpack.c.b16 %v2996, %v2980
        %v5381 = vpack.c.b16 %v2997, %v2981
        %v5382 = vpack.c.b16 %v2998, %v2982
        %v5383 = vpack.c.b16 %v3015, %v2999
        %v5384 = vpack.c.b16 %v3016, %v3000
        %v5385 = vpack.c.b16 %v3017, %v3001
        %v5386 = vpack.c.b16 %v3018, %v3002
        %v5387 = vpack.c.b16 %v3019, %v3003
        %v5388 = vpack.c.b16 %v3020, %v3004
        %v5389 = vpack.c.b16 %v3021, %v3005
        %v5390 = vpack.c.b16 %v3022, %v3006
        %v5391 = vpack.c.b16 %v3023, %v3007
        %v5392 = vpack.c.b16 %v3024, %v3008
        %v5393 = vpack.c.b16 %v3025, %v3009
        %v5394 = vpack.c.b16 %v3026, %v3010
        %v5395 = vpack.c.b16 %v3027, %v3011
        %v5396 = vpack.c.b16 %v3028, %v3012
        %v5397 = vpack.c.b16 %v3029, %v3013
        %v5398 = vpack.c.b16 %v3030, %v3014
        %v5399 = vpack.c.b16 %v3047, %v3031
        %v5400 = vpack.c.b16 %v3048, %v3032
        %v5401 = vpack.c.b16 %v3049, %v3033
        %v5402 = vpack.c.b16 %v3050, %v3034
        %v5403 = vpack.c.b16 %v3051, %v3035
        %v5404 = vpack.c.b16 %v3052, %v3036
        %v5405 = vpack.c.b16 %v3053, %v3037
        %v5406 = vpack.c.b16 %v3054, %v3038
        %v5407 = vpack.c.b16 %v3055, %v3039
        %v5408 = vpack.c.b16 %v3056, %v3040
        %v5409 = vpack.c.b16 %v3057, %v3041
        %v5410 = vpack.c.b16 %v3058, %v3042
        %v5411 = vpack.c.b16 %v3059, %v3043
        %v5412 = vpack.c.b16 %v3060, %v3044
        %v5413 = vpack.c.b16 %v3061, %v3045
        %v5414 = vpack.c.b16 %v3062, %v3046
        %v5415 = vpack.c.b16 %v3079, %v3063
        %v5416 = vpack.c.b16 %v3080, %v3064
        %v5417 = vpack.c.b16 %v3081, %v3065
        %v5418 = vpack.c.b16 %v3082, %v3066
        %v5419 = vpack.c.b16 %v3083, %v3067
        %v5420 = vpack.c.b16 %v3084, %v3068
        %v5421 = vpack.c.b16 %v3085, %v3069
        %v5422 = vpack.c.b16 %v3086, %v3070
        %v5423 = vpack.c.b16 %v3087, %v3071
        %v5424 = vpack.c.b16 %v3088, %v3072
        %v5425 = vpack.c.b16 %v3089, %v3073
        %v5426 = vpack.c.b16 %v3090, %v3074
        %v5427 = vpack.c.b16 %v3091, %v3075
        %v5428 = vpack.c.b16 %v3092, %v3076
        %v5429 = vpack.c.b16 %v3093, %v3077
        %v5430 = vpack.c.b16 %v3094, %v3078
        %v5431 = vpack.c.b16 %v3111, %v3095
        %v5432 = vpack.c.b16 %v3112, %v3096
        %v5433 = vpack.c.b16 %v3113, %v3097
        %v5434 = vpack.c.b16 %v3114, %v3098
        %v5435 = vpack.c.b16 %v3115, %v3099
        %v5436 = vpack.c.b16 %v3116, %v3100
        %v5437 = vpack.c.b16 %v3117, %v3101
        %v5438 = vpack.c.b16 %v3118, %v3102
        %v5439 = vpack.c.b16 %v3119, %v3103
        %v5440 = vpack.c.b16 %v3120, %v3104
        %v5441 = vpack.c.b16 %v3121, %v3105
        %v5442 = vpack.c.b16 %v3122, %v3106
        %v5443 = vpack.c.b16 %v3123, %v3107
        %v5444 = vpack.c.b16 %v3124, %v3108
        %v5445 = vpack.c.b16 %v3125, %v3109
        %v5446 = vpack.c.b16 %v3126, %v3110
        %v5447 = vpack.c.b16 %v3143, %v3127
        %v5448 = vpack.c.b16 %v3144, %v3128
        %v5449 = vpack.c.b16 %v3145, %v3129
        %v5450 = vpack.c.b16 %v3146, %v3130
        %v5451 = vpack.c.b16 %v3147, %v3131
        %v5452 = vpack.c.b16 %v3148, %v3132
        %v5453 = vpack.c.b16 %v3149, %v3133
        %v5454 = vpack.c.b16 %v3150, %v3134
        %v5455 = vpack.c.b16 %v3151, %v3135
        %v5456 = vpack.c.b16 %v3152, %v3136
        %v5457 = vpack.c.b16 %v3153, %v3137
        %v5458 = vpack.c.b16 %v3154, %v3138
        %v5459 = vpack.c.b16 %v3155, %v3139
        %v5460 = vpack.c.b16 %v3156, %v3140
        %v5461 = vpack.c.b16 %v3157, %v3141
        %v5462 = vpack.c.b16 %v3158, %v3142
        %v5463 = vpack.c.b16 %v3175, %v3159
        %v5464 = vpack.c.b16 %v3176, %v3160
        %v5465 = vpack.c.b16 %v3177, %v3161
        %v5466 = vpack.c.b16 %v3178, %v3162
        %v5467 = vpack.c.b16 %v3179, %v3163
        %v5468 = vpack.c.b16 %v3180, %v3164
        %v5469 = vpack.c.b16 %v3181, %v3165
        %v5470 = vpack.c.b16 %v3182, %v3166
        %v5471 = vpack.c.b16 %v3183, %v3167
        %v5472 = vpack.c.b16 %v3184, %v3168
        %v5473 = vpack.c.b16 %v3185, %v3169
        %v5474 = vpack.c.b16 %v3186, %v3170
        %v5475 = vpack.c.b16 %v3187, %v3171
        %v5476 = vpack.c.b16 %v3188, %v3172
        %v5477 = vpack.c.b16 %v3189, %v3173
        %v5478 = vpack.c.b16 %v3190, %v3174
        %v5479 = vpack.c.b16 %v3207, %v3191
        %v5480 = vpack.c.b16 %v3208, %v3192
        %v5481 = vpack.c.b16 %v3209, %v3193
        %v5482 = vpack.c.b16 %v3210, %v3194
        %v5483 = vpack.c.b16 %v3211, %v3195
        %v5484 = vpack.c.b16 %v3212, %v3196
        %v5485 = vpack.c.b16 %v3213, %v3197
        %v5486 = vpack.c.b16 %v3214, %v3198
        %v5487 = vpack.c.b16 %v3215, %v3199
        %v5488 = vpack.c.b16 %v3216, %v3200
        %v5489 = vpack.c.b16 %v3217, %v3201
        %v5490 = vpack.c.b16 %v3218, %v3202
        %v5491 = vpack.c.b16 %v3219, %v3203
        %v5492 = vpack.c.b16 %v3220, %v3204
        %v5493 = vpack.c.b16 %v3221, %v3205
        %v5494 = vpack.c.b16 %v3222, %v3206
        %v5495 = vpack.c.b16 %v3239, %v3223
        %v5496 = vpack.c.b16 %v3240, %v3224
        %v5497 = vpack.c.b16 %v3241, %v3225
        %v5498 = vpack.c.b16 %v3242, %v3226
        %v5499 = vpack.c.b16 %v3243, %v3227
        %v5500 = vpack.c.b16 %v3244, %v3228
        %v5501 = vpack.c.b16 %v3245, %v3229
        %v5502 = vpack.c.b16 %v3246, %v3230
        %v5503 = vpack.c.b16 %v3247, %v3231
        %v5504 = vpack.c.b16 %v3248, %v3232
        %v5505 = vpack.c.b16 %v3249, %v3233
        %v5506 = vpack.c.b16 %v3250, %v3234
        %v5507 = vpack.c.b16 %v3251, %v3235
        %v5508 = vpack.c.b16 %v3252, %v3236
        %v5509 = vpack.c.b16 %v3253, %v3237
        %v5510 = vpack.c.b16 %v3254, %v3238
        %v5511 = vpack.c.b16 %v3271, %v3255
        %v5512 = vpack.c.b16 %v3272, %v3256
        %v5513 = vpack.c.b16 %v3273, %v3257
        %v5514 = vpack.c.b16 %v3274, %v3258
        %v5515 = vpack.c.b16 %v3275, %v3259
        %v5516 = vpack.c.b16 %v3276, %v3260
        %v5517 = vpack.c.b16 %v3277, %v3261
        %v5518 = vpack.c.b16 %v3278, %v3262
        %v5519 = vpack.c.b16 %v3279, %v3263
        %v5520 = vpack.c.b16 %v3280, %v3264
        %v5521 = vpack.c.b16 %v3281, %v3265
        %v5522 = vpack.c.b16 %v3282, %v3266
        %v5523 = vpack.c.b16 %v3283, %v3267
        %v5524 = vpack.c.b16 %v3284, %v3268
        %v5525 = vpack.c.b16 %v3285, %v3269
        %v5526 = vpack.c.b16 %v3286, %v3270
        %v5527 = vpack.c.b16 %v3303, %v3287
        %v5528 = vpack.c.b16 %v3304, %v3288
        %v5529 = vpack.c.b16 %v3305, %v3289
        %v5530 = vpack.c.b16 %v3306, %v3290
        %v5531 = vpack.c.b16 %v3307, %v3291
        %v5532 = vpack.c.b16 %v3308, %v3292
        %v5533 = vpack.c.b16 %v3309, %v3293
        %v5534 = vpack.c.b16 %v3310, %v3294
        %v5535 = vpack.c.b16 %v3311, %v3295
        %v5536 = vpack.c.b16 %v3312, %v3296
        %v5537 = vpack.c.b16 %v3313, %v3297
        %v5538 = vpack.c.b16 %v3314, %v3298
        %v5539 = vpack.c.b16 %v3315, %v3299
        %v5540 = vpack.c.b16 %v3316, %v3300
        %v5541 = vpack.c.b16 %v3317, %v3301
        %v5542 = vpack.c.b16 %v3318, %v3302
        %v5543 = vpack.c.b16 %v3335, %v3319
        %v5544 = vpack.c.b16 %v3336, %v3320
        %v5545 = vpack.c.b16 %v3337, %v3321
        %v5546 = vpack.c.b16 %v3338, %v3322
        %v5547 = vpack.c.b16 %v3339, %v3323
        %v5548 = vpack.c.b16 %v3340, %v3324
        %v5549 = vpack.c.b16 %v3341, %v3325
        %v5550 = vpack.c.b16 %v3342, %v3326
        %v5551 = vpack.c.b16 %v3343, %v3327
        %v5552 = vpack.c.b16 %v3344, %v3328
        %v5553 = vpack.c.b16 %v3345, %v3329
        %v5554 = vpack.c.b16 %v3346, %v3330
        %v5555 = vpack.c.b16 %v3347, %v3331
        %v5556 = vpack.c.b16 %v3348, %v3332
        %v5557 = vpack.c.b16 %v3349, %v3333
        %v5558 = vpack.c.b16 %v3350, %v3334
        %v5559 = vpack.c.b16 %v3367, %v3351
        %v5560 = vpack.c.b16 %v3368, %v3352
        %v5561 = vpack.c.b16 %v3369, %v3353
        %v5562 = vpack.c.b16 %v3370, %v3354
        %v5563 = vpack.c.b16 %v3371, %v3355
        %v5564 = vpack.c.b16 %v3372, %v3356
        %v5565 = vpack.c.b16 %v3373, %v3357
        %v5566 = vpack.c.b16 %v3374, %v3358
        %v5567 = vpack.c.b16 %v3375, %v3359
        %v5568 = vpack.c.b16 %v3376, %v3360
        %v5569 = vpack.c.b16 %v3377, %v3361
        %v5570 = vpack.c.b16 %v3378, %v3362
        %v5571 = vpack.c.b16 %v3379, %v3363
        %v5572 = vpack.c.b16 %v3380, %v3364
        %v5573 = vpack.c.b16 %v3381, %v3365
        %v5574 = vpack.c.b16 %v3382, %v3366
        %v5575 = vpack.c.b16 %v3399, %v3383
        %v5576 = vpack.c.b16 %v3400, %v3384
        %v5577 = vpack.c.b16 %v3401, %v3385
        %v5578 = vpack.c.b16 %v3402, %v3386
        %v5579 = vpack.c.b16 %v3403, %v3387
        %v5580 = vpack.c.b16 %v3404, %v3388
        %v5581 = vpack.c.b16 %v3405, %v3389
        %v5582 = vpack.c.b16 %v3406, %v3390
        %v5583 = vpack.c.b16 %v3407, %v3391
        %v5584 = vpack.c.b16 %v3408, %v3392
        %v5585 = vpack.c.b16 %v3409, %v3393
        %v5586 = vpack.c.b16 %v3410, %v3394
        %v5587 = vpack.c.b16 %v3411, %v3395
        %v5588 = vpack.c.b16 %v3412, %v3396
        %v5589 = vpack.c.b16 %v3413, %v3397
        %v5590 = vpack.c.b16 %v3414, %v3398
        %v5591 = vpack.c.b16 %v3431, %v3415
        %v5592 = vpack.c.b16 %v3432, %v3416
        %v5593 = vpack.c.b16 %v3433, %v3417
        %v5594 = vpack.c.b16 %v3434, %v3418
        %v5595 = vpack.c.b16 %v3435, %v3419
        %v5596 = vpack.c.b16 %v3436, %v3420
        %v5597 = vpack.c.b16 %v3437, %v3421
        %v5598 = vpack.c.b16 %v3438, %v3422
        %v5599 = vpack.c.b16 %v3439, %v3423
        %v5600 = vpack.c.b16 %v3440, %v3424
        %v5601 = vpack.c.b16 %v3441, %v3425
        %v5602 = vpack.c.b16 %v3442, %v3426
        %v5603 = vpack.c.b16 %v3443, %v3427
        %v5604 = vpack.c.b16 %v3444, %v3428
        %v5605 = vpack.c.b16 %v3445, %v3429
        %v5606 = vpack.c.b16 %v3446, %v3430
        %v5607 = vpack.c.b16 %v3463, %v3447
        %v5608 = vpack.c.b16 %v3464, %v3448
        %v5609 = vpack.c.b16 %v3465, %v3449
        %v5610 = vpack.c.b16 %v3466, %v3450
        %v5611 = vpack.c.b16 %v3467, %v3451
        %v5612 = vpack.c.b16 %v3468, %v3452
        %v5613 = vpack.c.b16 %v3469, %v3453
        %v5614 = vpack.c.b16 %v3470, %v3454
        %v5615 = vpack.c.b16 %v3471, %v3455
        %v5616 = vpack.c.b16 %v3472, %v3456
        %v5617 = vpack.c.b16 %v3473, %v3457
        %v5618 = vpack.c.b16 %v3474, %v3458
        %v5619 = vpack.c.b16 %v3475, %v3459
        %v5620 = vpack.c.b16 %v3476, %v3460
        %v5621 = vpack.c.b16 %v3477, %v3461
        %v5622 = vpack.c.b16 %v3478, %v3462
        %v5623 = vpack.c.b16 %v3495, %v3479
        %v5624 = vpack.c.b16 %v3496, %v3480
        %v5625 = vpack.c.b16 %v3497, %v3481
        %v5626 = vpack.c.b16 %v3498, %v3482
        %v5627 = vpack.c.b16 %v3499, %v3483
        %v5628 = vpack.c.b16 %v3500, %v3484
        %v5629 = vpack.c.b16 %v3501, %v3485
        %v5630 = vpack.c.b16 %v3502, %v3486
        %v5631 = vpack.c.b16 %v3503, %v3487
        %v5632 = vpack.c.b16 %v3504, %v3488
        %v5633 = vpack.c.b16 %v3505, %v3489
        %v5634 = vpack.c.b16 %v3506, %v3490
        %v5635 = vpack.c.b16 %v3507, %v3491
        %v5636 = vpack.c.b16 %v3508, %v3492
        %v5637 = vpack.c.b16 %v3509, %v3493
        %v5638 = vpack.c.b16 %v3510, %v3494
        %v5639 = vpack.c.b16 %v3527, %v3511
        %v5640 = vpack.c.b16 %v3528, %v3512
        %v5641 = vpack.c.b16 %v3529, %v3513
        %v5642 = vpack.c.b16 %v3530, %v3514
        %v5643 = vpack.c.b16 %v3531, %v3515
        %v5644 = vpack.c.b16 %v3532, %v3516
        %v5645 = vpack.c.b16 %v3533, %v3517
        %v5646 = vpack.c.b16 %v3534, %v3518
        %v5647 = vpack.c.b16 %v3535, %v3519
        %v5648 = vpack.c.b16 %v3536, %v3520
        %v5649 = vpack.c.b16 %v3537, %v3521
        %v5650 = vpack.c.b16 %v3538, %v3522
        %v5651 = vpack.c.b16 %v3539, %v3523
        %v5652 = vpack.c.b16 %v3540, %v3524
        %v5653 = vpack.c.b16 %v3541, %v3525
        %v5654 = vpack.c.b16 %v3542, %v3526
        %v5655 = vpack.c.b16 %v3559, %v3543
        %v5656 = vpack.c.b16 %v3560, %v3544
        %v5657 = vpack.c.b16 %v3561, %v3545
        %v5658 = vpack.c.b16 %v3562, %v3546
        %v5659 = vpack.c.b16 %v3563, %v3547
        %v5660 = vpack.c.b16 %v3564, %v3548
        %v5661 = vpack.c.b16 %v3565, %v3549
        %v5662 = vpack.c.b16 %v3566, %v3550
        %v5663 = vpack.c.b16 %v3567, %v3551
        %v5664 = vpack.c.b16 %v3568, %v3552
        %v5665 = vpack.c.b16 %v3569, %v3553
        %v5666 = vpack.c.b16 %v3570, %v3554
        %v5667 = vpack.c.b16 %v3571, %v3555
        %v5668 = vpack.c.b16 %v3572, %v3556
        %v5669 = vpack.c.b16 %v3573, %v3557
        %v5670 = vpack.c.b16 %v3574, %v3558
        %v5671 = vpack.c.b16 %v3591, %v3575
        %v5672 = vpack.c.b16 %v3592, %v3576
        %v5673 = vpack.c.b16 %v3593, %v3577
        %v5674 = vpack.c.b16 %v3594, %v3578
        %v5675 = vpack.c.b16 %v3595, %v3579
        %v5676 = vpack.c.b16 %v3596, %v3580
        %v5677 = vpack.c.b16 %v3597, %v3581
        %v5678 = vpack.c.b16 %v3598, %v3582
        %v5679 = vpack.c.b16 %v3599, %v3583
        %v5680 = vpack.c.b16 %v3600, %v3584
        %v5681 = vpack.c.b16 %v3601, %v3585
        %v5682 = vpack.c.b16 %v3602, %v3586
        %v5683 = vpack.c.b16 %v3603, %v3587
        %v5684 = vpack.c.b16 %v3604, %v3588
        %v5685 = vpack.c.b16 %v3605, %v3589
        %v5686 = vpack.c.b16 %v3606, %v3590
        %v5687 = vpack.c.b16 %v3623, %v3607
        %v5688 = vpack.c.b16 %v3624, %v3608
        %v5689 = vpack.c.b16 %v3625, %v3609
        %v5690 = vpack.c.b16 %v3626, %v3610
        %v5691 = vpack.c.b16 %v3627, %v3611
        %v5692 = vpack.c.b16 %v3628, %v3612
        %v5693 = vpack.c.b16 %v3629, %v3613
        %v5694 = vpack.c.b16 %v3630, %v3614
        %v5695 = vpack.c.b16 %v3631, %v3615
        %v5696 = vpack.c.b16 %v3632, %v3616
        %v5697 = vpack.c.b16 %v3633, %v3617
        %v5698 = vpack.c.b16 %v3634, %v3618
        %v5699 = vpack.c.b16 %v3635, %v3619
        %v5700 = vpack.c.b16 %v3636, %v3620
        %v5701 = vpack.c.b16 %v3637, %v3621
        %v5702 = vpack.c.b16 %v3638, %v3622
        %v5703 = vpack.c.b16 %v3655, %v3639
        %v5704 = vpack.c.b16 %v3656, %v3640
        %v5705 = vpack.c.b16 %v3657, %v3641
        %v5706 = vpack.c.b16 %v3658, %v3642
        %v5707 = vpack.c.b16 %v3659, %v3643
        %v5708 = vpack.c.b16 %v3660, %v3644
        %v5709 = vpack.c.b16 %v3661, %v3645
        %v5710 = vpack.c.b16 %v3662, %v3646
        %v5711 = vpack.c.b16 %v3663, %v3647
        %v5712 = vpack.c.b16 %v3664, %v3648
        %v5713 = vpack.c.b16 %v3665, %v3649
        %v5714 = vpack.c.b16 %v3666, %v3650
        %v5715 = vpack.c.b16 %v3667, %v3651
        %v5716 = vpack.c.b16 %v3668, %v3652
        %v5717 = vpack.c.b16 %v3669, %v3653
        %v5718 = vpack.c.b16 %v3670, %v3654
        %v5719 = vpack.c.b16 %v3687, %v3671
        %v5720 = vpack.c.b16 %v3688, %v3672
        %v5721 = vpack.c.b16 %v3689, %v3673
        %v5722 = vpack.c.b16 %v3690, %v3674
        %v5723 = vpack.c.b16 %v3691, %v3675
        %v5724 = vpack.c.b16 %v3692, %v3676
        %v5725 = vpack.c.b16 %v3693, %v3677
        %v5726 = vpack.c.b16 %v3694, %v3678
        %v5727 = vpack.c.b16 %v3695, %v3679
        %v5728 = vpack.c.b16 %v3696, %v3680
        %v5729 = vpack.c.b16 %v3697, %v3681
        %v5730 = vpack.c.b16 %v3698, %v3682
        %v5731 = vpack.c.b16 %v3699, %v3683
        %v5732 = vpack.c.b16 %v3700, %v3684
        %v5733 = vpack.c.b16 %v3701, %v3685
        %v5734 = vpack.c.b16 %v3702, %v3686
        %v5735 = vpack.c.b16 %v3719, %v3703
        %v5736 = vpack.c.b16 %v3720, %v3704
        %v5737 = vpack.c.b16 %v3721, %v3705
        %v5738 = vpack.c.b16 %v3722, %v3706
        %v5739 = vpack.c.b16 %v3723, %v3707
        %v5740 = vpack.c.b16 %v3724, %v3708
        %v5741 = vpack.c.b16 %v3725, %v3709
        %v5742 = vpack.c.b16 %v3726, %v3710
        %v5743 = vpack.c.b16 %v3727, %v3711
        %v5744 = vpack.c.b16 %v3728, %v3712
        %v5745 = vpack.c.b16 %v3729, %v3713
        %v5746 = vpack.c.b16 %v3730, %v3714
        %v5747 = vpack.c.b16 %v3731, %v3715
        %v5748 = vpack.c.b16 %v3732, %v3716
        %v5749 = vpack.c.b16 %v3733, %v3717
        %v5750 = vpack.c.b16 %v3734, %v3718
        %v5751 = vpack.c.b16 %v3751, %v3735
        %v5752 = vpack.c.b16 %v3752, %v3736
        %v5753 = vpack.c.b16 %v3753, %v3737
        %v5754 = vpack.c.b16 %v3754, %v3738
        %v5755 = vpack.c.b16 %v3755, %v3739
        %v5756 = vpack.c.b16 %v3756, %v3740
        %v5757 = vpack.c.b16 %v3757, %v3741
        %v5758 = vpack.c.b16 %v3758, %v3742
        %v5759 = vpack.c.b16 %v3759, %v3743
        %v5760 = vpack.c.b16 %v3760, %v3744
        %v5761 = vpack.c.b16 %v3761, %v3745
        %v5762 = vpack.c.b16 %v3762, %v3746
        %v5763 = vpack.c.b16 %v3763, %v3747
        %v5764 = vpack.c.b16 %v3764, %v3748
        %v5765 = vpack.c.b16 %v3765, %v3749
        %v5766 = vpack.c.b16 %v3766, %v3750
        %v5767 = vpack.c.b16 %v3783, %v3767
        %v5768 = vpack.c.b16 %v3784, %v3768
        %v5769 = vpack.c.b16 %v3785, %v3769
        %v5770 = vpack.c.b16 %v3786, %v3770
        %v5771 = vpack.c.b16 %v3787, %v3771
        %v5772 = vpack.c.b16 %v3788, %v3772
        %v5773 = vpack.c.b16 %v3789, %v3773
        %v5774 = vpack.c.b16 %v3790, %v3774
        %v5775 = vpack.c.b16 %v3791, %v3775
        %v5776 = vpack.c.b16 %v3792, %v3776
        %v5777 = vpack.c.b16 %v3793, %v3777
        %v5778 = vpack.c.b16 %v3794, %v3778
        %v5779 = vpack.c.b16 %v3795, %v3779
        %v5780 = vpack.c.b16 %v3796, %v3780
        %v5781 = vpack.c.b16 %v3797, %v3781
        %v5782 = vpack.c.b16 %v3798, %v3782
        %v5783 = vpack.c.b16 %v3815, %v3799
        %v5784 = vpack.c.b16 %v3816, %v3800
        %v5785 = vpack.c.b16 %v3817, %v3801
        %v5786 = vpack.c.b16 %v3818, %v3802
        %v5787 = vpack.c.b16 %v3819, %v3803
        %v5788 = vpack.c.b16 %v3820, %v3804
        %v5789 = vpack.c.b16 %v3821, %v3805
        %v5790 = vpack.c.b16 %v3822, %v3806
        %v5791 = vpack.c.b16 %v3823, %v3807
        %v5792 = vpack.c.b16 %v3824, %v3808
        %v5793 = vpack.c.b16 %v3825, %v3809
        %v5794 = vpack.c.b16 %v3826, %v3810
        %v5795 = vpack.c.b16 %v3827, %v3811
        %v5796 = vpack.c.b16 %v3828, %v3812
        %v5797 = vpack.c.b16 %v3829, %v3813
        %v5798 = vpack.c.b16 %v3830, %v3814
        %v5799 = vpack.c.b16 %v3847, %v3831
        %v5800 = vpack.c.b16 %v3848, %v3832
        %v5801 = vpack.c.b16 %v3849, %v3833
        %v5802 = vpack.c.b16 %v3850, %v3834
        %v5803 = vpack.c.b16 %v3851, %v3835
        %v5804 = vpack.c.b16 %v3852, %v3836
        %v5805 = vpack.c.b16 %v3853, %v3837
        %v5806 = vpack.c.b16 %v3854, %v3838
        %v5807 = vpack.c.b16 %v3855, %v3839
        %v5808 = vpack.c.b16 %v3856, %v3840
        %v5809 = vpack.c.b16 %v3857, %v3841
        %v5810 = vpack.c.b16 %v3858, %v3842
        %v5811 = vpack.c.b16 %v3859, %v3843
        %v5812 = vpack.c.b16 %v3860, %v3844
        %v5813 = vpack.c.b16 %v3861, %v3845
        %v5814 = vpack.c.b16 %v3862, %v3846
        %v5815 = vpack.c.b16 %v3879, %v3863
        %v5816 = vpack.c.b16 %v3880, %v3864
        %v5817 = vpack.c.b16 %v3881, %v3865
        %v5818 = vpack.c.b16 %v3882, %v3866
        %v5819 = vpack.c.b16 %v3883, %v3867
        %v5820 = vpack.c.b16 %v3884, %v3868
        %v5821 = vpack.c.b16 %v3885, %v3869
        %v5822 = vpack.c.b16 %v3886, %v3870
        %v5823 = vpack.c.b16 %v3887, %v3871
        %v5824 = vpack.c.b16 %v3888, %v3872
        %v5825 = vpack.c.b16 %v3889, %v3873
        %v5826 = vpack.c.b16 %v3890, %v3874
        %v5827 = vpack.c.b16 %v3891, %v3875
        %v5828 = vpack.c.b16 %v3892, %v3876
        %v5829 = vpack.c.b16 %v3893, %v3877
        %v5830 = vpack.c.b16 %v3894, %v3878
        %v5831 = vpack.c.b16 %v3911, %v3895
        %v5832 = vpack.c.b16 %v3912, %v3896
        %v5833 = vpack.c.b16 %v3913, %v3897
        %v5834 = vpack.c.b16 %v3914, %v3898
        %v5835 = vpack.c.b16 %v3915, %v3899
        %v5836 = vpack.c.b16 %v3916, %v3900
        %v5837 = vpack.c.b16 %v3917, %v3901
        %v5838 = vpack.c.b16 %v3918, %v3902
        %v5839 = vpack.c.b16 %v3919, %v3903
        %v5840 = vpack.c.b16 %v3920, %v3904
        %v5841 = vpack.c.b16 %v3921, %v3905
        %v5842 = vpack.c.b16 %v3922, %v3906
        %v5843 = vpack.c.b16 %v3923, %v3907
        %v5844 = vpack.c.b16 %v3924, %v3908
        %v5845 = vpack.c.b16 %v3925, %v3909
        %v5846 = vpack.c.b16 %v3926, %v3910
        %v5847 = vpack.c.b16 %v3943, %v3927
        %v5848 = vpack.c.b16 %v3944, %v3928
        %v5849 = vpack.c.b16 %v3945, %v3929
        %v5850 = vpack.c.b16 %v3946, %v3930
        %v5851 = vpack.c.b16 %v3947, %v3931
        %v5852 = vpack.c.b16 %v3948, %v3932
        %v5853 = vpack.c.b16 %v3949, %v3933
        %v5854 = vpack.c.b16 %v3950, %v3934
        %v5855 = vpack.c.b16 %v3951, %v3935
        %v5856 = vpack.c.b16 %v3952, %v3936
        %v5857 = vpack.c.b16 %v3953, %v3937
        %v5858 = vpack.c.b16 %v3954, %v3938
        %v5859 = vpack.c.b16 %v3955, %v3939
        %v5860 = vpack.c.b16 %v3956, %v3940
        %v5861 = vpack.c.b16 %v3957, %v3941
        %v5862 = vpack.c.b16 %v3958, %v3942
        %v5863 = vpack.c.b16 %v3975, %v3959
        %v5864 = vpack.c.b16 %v3976, %v3960
        %v5865 = vpack.c.b16 %v3977, %v3961
        %v5866 = vpack.c.b16 %v3978, %v3962
        %v5867 = vpack.c.b16 %v3979, %v3963
        %v5868 = vpack.c.b16 %v3980, %v3964
        %v5869 = vpack.c.b16 %v3981, %v3965
        %v5870 = vpack.c.b16 %v3982, %v3966
        %v5871 = vpack.c.b16 %v3983, %v3967
        %v5872 = vpack.c.b16 %v3984, %v3968
        %v5873 = vpack.c.b16 %v3985, %v3969
        %v5874 = vpack.c.b16 %v3986, %v3970
        %v5875 = vpack.c.b16 %v3987, %v3971
        %v5876 = vpack.c.b16 %v3988, %v3972
        %v5877 = vpack.c.b16 %v3989, %v3973
        %v5878 = vpack.c.b16 %v3990, %v3974
        %v5879 = vpack.c.b16 %v4007, %v3991
        %v5880 = vpack.c.b16 %v4008, %v3992
        %v5881 = vpack.c.b16 %v4009, %v3993
        %v5882 = vpack.c.b16 %v4010, %v3994
        %v5883 = vpack.c.b16 %v4011, %v3995
        %v5884 = vpack.c.b16 %v4012, %v3996
        %v5885 = vpack.c.b16 %v4013, %v3997
        %v5886 = vpack.c.b16 %v4014, %v3998
        %v5887 = vpack.c.b16 %v4015, %v3999
        %v5888 = vpack.c.b16 %v4016, %v4000
        %v5889 = vpack.c.b16 %v4017, %v4001
        %v5890 = vpack.c.b16 %v4018, %v4002
        %v5891 = vpack.c.b16 %v4019, %v4003
        %v5892 = vpack.c.b16 %v4020, %v4004
        %v5893 = vpack.c.b16 %v4021, %v4005
        %v5894 = vpack.c.b16 %v4022, %v4006
        %v5895 = vpack.c.b16 %v4039, %v4023
        %v5896 = vpack.c.b16 %v4040, %v4024
        %v5897 = vpack.c.b16 %v4041, %v4025
        %v5898 = vpack.c.b16 %v4042, %v4026
        %v5899 = vpack.c.b16 %v4043, %v4027
        %v5900 = vpack.c.b16 %v4044, %v4028
        %v5901 = vpack.c.b16 %v4045, %v4029
        %v5902 = vpack.c.b16 %v4046, %v4030
        %v5903 = vpack.c.b16 %v4047, %v4031
        %v5904 = vpack.c.b16 %v4048, %v4032
        %v5905 = vpack.c.b16 %v4049, %v4033
        %v5906 = vpack.c.b16 %v4050, %v4034
        %v5907 = vpack.c.b16 %v4051, %v4035
        %v5908 = vpack.c.b16 %v4052, %v4036
        %v5909 = vpack.c.b16 %v4053, %v4037
        %v5910 = vpack.c.b16 %v4054, %v4038
        %v5911 = vpack.c.b16 %v4071, %v4055
        %v5912 = vpack.c.b16 %v4072, %v4056
        %v5913 = vpack.c.b16 %v4073, %v4057
        %v5914 = vpack.c.b16 %v4074, %v4058
        %v5915 = vpack.c.b16 %v4075, %v4059
        %v5916 = vpack.c.b16 %v4076, %v4060
        %v5917 = vpack.c.b16 %v4077, %v4061
        %v5918 = vpack.c.b16 %v4078, %v4062
        %v5919 = vpack.c.b16 %v4079, %v4063
        %v5920 = vpack.c.b16 %v4080, %v4064
        %v5921 = vpack.c.b16 %v4081, %v4065
        %v5922 = vpack.c.b16 %v4082, %v4066
        %v5923 = vpack.c.b16 %v4083, %v4067
        %v5924 = vpack.c.b16 %v4084, %v4068
        %v5925 = vpack.c.b16 %v4085, %v4069
        %v5926 = vpack.c.b16 %v4086, %v4070
        %v5927 = vpack.c.b16 %v4103, %v4087
        %v5928 = vpack.c.b16 %v4104, %v4088
        %v5929 = vpack.c.b16 %v4105, %v4089
        %v5930 = vpack.c.b16 %v4106, %v4090
        %v5931 = vpack.c.b16 %v4107, %v4091
        %v5932 = vpack.c.b16 %v4108, %v4092
        %v5933 = vpack.c.b16 %v4109, %v4093
        %v5934 = vpack.c.b16 %v4110, %v4094
        %v5935 = vpack.c.b16 %v4111, %v4095
        %v5936 = vpack.c.b16 %v4112, %v4096
        %v5937 = vpack.c.b16 %v4113, %v4097
        %v5938 = vpack.c.b16 %v4114, %v4098
        %v5939 = vpack.c.b16 %v4115, %v4099
        %v5940 = vpack.c.b16 %v4116, %v4100
        %v5941 = vpack.c.b16 %v4117, %v4101
        %v5942 = vpack.c.b16 %v4118, %v4102
        %v5943 = vpack.c.b16 %v4135, %v4119
        %v5944 = vpack.c.b16 %v4136, %v4120
        %v5945 = vpack.c.b16 %v4137, %v4121
        %v5946 = vpack.c.b16 %v4138, %v4122
        %v5947 = vpack.c.b16 %v4139, %v4123
        %v5948 = vpack.c.b16 %v4140, %v4124
        %v5949 = vpack.c.b16 %v4141, %v4125
        %v5950 = vpack.c.b16 %v4142, %v4126
        %v5951 = vpack.c.b16 %v4143, %v4127
        %v5952 = vpack.c.b16 %v4144, %v4128
        %v5953 = vpack.c.b16 %v4145, %v4129
        %v5954 = vpack.c.b16 %v4146, %v4130
        %v5955 = vpack.c.b16 %v4147, %v4131
        %v5956 = vpack.c.b16 %v4148, %v4132
        %v5957 = vpack.c.b16 %v4149, %v4133
        %v5958 = vpack.c.b16 %v4150, %v4134
        %v5959 = vpack.c.b16 %v4167, %v4151
        %v5960 = vpack.c.b16 %v4168, %v4152
        %v5961 = vpack.c.b16 %v4169, %v4153
        %v5962 = vpack.c.b16 %v4170, %v4154
        %v5963 = vpack.c.b16 %v4171, %v4155
        %v5964 = vpack.c.b16 %v4172, %v4156
        %v5965 = vpack.c.b16 %v4173, %v4157
        %v5966 = vpack.c.b16 %v4174, %v4158
        %v5967 = vpack.c.b16 %v4175, %v4159
        %v5968 = vpack.c.b16 %v4176, %v4160
        %v5969 = vpack.c.b16 %v4177, %v4161
        %v5970 = vpack.c.b16 %v4178, %v4162
        %v5971 = vpack.c.b16 %v4179, %v4163
        %v5972 = vpack.c.b16 %v4180, %v4164
        %v5973 = vpack.c.b16 %v4181, %v4165
        %v5974 = vpack.c.b16 %v4182, %v4166
        %v5975 = vpack.c.b16 %v4199, %v4183
        %v5976 = vpack.c.b16 %v4200, %v4184
        %v5977 = vpack.c.b16 %v4201, %v4185
        %v5978 = vpack.c.b16 %v4202, %v4186
        %v5979 = vpack.c.b16 %v4203, %v4187
        %v5980 = vpack.c.b16 %v4204, %v4188
        %v5981 = vpack.c.b16 %v4205, %v4189
        %v5982 = vpack.c.b16 %v4206, %v4190
        %v5983 = vpack.c.b16 %v4207, %v4191
        %v5984 = vpack.c.b16 %v4208, %v4192
        %v5985 = vpack.c.b16 %v4209, %v4193
        %v5986 = vpack.c.b16 %v4210, %v4194
        %v5987 = vpack.c.b16 %v4211, %v4195
        %v5988 = vpack.c.b16 %v4212, %v4196
        %v5989 = vpack.c.b16 %v4213, %v4197
        %v5990 = vpack.c.b16 %v4214, %v4198
        %v5991 = vpack.c.b16 %v4231, %v4215
        %v5992 = vpack.c.b16 %v4232, %v4216
        %v5993 = vpack.c.b16 %v4233, %v4217
        %v5994 = vpack.c.b16 %v4234, %v4218
        %v5995 = vpack.c.b16 %v4235, %v4219
        %v5996 = vpack.c.b16 %v4236, %v4220
        %v5997 = vpack.c.b16 %v4237, %v4221
        %v5998 = vpack.c.b16 %v4238, %v4222
        %v5999 = vpack.c.b16 %v4239, %v4223
        %v6000 = vpack.c.b16 %v4240, %v4224
        %v6001 = vpack.c.b16 %v4241, %v4225
        %v6002 = vpack.c.b16 %v4242, %v4226
        %v6003 = vpack.c.b16 %v4243, %v4227
        %v6004 = vpack.c.b16 %v4244, %v4228
        %v6005 = vpack.c.b16 %v4245, %v4229
        %v6006 = vpack.c.b16 %v4246, %v4230
        %v6007 = vpack.c.b16 %v4263, %v4247
        %v6008 = vpack.c.b16 %v4264, %v4248
        %v6009 = vpack.c.b16 %v4265, %v4249
        %v6010 = vpack.c.b16 %v4266, %v4250
        %v6011 = vpack.c.b16 %v4267, %v4251
        %v6012 = vpack.c.b16 %v4268, %v4252
        %v6013 = vpack.c.b16 %v4269, %v4253
        %v6014 = vpack.c.b16 %v4270, %v4254
        %v6015 = vpack.c.b16 %v4271, %v4255
        %v6016 = vpack.c.b16 %v4272, %v4256
        %v6017 = vpack.c.b16 %v4273, %v4257
        %v6018 = vpack.c.b16 %v4274, %v4258
        %v6019 = vpack.c.b16 %v4275, %v4259
        %v6020 = vpack.c.b16 %v4276, %v4260
        %v6021 = vpack.c.b16 %v4277, %v4261
        %v6022 = vpack.c.b16 %v4278, %v4262
        %v6023 = vpack.c.b16 %v4295, %v4279
        %v6024 = vpack.c.b16 %v4296, %v4280
        %v6025 = vpack.c.b16 %v4297, %v4281
        %v6026 = vpack.c.b16 %v4298, %v4282
        %v6027 = vpack.c.b16 %v4299, %v4283
        %v6028 = vpack.c.b16 %v4300, %v4284
        %v6029 = vpack.c.b16 %v4301, %v4285
        %v6030 = vpack.c.b16 %v4302, %v4286
        %v6031 = vpack.c.b16 %v4303, %v4287
        %v6032 = vpack.c.b16 %v4304, %v4288
        %v6033 = vpack.c.b16 %v4305, %v4289
        %v6034 = vpack.c.b16 %v4306, %v4290
        %v6035 = vpack.c.b16 %v4307, %v4291
        %v6036 = vpack.c.b16 %v4308, %v4292
        %v6037 = vpack.c.b16 %v4309, %v4293
        %v6038 = vpack.c.b16 %v4310, %v4294
        %v6039 = vpack.c.b16 %v4327, %v4311
        %v6040 = vpack.c.b16 %v4328, %v4312
        %v6041 = vpack.c.b16 %v4329, %v4313
        %v6042 = vpack.c.b16 %v4330, %v4314
        %v6043 = vpack.c.b16 %v4331, %v4315
        %v6044 = vpack.c.b16 %v4332, %v4316
        %v6045 = vpack.c.b16 %v4333, %v4317
        %v6046 = vpack.c.b16 %v4334, %v4318
        %v6047 = vpack.c.b16 %v4335, %v4319
        %v6048 = vpack.c.b16 %v4336, %v4320
        %v6049 = vpack.c.b16 %v4337, %v4321
        %v6050 = vpack.c.b16 %v4338, %v4322
        %v6051 = vpack.c.b16 %v4339, %v4323
        %v6052 = vpack.c.b16 %v4340, %v4324
        %v6053 = vpack.c.b16 %v4341, %v4325
        %v6054 = vpack.c.b16 %v4342, %v4326
        %v6055 = vpack.c.b16 %v4359, %v4343
        %v6056 = vpack.c.b16 %v4360, %v4344
        %v6057 = vpack.c.b16 %v4361, %v4345
        %v6058 = vpack.c.b16 %v4362, %v4346
        %v6059 = vpack.c.b16 %v4363, %v4347
        %v6060 = vpack.c.b16 %v4364, %v4348
        %v6061 = vpack.c.b16 %v4365, %v4349
        %v6062 = vpack.c.b16 %v4366, %v4350
        %v6063 = vpack.c.b16 %v4367, %v4351
        %v6064 = vpack.c.b16 %v4368, %v4352
        %v6065 = vpack.c.b16 %v4369, %v4353
        %v6066 = vpack.c.b16 %v4370, %v4354
        %v6067 = vpack.c.b16 %v4371, %v4355
        %v6068 = vpack.c.b16 %v4372, %v4356
        %v6069 = vpack.c.b16 %v4373, %v4357
        %v6070 = vpack.c.b16 %v4374, %v4358
        %v6071 = vpack.c.b16 %v4391, %v4375
        %v6072 = vpack.c.b16 %v4392, %v4376
        %v6073 = vpack.c.b16 %v4393, %v4377
        %v6074 = vpack.c.b16 %v4394, %v4378
        %v6075 = vpack.c.b16 %v4395, %v4379
        %v6076 = vpack.c.b16 %v4396, %v4380
        %v6077 = vpack.c.b16 %v4397, %v4381
        %v6078 = vpack.c.b16 %v4398, %v4382
        %v6079 = vpack.c.b16 %v4399, %v4383
        %v6080 = vpack.c.b16 %v4400, %v4384
        %v6081 = vpack.c.b16 %v4401, %v4385
        %v6082 = vpack.c.b16 %v4402, %v4386
        %v6083 = vpack.c.b16 %v4403, %v4387
        %v6084 = vpack.c.b16 %v4404, %v4388
        %v6085 = vpack.c.b16 %v4405, %v4389
        %v6086 = vpack.c.b16 %v4406, %v4390
        %v6087 = vpack.c.b16 %v4423, %v4407
        %v6088 = vpack.c.b16 %v4424, %v4408
        %v6089 = vpack.c.b16 %v4425, %v4409
        %v6090 = vpack.c.b16 %v4426, %v4410
        %v6091 = vpack.c.b16 %v4427, %v4411
        %v6092 = vpack.c.b16 %v4428, %v4412
        %v6093 = vpack.c.b16 %v4429, %v4413
        %v6094 = vpack.c.b16 %v4430, %v4414
        %v6095 = vpack.c.b16 %v4431, %v4415
        %v6096 = vpack.c.b16 %v4432, %v4416
        %v6097 = vpack.c.b16 %v4433, %v4417
        %v6098 = vpack.c.b16 %v4434, %v4418
        %v6099 = vpack.c.b16 %v4435, %v4419
        %v6100 = vpack.c.b16 %v4436, %v4420
        %v6101 = vpack.c.b16 %v4437, %v4421
        %v6102 = vpack.c.b16 %v4438, %v4422
        %v6103 = vpack.c.b16 %v4455, %v4439
        %v6104 = vpack.c.b16 %v4456, %v4440
        %v6105 = vpack.c.b16 %v4457, %v4441
        %v6106 = vpack.c.b16 %v4458, %v4442
        %v6107 = vpack.c.b16 %v4459, %v4443
        %v6108 = vpack.c.b16 %v4460, %v4444
        %v6109 = vpack.c.b16 %v4461, %v4445
        %v6110 = vpack.c.b16 %v4462, %v4446
        %v6111 = vpack.c.b16 %v4463, %v4447
        %v6112 = vpack.c.b16 %v4464, %v4448
        %v6113 = vpack.c.b16 %v4465, %v4449
        %v6114 = vpack.c.b16 %v4466, %v4450
        %v6115 = vpack.c.b16 %v4467, %v4451
        %v6116 = vpack.c.b16 %v4468, %v4452
        %v6117 = vpack.c.b16 %v4469, %v4453
        %v6118 = vpack.c.b16 %v4470, %v4454
        %v6119 = vpack.c.b16 %v4487, %v4471
        %v6120 = vpack.c.b16 %v4488, %v4472
        %v6121 = vpack.c.b16 %v4489, %v4473
        %v6122 = vpack.c.b16 %v4490, %v4474
        %v6123 = vpack.c.b16 %v4491, %v4475
        %v6124 = vpack.c.b16 %v4492, %v4476
        %v6125 = vpack.c.b16 %v4493, %v4477
        %v6126 = vpack.c.b16 %v4494, %v4478
        %v6127 = vpack.c.b16 %v4495, %v4479
        %v6128 = vpack.c.b16 %v4496, %v4480
        %v6129 = vpack.c.b16 %v4497, %v4481
        %v6130 = vpack.c.b16 %v4498, %v4482
        %v6131 = vpack.c.b16 %v4499, %v4483
        %v6132 = vpack.c.b16 %v4500, %v4484
        %v6133 = vpack.c.b16 %v4501, %v4485
        %v6134 = vpack.c.b16 %v4502, %v4486
        %v6135 = vpack.c.b16 %v4519, %v4503
        %v6136 = vpack.c.b16 %v4520, %v4504
        %v6137 = vpack.c.b16 %v4521, %v4505
        %v6138 = vpack.c.b16 %v4522, %v4506
        %v6139 = vpack.c.b16 %v4523, %v4507
        %v6140 = vpack.c.b16 %v4524, %v4508
        %v6141 = vpack.c.b16 %v4525, %v4509
        %v6142 = vpack.c.b16 %v4526, %v4510
        %v6143 = vpack.c.b16 %v4527, %v4511
        %v6144 = vpack.c.b16 %v4528, %v4512
        %v6145 = vpack.c.b16 %v4529, %v4513
        %v6146 = vpack.c.b16 %v4530, %v4514
        %v6147 = vpack.c.b16 %v4531, %v4515
        %v6148 = vpack.c.b16 %v4532, %v4516
        %v6149 = vpack.c.b16 %v4533, %v4517
        %v6150 = vpack.c.b16 %v4534, %v4518
        %v6151 = vpack.c.b16 %v4551, %v4535
        %v6152 = vpack.c.b16 %v4552, %v4536
        %v6153 = vpack.c.b16 %v4553, %v4537
        %v6154 = vpack.c.b16 %v4554, %v4538
        %v6155 = vpack.c.b16 %v4555, %v4539
        %v6156 = vpack.c.b16 %v4556, %v4540
        %v6157 = vpack.c.b16 %v4557, %v4541
        %v6158 = vpack.c.b16 %v4558, %v4542
        %v6159 = vpack.c.b16 %v4559, %v4543
        %v6160 = vpack.c.b16 %v4560, %v4544
        %v6161 = vpack.c.b16 %v4561, %v4545
        %v6162 = vpack.c.b16 %v4562, %v4546
        %v6163 = vpack.c.b16 %v4563, %v4547
        %v6164 = vpack.c.b16 %v4564, %v4548
        %v6165 = vpack.c.b16 %v4565, %v4549
        %v6166 = vpack.c.b16 %v4566, %v4550
        %v6167 = vpack.c.b16 %v4583, %v4567
        %v6168 = vpack.c.b16 %v4584, %v4568
        %v6169 = vpack.c.b16 %v4585, %v4569
        %v6170 = vpack.c.b16 %v4586, %v4570
        %v6171 = vpack.c.b16 %v4587, %v4571
        %v6172 = vpack.c.b16 %v4588, %v4572
        %v6173 = vpack.c.b16 %v4589, %v4573
        %v6174 = vpack.c.b16 %v4590, %v4574
        %v6175 = vpack.c.b16 %v4591, %v4575
        %v6176 = vpack.c.b16 %v4592, %v4576
        %v6177 = vpack.c.b16 %v4593, %v4577
        %v6178 = vpack.c.b16 %v4594, %v4578
        %v6179 = vpack.c.b16 %v4595, %v4579
        %v6180 = vpack.c.b16 %v4596, %v4580
        %v6181 = vpack.c.b16 %v4597, %v4581
        %v6182 = vpack.c.b16 %v4598, %v4582
        %v6183 = vpack.c.b16 %v4615, %v4599
        %v6184 = vpack.c.b16 %v4616, %v4600
        %v6185 = vpack.c.b16 %v4617, %v4601
        %v6186 = vpack.c.b16 %v4618, %v4602
        %v6187 = vpack.c.b16 %v4619, %v4603
        %v6188 = vpack.c.b16 %v4620, %v4604
        %v6189 = vpack.c.b16 %v4621, %v4605
        %v6190 = vpack.c.b16 %v4622, %v4606
        %v6191 = vpack.c.b16 %v4623, %v4607
        %v6192 = vpack.c.b16 %v4624, %v4608
        %v6193 = vpack.c.b16 %v4625, %v4609
        %v6194 = vpack.c.b16 %v4626, %v4610
        %v6195 = vpack.c.b16 %v4627, %v4611
        %v6196 = vpack.c.b16 %v4628, %v4612
        %v6197 = vpack.c.b16 %v4629, %v4613
        %v6198 = vpack.c.b16 %v4630, %v4614
        %v6199 = vpack.c.b16 %v4647, %v4631
        %v6200 = vpack.c.b16 %v4648, %v4632
        %v6201 = vpack.c.b16 %v4649, %v4633
        %v6202 = vpack.c.b16 %v4650, %v4634
        %v6203 = vpack.c.b16 %v4651, %v4635
        %v6204 = vpack.c.b16 %v4652, %v4636
        %v6205 = vpack.c.b16 %v4653, %v4637
        %v6206 = vpack.c.b16 %v4654, %v4638
        %v6207 = vpack.c.b16 %v4655, %v4639
        %v6208 = vpack.c.b16 %v4656, %v4640
        %v6209 = vpack.c.b16 %v4657, %v4641
        %v6210 = vpack.c.b16 %v4658, %v4642
        %v6211 = vpack.c.b16 %v4659, %v4643
        %v6212 = vpack.c.b16 %v4660, %v4644
        %v6213 = vpack.c.b16 %v4661, %v4645
        %v6214 = vpack.c.b16 %v4662, %v4646
        %v6215 = vpack.c.b16 %v4679, %v4663
        %v6216 = vpack.c.b16 %v4680, %v4664
        %v6217 = vpack.c.b16 %v4681, %v4665
        %v6218 = vpack.c.b16 %v4682, %v4666
        %v6219 = vpack.c.b16 %v4683, %v4667
        %v6220 = vpack.c.b16 %v4684, %v4668
        %v6221 = vpack.c.b16 %v4685, %v4669
        %v6222 = vpack.c.b16 %v4686, %v4670
        %v6223 = vpack.c.b16 %v4687, %v4671
        %v6224 = vpack.c.b16 %v4688, %v4672
        %v6225 = vpack.c.b16 %v4689, %v4673
        %v6226 = vpack.c.b16 %v4690, %v4674
        %v6227 = vpack.c.b16 %v4691, %v4675
        %v6228 = vpack.c.b16 %v4692, %v4676
        %v6229 = vpack.c.b16 %v4693, %v4677
        %v6230 = vpack.c.b16 %v4694, %v4678
        %v6231 = vpack.c.b16 %v4711, %v4695
        %v6232 = vpack.c.b16 %v4712, %v4696
        %v6233 = vpack.c.b16 %v4713, %v4697
        %v6234 = vpack.c.b16 %v4714, %v4698
        %v6235 = vpack.c.b16 %v4715, %v4699
        %v6236 = vpack.c.b16 %v4716, %v4700
        %v6237 = vpack.c.b16 %v4717, %v4701
        %v6238 = vpack.c.b16 %v4718, %v4702
        %v6239 = vpack.c.b16 %v4719, %v4703
        %v6240 = vpack.c.b16 %v4720, %v4704
        %v6241 = vpack.c.b16 %v4721, %v4705
        %v6242 = vpack.c.b16 %v4722, %v4706
        %v6243 = vpack.c.b16 %v4723, %v4707
        %v6244 = vpack.c.b16 %v4724, %v4708
        %v6245 = vpack.c.b16 %v4725, %v4709
        %v6246 = vpack.c.b16 %v4726, %v4710
        %v6247 = vpack.c.b16 %v4743, %v4727
        %v6248 = vpack.c.b16 %v4744, %v4728
        %v6249 = vpack.c.b16 %v4745, %v4729
        %v6250 = vpack.c.b16 %v4746, %v4730
        %v6251 = vpack.c.b16 %v4747, %v4731
        %v6252 = vpack.c.b16 %v4748, %v4732
        %v6253 = vpack.c.b16 %v4749, %v4733
        %v6254 = vpack.c.b16 %v4750, %v4734
        %v6255 = vpack.c.b16 %v4751, %v4735
        %v6256 = vpack.c.b16 %v4752, %v4736
        %v6257 = vpack.c.b16 %v4753, %v4737
        %v6258 = vpack.c.b16 %v4754, %v4738
        %v6259 = vpack.c.b16 %v4755, %v4739
        %v6260 = vpack.c.b16 %v4756, %v4740
        %v6261 = vpack.c.b16 %v4757, %v4741
        %v6262 = vpack.c.b16 %v4758, %v4742
        %v6263 = vpack.c.b16 %v4775, %v4759
        %v6264 = vpack.c.b16 %v4776, %v4760
        %v6265 = vpack.c.b16 %v4777, %v4761
        %v6266 = vpack.c.b16 %v4778, %v4762
        %v6267 = vpack.c.b16 %v4779, %v4763
        %v6268 = vpack.c.b16 %v4780, %v4764
        %v6269 = vpack.c.b16 %v4781, %v4765
        %v6270 = vpack.c.b16 %v4782, %v4766
        %v6271 = vpack.c.b16 %v4783, %v4767
        %v6272 = vpack.c.b16 %v4784, %v4768
        %v6273 = vpack.c.b16 %v4785, %v4769
        %v6274 = vpack.c.b16 %v4786, %v4770
        %v6275 = vpack.c.b16 %v4787, %v4771
        %v6276 = vpack.c.b16 %v4788, %v4772
        %v6277 = vpack.c.b16 %v4789, %v4773
        %v6278 = vpack.c.b16 %v4790, %v4774
        %v6279 = vpack.c.b16 %v4807, %v4791
        %v6280 = vpack.c.b16 %v4808, %v4792
        %v6281 = vpack.c.b16 %v4809, %v4793
        %v6282 = vpack.c.b16 %v4810, %v4794
        %v6283 = vpack.c.b16 %v4811, %v4795
        %v6284 = vpack.c.b16 %v4812, %v4796
        %v6285 = vpack.c.b16 %v4813, %v4797
        %v6286 = vpack.c.b16 %v4814, %v4798
        %v6287 = vpack.c.b16 %v4815, %v4799
        %v6288 = vpack.c.b16 %v4816, %v4800
        %v6289 = vpack.c.b16 %v4817, %v4801
        %v6290 = vpack.c.b16 %v4818, %v4802
        %v6291 = vpack.c.b16 %v4819, %v4803
        %v6292 = vpack.c.b16 %v4820, %v4804
        %v6293 = vpack.c.b16 %v4821, %v4805
        %v6294 = vpack.c.b16 %v4822, %v4806
        %v6295 = vpack.c.b16 %v4839, %v4823
        %v6296 = vpack.c.b16 %v4840, %v4824
        %v6297 = vpack.c.b16 %v4841, %v4825
        %v6298 = vpack.c.b16 %v4842, %v4826
        %v6299 = vpack.c.b16 %v4843, %v4827
        %v6300 = vpack.c.b16 %v4844, %v4828
        %v6301 = vpack.c.b16 %v4845, %v4829
        %v6302 = vpack.c.b16 %v4846, %v4830
        %v6303 = vpack.c.b16 %v4847, %v4831
        %v6304 = vpack.c.b16 %v4848, %v4832
        %v6305 = vpack.c.b16 %v4849, %v4833
        %v6306 = vpack.c.b16 %v4850, %v4834
        %v6307 = vpack.c.b16 %v4851, %v4835
        %v6308 = vpack.c.b16 %v4852, %v4836
        %v6309 = vpack.c.b16 %v4853, %v4837
        %v6310 = vpack.c.b16 %v4854, %v4838
        %v6311 = vpack.c.b16 %v4871, %v4855
        %v6312 = vpack.c.b16 %v4872, %v4856
        %v6313 = vpack.c.b16 %v4873, %v4857
        %v6314 = vpack.c.b16 %v4874, %v4858
        %v6315 = vpack.c.b16 %v4875, %v4859
        %v6316 = vpack.c.b16 %v4876, %v4860
        %v6317 = vpack.c.b16 %v4877, %v4861
        %v6318 = vpack.c.b16 %v4878, %v4862
        %v6319 = vpack.c.b16 %v4879, %v4863
        %v6320 = vpack.c.b16 %v4880, %v4864
        %v6321 = vpack.c.b16 %v4881, %v4865
        %v6322 = vpack.c.b16 %v4882, %v4866
        %v6323 = vpack.c.b16 %v4883, %v4867
        %v6324 = vpack.c.b16 %v4884, %v4868
        %v6325 = vpack.c.b16 %v4885, %v4869
        %v6326 = vpack.c.b16 %v4886, %v4870
        %v6327 = vpack.c.b16 %v4903, %v4887
        %v6328 = vpack.c.b16 %v4904, %v4888
        %v6329 = vpack.c.b16 %v4905, %v4889
        %v6330 = vpack.c.b16 %v4906, %v4890
        %v6331 = vpack.c.b16 %v4907, %v4891
        %v6332 = vpack.c.b16 %v4908, %v4892
        %v6333 = vpack.c.b16 %v4909, %v4893
        %v6334 = vpack.c.b16 %v4910, %v4894
        %v6335 = vpack.c.b16 %v4911, %v4895
        %v6336 = vpack.c.b16 %v4912, %v4896
        %v6337 = vpack.c.b16 %v4913, %v4897
        %v6338 = vpack.c.b16 %v4914, %v4898
        %v6339 = vpack.c.b16 %v4915, %v4899
        %v6340 = vpack.c.b16 %v4916, %v4900
        %v6341 = vpack.c.b16 %v4917, %v4901
        %v6342 = vpack.c.b16 %v4918, %v4902
        %v6343 = vpack.c.b16 %v4935, %v4919
        %v6344 = vpack.c.b16 %v4936, %v4920
        %v6345 = vpack.c.b16 %v4937, %v4921
        %v6346 = vpack.c.b16 %v4938, %v4922
        %v6347 = vpack.c.b16 %v4939, %v4923
        %v6348 = vpack.c.b16 %v4940, %v4924
        %v6349 = vpack.c.b16 %v4941, %v4925
        %v6350 = vpack.c.b16 %v4942, %v4926
        %v6351 = vpack.c.b16 %v4943, %v4927
        %v6352 = vpack.c.b16 %v4944, %v4928
        %v6353 = vpack.c.b16 %v4945, %v4929
        %v6354 = vpack.c.b16 %v4946, %v4930
        %v6355 = vpack.c.b16 %v4947, %v4931
        %v6356 = vpack.c.b16 %v4948, %v4932
        %v6357 = vpack.c.b16 %v4949, %v4933
        %v6358 = vpack.c.b16 %v4950, %v4934
        %v6359 = vpack.c.b16 %v4967, %v4951
        %v6360 = vpack.c.b16 %v4968, %v4952
        %v6361 = vpack.c.b16 %v4969, %v4953
        %v6362 = vpack.c.b16 %v4970, %v4954
        %v6363 = vpack.c.b16 %v4971, %v4955
        %v6364 = vpack.c.b16 %v4972, %v4956
        %v6365 = vpack.c.b16 %v4973, %v4957
        %v6366 = vpack.c.b16 %v4974, %v4958
        %v6367 = vpack.c.b16 %v4975, %v4959
        %v6368 = vpack.c.b16 %v4976, %v4960
        %v6369 = vpack.c.b16 %v4977, %v4961
        %v6370 = vpack.c.b16 %v4978, %v4962
        %v6371 = vpack.c.b16 %v4979, %v4963
        %v6372 = vpack.c.b16 %v4980, %v4964
        %v6373 = vpack.c.b16 %v4981, %v4965
        %v6374 = vpack.c.b16 %v4982, %v4966
        %v6375 = vpack.c.b16 %v4999, %v4983
        %v6376 = vpack.c.b16 %v5000, %v4984
        %v6377 = vpack.c.b16 %v5001, %v4985
        %v6378 = vpack.c.b16 %v5002, %v4986
        %v6379 = vpack.c.b16 %v5003, %v4987
        %v6380 = vpack.c.b16 %v5004, %v4988
        %v6381 = vpack.c.b16 %v5005, %v4989
        %v6382 = vpack.c.b16 %v5006, %v4990
        %v6383 = vpack.c.b16 %v5007, %v4991
        %v6384 = vpack.c.b16 %v5008, %v4992
        %v6385 = vpack.c.b16 %v5009, %v4993
        %v6386 = vpack.c.b16 %v5010, %v4994
        %v6387 = vpack.c.b16 %v5011, %v4995
        %v6388 = vpack.c.b16 %v5012, %v4996
        %v6389 = vpack.c.b16 %v5013, %v4997
        %v6390 = vpack.c.b16 %v5014, %v4998
        %v6391 = vpack.c.b16 %v5031, %v5015
        %v6392 = vpack.c.b16 %v5032, %v5016
        %v6393 = vpack.c.b16 %v5033, %v5017
        %v6394 = vpack.c.b16 %v5034, %v5018
        %v6395 = vpack.c.b16 %v5035, %v5019
        %v6396 = vpack.c.b16 %v5036, %v5020
        %v6397 = vpack.c.b16 %v5037, %v5021
        %v6398 = vpack.c.b16 %v5038, %v5022
        %v6399 = vpack.c.b16 %v5039, %v5023
        %v6400 = vpack.c.b16 %v5040, %v5024
        %v6401 = vpack.c.b16 %v5041, %v5025
        %v6402 = vpack.c.b16 %v5042, %v5026
        %v6403 = vpack.c.b16 %v5043, %v5027
        %v6404 = vpack.c.b16 %v5044, %v5028
        %v6405 = vpack.c.b16 %v5045, %v5029
        %v6406 = vpack.c.b16 %v5046, %v5030
        %v6407 = vpack.c.b16 %v5063, %v5047
        %v6408 = vpack.c.b16 %v5064, %v5048
        %v6409 = vpack.c.b16 %v5065, %v5049
        %v6410 = vpack.c.b16 %v5066, %v5050
        %v6411 = vpack.c.b16 %v5067, %v5051
        %v6412 = vpack.c.b16 %v5068, %v5052
        %v6413 = vpack.c.b16 %v5069, %v5053
        %v6414 = vpack.c.b16 %v5070, %v5054
        %v6415 = vpack.c.b16 %v5071, %v5055
        %v6416 = vpack.c.b16 %v5072, %v5056
        %v6417 = vpack.c.b16 %v5073, %v5057
        %v6418 = vpack.c.b16 %v5074, %v5058
        %v6419 = vpack.c.b16 %v5075, %v5059
        %v6420 = vpack.c.b16 %v5076, %v5060
        %v6421 = vpack.c.b16 %v5077, %v5061
        %v6422 = vpack.c.b16 %v5078, %v5062
        %v6423 = vpack.c.b16 %v5095, %v5079
        %v6424 = vpack.c.b16 %v5096, %v5080
        %v6425 = vpack.c.b16 %v5097, %v5081
        %v6426 = vpack.c.b16 %v5098, %v5082
        %v6427 = vpack.c.b16 %v5099, %v5083
        %v6428 = vpack.c.b16 %v5100, %v5084
        %v6429 = vpack.c.b16 %v5101, %v5085
        %v6430 = vpack.c.b16 %v5102, %v5086
        %v6431 = vpack.c.b16 %v5103, %v5087
        %v6432 = vpack.c.b16 %v5104, %v5088
        %v6433 = vpack.c.b16 %v5105, %v5089
        %v6434 = vpack.c.b16 %v5106, %v5090
        %v6435 = vpack.c.b16 %v5107, %v5091
        %v6436 = vpack.c.b16 %v5108, %v5092
        %v6437 = vpack.c.b16 %v5109, %v5093
        %v6438 = vpack.c.b16 %v5110, %v5094
        %v6439 = vpack.c.b16 %v5127, %v5111
        %v6440 = vpack.c.b16 %v5128, %v5112
        %v6441 = vpack.c.b16 %v5129, %v5113
        %v6442 = vpack.c.b16 %v5130, %v5114
        %v6443 = vpack.c.b16 %v5131, %v5115
        %v6444 = vpack.c.b16 %v5132, %v5116
        %v6445 = vpack.c.b16 %v5133, %v5117
        %v6446 = vpack.c.b16 %v5134, %v5118
        %v6447 = vpack.c.b16 %v5135, %v5119
        %v6448 = vpack.c.b16 %v5136, %v5120
        %v6449 = vpack.c.b16 %v5137, %v5121
        %v6450 = vpack.c.b16 %v5138, %v5122
        %v6451 = vpack.c.b16 %v5139, %v5123
        %v6452 = vpack.c.b16 %v5140, %v5124
        %v6453 = vpack.c.b16 %v5141, %v5125
        %v6454 = vpack.c.b16 %v5142, %v5126
        %v6455 = vpack.c.b16 %v5159, %v5143
        %v6456 = vpack.c.b16 %v5160, %v5144
        %v6457 = vpack.c.b16 %v5161, %v5145
        %v6458 = vpack.c.b16 %v5162, %v5146
        %v6459 = vpack.c.b16 %v5163, %v5147
        %v6460 = vpack.c.b16 %v5164, %v5148
        %v6461 = vpack.c.b16 %v5165, %v5149
        %v6462 = vpack.c.b16 %v5166, %v5150
        %v6463 = vpack.c.b16 %v5167, %v5151
        %v6464 = vpack.c.b16 %v5168, %v5152
        %v6465 = vpack.c.b16 %v5169, %v5153
        %v6466 = vpack.c.b16 %v5170, %v5154
        %v6467 = vpack.c.b16 %v5171, %v5155
        %v6468 = vpack.c.b16 %v5172, %v5156
        %v6469 = vpack.c.b16 %v5173, %v5157
        %v6470 = vpack.c.b16 %v5174, %v5158
        %v6471 = vpack.c.b16 %v5191, %v5175
        %v6472 = vpack.c.b16 %v5192, %v5176
        %v6473 = vpack.c.b16 %v5193, %v5177
        %v6474 = vpack.c.b16 %v5194, %v5178
        %v6475 = vpack.c.b16 %v5195, %v5179
        %v6476 = vpack.c.b16 %v5196, %v5180
        %v6477 = vpack.c.b16 %v5197, %v5181
        %v6478 = vpack.c.b16 %v5198, %v5182
        %v6479 = vpack.c.b16 %v5199, %v5183
        %v6480 = vpack.c.b16 %v5200, %v5184
        %v6481 = vpack.c.b16 %v5201, %v5185
        %v6482 = vpack.c.b16 %v5202, %v5186
        %v6483 = vpack.c.b16 %v5203, %v5187
        %v6484 = vpack.c.b16 %v5204, %v5188
        %v6485 = vpack.c.b16 %v5205, %v5189
        %v6486 = vpack.c.b16 %v5206, %v5190
        %v6487 = vpack.c.b16 %v5223, %v5207
        %v6488 = vpack.c.b16 %v5224, %v5208
        %v6489 = vpack.c.b16 %v5225, %v5209
        %v6490 = vpack.c.b16 %v5226, %v5210
        %v6491 = vpack.c.b16 %v5227, %v5211
        %v6492 = vpack.c.b16 %v5228, %v5212
        %v6493 = vpack.c.b16 %v5229, %v5213
        %v6494 = vpack.c.b16 %v5230, %v5214
        %v6495 = vpack.c.b16 %v5231, %v5215
        %v6496 = vpack.c.b16 %v5232, %v5216
        %v6497 = vpack.c.b16 %v5233, %v5217
        %v6498 = vpack.c.b16 %v5234, %v5218
        %v6499 = vpack.c.b16 %v5235, %v5219
        %v6500 = vpack.c.b16 %v5236, %v5220
        %v6501 = vpack.c.b16 %v5237, %v5221
        %v6502 = vpack.c.b16 %v5238, %v5222
        %v6503 = vpack.c.b16 %v5255, %v5239
        %v6504 = vpack.c.b16 %v5256, %v5240
        %v6505 = vpack.c.b16 %v5257, %v5241
        %v6506 = vpack.c.b16 %v5258, %v5242
        %v6507 = vpack.c.b16 %v5259, %v5243
        %v6508 = vpack.c.b16 %v5260, %v5244
        %v6509 = vpack.c.b16 %v5261, %v5245
        %v6510 = vpack.c.b16 %v5262, %v5246
        %v6511 = vpack.c.b16 %v5263, %v5247
        %v6512 = vpack.c.b16 %v5264, %v5248
        %v6513 = vpack.c.b16 %v5265, %v5249
        %v6514 = vpack.c.b16 %v5266, %v5250
        %v6515 = vpack.c.b16 %v5267, %v5251
        %v6516 = vpack.c.b16 %v5268, %v5252
        %v6517 = vpack.c.b16 %v5269, %v5253
        %v6518 = vpack.c.b16 %v5270, %v5254
        %v6519 = vpack.c.b16 %v5287, %v5271
        %v6520 = vpack.c.b16 %v5288, %v5272
        %v6521 = vpack.c.b16 %v5289, %v5273
        %v6522 = vpack.c.b16 %v5290, %v5274
        %v6523 = vpack.c.b16 %v5291, %v5275
        %v6524 = vpack.c.b16 %v5292, %v5276
        %v6525 = vpack.c.b16 %v5293, %v5277
        %v6526 = vpack.c.b16 %v5294, %v5278
        %v6527 = vpack.c.b16 %v5295, %v5279
        %v6528 = vpack.c.b16 %v5296, %v5280
        %v6529 = vpack.c.b16 %v5297, %v5281
        %v6530 = vpack.c.b16 %v5298, %v5282
        %v6531 = vpack.c.b16 %v5299, %v5283
        %v6532 = vpack.c.b16 %v5300, %v5284
        %v6533 = vpack.c.b16 %v5301, %v5285
        %v6534 = vpack.c.b16 %v5302, %v5286
        %v6535 = vpack.c.b16 %v5319, %v5303
        %v6536 = vpack.c.b16 %v5320, %v5304
        %v6537 = vpack.c.b16 %v5321, %v5305
        %v6538 = vpack.c.b16 %v5322, %v5306
        %v6539 = vpack.c.b16 %v5323, %v5307
        %v6540 = vpack.c.b16 %v5324, %v5308
        %v6541 = vpack.c.b16 %v5325, %v5309
        %v6542 = vpack.c.b16 %v5326, %v5310
        %v6543 = vpack.c.b16 %v5327, %v5311
        %v6544 = vpack.c.b16 %v5328, %v5312
        %v6545 = vpack.c.b16 %v5329, %v5313
        %v6546 = vpack.c.b16 %v5330, %v5314
        %v6547 = vpack.c.b16 %v5331, %v5315
        %v6548 = vpack.c.b16 %v5332, %v5316
        %v6549 = vpack.c.b16 %v5333, %v5317
        %v6550 = vpack.c.b16 %v5334, %v5318
        %v6551 = vpack.c.b16 %v5351, %v5335
        %v6552 = vpack.c.b16 %v5352, %v5336
        %v6553 = vpack.c.b16 %v5353, %v5337
        %v6554 = vpack.c.b16 %v5354, %v5338
        %v6555 = vpack.c.b16 %v5355, %v5339
        %v6556 = vpack.c.b16 %v5356, %v5340
        %v6557 = vpack.c.b16 %v5357, %v5341
        %v6558 = vpack.c.b16 %v5358, %v5342
        %v6559 = vpack.c.b16 %v5359, %v5343
        %v6560 = vpack.c.b16 %v5360, %v5344
        %v6561 = vpack.c.b16 %v5361, %v5345
        %v6562 = vpack.c.b16 %v5362, %v5346
        %v6563 = vpack.c.b16 %v5363, %v5347
        %v6564 = vpack.c.b16 %v5364, %v5348
        %v6565 = vpack.c.b16 %v5365, %v5349
        %v6566 = vpack.c.b16 %v5366, %v5350
        %vm7767 = vcmask 392192
        %v7769 = vsel %vm7767, %v1757, 0
        %7771 = vmatprep.subr.bf16.mxu0 %v5480
        %7772 = vmatpush1.bf16.msra.mxu0 %v5479
        %7773 = vmatprep.subr.bf16.mxu0 %v5464
        %7774 = vmatpush1.bf16.msra.mxu0 %v5463
        %7775 = vmatprep.subr.bf16.mxu0 %v5448
        %7776 = vmatpush1.bf16.msra.mxu0 %v5447
        %7777 = vmatprep.subr.bf16.mxu0 %v5432
        %7778 = vmatpush1.bf16.msra.mxu0 %v5431
        %7779 = vmatprep.subr.bf16.mxu0 %v5416
        %7780 = vmatpush1.bf16.msra.mxu0 %v5415
        %7781 = vmatprep.subr.bf16.mxu0 %v5400
        %7782 = vmatpush1.bf16.msra.mxu0 %v5399
        %7783 = vmatprep.subr.bf16.mxu0 %v5384
        %7784 = vmatpush1.bf16.msra.mxu0 %v5383
        %7785 = vmatprep.subr.bf16.mxu0 %v5368
        %7786 = vmatpush1.bf16.msra.mxu0 %v5367
        %7787 = vmatprep.subr.bf16.mxu0 %v5608
        %7788 = vmatpush2.bf16.msra.mxu0 %v5607
        %7789 = vmatprep.subr.bf16.mxu0 %v5592
        %7790 = vmatpush2.bf16.msra.mxu0 %v5591
        %7791 = vmatprep.subr.bf16.mxu0 %v5576
        %7792 = vmatpush2.bf16.msra.mxu0 %v5575
        %7793 = vmatprep.subr.bf16.mxu0 %v5560
        %7794 = vmatpush2.bf16.msra.mxu0 %v5559
        %7795 = vmatprep.subr.bf16.mxu0 %v5544
        %7796 = vmatpush2.bf16.msra.mxu0 %v5543
        %7797 = vmatprep.subr.bf16.mxu0 %v5528
        %7798 = vmatpush2.bf16.msra.mxu0 %v5527
        %7799 = vmatprep.subr.bf16.mxu0 %v5512
        %7800 = vmatpush2.bf16.msra.mxu0 %v5511
        %7801 = vmatprep.subr.bf16.mxu0 %v5496
        %7802 = vmatpush2.bf16.msra.mxu0 %v5495
        %7803 = vmatprep.mubr.bf16.mxu0 %v1749
        %7804 = vmatmul.mubr.bf16.gmra.mxu0 %v1748
        %v7805 = vpop.f32.mrf.mxu0
        %v7806 = vadd.f32 %v1641, %v7805
        %v7807 = vpop.f32.mrf.mxu0
        %v7808 = vadd.f32 %v1645, %v7807
        %v7809 = vpop.f32.mrf.mxu0
        %v7810 = vadd.f32 %v1641, %v7809
        %v7811 = vpop.f32.mrf.mxu0
        %v7812 = vadd.f32 %v1645, %v7811
        %7813 = vdwg.mxu0
        %7814 = vmatprep.subr.bf16.mxu0 %v5736
        %7815 = vmatpush1.bf16.msra.mxu0 %v5735
        %7816 = vmatprep.subr.bf16.mxu0 %v5720
        %7817 = vmatpush1.bf16.msra.mxu0 %v5719
        %7818 = vmatprep.subr.bf16.mxu0 %v5704
        %7819 = vmatpush1.bf16.msra.mxu0 %v5703
        %7820 = vmatprep.subr.bf16.mxu0 %v5688
        %7821 = vmatpush1.bf16.msra.mxu0 %v5687
        %7822 = vmatprep.subr.bf16.mxu0 %v5672
        %7823 = vmatpush1.bf16.msra.mxu0 %v5671
        %7824 = vmatprep.subr.bf16.mxu0 %v5656
        %7825 = vmatpush1.bf16.msra.mxu0 %v5655
        %7826 = vmatprep.subr.bf16.mxu0 %v5640
        %7827 = vmatpush1.bf16.msra.mxu0 %v5639
        %7828 = vmatprep.subr.bf16.mxu0 %v5624
        %7829 = vmatpush1.bf16.msra.mxu0 %v5623
        %7830 = vmatprep.subr.bf16.mxu0 %v5864
        %7831 = vmatpush2.bf16.msra.mxu0 %v5863
        %7832 = vmatprep.subr.bf16.mxu0 %v5848
        %7833 = vmatpush2.bf16.msra.mxu0 %v5847
        %7834 = vmatprep.subr.bf16.mxu0 %v5832
        %7835 = vmatpush2.bf16.msra.mxu0 %v5831
        %7836 = vmatprep.subr.bf16.mxu0 %v5816
        %7837 = vmatpush2.bf16.msra.mxu0 %v5815
        %7838 = vmatprep.subr.bf16.mxu0 %v5800
        %7839 = vmatpush2.bf16.msra.mxu0 %v5799
        %7840 = vmatprep.subr.bf16.mxu0 %v5784
        %7841 = vmatpush2.bf16.msra.mxu0 %v5783
        %7842 = vmatprep.subr.bf16.mxu0 %v5768
        %7843 = vmatpush2.bf16.msra.mxu0 %v5767
        %7844 = vmatprep.subr.bf16.mxu0 %v5752
        %7845 = vmatpush2.bf16.msra.mxu0 %v5751
        %7846 = vmatprep.mubr.bf16.mxu0 %v1751
        %7847 = vmatmul.mubr.bf16.gmra.mxu0 %v1750
        %v7848 = vpop.f32.mrf.mxu0
        %v7849 = vadd.f32 %v7806, %v7848
        %v7850 = vpop.f32.mrf.mxu0
        %v7851 = vadd.f32 %v7808, %v7850
        %v7852 = vpop.f32.mrf.mxu0
        %v7853 = vadd.f32 %v7810, %v7852
        %v7854 = vpop.f32.mrf.mxu0
        %v7855 = vadd.f32 %v7812, %v7854
        %7856 = vdwg.mxu0
        %7857 = vmatprep.subr.bf16.mxu0 %v5992
        %7858 = vmatpush1.bf16.msra.mxu0 %v5991
        %7859 = vmatprep.subr.bf16.mxu0 %v5976
        %7860 = vmatpush1.bf16.msra.mxu0 %v5975
        %7861 = vmatprep.subr.bf16.mxu0 %v5960
        %7862 = vmatpush1.bf16.msra.mxu0 %v5959
        %7863 = vmatprep.subr.bf16.mxu0 %v5944
        %7864 = vmatpush1.bf16.msra.mxu0 %v5943
        %7865 = vmatprep.subr.bf16.mxu0 %v5928
        %7866 = vmatpush1.bf16.msra.mxu0 %v5927
        %7867 = vmatprep.subr.bf16.mxu0 %v5912
        %7868 = vmatpush1.bf16.msra.mxu0 %v5911
        %7869 = vmatprep.subr.bf16.mxu0 %v5896
        %7870 = vmatpush1.bf16.msra.mxu0 %v5895
        %7871 = vmatprep.subr.bf16.mxu0 %v5880
        %7872 = vmatpush1.bf16.msra.mxu0 %v5879
        %7873 = vmatprep.subr.bf16.mxu0 %v6120
        %7874 = vmatpush2.bf16.msra.mxu0 %v6119
        %7875 = vmatprep.subr.bf16.mxu0 %v6104
        %7876 = vmatpush2.bf16.msra.mxu0 %v6103
        %7877 = vmatprep.subr.bf16.mxu0 %v6088
        %7878 = vmatpush2.bf16.msra.mxu0 %v6087
        %7879 = vmatprep.subr.bf16.mxu0 %v6072
        %7880 = vmatpush2.bf16.msra.mxu0 %v6071
        %7881 = vmatprep.subr.bf16.mxu0 %v6056
        %7882 = vmatpush2.bf16.msra.mxu0 %v6055
        %7883 = vmatprep.subr.bf16.mxu0 %v6040
        %7884 = vmatpush2.bf16.msra.mxu0 %v6039
        %7885 = vmatprep.subr.bf16.mxu0 %v6024
        %7886 = vmatpush2.bf16.msra.mxu0 %v6023
        %7887 = vmatprep.subr.bf16.mxu0 %v6008
        %7888 = vmatpush2.bf16.msra.mxu0 %v6007
        %7889 = vmatprep.mubr.bf16.mxu0 %v1753
        %7890 = vmatmul.mubr.bf16.gmra.mxu0 %v1752
        %v7891 = vpop.f32.mrf.mxu0
        %v7892 = vadd.f32 %v7849, %v7891
        %v7893 = vpop.f32.mrf.mxu0
        %v7894 = vadd.f32 %v7851, %v7893
        %v7895 = vpop.f32.mrf.mxu0
        %v7896 = vadd.f32 %v7853, %v7895
        %v7897 = vpop.f32.mrf.mxu0
        %v7898 = vadd.f32 %v7855, %v7897
        %7899 = vdwg.mxu0
        %7900 = vmatprep.subr.bf16.mxu0 %v6248
        %7901 = vmatpush1.bf16.msra.mxu0 %v6247
        %7902 = vmatprep.subr.bf16.mxu0 %v6232
        %7903 = vmatpush1.bf16.msra.mxu0 %v6231
        %7904 = vmatprep.subr.bf16.mxu0 %v6216
        %7905 = vmatpush1.bf16.msra.mxu0 %v6215
        %7906 = vmatprep.subr.bf16.mxu0 %v6200
        %7907 = vmatpush1.bf16.msra.mxu0 %v6199
        %7908 = vmatprep.subr.bf16.mxu0 %v6184
        %7909 = vmatpush1.bf16.msra.mxu0 %v6183
        %7910 = vmatprep.subr.bf16.mxu0 %v6168
        %7911 = vmatpush1.bf16.msra.mxu0 %v6167
        %7912 = vmatprep.subr.bf16.mxu0 %v6152
        %7913 = vmatpush1.bf16.msra.mxu0 %v6151
        %7914 = vmatprep.subr.bf16.mxu0 %v6136
        %7915 = vmatpush1.bf16.msra.mxu0 %v6135
        %7916 = vmatprep.subr.bf16.mxu0 %v6376
        %7917 = vmatpush2.bf16.msra.mxu0 %v6375
        %7918 = vmatprep.subr.bf16.mxu0 %v6360
        %7919 = vmatpush2.bf16.msra.mxu0 %v6359
        %7920 = vmatprep.subr.bf16.mxu0 %v6344
        %7921 = vmatpush2.bf16.msra.mxu0 %v6343
        %7922 = vmatprep.subr.bf16.mxu0 %v6328
        %7923 = vmatpush2.bf16.msra.mxu0 %v6327
        %7924 = vmatprep.subr.bf16.mxu0 %v6312
        %7925 = vmatpush2.bf16.msra.mxu0 %v6311
        %7926 = vmatprep.subr.bf16.mxu0 %v6296
        %7927 = vmatpush2.bf16.msra.mxu0 %v6295
        %7928 = vmatprep.subr.bf16.mxu0 %v6280
        %7929 = vmatpush2.bf16.msra.mxu0 %v6279
        %7930 = vmatprep.subr.bf16.mxu0 %v6264
        %7931 = vmatpush2.bf16.msra.mxu0 %v6263
        %7932 = vmatprep.mubr.bf16.mxu0 %v1755
        %7933 = vmatmul.mubr.bf16.gmra.mxu0 %v1754
        %v7934 = vpop.f32.mrf.mxu0
        %v7935 = vadd.f32 %v7892, %v7934
        %v7936 = vpop.f32.mrf.mxu0
        %v7937 = vadd.f32 %v7894, %v7936
        %v7938 = vpop.f32.mrf.mxu0
        %v7939 = vadd.f32 %v7896, %v7938
        %v7940 = vpop.f32.mrf.mxu0
        %v7941 = vadd.f32 %v7898, %v7940
        %7942 = vdwg.mxu0
        %7943 = vmatprep.subr.bf16.mxu0 %v6504
        %7944 = vmatpush1.bf16.msra.mxu0 %v6503
        %7945 = vmatprep.subr.bf16.mxu0 %v6488
        %7946 = vmatpush1.bf16.msra.mxu0 %v6487
        %7947 = vmatprep.subr.bf16.mxu0 %v6472
        %7948 = vmatpush1.bf16.msra.mxu0 %v6471
        %7949 = vmatprep.subr.bf16.mxu0 %v6456
        %7950 = vmatpush1.bf16.msra.mxu0 %v6455
        %7951 = vmatprep.subr.bf16.mxu0 %v6440
        %7952 = vmatpush1.bf16.msra.mxu0 %v6439
        %7953 = vmatprep.subr.bf16.mxu0 %v6424
        %7954 = vmatpush1.bf16.msra.mxu0 %v6423
        %7955 = vmatprep.subr.bf16.mxu0 %v6408
        %7956 = vmatpush1.bf16.msra.mxu0 %v6407
        %7957 = vmatprep.subr.bf16.mxu0 %v6392
        %7958 = vmatpush1.bf16.msra.mxu0 %v6391
        %7959 = vmatprep.subr.bf16.mxu0 0
        %7960 = vmatpush2.bf16.msra.mxu0 0
        %7961 = vmatprep.subr.bf16.mxu0 0
        %7962 = vmatpush2.bf16.msra.mxu0 0
        %7963 = vmatprep.subr.bf16.mxu0 0
        %7964 = vmatpush2.bf16.msra.mxu0 0
        %7965 = vmatprep.subr.bf16.mxu0 0
        %7966 = vmatpush2.bf16.msra.mxu0 0
        %7967 = vmatprep.subr.bf16.mxu0 0
        %7968 = vmatpush2.bf16.msra.mxu0 0
        %7969 = vmatprep.subr.bf16.mxu0 %v6552
        %7970 = vmatpush2.bf16.msra.mxu0 %v6551
        %7971 = vmatprep.subr.bf16.mxu0 %v6536
        %7972 = vmatpush2.bf16.msra.mxu0 %v6535
        %7973 = vmatprep.subr.bf16.mxu0 %v6520
        %7974 = vmatpush2.bf16.msra.mxu0 %v6519
        %7975 = vmatprep.mubr.bf16.mxu0 %v7769
        %7976 = vmatmul.mubr.bf16.gmra.mxu0 %v1756
        %v7977 = vpop.f32.mrf.mxu0
        %v7978 = vadd.f32 %v7935, %v7977
        %v7979 = vpop.f32.mrf.mxu0
        %v7980 = vadd.f32 %v7937, %v7979
        %v7981 = vpop.f32.mrf.mxu0
        %v7982 = vadd.f32 %v7939, %v7981
        %v7983 = vpop.f32.mrf.mxu0
        %v7984 = vadd.f32 %v7941, %v7983
        %7985 = vdwg.mxu0
        %7986 = vmatprep.subr.bf16.mxu0 %v5482
        %7987 = vmatpush1.bf16.msra.mxu0 %v5481
        %7988 = vmatprep.subr.bf16.mxu0 %v5466
        %7989 = vmatpush1.bf16.msra.mxu0 %v5465
        %7990 = vmatprep.subr.bf16.mxu0 %v5450
        %7991 = vmatpush1.bf16.msra.mxu0 %v5449
        %7992 = vmatprep.subr.bf16.mxu0 %v5434
        %7993 = vmatpush1.bf16.msra.mxu0 %v5433
        %7994 = vmatprep.subr.bf16.mxu0 %v5418
        %7995 = vmatpush1.bf16.msra.mxu0 %v5417
        %7996 = vmatprep.subr.bf16.mxu0 %v5402
        %7997 = vmatpush1.bf16.msra.mxu0 %v5401
        %7998 = vmatprep.subr.bf16.mxu0 %v5386
        %7999 = vmatpush1.bf16.msra.mxu0 %v5385
        %8000 = vmatprep.subr.bf16.mxu0 %v5370
        %8001 = vmatpush1.bf16.msra.mxu0 %v5369
        %8002 = vmatprep.subr.bf16.mxu0 %v5610
        %8003 = vmatpush2.bf16.msra.mxu0 %v5609
        %8004 = vmatprep.subr.bf16.mxu0 %v5594
        %8005 = vmatpush2.bf16.msra.mxu0 %v5593
        %8006 = vmatprep.subr.bf16.mxu0 %v5578
        %8007 = vmatpush2.bf16.msra.mxu0 %v5577
        %8008 = vmatprep.subr.bf16.mxu0 %v5562
        %8009 = vmatpush2.bf16.msra.mxu0 %v5561
        %8010 = vmatprep.subr.bf16.mxu0 %v5546
        %8011 = vmatpush2.bf16.msra.mxu0 %v5545
        %8012 = vmatprep.subr.bf16.mxu0 %v5530
        %8013 = vmatpush2.bf16.msra.mxu0 %v5529
        %8014 = vmatprep.subr.bf16.mxu0 %v5514
        %8015 = vmatpush2.bf16.msra.mxu0 %v5513
        %8016 = vmatprep.subr.bf16.mxu0 %v5498
        %8017 = vmatpush2.bf16.msra.mxu0 %v5497
        %8018 = vmatprep.mubr.bf16.mxu0 %v1749
        %8019 = vmatmul.mubr.bf16.gmra.mxu0 %v1748
        %v8020 = vpop.f32.mrf.mxu0
        %v8021 = vadd.f32 %v1649, %v8020
        %v8022 = vpop.f32.mrf.mxu0
        %v8023 = vadd.f32 %v1653, %v8022
        %v8024 = vpop.f32.mrf.mxu0
        %v8025 = vadd.f32 %v1649, %v8024
        %v8026 = vpop.f32.mrf.mxu0
        %v8027 = vadd.f32 %v1653, %v8026
        %8028 = vdwg.mxu0
        %8029 = vmatprep.subr.bf16.mxu0 %v5738
        %8030 = vmatpush1.bf16.msra.mxu0 %v5737
        %8031 = vmatprep.subr.bf16.mxu0 %v5722
        %8032 = vmatpush1.bf16.msra.mxu0 %v5721
        %8033 = vmatprep.subr.bf16.mxu0 %v5706
        %8034 = vmatpush1.bf16.msra.mxu0 %v5705
        %8035 = vmatprep.subr.bf16.mxu0 %v5690
        %8036 = vmatpush1.bf16.msra.mxu0 %v5689
        %8037 = vmatprep.subr.bf16.mxu0 %v5674
        %8038 = vmatpush1.bf16.msra.mxu0 %v5673
        %8039 = vmatprep.subr.bf16.mxu0 %v5658
        %8040 = vmatpush1.bf16.msra.mxu0 %v5657
        %8041 = vmatprep.subr.bf16.mxu0 %v5642
        %8042 = vmatpush1.bf16.msra.mxu0 %v5641
        %8043 = vmatprep.subr.bf16.mxu0 %v5626
        %8044 = vmatpush1.bf16.msra.mxu0 %v5625
        %8045 = vmatprep.subr.bf16.mxu0 %v5866
        %8046 = vmatpush2.bf16.msra.mxu0 %v5865
        %8047 = vmatprep.subr.bf16.mxu0 %v5850
        %8048 = vmatpush2.bf16.msra.mxu0 %v5849
        %8049 = vmatprep.subr.bf16.mxu0 %v5834
        %8050 = vmatpush2.bf16.msra.mxu0 %v5833
        %8051 = vmatprep.subr.bf16.mxu0 %v5818
        %8052 = vmatpush2.bf16.msra.mxu0 %v5817
        %8053 = vmatprep.subr.bf16.mxu0 %v5802
        %8054 = vmatpush2.bf16.msra.mxu0 %v5801
        %8055 = vmatprep.subr.bf16.mxu0 %v5786
        %8056 = vmatpush2.bf16.msra.mxu0 %v5785
        %8057 = vmatprep.subr.bf16.mxu0 %v5770
        %8058 = vmatpush2.bf16.msra.mxu0 %v5769
        %8059 = vmatprep.subr.bf16.mxu0 %v5754
        %8060 = vmatpush2.bf16.msra.mxu0 %v5753
        %8061 = vmatprep.mubr.bf16.mxu0 %v1751
        %8062 = vmatmul.mubr.bf16.gmra.mxu0 %v1750
        %v8063 = vpop.f32.mrf.mxu0
        %v8064 = vadd.f32 %v8021, %v8063
        %v8065 = vpop.f32.mrf.mxu0
        %v8066 = vadd.f32 %v8023, %v8065
        %v8067 = vpop.f32.mrf.mxu0
        %v8068 = vadd.f32 %v8025, %v8067
        %v8069 = vpop.f32.mrf.mxu0
        %v8070 = vadd.f32 %v8027, %v8069
        %8071 = vdwg.mxu0
        %8072 = vmatprep.subr.bf16.mxu0 %v5994
        %8073 = vmatpush1.bf16.msra.mxu0 %v5993
        %8074 = vmatprep.subr.bf16.mxu0 %v5978
        %8075 = vmatpush1.bf16.msra.mxu0 %v5977
        %8076 = vmatprep.subr.bf16.mxu0 %v5962
        %8077 = vmatpush1.bf16.msra.mxu0 %v5961
        %8078 = vmatprep.subr.bf16.mxu0 %v5946
        %8079 = vmatpush1.bf16.msra.mxu0 %v5945
        %8080 = vmatprep.subr.bf16.mxu0 %v5930
        %8081 = vmatpush1.bf16.msra.mxu0 %v5929
        %8082 = vmatprep.subr.bf16.mxu0 %v5914
        %8083 = vmatpush1.bf16.msra.mxu0 %v5913
        %8084 = vmatprep.subr.bf16.mxu0 %v5898
        %8085 = vmatpush1.bf16.msra.mxu0 %v5897
        %8086 = vmatprep.subr.bf16.mxu0 %v5882
        %8087 = vmatpush1.bf16.msra.mxu0 %v5881
        %8088 = vmatprep.subr.bf16.mxu0 %v6122
        %8089 = vmatpush2.bf16.msra.mxu0 %v6121
        %8090 = vmatprep.subr.bf16.mxu0 %v6106
        %8091 = vmatpush2.bf16.msra.mxu0 %v6105
        %8092 = vmatprep.subr.bf16.mxu0 %v6090
        %8093 = vmatpush2.bf16.msra.mxu0 %v6089
        %8094 = vmatprep.subr.bf16.mxu0 %v6074
        %8095 = vmatpush2.bf16.msra.mxu0 %v6073
        %8096 = vmatprep.subr.bf16.mxu0 %v6058
        %8097 = vmatpush2.bf16.msra.mxu0 %v6057
        %8098 = vmatprep.subr.bf16.mxu0 %v6042
        %8099 = vmatpush2.bf16.msra.mxu0 %v6041
        %8100 = vmatprep.subr.bf16.mxu0 %v6026
        %8101 = vmatpush2.bf16.msra.mxu0 %v6025
        %8102 = vmatprep.subr.bf16.mxu0 %v6010
        %8103 = vmatpush2.bf16.msra.mxu0 %v6009
        %8104 = vmatprep.mubr.bf16.mxu0 %v1753
        %8105 = vmatmul.mubr.bf16.gmra.mxu0 %v1752
        %v8106 = vpop.f32.mrf.mxu0
        %v8107 = vadd.f32 %v8064, %v8106
        %v8108 = vpop.f32.mrf.mxu0
        %v8109 = vadd.f32 %v8066, %v8108
        %v8110 = vpop.f32.mrf.mxu0
        %v8111 = vadd.f32 %v8068, %v8110
        %v8112 = vpop.f32.mrf.mxu0
        %v8113 = vadd.f32 %v8070, %v8112
        %8114 = vdwg.mxu0
        %8115 = vmatprep.subr.bf16.mxu0 %v6250
        %8116 = vmatpush1.bf16.msra.mxu0 %v6249
        %8117 = vmatprep.subr.bf16.mxu0 %v6234
        %8118 = vmatpush1.bf16.msra.mxu0 %v6233
        %8119 = vmatprep.subr.bf16.mxu0 %v6218
        %8120 = vmatpush1.bf16.msra.mxu0 %v6217
        %8121 = vmatprep.subr.bf16.mxu0 %v6202
        %8122 = vmatpush1.bf16.msra.mxu0 %v6201
        %8123 = vmatprep.subr.bf16.mxu0 %v6186
        %8124 = vmatpush1.bf16.msra.mxu0 %v6185
        %8125 = vmatprep.subr.bf16.mxu0 %v6170
        %8126 = vmatpush1.bf16.msra.mxu0 %v6169
        %8127 = vmatprep.subr.bf16.mxu0 %v6154
        %8128 = vmatpush1.bf16.msra.mxu0 %v6153
        %8129 = vmatprep.subr.bf16.mxu0 %v6138
        %8130 = vmatpush1.bf16.msra.mxu0 %v6137
        %8131 = vmatprep.subr.bf16.mxu0 %v6378
        %8132 = vmatpush2.bf16.msra.mxu0 %v6377
        %8133 = vmatprep.subr.bf16.mxu0 %v6362
        %8134 = vmatpush2.bf16.msra.mxu0 %v6361
        %8135 = vmatprep.subr.bf16.mxu0 %v6346
        %8136 = vmatpush2.bf16.msra.mxu0 %v6345
        %8137 = vmatprep.subr.bf16.mxu0 %v6330
        %8138 = vmatpush2.bf16.msra.mxu0 %v6329
        %8139 = vmatprep.subr.bf16.mxu0 %v6314
        %8140 = vmatpush2.bf16.msra.mxu0 %v6313
        %8141 = vmatprep.subr.bf16.mxu0 %v6298
        %8142 = vmatpush2.bf16.msra.mxu0 %v6297
        %8143 = vmatprep.subr.bf16.mxu0 %v6282
        %8144 = vmatpush2.bf16.msra.mxu0 %v6281
        %8145 = vmatprep.subr.bf16.mxu0 %v6266
        %8146 = vmatpush2.bf16.msra.mxu0 %v6265
        %8147 = vmatprep.mubr.bf16.mxu0 %v1755
        %8148 = vmatmul.mubr.bf16.gmra.mxu0 %v1754
        %v8149 = vpop.f32.mrf.mxu0
        %v8150 = vadd.f32 %v8107, %v8149
        %v8151 = vpop.f32.mrf.mxu0
        %v8152 = vadd.f32 %v8109, %v8151
        %v8153 = vpop.f32.mrf.mxu0
        %v8154 = vadd.f32 %v8111, %v8153
        %v8155 = vpop.f32.mrf.mxu0
        %v8156 = vadd.f32 %v8113, %v8155
        %8157 = vdwg.mxu0
        %8158 = vmatprep.subr.bf16.mxu0 %v6506
        %8159 = vmatpush1.bf16.msra.mxu0 %v6505
        %8160 = vmatprep.subr.bf16.mxu0 %v6490
        %8161 = vmatpush1.bf16.msra.mxu0 %v6489
        %8162 = vmatprep.subr.bf16.mxu0 %v6474
        %8163 = vmatpush1.bf16.msra.mxu0 %v6473
        %8164 = vmatprep.subr.bf16.mxu0 %v6458
        %8165 = vmatpush1.bf16.msra.mxu0 %v6457
        %8166 = vmatprep.subr.bf16.mxu0 %v6442
        %8167 = vmatpush1.bf16.msra.mxu0 %v6441
        %8168 = vmatprep.subr.bf16.mxu0 %v6426
        %8169 = vmatpush1.bf16.msra.mxu0 %v6425
        %8170 = vmatprep.subr.bf16.mxu0 %v6410
        %8171 = vmatpush1.bf16.msra.mxu0 %v6409
        %8172 = vmatprep.subr.bf16.mxu0 %v6394
        %8173 = vmatpush1.bf16.msra.mxu0 %v6393
        %8174 = vmatprep.subr.bf16.mxu0 0
        %8175 = vmatpush2.bf16.msra.mxu0 0
        %8176 = vmatprep.subr.bf16.mxu0 0
        %8177 = vmatpush2.bf16.msra.mxu0 0
        %8178 = vmatprep.subr.bf16.mxu0 0
        %8179 = vmatpush2.bf16.msra.mxu0 0
        %8180 = vmatprep.subr.bf16.mxu0 0
        %8181 = vmatpush2.bf16.msra.mxu0 0
        %8182 = vmatprep.subr.bf16.mxu0 0
        %8183 = vmatpush2.bf16.msra.mxu0 0
        %8184 = vmatprep.subr.bf16.mxu0 %v6554
        %8185 = vmatpush2.bf16.msra.mxu0 %v6553
        %8186 = vmatprep.subr.bf16.mxu0 %v6538
        %8187 = vmatpush2.bf16.msra.mxu0 %v6537
        %8188 = vmatprep.subr.bf16.mxu0 %v6522
        %8189 = vmatpush2.bf16.msra.mxu0 %v6521
        %8190 = vmatprep.mubr.bf16.mxu0 %v7769
        %8191 = vmatmul.mubr.bf16.gmra.mxu0 %v1756
        %v8192 = vpop.f32.mrf.mxu0
        %v8193 = vadd.f32 %v8150, %v8192
        %v8194 = vpop.f32.mrf.mxu0
        %v8195 = vadd.f32 %v8152, %v8194
        %v8196 = vpop.f32.mrf.mxu0
        %v8197 = vadd.f32 %v8154, %v8196
        %v8198 = vpop.f32.mrf.mxu0
        %v8199 = vadd.f32 %v8156, %v8198
        %8200 = vdwg.mxu0
        %8201 = vmatprep.subr.bf16.mxu0 %v5484
        %8202 = vmatpush1.bf16.msra.mxu0 %v5483
        %8203 = vmatprep.subr.bf16.mxu0 %v5468
        %8204 = vmatpush1.bf16.msra.mxu0 %v5467
        %8205 = vmatprep.subr.bf16.mxu0 %v5452
        %8206 = vmatpush1.bf16.msra.mxu0 %v5451
        %8207 = vmatprep.subr.bf16.mxu0 %v5436
        %8208 = vmatpush1.bf16.msra.mxu0 %v5435
        %8209 = vmatprep.subr.bf16.mxu0 %v5420
        %8210 = vmatpush1.bf16.msra.mxu0 %v5419
        %8211 = vmatprep.subr.bf16.mxu0 %v5404
        %8212 = vmatpush1.bf16.msra.mxu0 %v5403
        %8213 = vmatprep.subr.bf16.mxu0 %v5388
        %8214 = vmatpush1.bf16.msra.mxu0 %v5387
        %8215 = vmatprep.subr.bf16.mxu0 %v5372
        %8216 = vmatpush1.bf16.msra.mxu0 %v5371
        %8217 = vmatprep.subr.bf16.mxu0 %v5612
        %8218 = vmatpush2.bf16.msra.mxu0 %v5611
        %8219 = vmatprep.subr.bf16.mxu0 %v5596
        %8220 = vmatpush2.bf16.msra.mxu0 %v5595
        %8221 = vmatprep.subr.bf16.mxu0 %v5580
        %8222 = vmatpush2.bf16.msra.mxu0 %v5579
        %8223 = vmatprep.subr.bf16.mxu0 %v5564
        %8224 = vmatpush2.bf16.msra.mxu0 %v5563
        %8225 = vmatprep.subr.bf16.mxu0 %v5548
        %8226 = vmatpush2.bf16.msra.mxu0 %v5547
        %8227 = vmatprep.subr.bf16.mxu0 %v5532
        %8228 = vmatpush2.bf16.msra.mxu0 %v5531
        %8229 = vmatprep.subr.bf16.mxu0 %v5516
        %8230 = vmatpush2.bf16.msra.mxu0 %v5515
        %8231 = vmatprep.subr.bf16.mxu0 %v5500
        %8232 = vmatpush2.bf16.msra.mxu0 %v5499
        %8233 = vmatprep.mubr.bf16.mxu0 %v1749
        %8234 = vmatmul.mubr.bf16.gmra.mxu0 %v1748
        %v8235 = vpop.f32.mrf.mxu0
        %v8236 = vadd.f32 %v1657, %v8235
        %v8237 = vpop.f32.mrf.mxu0
        %v8238 = vadd.f32 %v1661, %v8237
        %v8239 = vpop.f32.mrf.mxu0
        %v8240 = vadd.f32 %v1657, %v8239
        %v8241 = vpop.f32.mrf.mxu0
        %v8242 = vadd.f32 %v1661, %v8241
        %8243 = vdwg.mxu0
        %8244 = vmatprep.subr.bf16.mxu0 %v5740
        %8245 = vmatpush1.bf16.msra.mxu0 %v5739
        %8246 = vmatprep.subr.bf16.mxu0 %v5724
        %8247 = vmatpush1.bf16.msra.mxu0 %v5723
        %8248 = vmatprep.subr.bf16.mxu0 %v5708
        %8249 = vmatpush1.bf16.msra.mxu0 %v5707
        %8250 = vmatprep.subr.bf16.mxu0 %v5692
        %8251 = vmatpush1.bf16.msra.mxu0 %v5691
        %8252 = vmatprep.subr.bf16.mxu0 %v5676
        %8253 = vmatpush1.bf16.msra.mxu0 %v5675
        %8254 = vmatprep.subr.bf16.mxu0 %v5660
        %8255 = vmatpush1.bf16.msra.mxu0 %v5659
        %8256 = vmatprep.subr.bf16.mxu0 %v5644
        %8257 = vmatpush1.bf16.msra.mxu0 %v5643
        %8258 = vmatprep.subr.bf16.mxu0 %v5628
        %8259 = vmatpush1.bf16.msra.mxu0 %v5627
        %8260 = vmatprep.subr.bf16.mxu0 %v5868
        %8261 = vmatpush2.bf16.msra.mxu0 %v5867
        %8262 = vmatprep.subr.bf16.mxu0 %v5852
        %8263 = vmatpush2.bf16.msra.mxu0 %v5851
        %8264 = vmatprep.subr.bf16.mxu0 %v5836
        %8265 = vmatpush2.bf16.msra.mxu0 %v5835
        %8266 = vmatprep.subr.bf16.mxu0 %v5820
        %8267 = vmatpush2.bf16.msra.mxu0 %v5819
        %8268 = vmatprep.subr.bf16.mxu0 %v5804
        %8269 = vmatpush2.bf16.msra.mxu0 %v5803
        %8270 = vmatprep.subr.bf16.mxu0 %v5788
        %8271 = vmatpush2.bf16.msra.mxu0 %v5787
        %8272 = vmatprep.subr.bf16.mxu0 %v5772
        %8273 = vmatpush2.bf16.msra.mxu0 %v5771
        %8274 = vmatprep.subr.bf16.mxu0 %v5756
        %8275 = vmatpush2.bf16.msra.mxu0 %v5755
        %8276 = vmatprep.mubr.bf16.mxu0 %v1751
        %8277 = vmatmul.mubr.bf16.gmra.mxu0 %v1750
        %v8278 = vpop.f32.mrf.mxu0
        %v8279 = vadd.f32 %v8236, %v8278
        %v8280 = vpop.f32.mrf.mxu0
        %v8281 = vadd.f32 %v8238, %v8280
        %v8282 = vpop.f32.mrf.mxu0
        %v8283 = vadd.f32 %v8240, %v8282
        %v8284 = vpop.f32.mrf.mxu0
        %v8285 = vadd.f32 %v8242, %v8284
        %8286 = vdwg.mxu0
        %8287 = vmatprep.subr.bf16.mxu0 %v5996
        %8288 = vmatpush1.bf16.msra.mxu0 %v5995
        %8289 = vmatprep.subr.bf16.mxu0 %v5980
        %8290 = vmatpush1.bf16.msra.mxu0 %v5979
        %8291 = vmatprep.subr.bf16.mxu0 %v5964
        %8292 = vmatpush1.bf16.msra.mxu0 %v5963
        %8293 = vmatprep.subr.bf16.mxu0 %v5948
        %8294 = vmatpush1.bf16.msra.mxu0 %v5947
        %8295 = vmatprep.subr.bf16.mxu0 %v5932
        %8296 = vmatpush1.bf16.msra.mxu0 %v5931
        %8297 = vmatprep.subr.bf16.mxu0 %v5916
        %8298 = vmatpush1.bf16.msra.mxu0 %v5915
        %8299 = vmatprep.subr.bf16.mxu0 %v5900
        %8300 = vmatpush1.bf16.msra.mxu0 %v5899
        %8301 = vmatprep.subr.bf16.mxu0 %v5884
        %8302 = vmatpush1.bf16.msra.mxu0 %v5883
        %8303 = vmatprep.subr.bf16.mxu0 %v6124
        %8304 = vmatpush2.bf16.msra.mxu0 %v6123
        %8305 = vmatprep.subr.bf16.mxu0 %v6108
        %8306 = vmatpush2.bf16.msra.mxu0 %v6107
        %8307 = vmatprep.subr.bf16.mxu0 %v6092
        %8308 = vmatpush2.bf16.msra.mxu0 %v6091
        %8309 = vmatprep.subr.bf16.mxu0 %v6076
        %8310 = vmatpush2.bf16.msra.mxu0 %v6075
        %8311 = vmatprep.subr.bf16.mxu0 %v6060
        %8312 = vmatpush2.bf16.msra.mxu0 %v6059
        %8313 = vmatprep.subr.bf16.mxu0 %v6044
        %8314 = vmatpush2.bf16.msra.mxu0 %v6043
        %8315 = vmatprep.subr.bf16.mxu0 %v6028
        %8316 = vmatpush2.bf16.msra.mxu0 %v6027
        %8317 = vmatprep.subr.bf16.mxu0 %v6012
        %8318 = vmatpush2.bf16.msra.mxu0 %v6011
        %8319 = vmatprep.mubr.bf16.mxu0 %v1753
        %8320 = vmatmul.mubr.bf16.gmra.mxu0 %v1752
        %v8321 = vpop.f32.mrf.mxu0
        %v8322 = vadd.f32 %v8279, %v8321
        %v8323 = vpop.f32.mrf.mxu0
        %v8324 = vadd.f32 %v8281, %v8323
        %v8325 = vpop.f32.mrf.mxu0
        %v8326 = vadd.f32 %v8283, %v8325
        %v8327 = vpop.f32.mrf.mxu0
        %v8328 = vadd.f32 %v8285, %v8327
        %8329 = vdwg.mxu0
        %8330 = vmatprep.subr.bf16.mxu0 %v6252
        %8331 = vmatpush1.bf16.msra.mxu0 %v6251
        %8332 = vmatprep.subr.bf16.mxu0 %v6236
        %8333 = vmatpush1.bf16.msra.mxu0 %v6235
        %8334 = vmatprep.subr.bf16.mxu0 %v6220
        %8335 = vmatpush1.bf16.msra.mxu0 %v6219
        %8336 = vmatprep.subr.bf16.mxu0 %v6204
        %8337 = vmatpush1.bf16.msra.mxu0 %v6203
        %8338 = vmatprep.subr.bf16.mxu0 %v6188
        %8339 = vmatpush1.bf16.msra.mxu0 %v6187
        %8340 = vmatprep.subr.bf16.mxu0 %v6172
        %8341 = vmatpush1.bf16.msra.mxu0 %v6171
        %8342 = vmatprep.subr.bf16.mxu0 %v6156
        %8343 = vmatpush1.bf16.msra.mxu0 %v6155
        %8344 = vmatprep.subr.bf16.mxu0 %v6140
        %8345 = vmatpush1.bf16.msra.mxu0 %v6139
        %8346 = vmatprep.subr.bf16.mxu0 %v6380
        %8347 = vmatpush2.bf16.msra.mxu0 %v6379
        %8348 = vmatprep.subr.bf16.mxu0 %v6364
        %8349 = vmatpush2.bf16.msra.mxu0 %v6363
        %8350 = vmatprep.subr.bf16.mxu0 %v6348
        %8351 = vmatpush2.bf16.msra.mxu0 %v6347
        %8352 = vmatprep.subr.bf16.mxu0 %v6332
        %8353 = vmatpush2.bf16.msra.mxu0 %v6331
        %8354 = vmatprep.subr.bf16.mxu0 %v6316
        %8355 = vmatpush2.bf16.msra.mxu0 %v6315
        %8356 = vmatprep.subr.bf16.mxu0 %v6300
        %8357 = vmatpush2.bf16.msra.mxu0 %v6299
        %8358 = vmatprep.subr.bf16.mxu0 %v6284
        %8359 = vmatpush2.bf16.msra.mxu0 %v6283
        %8360 = vmatprep.subr.bf16.mxu0 %v6268
        %8361 = vmatpush2.bf16.msra.mxu0 %v6267
        %8362 = vmatprep.mubr.bf16.mxu0 %v1755
        %8363 = vmatmul.mubr.bf16.gmra.mxu0 %v1754
        %v8364 = vpop.f32.mrf.mxu0
        %v8365 = vadd.f32 %v8322, %v8364
        %v8366 = vpop.f32.mrf.mxu0
        %v8367 = vadd.f32 %v8324, %v8366
        %v8368 = vpop.f32.mrf.mxu0
        %v8369 = vadd.f32 %v8326, %v8368
        %v8370 = vpop.f32.mrf.mxu0
        %v8371 = vadd.f32 %v8328, %v8370
        %8372 = vdwg.mxu0
        %8373 = vmatprep.subr.bf16.mxu0 %v6508
        %8374 = vmatpush1.bf16.msra.mxu0 %v6507
        %8375 = vmatprep.subr.bf16.mxu0 %v6492
        %8376 = vmatpush1.bf16.msra.mxu0 %v6491
        %8377 = vmatprep.subr.bf16.mxu0 %v6476
        %8378 = vmatpush1.bf16.msra.mxu0 %v6475
        %8379 = vmatprep.subr.bf16.mxu0 %v6460
        %8380 = vmatpush1.bf16.msra.mxu0 %v6459
        %8381 = vmatprep.subr.bf16.mxu0 %v6444
        %8382 = vmatpush1.bf16.msra.mxu0 %v6443
        %8383 = vmatprep.subr.bf16.mxu0 %v6428
        %8384 = vmatpush1.bf16.msra.mxu0 %v6427
        %8385 = vmatprep.subr.bf16.mxu0 %v6412
        %8386 = vmatpush1.bf16.msra.mxu0 %v6411
        %8387 = vmatprep.subr.bf16.mxu0 %v6396
        %8388 = vmatpush1.bf16.msra.mxu0 %v6395
        %8389 = vmatprep.subr.bf16.mxu0 0
        %8390 = vmatpush2.bf16.msra.mxu0 0
        %8391 = vmatprep.subr.bf16.mxu0 0
        %8392 = vmatpush2.bf16.msra.mxu0 0
        %8393 = vmatprep.subr.bf16.mxu0 0
        %8394 = vmatpush2.bf16.msra.mxu0 0
        %8395 = vmatprep.subr.bf16.mxu0 0
        %8396 = vmatpush2.bf16.msra.mxu0 0
        %8397 = vmatprep.subr.bf16.mxu0 0
        %8398 = vmatpush2.bf16.msra.mxu0 0
        %8399 = vmatprep.subr.bf16.mxu0 %v6556
        %8400 = vmatpush2.bf16.msra.mxu0 %v6555
        %8401 = vmatprep.subr.bf16.mxu0 %v6540
        %8402 = vmatpush2.bf16.msra.mxu0 %v6539
        %8403 = vmatprep.subr.bf16.mxu0 %v6524
        %8404 = vmatpush2.bf16.msra.mxu0 %v6523
        %8405 = vmatprep.mubr.bf16.mxu0 %v7769
        %8406 = vmatmul.mubr.bf16.gmra.mxu0 %v1756
        %v8407 = vpop.f32.mrf.mxu0
        %v8408 = vadd.f32 %v8365, %v8407
        %v8409 = vpop.f32.mrf.mxu0
        %v8410 = vadd.f32 %v8367, %v8409
        %v8411 = vpop.f32.mrf.mxu0
        %v8412 = vadd.f32 %v8369, %v8411
        %v8413 = vpop.f32.mrf.mxu0
        %v8414 = vadd.f32 %v8371, %v8413
        %8415 = vdwg.mxu0
        %8416 = vmatprep.subr.bf16.mxu0 %v5486
        %8417 = vmatpush1.bf16.msra.mxu0 %v5485
        %8418 = vmatprep.subr.bf16.mxu0 %v5470
        %8419 = vmatpush1.bf16.msra.mxu0 %v5469
        %8420 = vmatprep.subr.bf16.mxu0 %v5454
        %8421 = vmatpush1.bf16.msra.mxu0 %v5453
        %8422 = vmatprep.subr.bf16.mxu0 %v5438
        %8423 = vmatpush1.bf16.msra.mxu0 %v5437
        %8424 = vmatprep.subr.bf16.mxu0 %v5422
        %8425 = vmatpush1.bf16.msra.mxu0 %v5421
        %8426 = vmatprep.subr.bf16.mxu0 %v5406
        %8427 = vmatpush1.bf16.msra.mxu0 %v5405
        %8428 = vmatprep.subr.bf16.mxu0 %v5390
        %8429 = vmatpush1.bf16.msra.mxu0 %v5389
        %8430 = vmatprep.subr.bf16.mxu0 %v5374
        %8431 = vmatpush1.bf16.msra.mxu0 %v5373
        %8432 = vmatprep.subr.bf16.mxu0 %v5614
        %8433 = vmatpush2.bf16.msra.mxu0 %v5613
        %8434 = vmatprep.subr.bf16.mxu0 %v5598
        %8435 = vmatpush2.bf16.msra.mxu0 %v5597
        %8436 = vmatprep.subr.bf16.mxu0 %v5582
        %8437 = vmatpush2.bf16.msra.mxu0 %v5581
        %8438 = vmatprep.subr.bf16.mxu0 %v5566
        %8439 = vmatpush2.bf16.msra.mxu0 %v5565
        %8440 = vmatprep.subr.bf16.mxu0 %v5550
        %8441 = vmatpush2.bf16.msra.mxu0 %v5549
        %8442 = vmatprep.subr.bf16.mxu0 %v5534
        %8443 = vmatpush2.bf16.msra.mxu0 %v5533
        %8444 = vmatprep.subr.bf16.mxu0 %v5518
        %8445 = vmatpush2.bf16.msra.mxu0 %v5517
        %8446 = vmatprep.subr.bf16.mxu0 %v5502
        %8447 = vmatpush2.bf16.msra.mxu0 %v5501
        %8448 = vmatprep.mubr.bf16.mxu0 %v1749
        %8449 = vmatmul.mubr.bf16.gmra.mxu0 %v1748
        %v8450 = vpop.f32.mrf.mxu0
        %v8451 = vadd.f32 %v1665, %v8450
        %v8452 = vpop.f32.mrf.mxu0
        %v8453 = vadd.f32 %v1669, %v8452
        %v8454 = vpop.f32.mrf.mxu0
        %v8455 = vadd.f32 %v1665, %v8454
        %v8456 = vpop.f32.mrf.mxu0
        %v8457 = vadd.f32 %v1669, %v8456
        %8458 = vdwg.mxu0
        %8459 = vmatprep.subr.bf16.mxu0 %v5742
        %8460 = vmatpush1.bf16.msra.mxu0 %v5741
        %8461 = vmatprep.subr.bf16.mxu0 %v5726
        %8462 = vmatpush1.bf16.msra.mxu0 %v5725
        %8463 = vmatprep.subr.bf16.mxu0 %v5710
        %8464 = vmatpush1.bf16.msra.mxu0 %v5709
        %8465 = vmatprep.subr.bf16.mxu0 %v5694
        %8466 = vmatpush1.bf16.msra.mxu0 %v5693
        %8467 = vmatprep.subr.bf16.mxu0 %v5678
        %8468 = vmatpush1.bf16.msra.mxu0 %v5677
        %8469 = vmatprep.subr.bf16.mxu0 %v5662
        %8470 = vmatpush1.bf16.msra.mxu0 %v5661
        %8471 = vmatprep.subr.bf16.mxu0 %v5646
        %8472 = vmatpush1.bf16.msra.mxu0 %v5645
        %8473 = vmatprep.subr.bf16.mxu0 %v5630
        %8474 = vmatpush1.bf16.msra.mxu0 %v5629
        %8475 = vmatprep.subr.bf16.mxu0 %v5870
        %8476 = vmatpush2.bf16.msra.mxu0 %v5869
        %8477 = vmatprep.subr.bf16.mxu0 %v5854
        %8478 = vmatpush2.bf16.msra.mxu0 %v5853
        %8479 = vmatprep.subr.bf16.mxu0 %v5838
        %8480 = vmatpush2.bf16.msra.mxu0 %v5837
        %8481 = vmatprep.subr.bf16.mxu0 %v5822
        %8482 = vmatpush2.bf16.msra.mxu0 %v5821
        %8483 = vmatprep.subr.bf16.mxu0 %v5806
        %8484 = vmatpush2.bf16.msra.mxu0 %v5805
        %8485 = vmatprep.subr.bf16.mxu0 %v5790
        %8486 = vmatpush2.bf16.msra.mxu0 %v5789
        %8487 = vmatprep.subr.bf16.mxu0 %v5774
        %8488 = vmatpush2.bf16.msra.mxu0 %v5773
        %8489 = vmatprep.subr.bf16.mxu0 %v5758
        %8490 = vmatpush2.bf16.msra.mxu0 %v5757
        %8491 = vmatprep.mubr.bf16.mxu0 %v1751
        %8492 = vmatmul.mubr.bf16.gmra.mxu0 %v1750
        %v8493 = vpop.f32.mrf.mxu0
        %v8494 = vadd.f32 %v8451, %v8493
        %v8495 = vpop.f32.mrf.mxu0
        %v8496 = vadd.f32 %v8453, %v8495
        %v8497 = vpop.f32.mrf.mxu0
        %v8498 = vadd.f32 %v8455, %v8497
        %v8499 = vpop.f32.mrf.mxu0
        %v8500 = vadd.f32 %v8457, %v8499
        %8501 = vdwg.mxu0
        %8502 = vmatprep.subr.bf16.mxu0 %v5998
        %8503 = vmatpush1.bf16.msra.mxu0 %v5997
        %8504 = vmatprep.subr.bf16.mxu0 %v5982
        %8505 = vmatpush1.bf16.msra.mxu0 %v5981
        %8506 = vmatprep.subr.bf16.mxu0 %v5966
        %8507 = vmatpush1.bf16.msra.mxu0 %v5965
        %8508 = vmatprep.subr.bf16.mxu0 %v5950
        %8509 = vmatpush1.bf16.msra.mxu0 %v5949
        %8510 = vmatprep.subr.bf16.mxu0 %v5934
        %8511 = vmatpush1.bf16.msra.mxu0 %v5933
        %8512 = vmatprep.subr.bf16.mxu0 %v5918
        %8513 = vmatpush1.bf16.msra.mxu0 %v5917
        %8514 = vmatprep.subr.bf16.mxu0 %v5902
        %8515 = vmatpush1.bf16.msra.mxu0 %v5901
        %8516 = vmatprep.subr.bf16.mxu0 %v5886
        %8517 = vmatpush1.bf16.msra.mxu0 %v5885
        %8518 = vmatprep.subr.bf16.mxu0 %v6126
        %8519 = vmatpush2.bf16.msra.mxu0 %v6125
        %8520 = vmatprep.subr.bf16.mxu0 %v6110
        %8521 = vmatpush2.bf16.msra.mxu0 %v6109
        %8522 = vmatprep.subr.bf16.mxu0 %v6094
        %8523 = vmatpush2.bf16.msra.mxu0 %v6093
        %8524 = vmatprep.subr.bf16.mxu0 %v6078
        %8525 = vmatpush2.bf16.msra.mxu0 %v6077
        %8526 = vmatprep.subr.bf16.mxu0 %v6062
        %8527 = vmatpush2.bf16.msra.mxu0 %v6061
        %8528 = vmatprep.subr.bf16.mxu0 %v6046
        %8529 = vmatpush2.bf16.msra.mxu0 %v6045
        %8530 = vmatprep.subr.bf16.mxu0 %v6030
        %8531 = vmatpush2.bf16.msra.mxu0 %v6029
        %8532 = vmatprep.subr.bf16.mxu0 %v6014
        %8533 = vmatpush2.bf16.msra.mxu0 %v6013
        %8534 = vmatprep.mubr.bf16.mxu0 %v1753
        %8535 = vmatmul.mubr.bf16.gmra.mxu0 %v1752
        %v8536 = vpop.f32.mrf.mxu0
        %v8537 = vadd.f32 %v8494, %v8536
        %v8538 = vpop.f32.mrf.mxu0
        %v8539 = vadd.f32 %v8496, %v8538
        %v8540 = vpop.f32.mrf.mxu0
        %v8541 = vadd.f32 %v8498, %v8540
        %v8542 = vpop.f32.mrf.mxu0
        %v8543 = vadd.f32 %v8500, %v8542
        %8544 = vdwg.mxu0
        %8545 = vmatprep.subr.bf16.mxu0 %v6254
        %8546 = vmatpush1.bf16.msra.mxu0 %v6253
        %8547 = vmatprep.subr.bf16.mxu0 %v6238
        %8548 = vmatpush1.bf16.msra.mxu0 %v6237
        %8549 = vmatprep.subr.bf16.mxu0 %v6222
        %8550 = vmatpush1.bf16.msra.mxu0 %v6221
        %8551 = vmatprep.subr.bf16.mxu0 %v6206
        %8552 = vmatpush1.bf16.msra.mxu0 %v6205
        %8553 = vmatprep.subr.bf16.mxu0 %v6190
        %8554 = vmatpush1.bf16.msra.mxu0 %v6189
        %8555 = vmatprep.subr.bf16.mxu0 %v6174
        %8556 = vmatpush1.bf16.msra.mxu0 %v6173
        %8557 = vmatprep.subr.bf16.mxu0 %v6158
        %8558 = vmatpush1.bf16.msra.mxu0 %v6157
        %8559 = vmatprep.subr.bf16.mxu0 %v6142
        %8560 = vmatpush1.bf16.msra.mxu0 %v6141
        %8561 = vmatprep.subr.bf16.mxu0 %v6382
        %8562 = vmatpush2.bf16.msra.mxu0 %v6381
        %8563 = vmatprep.subr.bf16.mxu0 %v6366
        %8564 = vmatpush2.bf16.msra.mxu0 %v6365
        %8565 = vmatprep.subr.bf16.mxu0 %v6350
        %8566 = vmatpush2.bf16.msra.mxu0 %v6349
        %8567 = vmatprep.subr.bf16.mxu0 %v6334
        %8568 = vmatpush2.bf16.msra.mxu0 %v6333
        %8569 = vmatprep.subr.bf16.mxu0 %v6318
        %8570 = vmatpush2.bf16.msra.mxu0 %v6317
        %8571 = vmatprep.subr.bf16.mxu0 %v6302
        %8572 = vmatpush2.bf16.msra.mxu0 %v6301
        %8573 = vmatprep.subr.bf16.mxu0 %v6286
        %8574 = vmatpush2.bf16.msra.mxu0 %v6285
        %8575 = vmatprep.subr.bf16.mxu0 %v6270
        %8576 = vmatpush2.bf16.msra.mxu0 %v6269
        %8577 = vmatprep.mubr.bf16.mxu0 %v1755
        %8578 = vmatmul.mubr.bf16.gmra.mxu0 %v1754
        %v8579 = vpop.f32.mrf.mxu0
        %v8580 = vadd.f32 %v8537, %v8579
        %v8581 = vpop.f32.mrf.mxu0
        %v8582 = vadd.f32 %v8539, %v8581
        %v8583 = vpop.f32.mrf.mxu0
        %v8584 = vadd.f32 %v8541, %v8583
        %v8585 = vpop.f32.mrf.mxu0
        %v8586 = vadd.f32 %v8543, %v8585
        %8587 = vdwg.mxu0
        %8588 = vmatprep.subr.bf16.mxu0 %v6510
        %8589 = vmatpush1.bf16.msra.mxu0 %v6509
        %8590 = vmatprep.subr.bf16.mxu0 %v6494
        %8591 = vmatpush1.bf16.msra.mxu0 %v6493
        %8592 = vmatprep.subr.bf16.mxu0 %v6478
        %8593 = vmatpush1.bf16.msra.mxu0 %v6477
        %8594 = vmatprep.subr.bf16.mxu0 %v6462
        %8595 = vmatpush1.bf16.msra.mxu0 %v6461
        %8596 = vmatprep.subr.bf16.mxu0 %v6446
        %8597 = vmatpush1.bf16.msra.mxu0 %v6445
        %8598 = vmatprep.subr.bf16.mxu0 %v6430
        %8599 = vmatpush1.bf16.msra.mxu0 %v6429
        %8600 = vmatprep.subr.bf16.mxu0 %v6414
        %8601 = vmatpush1.bf16.msra.mxu0 %v6413
        %8602 = vmatprep.subr.bf16.mxu0 %v6398
        %8603 = vmatpush1.bf16.msra.mxu0 %v6397
        %8604 = vmatprep.subr.bf16.mxu0 0
        %8605 = vmatpush2.bf16.msra.mxu0 0
        %8606 = vmatprep.subr.bf16.mxu0 0
        %8607 = vmatpush2.bf16.msra.mxu0 0
        %8608 = vmatprep.subr.bf16.mxu0 0
        %8609 = vmatpush2.bf16.msra.mxu0 0
        %8610 = vmatprep.subr.bf16.mxu0 0
        %8611 = vmatpush2.bf16.msra.mxu0 0
        %8612 = vmatprep.subr.bf16.mxu0 0
        %8613 = vmatpush2.bf16.msra.mxu0 0
        %8614 = vmatprep.subr.bf16.mxu0 %v6558
        %8615 = vmatpush2.bf16.msra.mxu0 %v6557
        %8616 = vmatprep.subr.bf16.mxu0 %v6542
        %8617 = vmatpush2.bf16.msra.mxu0 %v6541
        %8618 = vmatprep.subr.bf16.mxu0 %v6526
        %8619 = vmatpush2.bf16.msra.mxu0 %v6525
        %8620 = vmatprep.mubr.bf16.mxu0 %v7769
        %8621 = vmatmul.mubr.bf16.gmra.mxu0 %v1756
        %v8622 = vpop.f32.mrf.mxu0
        %v8623 = vadd.f32 %v8580, %v8622
        %v8624 = vpop.f32.mrf.mxu0
        %v8625 = vadd.f32 %v8582, %v8624
        %v8626 = vpop.f32.mrf.mxu0
        %v8627 = vadd.f32 %v8584, %v8626
        %v8628 = vpop.f32.mrf.mxu0
        %v8629 = vadd.f32 %v8586, %v8628
        %8630 = vdwg.mxu0
        %8631 = vmatprep.subr.bf16.mxu0 %v5488
        %8632 = vmatpush1.bf16.msra.mxu0 %v5487
        %8633 = vmatprep.subr.bf16.mxu0 %v5472
        %8634 = vmatpush1.bf16.msra.mxu0 %v5471
        %8635 = vmatprep.subr.bf16.mxu0 %v5456
        %8636 = vmatpush1.bf16.msra.mxu0 %v5455
        %8637 = vmatprep.subr.bf16.mxu0 %v5440
        %8638 = vmatpush1.bf16.msra.mxu0 %v5439
        %8639 = vmatprep.subr.bf16.mxu0 %v5424
        %8640 = vmatpush1.bf16.msra.mxu0 %v5423
        %8641 = vmatprep.subr.bf16.mxu0 %v5408
        %8642 = vmatpush1.bf16.msra.mxu0 %v5407
        %8643 = vmatprep.subr.bf16.mxu0 %v5392
        %8644 = vmatpush1.bf16.msra.mxu0 %v5391
        %8645 = vmatprep.subr.bf16.mxu0 %v5376
        %8646 = vmatpush1.bf16.msra.mxu0 %v5375
        %8647 = vmatprep.subr.bf16.mxu0 %v5616
        %8648 = vmatpush2.bf16.msra.mxu0 %v5615
        %8649 = vmatprep.subr.bf16.mxu0 %v5600
        %8650 = vmatpush2.bf16.msra.mxu0 %v5599
        %8651 = vmatprep.subr.bf16.mxu0 %v5584
        %8652 = vmatpush2.bf16.msra.mxu0 %v5583
        %8653 = vmatprep.subr.bf16.mxu0 %v5568
        %8654 = vmatpush2.bf16.msra.mxu0 %v5567
        %8655 = vmatprep.subr.bf16.mxu0 %v5552
        %8656 = vmatpush2.bf16.msra.mxu0 %v5551
        %8657 = vmatprep.subr.bf16.mxu0 %v5536
        %8658 = vmatpush2.bf16.msra.mxu0 %v5535
        %8659 = vmatprep.subr.bf16.mxu0 %v5520
        %8660 = vmatpush2.bf16.msra.mxu0 %v5519
        %8661 = vmatprep.subr.bf16.mxu0 %v5504
        %8662 = vmatpush2.bf16.msra.mxu0 %v5503
        %8663 = vmatprep.mubr.bf16.mxu0 %v1749
        %8664 = vmatmul.mubr.bf16.gmra.mxu0 %v1748
        %v8665 = vpop.f32.mrf.mxu0
        %v8666 = vadd.f32 %v1673, %v8665
        %v8667 = vpop.f32.mrf.mxu0
        %v8668 = vadd.f32 %v1677, %v8667
        %v8669 = vpop.f32.mrf.mxu0
        %v8670 = vadd.f32 %v1673, %v8669
        %v8671 = vpop.f32.mrf.mxu0
        %v8672 = vadd.f32 %v1677, %v8671
        %8673 = vdwg.mxu0
        %8674 = vmatprep.subr.bf16.mxu0 %v5744
        %8675 = vmatpush1.bf16.msra.mxu0 %v5743
        %8676 = vmatprep.subr.bf16.mxu0 %v5728
        %8677 = vmatpush1.bf16.msra.mxu0 %v5727
        %8678 = vmatprep.subr.bf16.mxu0 %v5712
        %8679 = vmatpush1.bf16.msra.mxu0 %v5711
        %8680 = vmatprep.subr.bf16.mxu0 %v5696
        %8681 = vmatpush1.bf16.msra.mxu0 %v5695
        %8682 = vmatprep.subr.bf16.mxu0 %v5680
        %8683 = vmatpush1.bf16.msra.mxu0 %v5679
        %8684 = vmatprep.subr.bf16.mxu0 %v5664
        %8685 = vmatpush1.bf16.msra.mxu0 %v5663
        %8686 = vmatprep.subr.bf16.mxu0 %v5648
        %8687 = vmatpush1.bf16.msra.mxu0 %v5647
        %8688 = vmatprep.subr.bf16.mxu0 %v5632
        %8689 = vmatpush1.bf16.msra.mxu0 %v5631
        %8690 = vmatprep.subr.bf16.mxu0 %v5872
        %8691 = vmatpush2.bf16.msra.mxu0 %v5871
        %8692 = vmatprep.subr.bf16.mxu0 %v5856
        %8693 = vmatpush2.bf16.msra.mxu0 %v5855
        %8694 = vmatprep.subr.bf16.mxu0 %v5840
        %8695 = vmatpush2.bf16.msra.mxu0 %v5839
        %8696 = vmatprep.subr.bf16.mxu0 %v5824
        %8697 = vmatpush2.bf16.msra.mxu0 %v5823
        %8698 = vmatprep.subr.bf16.mxu0 %v5808
        %8699 = vmatpush2.bf16.msra.mxu0 %v5807
        %8700 = vmatprep.subr.bf16.mxu0 %v5792
        %8701 = vmatpush2.bf16.msra.mxu0 %v5791
        %8702 = vmatprep.subr.bf16.mxu0 %v5776
        %8703 = vmatpush2.bf16.msra.mxu0 %v5775
        %8704 = vmatprep.subr.bf16.mxu0 %v5760
        %8705 = vmatpush2.bf16.msra.mxu0 %v5759
        %8706 = vmatprep.mubr.bf16.mxu0 %v1751
        %8707 = vmatmul.mubr.bf16.gmra.mxu0 %v1750
        %v8708 = vpop.f32.mrf.mxu0
        %v8709 = vadd.f32 %v8666, %v8708
        %v8710 = vpop.f32.mrf.mxu0
        %v8711 = vadd.f32 %v8668, %v8710
        %v8712 = vpop.f32.mrf.mxu0
        %v8713 = vadd.f32 %v8670, %v8712
        %v8714 = vpop.f32.mrf.mxu0
        %v8715 = vadd.f32 %v8672, %v8714
        %8716 = vdwg.mxu0
        %8717 = vmatprep.subr.bf16.mxu0 %v6000
        %8718 = vmatpush1.bf16.msra.mxu0 %v5999
        %8719 = vmatprep.subr.bf16.mxu0 %v5984
        %8720 = vmatpush1.bf16.msra.mxu0 %v5983
        %8721 = vmatprep.subr.bf16.mxu0 %v5968
        %8722 = vmatpush1.bf16.msra.mxu0 %v5967
        %8723 = vmatprep.subr.bf16.mxu0 %v5952
        %8724 = vmatpush1.bf16.msra.mxu0 %v5951
        %8725 = vmatprep.subr.bf16.mxu0 %v5936
        %8726 = vmatpush1.bf16.msra.mxu0 %v5935
        %8727 = vmatprep.subr.bf16.mxu0 %v5920
        %8728 = vmatpush1.bf16.msra.mxu0 %v5919
        %8729 = vmatprep.subr.bf16.mxu0 %v5904
        %8730 = vmatpush1.bf16.msra.mxu0 %v5903
        %8731 = vmatprep.subr.bf16.mxu0 %v5888
        %8732 = vmatpush1.bf16.msra.mxu0 %v5887
        %8733 = vmatprep.subr.bf16.mxu0 %v6128
        %8734 = vmatpush2.bf16.msra.mxu0 %v6127
        %8735 = vmatprep.subr.bf16.mxu0 %v6112
        %8736 = vmatpush2.bf16.msra.mxu0 %v6111
        %8737 = vmatprep.subr.bf16.mxu0 %v6096
        %8738 = vmatpush2.bf16.msra.mxu0 %v6095
        %8739 = vmatprep.subr.bf16.mxu0 %v6080
        %8740 = vmatpush2.bf16.msra.mxu0 %v6079
        %8741 = vmatprep.subr.bf16.mxu0 %v6064
        %8742 = vmatpush2.bf16.msra.mxu0 %v6063
        %8743 = vmatprep.subr.bf16.mxu0 %v6048
        %8744 = vmatpush2.bf16.msra.mxu0 %v6047
        %8745 = vmatprep.subr.bf16.mxu0 %v6032
        %8746 = vmatpush2.bf16.msra.mxu0 %v6031
        %8747 = vmatprep.subr.bf16.mxu0 %v6016
        %8748 = vmatpush2.bf16.msra.mxu0 %v6015
        %8749 = vmatprep.mubr.bf16.mxu0 %v1753
        %8750 = vmatmul.mubr.bf16.gmra.mxu0 %v1752
        %v8751 = vpop.f32.mrf.mxu0
        %v8752 = vadd.f32 %v8709, %v8751
        %v8753 = vpop.f32.mrf.mxu0
        %v8754 = vadd.f32 %v8711, %v8753
        %v8755 = vpop.f32.mrf.mxu0
        %v8756 = vadd.f32 %v8713, %v8755
        %v8757 = vpop.f32.mrf.mxu0
        %v8758 = vadd.f32 %v8715, %v8757
        %8759 = vdwg.mxu0
        %8760 = vmatprep.subr.bf16.mxu0 %v6256
        %8761 = vmatpush1.bf16.msra.mxu0 %v6255
        %8762 = vmatprep.subr.bf16.mxu0 %v6240
        %8763 = vmatpush1.bf16.msra.mxu0 %v6239
        %8764 = vmatprep.subr.bf16.mxu0 %v6224
        %8765 = vmatpush1.bf16.msra.mxu0 %v6223
        %8766 = vmatprep.subr.bf16.mxu0 %v6208
        %8767 = vmatpush1.bf16.msra.mxu0 %v6207
        %8768 = vmatprep.subr.bf16.mxu0 %v6192
        %8769 = vmatpush1.bf16.msra.mxu0 %v6191
        %8770 = vmatprep.subr.bf16.mxu0 %v6176
        %8771 = vmatpush1.bf16.msra.mxu0 %v6175
        %8772 = vmatprep.subr.bf16.mxu0 %v6160
        %8773 = vmatpush1.bf16.msra.mxu0 %v6159
        %8774 = vmatprep.subr.bf16.mxu0 %v6144
        %8775 = vmatpush1.bf16.msra.mxu0 %v6143
        %8776 = vmatprep.subr.bf16.mxu0 %v6384
        %8777 = vmatpush2.bf16.msra.mxu0 %v6383
        %8778 = vmatprep.subr.bf16.mxu0 %v6368
        %8779 = vmatpush2.bf16.msra.mxu0 %v6367
        %8780 = vmatprep.subr.bf16.mxu0 %v6352
        %8781 = vmatpush2.bf16.msra.mxu0 %v6351
        %8782 = vmatprep.subr.bf16.mxu0 %v6336
        %8783 = vmatpush2.bf16.msra.mxu0 %v6335
        %8784 = vmatprep.subr.bf16.mxu0 %v6320
        %8785 = vmatpush2.bf16.msra.mxu0 %v6319
        %8786 = vmatprep.subr.bf16.mxu0 %v6304
        %8787 = vmatpush2.bf16.msra.mxu0 %v6303
        %8788 = vmatprep.subr.bf16.mxu0 %v6288
        %8789 = vmatpush2.bf16.msra.mxu0 %v6287
        %8790 = vmatprep.subr.bf16.mxu0 %v6272
        %8791 = vmatpush2.bf16.msra.mxu0 %v6271
        %8792 = vmatprep.mubr.bf16.mxu0 %v1755
        %8793 = vmatmul.mubr.bf16.gmra.mxu0 %v1754
        %v8794 = vpop.f32.mrf.mxu0
        %v8795 = vadd.f32 %v8752, %v8794
        %v8796 = vpop.f32.mrf.mxu0
        %v8797 = vadd.f32 %v8754, %v8796
        %v8798 = vpop.f32.mrf.mxu0
        %v8799 = vadd.f32 %v8756, %v8798
        %v8800 = vpop.f32.mrf.mxu0
        %v8801 = vadd.f32 %v8758, %v8800
        %8802 = vdwg.mxu0
        %8803 = vmatprep.subr.bf16.mxu0 %v6512
        %8804 = vmatpush1.bf16.msra.mxu0 %v6511
        %8805 = vmatprep.subr.bf16.mxu0 %v6496
        %8806 = vmatpush1.bf16.msra.mxu0 %v6495
        %8807 = vmatprep.subr.bf16.mxu0 %v6480
        %8808 = vmatpush1.bf16.msra.mxu0 %v6479
        %8809 = vmatprep.subr.bf16.mxu0 %v6464
        %8810 = vmatpush1.bf16.msra.mxu0 %v6463
        %8811 = vmatprep.subr.bf16.mxu0 %v6448
        %8812 = vmatpush1.bf16.msra.mxu0 %v6447
        %8813 = vmatprep.subr.bf16.mxu0 %v6432
        %8814 = vmatpush1.bf16.msra.mxu0 %v6431
        %8815 = vmatprep.subr.bf16.mxu0 %v6416
        %8816 = vmatpush1.bf16.msra.mxu0 %v6415
        %8817 = vmatprep.subr.bf16.mxu0 %v6400
        %8818 = vmatpush1.bf16.msra.mxu0 %v6399
        %8819 = vmatprep.subr.bf16.mxu0 0
        %8820 = vmatpush2.bf16.msra.mxu0 0
        %8821 = vmatprep.subr.bf16.mxu0 0
        %8822 = vmatpush2.bf16.msra.mxu0 0
        %8823 = vmatprep.subr.bf16.mxu0 0
        %8824 = vmatpush2.bf16.msra.mxu0 0
        %8825 = vmatprep.subr.bf16.mxu0 0
        %8826 = vmatpush2.bf16.msra.mxu0 0
        %8827 = vmatprep.subr.bf16.mxu0 0
        %8828 = vmatpush2.bf16.msra.mxu0 0
        %8829 = vmatprep.subr.bf16.mxu0 %v6560
        %8830 = vmatpush2.bf16.msra.mxu0 %v6559
        %8831 = vmatprep.subr.bf16.mxu0 %v6544
        %8832 = vmatpush2.bf16.msra.mxu0 %v6543
        %8833 = vmatprep.subr.bf16.mxu0 %v6528
        %8834 = vmatpush2.bf16.msra.mxu0 %v6527
        %8835 = vmatprep.mubr.bf16.mxu0 %v7769
        %8836 = vmatmul.mubr.bf16.gmra.mxu0 %v1756
        %v8837 = vpop.f32.mrf.mxu0
        %v8838 = vadd.f32 %v8795, %v8837
        %v8839 = vpop.f32.mrf.mxu0
        %v8840 = vadd.f32 %v8797, %v8839
        %v8841 = vpop.f32.mrf.mxu0
        %v8842 = vadd.f32 %v8799, %v8841
        %v8843 = vpop.f32.mrf.mxu0
        %v8844 = vadd.f32 %v8801, %v8843
        %8845 = vdwg.mxu0
        %8846 = vmatprep.subr.bf16.mxu0 %v5490
        %8847 = vmatpush1.bf16.msra.mxu0 %v5489
        %8848 = vmatprep.subr.bf16.mxu0 %v5474
        %8849 = vmatpush1.bf16.msra.mxu0 %v5473
        %8850 = vmatprep.subr.bf16.mxu0 %v5458
        %8851 = vmatpush1.bf16.msra.mxu0 %v5457
        %8852 = vmatprep.subr.bf16.mxu0 %v5442
        %8853 = vmatpush1.bf16.msra.mxu0 %v5441
        %8854 = vmatprep.subr.bf16.mxu0 %v5426
        %8855 = vmatpush1.bf16.msra.mxu0 %v5425
        %8856 = vmatprep.subr.bf16.mxu0 %v5410
        %8857 = vmatpush1.bf16.msra.mxu0 %v5409
        %8858 = vmatprep.subr.bf16.mxu0 %v5394
        %8859 = vmatpush1.bf16.msra.mxu0 %v5393
        %8860 = vmatprep.subr.bf16.mxu0 %v5378
        %8861 = vmatpush1.bf16.msra.mxu0 %v5377
        %8862 = vmatprep.subr.bf16.mxu0 %v5618
        %8863 = vmatpush2.bf16.msra.mxu0 %v5617
        %8864 = vmatprep.subr.bf16.mxu0 %v5602
        %8865 = vmatpush2.bf16.msra.mxu0 %v5601
        %8866 = vmatprep.subr.bf16.mxu0 %v5586
        %8867 = vmatpush2.bf16.msra.mxu0 %v5585
        %8868 = vmatprep.subr.bf16.mxu0 %v5570
        %8869 = vmatpush2.bf16.msra.mxu0 %v5569
        %8870 = vmatprep.subr.bf16.mxu0 %v5554
        %8871 = vmatpush2.bf16.msra.mxu0 %v5553
        %8872 = vmatprep.subr.bf16.mxu0 %v5538
        %8873 = vmatpush2.bf16.msra.mxu0 %v5537
        %8874 = vmatprep.subr.bf16.mxu0 %v5522
        %8875 = vmatpush2.bf16.msra.mxu0 %v5521
        %8876 = vmatprep.subr.bf16.mxu0 %v5506
        %8877 = vmatpush2.bf16.msra.mxu0 %v5505
        %8878 = vmatprep.mubr.bf16.mxu0 %v1749
        %8879 = vmatmul.mubr.bf16.gmra.mxu0 %v1748
        %v8880 = vpop.f32.mrf.mxu0
        %v8881 = vadd.f32 %v1681, %v8880
        %v8882 = vpop.f32.mrf.mxu0
        %v8883 = vadd.f32 %v1685, %v8882
        %v8884 = vpop.f32.mrf.mxu0
        %v8885 = vadd.f32 %v1681, %v8884
        %v8886 = vpop.f32.mrf.mxu0
        %v8887 = vadd.f32 %v1685, %v8886
        %8888 = vdwg.mxu0
        %8889 = vmatprep.subr.bf16.mxu0 %v5746
        %8890 = vmatpush1.bf16.msra.mxu0 %v5745
        %8891 = vmatprep.subr.bf16.mxu0 %v5730
        %8892 = vmatpush1.bf16.msra.mxu0 %v5729
        %8893 = vmatprep.subr.bf16.mxu0 %v5714
        %8894 = vmatpush1.bf16.msra.mxu0 %v5713
        %8895 = vmatprep.subr.bf16.mxu0 %v5698
        %8896 = vmatpush1.bf16.msra.mxu0 %v5697
        %8897 = vmatprep.subr.bf16.mxu0 %v5682
        %8898 = vmatpush1.bf16.msra.mxu0 %v5681
        %8899 = vmatprep.subr.bf16.mxu0 %v5666
        %8900 = vmatpush1.bf16.msra.mxu0 %v5665
        %8901 = vmatprep.subr.bf16.mxu0 %v5650
        %8902 = vmatpush1.bf16.msra.mxu0 %v5649
        %8903 = vmatprep.subr.bf16.mxu0 %v5634
        %8904 = vmatpush1.bf16.msra.mxu0 %v5633
        %8905 = vmatprep.subr.bf16.mxu0 %v5874
        %8906 = vmatpush2.bf16.msra.mxu0 %v5873
        %8907 = vmatprep.subr.bf16.mxu0 %v5858
        %8908 = vmatpush2.bf16.msra.mxu0 %v5857
        %8909 = vmatprep.subr.bf16.mxu0 %v5842
        %8910 = vmatpush2.bf16.msra.mxu0 %v5841
        %8911 = vmatprep.subr.bf16.mxu0 %v5826
        %8912 = vmatpush2.bf16.msra.mxu0 %v5825
        %8913 = vmatprep.subr.bf16.mxu0 %v5810
        %8914 = vmatpush2.bf16.msra.mxu0 %v5809
        %8915 = vmatprep.subr.bf16.mxu0 %v5794
        %8916 = vmatpush2.bf16.msra.mxu0 %v5793
        %8917 = vmatprep.subr.bf16.mxu0 %v5778
        %8918 = vmatpush2.bf16.msra.mxu0 %v5777
        %8919 = vmatprep.subr.bf16.mxu0 %v5762
        %8920 = vmatpush2.bf16.msra.mxu0 %v5761
        %8921 = vmatprep.mubr.bf16.mxu0 %v1751
        %8922 = vmatmul.mubr.bf16.gmra.mxu0 %v1750
        %v8923 = vpop.f32.mrf.mxu0
        %v8924 = vadd.f32 %v8881, %v8923
        %v8925 = vpop.f32.mrf.mxu0
        %v8926 = vadd.f32 %v8883, %v8925
        %v8927 = vpop.f32.mrf.mxu0
        %v8928 = vadd.f32 %v8885, %v8927
        %v8929 = vpop.f32.mrf.mxu0
        %v8930 = vadd.f32 %v8887, %v8929
        %8931 = vdwg.mxu0
        %8932 = vmatprep.subr.bf16.mxu0 %v6002
        %8933 = vmatpush1.bf16.msra.mxu0 %v6001
        %8934 = vmatprep.subr.bf16.mxu0 %v5986
        %8935 = vmatpush1.bf16.msra.mxu0 %v5985
        %8936 = vmatprep.subr.bf16.mxu0 %v5970
        %8937 = vmatpush1.bf16.msra.mxu0 %v5969
        %8938 = vmatprep.subr.bf16.mxu0 %v5954
        %8939 = vmatpush1.bf16.msra.mxu0 %v5953
        %8940 = vmatprep.subr.bf16.mxu0 %v5938
        %8941 = vmatpush1.bf16.msra.mxu0 %v5937
        %8942 = vmatprep.subr.bf16.mxu0 %v5922
        %8943 = vmatpush1.bf16.msra.mxu0 %v5921
        %8944 = vmatprep.subr.bf16.mxu0 %v5906
        %8945 = vmatpush1.bf16.msra.mxu0 %v5905
        %8946 = vmatprep.subr.bf16.mxu0 %v5890
        %8947 = vmatpush1.bf16.msra.mxu0 %v5889
        %8948 = vmatprep.subr.bf16.mxu0 %v6130
        %8949 = vmatpush2.bf16.msra.mxu0 %v6129
        %8950 = vmatprep.subr.bf16.mxu0 %v6114
        %8951 = vmatpush2.bf16.msra.mxu0 %v6113
        %8952 = vmatprep.subr.bf16.mxu0 %v6098
        %8953 = vmatpush2.bf16.msra.mxu0 %v6097
        %8954 = vmatprep.subr.bf16.mxu0 %v6082
        %8955 = vmatpush2.bf16.msra.mxu0 %v6081
        %8956 = vmatprep.subr.bf16.mxu0 %v6066
        %8957 = vmatpush2.bf16.msra.mxu0 %v6065
        %8958 = vmatprep.subr.bf16.mxu0 %v6050
        %8959 = vmatpush2.bf16.msra.mxu0 %v6049
        %8960 = vmatprep.subr.bf16.mxu0 %v6034
        %8961 = vmatpush2.bf16.msra.mxu0 %v6033
        %8962 = vmatprep.subr.bf16.mxu0 %v6018
        %8963 = vmatpush2.bf16.msra.mxu0 %v6017
        %8964 = vmatprep.mubr.bf16.mxu0 %v1753
        %8965 = vmatmul.mubr.bf16.gmra.mxu0 %v1752
        %v8966 = vpop.f32.mrf.mxu0
        %v8967 = vadd.f32 %v8924, %v8966
        %v8968 = vpop.f32.mrf.mxu0
        %v8969 = vadd.f32 %v8926, %v8968
        %v8970 = vpop.f32.mrf.mxu0
        %v8971 = vadd.f32 %v8928, %v8970
        %v8972 = vpop.f32.mrf.mxu0
        %v8973 = vadd.f32 %v8930, %v8972
        %8974 = vdwg.mxu0
        %8975 = vmatprep.subr.bf16.mxu0 %v6258
        %8976 = vmatpush1.bf16.msra.mxu0 %v6257
        %8977 = vmatprep.subr.bf16.mxu0 %v6242
        %8978 = vmatpush1.bf16.msra.mxu0 %v6241
        %8979 = vmatprep.subr.bf16.mxu0 %v6226
        %8980 = vmatpush1.bf16.msra.mxu0 %v6225
        %8981 = vmatprep.subr.bf16.mxu0 %v6210
        %8982 = vmatpush1.bf16.msra.mxu0 %v6209
        %8983 = vmatprep.subr.bf16.mxu0 %v6194
        %8984 = vmatpush1.bf16.msra.mxu0 %v6193
        %8985 = vmatprep.subr.bf16.mxu0 %v6178
        %8986 = vmatpush1.bf16.msra.mxu0 %v6177
        %8987 = vmatprep.subr.bf16.mxu0 %v6162
        %8988 = vmatpush1.bf16.msra.mxu0 %v6161
        %8989 = vmatprep.subr.bf16.mxu0 %v6146
        %8990 = vmatpush1.bf16.msra.mxu0 %v6145
        %8991 = vmatprep.subr.bf16.mxu0 %v6386
        %8992 = vmatpush2.bf16.msra.mxu0 %v6385
        %8993 = vmatprep.subr.bf16.mxu0 %v6370
        %8994 = vmatpush2.bf16.msra.mxu0 %v6369
        %8995 = vmatprep.subr.bf16.mxu0 %v6354
        %8996 = vmatpush2.bf16.msra.mxu0 %v6353
        %8997 = vmatprep.subr.bf16.mxu0 %v6338
        %8998 = vmatpush2.bf16.msra.mxu0 %v6337
        %8999 = vmatprep.subr.bf16.mxu0 %v6322
        %9000 = vmatpush2.bf16.msra.mxu0 %v6321
        %9001 = vmatprep.subr.bf16.mxu0 %v6306
        %9002 = vmatpush2.bf16.msra.mxu0 %v6305
        %9003 = vmatprep.subr.bf16.mxu0 %v6290
        %9004 = vmatpush2.bf16.msra.mxu0 %v6289
        %9005 = vmatprep.subr.bf16.mxu0 %v6274
        %9006 = vmatpush2.bf16.msra.mxu0 %v6273
        %9007 = vmatprep.mubr.bf16.mxu0 %v1755
        %9008 = vmatmul.mubr.bf16.gmra.mxu0 %v1754
        %v9009 = vpop.f32.mrf.mxu0
        %v9010 = vadd.f32 %v8967, %v9009
        %v9011 = vpop.f32.mrf.mxu0
        %v9012 = vadd.f32 %v8969, %v9011
        %v9013 = vpop.f32.mrf.mxu0
        %v9014 = vadd.f32 %v8971, %v9013
        %v9015 = vpop.f32.mrf.mxu0
        %v9016 = vadd.f32 %v8973, %v9015
        %9017 = vdwg.mxu0
        %9018 = vmatprep.subr.bf16.mxu0 %v6514
        %9019 = vmatpush1.bf16.msra.mxu0 %v6513
        %9020 = vmatprep.subr.bf16.mxu0 %v6498
        %9021 = vmatpush1.bf16.msra.mxu0 %v6497
        %9022 = vmatprep.subr.bf16.mxu0 %v6482
        %9023 = vmatpush1.bf16.msra.mxu0 %v6481
        %9024 = vmatprep.subr.bf16.mxu0 %v6466
        %9025 = vmatpush1.bf16.msra.mxu0 %v6465
        %9026 = vmatprep.subr.bf16.mxu0 %v6450
        %9027 = vmatpush1.bf16.msra.mxu0 %v6449
        %9028 = vmatprep.subr.bf16.mxu0 %v6434
        %9029 = vmatpush1.bf16.msra.mxu0 %v6433
        %9030 = vmatprep.subr.bf16.mxu0 %v6418
        %9031 = vmatpush1.bf16.msra.mxu0 %v6417
        %9032 = vmatprep.subr.bf16.mxu0 %v6402
        %9033 = vmatpush1.bf16.msra.mxu0 %v6401
        %9034 = vmatprep.subr.bf16.mxu0 0
        %9035 = vmatpush2.bf16.msra.mxu0 0
        %9036 = vmatprep.subr.bf16.mxu0 0
        %9037 = vmatpush2.bf16.msra.mxu0 0
        %9038 = vmatprep.subr.bf16.mxu0 0
        %9039 = vmatpush2.bf16.msra.mxu0 0
        %9040 = vmatprep.subr.bf16.mxu0 0
        %9041 = vmatpush2.bf16.msra.mxu0 0
        %9042 = vmatprep.subr.bf16.mxu0 0
        %9043 = vmatpush2.bf16.msra.mxu0 0
        %9044 = vmatprep.subr.bf16.mxu0 %v6562
        %9045 = vmatpush2.bf16.msra.mxu0 %v6561
        %9046 = vmatprep.subr.bf16.mxu0 %v6546
        %9047 = vmatpush2.bf16.msra.mxu0 %v6545
        %9048 = vmatprep.subr.bf16.mxu0 %v6530
        %9049 = vmatpush2.bf16.msra.mxu0 %v6529
        %9050 = vmatprep.mubr.bf16.mxu0 %v7769
        %9051 = vmatmul.mubr.bf16.gmra.mxu0 %v1756
        %v9052 = vpop.f32.mrf.mxu0
        %v9053 = vadd.f32 %v9010, %v9052
        %v9054 = vpop.f32.mrf.mxu0
        %v9055 = vadd.f32 %v9012, %v9054
        %v9056 = vpop.f32.mrf.mxu0
        %v9057 = vadd.f32 %v9014, %v9056
        %v9058 = vpop.f32.mrf.mxu0
        %v9059 = vadd.f32 %v9016, %v9058
        %9060 = vdwg.mxu0
        %9061 = vmatprep.subr.bf16.mxu0 %v5492
        %9062 = vmatpush1.bf16.msra.mxu0 %v5491
        %9063 = vmatprep.subr.bf16.mxu0 %v5476
        %9064 = vmatpush1.bf16.msra.mxu0 %v5475
        %9065 = vmatprep.subr.bf16.mxu0 %v5460
        %9066 = vmatpush1.bf16.msra.mxu0 %v5459
        %9067 = vmatprep.subr.bf16.mxu0 %v5444
        %9068 = vmatpush1.bf16.msra.mxu0 %v5443
        %9069 = vmatprep.subr.bf16.mxu0 %v5428
        %9070 = vmatpush1.bf16.msra.mxu0 %v5427
        %9071 = vmatprep.subr.bf16.mxu0 %v5412
        %9072 = vmatpush1.bf16.msra.mxu0 %v5411
        %9073 = vmatprep.subr.bf16.mxu0 %v5396
        %9074 = vmatpush1.bf16.msra.mxu0 %v5395
        %9075 = vmatprep.subr.bf16.mxu0 %v5380
        %9076 = vmatpush1.bf16.msra.mxu0 %v5379
        %9077 = vmatprep.subr.bf16.mxu0 %v5620
        %9078 = vmatpush2.bf16.msra.mxu0 %v5619
        %9079 = vmatprep.subr.bf16.mxu0 %v5604
        %9080 = vmatpush2.bf16.msra.mxu0 %v5603
        %9081 = vmatprep.subr.bf16.mxu0 %v5588
        %9082 = vmatpush2.bf16.msra.mxu0 %v5587
        %9083 = vmatprep.subr.bf16.mxu0 %v5572
        %9084 = vmatpush2.bf16.msra.mxu0 %v5571
        %9085 = vmatprep.subr.bf16.mxu0 %v5556
        %9086 = vmatpush2.bf16.msra.mxu0 %v5555
        %9087 = vmatprep.subr.bf16.mxu0 %v5540
        %9088 = vmatpush2.bf16.msra.mxu0 %v5539
        %9089 = vmatprep.subr.bf16.mxu0 %v5524
        %9090 = vmatpush2.bf16.msra.mxu0 %v5523
        %9091 = vmatprep.subr.bf16.mxu0 %v5508
        %9092 = vmatpush2.bf16.msra.mxu0 %v5507
        %9093 = vmatprep.mubr.bf16.mxu0 %v1749
        %9094 = vmatmul.mubr.bf16.gmra.mxu0 %v1748
        %v9095 = vpop.f32.mrf.mxu0
        %v9096 = vadd.f32 %v1689, %v9095
        %v9097 = vpop.f32.mrf.mxu0
        %v9098 = vadd.f32 %v1693, %v9097
        %v9099 = vpop.f32.mrf.mxu0
        %v9100 = vadd.f32 %v1689, %v9099
        %v9101 = vpop.f32.mrf.mxu0
        %v9102 = vadd.f32 %v1693, %v9101
        %9103 = vdwg.mxu0
        %9104 = vmatprep.subr.bf16.mxu0 %v5748
        %9105 = vmatpush1.bf16.msra.mxu0 %v5747
        %9106 = vmatprep.subr.bf16.mxu0 %v5732
        %9107 = vmatpush1.bf16.msra.mxu0 %v5731
        %9108 = vmatprep.subr.bf16.mxu0 %v5716
        %9109 = vmatpush1.bf16.msra.mxu0 %v5715
        %9110 = vmatprep.subr.bf16.mxu0 %v5700
        %9111 = vmatpush1.bf16.msra.mxu0 %v5699
        %9112 = vmatprep.subr.bf16.mxu0 %v5684
        %9113 = vmatpush1.bf16.msra.mxu0 %v5683
        %9114 = vmatprep.subr.bf16.mxu0 %v5668
        %9115 = vmatpush1.bf16.msra.mxu0 %v5667
        %9116 = vmatprep.subr.bf16.mxu0 %v5652
        %9117 = vmatpush1.bf16.msra.mxu0 %v5651
        %9118 = vmatprep.subr.bf16.mxu0 %v5636
        %9119 = vmatpush1.bf16.msra.mxu0 %v5635
        %9120 = vmatprep.subr.bf16.mxu0 %v5876
        %9121 = vmatpush2.bf16.msra.mxu0 %v5875
        %9122 = vmatprep.subr.bf16.mxu0 %v5860
        %9123 = vmatpush2.bf16.msra.mxu0 %v5859
        %9124 = vmatprep.subr.bf16.mxu0 %v5844
        %9125 = vmatpush2.bf16.msra.mxu0 %v5843
        %9126 = vmatprep.subr.bf16.mxu0 %v5828
        %9127 = vmatpush2.bf16.msra.mxu0 %v5827
        %9128 = vmatprep.subr.bf16.mxu0 %v5812
        %9129 = vmatpush2.bf16.msra.mxu0 %v5811
        %9130 = vmatprep.subr.bf16.mxu0 %v5796
        %9131 = vmatpush2.bf16.msra.mxu0 %v5795
        %9132 = vmatprep.subr.bf16.mxu0 %v5780
        %9133 = vmatpush2.bf16.msra.mxu0 %v5779
        %9134 = vmatprep.subr.bf16.mxu0 %v5764
        %9135 = vmatpush2.bf16.msra.mxu0 %v5763
        %9136 = vmatprep.mubr.bf16.mxu0 %v1751
        %9137 = vmatmul.mubr.bf16.gmra.mxu0 %v1750
        %v9138 = vpop.f32.mrf.mxu0
        %v9139 = vadd.f32 %v9096, %v9138
        %v9140 = vpop.f32.mrf.mxu0
        %v9141 = vadd.f32 %v9098, %v9140
        %v9142 = vpop.f32.mrf.mxu0
        %v9143 = vadd.f32 %v9100, %v9142
        %v9144 = vpop.f32.mrf.mxu0
        %v9145 = vadd.f32 %v9102, %v9144
        %9146 = vdwg.mxu0
        %9147 = vmatprep.subr.bf16.mxu0 %v6004
        %9148 = vmatpush1.bf16.msra.mxu0 %v6003
        %9149 = vmatprep.subr.bf16.mxu0 %v5988
        %9150 = vmatpush1.bf16.msra.mxu0 %v5987
        %9151 = vmatprep.subr.bf16.mxu0 %v5972
        %9152 = vmatpush1.bf16.msra.mxu0 %v5971
        %9153 = vmatprep.subr.bf16.mxu0 %v5956
        %9154 = vmatpush1.bf16.msra.mxu0 %v5955
        %9155 = vmatprep.subr.bf16.mxu0 %v5940
        %9156 = vmatpush1.bf16.msra.mxu0 %v5939
        %9157 = vmatprep.subr.bf16.mxu0 %v5924
        %9158 = vmatpush1.bf16.msra.mxu0 %v5923
        %9159 = vmatprep.subr.bf16.mxu0 %v5908
        %9160 = vmatpush1.bf16.msra.mxu0 %v5907
        %9161 = vmatprep.subr.bf16.mxu0 %v5892
        %9162 = vmatpush1.bf16.msra.mxu0 %v5891
        %9163 = vmatprep.subr.bf16.mxu0 %v6132
        %9164 = vmatpush2.bf16.msra.mxu0 %v6131
        %9165 = vmatprep.subr.bf16.mxu0 %v6116
        %9166 = vmatpush2.bf16.msra.mxu0 %v6115
        %9167 = vmatprep.subr.bf16.mxu0 %v6100
        %9168 = vmatpush2.bf16.msra.mxu0 %v6099
        %9169 = vmatprep.subr.bf16.mxu0 %v6084
        %9170 = vmatpush2.bf16.msra.mxu0 %v6083
        %9171 = vmatprep.subr.bf16.mxu0 %v6068
        %9172 = vmatpush2.bf16.msra.mxu0 %v6067
        %9173 = vmatprep.subr.bf16.mxu0 %v6052
        %9174 = vmatpush2.bf16.msra.mxu0 %v6051
        %9175 = vmatprep.subr.bf16.mxu0 %v6036
        %9176 = vmatpush2.bf16.msra.mxu0 %v6035
        %9177 = vmatprep.subr.bf16.mxu0 %v6020
        %9178 = vmatpush2.bf16.msra.mxu0 %v6019
        %9179 = vmatprep.mubr.bf16.mxu0 %v1753
        %9180 = vmatmul.mubr.bf16.gmra.mxu0 %v1752
        %v9181 = vpop.f32.mrf.mxu0
        %v9182 = vadd.f32 %v9139, %v9181
        %v9183 = vpop.f32.mrf.mxu0
        %v9184 = vadd.f32 %v9141, %v9183
        %v9185 = vpop.f32.mrf.mxu0
        %v9186 = vadd.f32 %v9143, %v9185
        %v9187 = vpop.f32.mrf.mxu0
        %v9188 = vadd.f32 %v9145, %v9187
        %9189 = vdwg.mxu0
        %9190 = vmatprep.subr.bf16.mxu0 %v6260
        %9191 = vmatpush1.bf16.msra.mxu0 %v6259
        %9192 = vmatprep.subr.bf16.mxu0 %v6244
        %9193 = vmatpush1.bf16.msra.mxu0 %v6243
        %9194 = vmatprep.subr.bf16.mxu0 %v6228
        %9195 = vmatpush1.bf16.msra.mxu0 %v6227
        %9196 = vmatprep.subr.bf16.mxu0 %v6212
        %9197 = vmatpush1.bf16.msra.mxu0 %v6211
        %9198 = vmatprep.subr.bf16.mxu0 %v6196
        %9199 = vmatpush1.bf16.msra.mxu0 %v6195
        %9200 = vmatprep.subr.bf16.mxu0 %v6180
        %9201 = vmatpush1.bf16.msra.mxu0 %v6179
        %9202 = vmatprep.subr.bf16.mxu0 %v6164
        %9203 = vmatpush1.bf16.msra.mxu0 %v6163
        %9204 = vmatprep.subr.bf16.mxu0 %v6148
        %9205 = vmatpush1.bf16.msra.mxu0 %v6147
        %9206 = vmatprep.subr.bf16.mxu0 %v6388
        %9207 = vmatpush2.bf16.msra.mxu0 %v6387
        %9208 = vmatprep.subr.bf16.mxu0 %v6372
        %9209 = vmatpush2.bf16.msra.mxu0 %v6371
        %9210 = vmatprep.subr.bf16.mxu0 %v6356
        %9211 = vmatpush2.bf16.msra.mxu0 %v6355
        %9212 = vmatprep.subr.bf16.mxu0 %v6340
        %9213 = vmatpush2.bf16.msra.mxu0 %v6339
        %9214 = vmatprep.subr.bf16.mxu0 %v6324
        %9215 = vmatpush2.bf16.msra.mxu0 %v6323
        %9216 = vmatprep.subr.bf16.mxu0 %v6308
        %9217 = vmatpush2.bf16.msra.mxu0 %v6307
        %9218 = vmatprep.subr.bf16.mxu0 %v6292
        %9219 = vmatpush2.bf16.msra.mxu0 %v6291
        %9220 = vmatprep.subr.bf16.mxu0 %v6276
        %9221 = vmatpush2.bf16.msra.mxu0 %v6275
        %9222 = vmatprep.mubr.bf16.mxu0 %v1755
        %9223 = vmatmul.mubr.bf16.gmra.mxu0 %v1754
        %v9224 = vpop.f32.mrf.mxu0
        %v9225 = vadd.f32 %v9182, %v9224
        %v9226 = vpop.f32.mrf.mxu0
        %v9227 = vadd.f32 %v9184, %v9226
        %v9228 = vpop.f32.mrf.mxu0
        %v9229 = vadd.f32 %v9186, %v9228
        %v9230 = vpop.f32.mrf.mxu0
        %v9231 = vadd.f32 %v9188, %v9230
        %9232 = vdwg.mxu0
        %9233 = vmatprep.subr.bf16.mxu0 %v6516
        %9234 = vmatpush1.bf16.msra.mxu0 %v6515
        %9235 = vmatprep.subr.bf16.mxu0 %v6500
        %9236 = vmatpush1.bf16.msra.mxu0 %v6499
        %9237 = vmatprep.subr.bf16.mxu0 %v6484
        %9238 = vmatpush1.bf16.msra.mxu0 %v6483
        %9239 = vmatprep.subr.bf16.mxu0 %v6468
        %9240 = vmatpush1.bf16.msra.mxu0 %v6467
        %9241 = vmatprep.subr.bf16.mxu0 %v6452
        %9242 = vmatpush1.bf16.msra.mxu0 %v6451
        %9243 = vmatprep.subr.bf16.mxu0 %v6436
        %9244 = vmatpush1.bf16.msra.mxu0 %v6435
        %9245 = vmatprep.subr.bf16.mxu0 %v6420
        %9246 = vmatpush1.bf16.msra.mxu0 %v6419
        %9247 = vmatprep.subr.bf16.mxu0 %v6404
        %9248 = vmatpush1.bf16.msra.mxu0 %v6403
        %9249 = vmatprep.subr.bf16.mxu0 0
        %9250 = vmatpush2.bf16.msra.mxu0 0
        %9251 = vmatprep.subr.bf16.mxu0 0
        %9252 = vmatpush2.bf16.msra.mxu0 0
        %9253 = vmatprep.subr.bf16.mxu0 0
        %9254 = vmatpush2.bf16.msra.mxu0 0
        %9255 = vmatprep.subr.bf16.mxu0 0
        %9256 = vmatpush2.bf16.msra.mxu0 0
        %9257 = vmatprep.subr.bf16.mxu0 0
        %9258 = vmatpush2.bf16.msra.mxu0 0
        %9259 = vmatprep.subr.bf16.mxu0 %v6564
        %9260 = vmatpush2.bf16.msra.mxu0 %v6563
        %9261 = vmatprep.subr.bf16.mxu0 %v6548
        %9262 = vmatpush2.bf16.msra.mxu0 %v6547
        %9263 = vmatprep.subr.bf16.mxu0 %v6532
        %9264 = vmatpush2.bf16.msra.mxu0 %v6531
        %9265 = vmatprep.mubr.bf16.mxu0 %v7769
        %9266 = vmatmul.mubr.bf16.gmra.mxu0 %v1756
        %v9267 = vpop.f32.mrf.mxu0
        %v9268 = vadd.f32 %v9225, %v9267
        %v9269 = vpop.f32.mrf.mxu0
        %v9270 = vadd.f32 %v9227, %v9269
        %v9271 = vpop.f32.mrf.mxu0
        %v9272 = vadd.f32 %v9229, %v9271
        %v9273 = vpop.f32.mrf.mxu0
        %v9274 = vadd.f32 %v9231, %v9273
        %9275 = vdwg.mxu0
        %9276 = vmatprep.subr.bf16.mxu0 %v5494
        %9277 = vmatpush1.bf16.msra.mxu0 %v5493
        %9278 = vmatprep.subr.bf16.mxu0 %v5478
        %9279 = vmatpush1.bf16.msra.mxu0 %v5477
        %9280 = vmatprep.subr.bf16.mxu0 %v5462
        %9281 = vmatpush1.bf16.msra.mxu0 %v5461
        %9282 = vmatprep.subr.bf16.mxu0 %v5446
        %9283 = vmatpush1.bf16.msra.mxu0 %v5445
        %9284 = vmatprep.subr.bf16.mxu0 %v5430
        %9285 = vmatpush1.bf16.msra.mxu0 %v5429
        %9286 = vmatprep.subr.bf16.mxu0 %v5414
        %9287 = vmatpush1.bf16.msra.mxu0 %v5413
        %9288 = vmatprep.subr.bf16.mxu0 %v5398
        %9289 = vmatpush1.bf16.msra.mxu0 %v5397
        %9290 = vmatprep.subr.bf16.mxu0 %v5382
        %9291 = vmatpush1.bf16.msra.mxu0 %v5381
        %9292 = vmatprep.subr.bf16.mxu0 %v5622
        %9293 = vmatpush2.bf16.msra.mxu0 %v5621
        %9294 = vmatprep.subr.bf16.mxu0 %v5606
        %9295 = vmatpush2.bf16.msra.mxu0 %v5605
        %9296 = vmatprep.subr.bf16.mxu0 %v5590
        %9297 = vmatpush2.bf16.msra.mxu0 %v5589
        %9298 = vmatprep.subr.bf16.mxu0 %v5574
        %9299 = vmatpush2.bf16.msra.mxu0 %v5573
        %9300 = vmatprep.subr.bf16.mxu0 %v5558
        %9301 = vmatpush2.bf16.msra.mxu0 %v5557
        %9302 = vmatprep.subr.bf16.mxu0 %v5542
        %9303 = vmatpush2.bf16.msra.mxu0 %v5541
        %9304 = vmatprep.subr.bf16.mxu0 %v5526
        %9305 = vmatpush2.bf16.msra.mxu0 %v5525
        %9306 = vmatprep.subr.bf16.mxu0 %v5510
        %9307 = vmatpush2.bf16.msra.mxu0 %v5509
        %9308 = vmatprep.mubr.bf16.mxu0 %v1749
        %9309 = vmatmul.mubr.bf16.gmra.mxu0 %v1748
        %v9310 = vpop.f32.mrf.mxu0
        %v9311 = vadd.f32 %v1697, %v9310
        %v9312 = vpop.f32.mrf.mxu0
        %v9313 = vadd.f32 %v1701, %v9312
        %v9314 = vpop.f32.mrf.mxu0
        %v9315 = vadd.f32 %v1697, %v9314
        %v9316 = vpop.f32.mrf.mxu0
        %v9317 = vadd.f32 %v1701, %v9316
        %9318 = vdwg.mxu0
        %9319 = vmatprep.subr.bf16.mxu0 %v5750
        %9320 = vmatpush1.bf16.msra.mxu0 %v5749
        %9321 = vmatprep.subr.bf16.mxu0 %v5734
        %9322 = vmatpush1.bf16.msra.mxu0 %v5733
        %9323 = vmatprep.subr.bf16.mxu0 %v5718
        %9324 = vmatpush1.bf16.msra.mxu0 %v5717
        %9325 = vmatprep.subr.bf16.mxu0 %v5702
        %9326 = vmatpush1.bf16.msra.mxu0 %v5701
        %9327 = vmatprep.subr.bf16.mxu0 %v5686
        %9328 = vmatpush1.bf16.msra.mxu0 %v5685
        %9329 = vmatprep.subr.bf16.mxu0 %v5670
        %9330 = vmatpush1.bf16.msra.mxu0 %v5669
        %9331 = vmatprep.subr.bf16.mxu0 %v5654
        %9332 = vmatpush1.bf16.msra.mxu0 %v5653
        %9333 = vmatprep.subr.bf16.mxu0 %v5638
        %9334 = vmatpush1.bf16.msra.mxu0 %v5637
        %9335 = vmatprep.subr.bf16.mxu0 %v5878
        %9336 = vmatpush2.bf16.msra.mxu0 %v5877
        %9337 = vmatprep.subr.bf16.mxu0 %v5862
        %9338 = vmatpush2.bf16.msra.mxu0 %v5861
        %9339 = vmatprep.subr.bf16.mxu0 %v5846
        %9340 = vmatpush2.bf16.msra.mxu0 %v5845
        %9341 = vmatprep.subr.bf16.mxu0 %v5830
        %9342 = vmatpush2.bf16.msra.mxu0 %v5829
        %9343 = vmatprep.subr.bf16.mxu0 %v5814
        %9344 = vmatpush2.bf16.msra.mxu0 %v5813
        %9345 = vmatprep.subr.bf16.mxu0 %v5798
        %9346 = vmatpush2.bf16.msra.mxu0 %v5797
        %9347 = vmatprep.subr.bf16.mxu0 %v5782
        %9348 = vmatpush2.bf16.msra.mxu0 %v5781
        %9349 = vmatprep.subr.bf16.mxu0 %v5766
        %9350 = vmatpush2.bf16.msra.mxu0 %v5765
        %9351 = vmatprep.mubr.bf16.mxu0 %v1751
        %9352 = vmatmul.mubr.bf16.gmra.mxu0 %v1750
        %v9353 = vpop.f32.mrf.mxu0
        %v9354 = vadd.f32 %v9311, %v9353
        %v9355 = vpop.f32.mrf.mxu0
        %v9356 = vadd.f32 %v9313, %v9355
        %v9357 = vpop.f32.mrf.mxu0
        %v9358 = vadd.f32 %v9315, %v9357
        %v9359 = vpop.f32.mrf.mxu0
        %v9360 = vadd.f32 %v9317, %v9359
        %9361 = vdwg.mxu0
        %9362 = vmatprep.subr.bf16.mxu0 %v6006
        %9363 = vmatpush1.bf16.msra.mxu0 %v6005
        %9364 = vmatprep.subr.bf16.mxu0 %v5990
        %9365 = vmatpush1.bf16.msra.mxu0 %v5989
        %9366 = vmatprep.subr.bf16.mxu0 %v5974
        %9367 = vmatpush1.bf16.msra.mxu0 %v5973
        %9368 = vmatprep.subr.bf16.mxu0 %v5958
        %9369 = vmatpush1.bf16.msra.mxu0 %v5957
        %9370 = vmatprep.subr.bf16.mxu0 %v5942
        %9371 = vmatpush1.bf16.msra.mxu0 %v5941
        %9372 = vmatprep.subr.bf16.mxu0 %v5926
        %9373 = vmatpush1.bf16.msra.mxu0 %v5925
        %9374 = vmatprep.subr.bf16.mxu0 %v5910
        %9375 = vmatpush1.bf16.msra.mxu0 %v5909
        %9376 = vmatprep.subr.bf16.mxu0 %v5894
        %9377 = vmatpush1.bf16.msra.mxu0 %v5893
        %9378 = vmatprep.subr.bf16.mxu0 %v6134
        %9379 = vmatpush2.bf16.msra.mxu0 %v6133
        %9380 = vmatprep.subr.bf16.mxu0 %v6118
        %9381 = vmatpush2.bf16.msra.mxu0 %v6117
        %9382 = vmatprep.subr.bf16.mxu0 %v6102
        %9383 = vmatpush2.bf16.msra.mxu0 %v6101
        %9384 = vmatprep.subr.bf16.mxu0 %v6086
        %9385 = vmatpush2.bf16.msra.mxu0 %v6085
        %9386 = vmatprep.subr.bf16.mxu0 %v6070
        %9387 = vmatpush2.bf16.msra.mxu0 %v6069
        %9388 = vmatprep.subr.bf16.mxu0 %v6054
        %9389 = vmatpush2.bf16.msra.mxu0 %v6053
        %9390 = vmatprep.subr.bf16.mxu0 %v6038
        %9391 = vmatpush2.bf16.msra.mxu0 %v6037
        %9392 = vmatprep.subr.bf16.mxu0 %v6022
        %9393 = vmatpush2.bf16.msra.mxu0 %v6021
        %9394 = vmatprep.mubr.bf16.mxu0 %v1753
        %9395 = vmatmul.mubr.bf16.gmra.mxu0 %v1752
        %v9396 = vpop.f32.mrf.mxu0
        %v9397 = vadd.f32 %v9354, %v9396
        %v9398 = vpop.f32.mrf.mxu0
        %v9399 = vadd.f32 %v9356, %v9398
        %v9400 = vpop.f32.mrf.mxu0
        %v9401 = vadd.f32 %v9358, %v9400
        %v9402 = vpop.f32.mrf.mxu0
        %v9403 = vadd.f32 %v9360, %v9402
        %9404 = vdwg.mxu0
        %9405 = vmatprep.subr.bf16.mxu0 %v6262
        %9406 = vmatpush1.bf16.msra.mxu0 %v6261
        %9407 = vmatprep.subr.bf16.mxu0 %v6246
        %9408 = vmatpush1.bf16.msra.mxu0 %v6245
        %9409 = vmatprep.subr.bf16.mxu0 %v6230
        %9410 = vmatpush1.bf16.msra.mxu0 %v6229
        %9411 = vmatprep.subr.bf16.mxu0 %v6214
        %9412 = vmatpush1.bf16.msra.mxu0 %v6213
        %9413 = vmatprep.subr.bf16.mxu0 %v6198
        %9414 = vmatpush1.bf16.msra.mxu0 %v6197
        %9415 = vmatprep.subr.bf16.mxu0 %v6182
        %9416 = vmatpush1.bf16.msra.mxu0 %v6181
        %9417 = vmatprep.subr.bf16.mxu0 %v6166
        %9418 = vmatpush1.bf16.msra.mxu0 %v6165
        %9419 = vmatprep.subr.bf16.mxu0 %v6150
        %9420 = vmatpush1.bf16.msra.mxu0 %v6149
        %9421 = vmatprep.subr.bf16.mxu0 %v6390
        %9422 = vmatpush2.bf16.msra.mxu0 %v6389
        %9423 = vmatprep.subr.bf16.mxu0 %v6374
        %9424 = vmatpush2.bf16.msra.mxu0 %v6373
        %9425 = vmatprep.subr.bf16.mxu0 %v6358
        %9426 = vmatpush2.bf16.msra.mxu0 %v6357
        %9427 = vmatprep.subr.bf16.mxu0 %v6342
        %9428 = vmatpush2.bf16.msra.mxu0 %v6341
        %9429 = vmatprep.subr.bf16.mxu0 %v6326
        %9430 = vmatpush2.bf16.msra.mxu0 %v6325
        %9431 = vmatprep.subr.bf16.mxu0 %v6310
        %9432 = vmatpush2.bf16.msra.mxu0 %v6309
        %9433 = vmatprep.subr.bf16.mxu0 %v6294
        %9434 = vmatpush2.bf16.msra.mxu0 %v6293
        %9435 = vmatprep.subr.bf16.mxu0 %v6278
        %9436 = vmatpush2.bf16.msra.mxu0 %v6277
        %9437 = vmatprep.mubr.bf16.mxu0 %v1755
        %9438 = vmatmul.mubr.bf16.gmra.mxu0 %v1754
        %v9439 = vpop.f32.mrf.mxu0
        %v9440 = vadd.f32 %v9397, %v9439
        %v9441 = vpop.f32.mrf.mxu0
        %v9442 = vadd.f32 %v9399, %v9441
        %v9443 = vpop.f32.mrf.mxu0
        %v9444 = vadd.f32 %v9401, %v9443
        %v9445 = vpop.f32.mrf.mxu0
        %v9446 = vadd.f32 %v9403, %v9445
        %9447 = vdwg.mxu0
        %9448 = vmatprep.subr.bf16.mxu0 %v6518
        %9449 = vmatpush1.bf16.msra.mxu0 %v6517
        %9450 = vmatprep.subr.bf16.mxu0 %v6502
        %9451 = vmatpush1.bf16.msra.mxu0 %v6501
        %9452 = vmatprep.subr.bf16.mxu0 %v6486
        %9453 = vmatpush1.bf16.msra.mxu0 %v6485
        %9454 = vmatprep.subr.bf16.mxu0 %v6470
        %9455 = vmatpush1.bf16.msra.mxu0 %v6469
        %9456 = vmatprep.subr.bf16.mxu0 %v6454
        %9457 = vmatpush1.bf16.msra.mxu0 %v6453
        %9458 = vmatprep.subr.bf16.mxu0 %v6438
        %9459 = vmatpush1.bf16.msra.mxu0 %v6437
        %9460 = vmatprep.subr.bf16.mxu0 %v6422
        %9461 = vmatpush1.bf16.msra.mxu0 %v6421
        %9462 = vmatprep.subr.bf16.mxu0 %v6406
        %9463 = vmatpush1.bf16.msra.mxu0 %v6405
        %9464 = vmatprep.subr.bf16.mxu0 0
        %9465 = vmatpush2.bf16.msra.mxu0 0
        %9466 = vmatprep.subr.bf16.mxu0 0
        %9467 = vmatpush2.bf16.msra.mxu0 0
        %9468 = vmatprep.subr.bf16.mxu0 0
        %9469 = vmatpush2.bf16.msra.mxu0 0
        %9470 = vmatprep.subr.bf16.mxu0 0
        %9471 = vmatpush2.bf16.msra.mxu0 0
        %9472 = vmatprep.subr.bf16.mxu0 0
        %9473 = vmatpush2.bf16.msra.mxu0 0
        %9474 = vmatprep.subr.bf16.mxu0 %v6566
        %9475 = vmatpush2.bf16.msra.mxu0 %v6565
        %9476 = vmatprep.subr.bf16.mxu0 %v6550
        %9477 = vmatpush2.bf16.msra.mxu0 %v6549
        %9478 = vmatprep.subr.bf16.mxu0 %v6534
        %9479 = vmatpush2.bf16.msra.mxu0 %v6533
        %9480 = vmatprep.mubr.bf16.mxu0 %v7769
        %9481 = vmatmul.mubr.bf16.gmra.mxu0 %v1756
        %v9482 = vpop.f32.mrf.mxu0
        %v9483 = vadd.f32 %v9440, %v9482
        %v9484 = vpop.f32.mrf.mxu0
        %v9485 = vadd.f32 %v9442, %v9484
        %v9486 = vpop.f32.mrf.mxu0
        %v9487 = vadd.f32 %v9444, %v9486
        %v9488 = vpop.f32.mrf.mxu0
        %v9489 = vadd.f32 %v9446, %v9488
        %9490 = vdwg.mxu0
        %v9491 = vmax.f32 %v7978, 0.0
        %v9492 = vmax.f32 %v7980, 0.0
        %v9493 = vmax.f32 %v8193, 0.0
        %v9494 = vmax.f32 %v8195, 0.0
        %v9495 = vmax.f32 %v8408, 0.0
        %v9496 = vmax.f32 %v8410, 0.0
        %v9497 = vmax.f32 %v8623, 0.0
        %v9498 = vmax.f32 %v8625, 0.0
        %v9499 = vmax.f32 %v8838, 0.0
        %v9500 = vmax.f32 %v8840, 0.0
        %v9501 = vmax.f32 %v9053, 0.0
        %v9502 = vmax.f32 %v9055, 0.0
        %v9503 = vmax.f32 %v9268, 0.0
        %v9504 = vmax.f32 %v9270, 0.0
        %v9505 = vmax.f32 %v9483, 0.0
        %v9506 = vmax.f32 %v9485, 0.0
        %v9507 = vmax.f32 %v7982, 0.0
        %v9508 = vmax.f32 %v7984, 0.0
        %v9509 = vmax.f32 %v8197, 0.0
        %v9510 = vmax.f32 %v8199, 0.0
        %v9511 = vmax.f32 %v8412, 0.0
        %v9512 = vmax.f32 %v8414, 0.0
        %v9513 = vmax.f32 %v8627, 0.0
        %v9514 = vmax.f32 %v8629, 0.0
        %v9515 = vmax.f32 %v8842, 0.0
        %v9516 = vmax.f32 %v8844, 0.0
        %v9517 = vmax.f32 %v9057, 0.0
        %v9518 = vmax.f32 %v9059, 0.0
        %v9519 = vmax.f32 %v9272, 0.0
        %v9520 = vmax.f32 %v9274, 0.0
        %v9521 = vmax.f32 %v9487, 0.0
        %v9522 = vmax.f32 %v9489, 0.0
        %v9523 = vld [vmem:[#allocation2] sm:$0xff]
        %v9524 = vld [vmem:[#allocation2 + $0x8] sm:$0xff]
        %v9525 = vld [vmem:[#allocation2 + $0x10] sm:$0xff]
        %v9526 = vld [vmem:[#allocation2 + $0x18] sm:$0xff]
        %v9527 = vpack.c.bf16 %v9507, %v9491
        %v9528 = vpack.c.bf16 %v9508, %v9492
        %v9529 = vpack.c.bf16 %v9509, %v9493
        %v9530 = vpack.c.bf16 %v9510, %v9494
        %v9531 = vpack.c.bf16 %v9511, %v9495
        %v9532 = vpack.c.bf16 %v9512, %v9496
        %v9533 = vpack.c.bf16 %v9513, %v9497
        %v9534 = vpack.c.bf16 %v9514, %v9498
        %v9535 = vpack.c.bf16 %v9515, %v9499
        %v9536 = vpack.c.bf16 %v9516, %v9500
        %v9537 = vpack.c.bf16 %v9517, %v9501
        %v9538 = vpack.c.bf16 %v9518, %v9502
        %v9539 = vpack.c.bf16 %v9519, %v9503
        %v9540 = vpack.c.bf16 %v9520, %v9504
        %v9541 = vpack.c.bf16 %v9521, %v9505
        %v9542 = vpack.c.bf16 %v9522, %v9506
        %v9543 = vld [vmem:[%s352] sm:$0xff]
        %v9544 = vld [vmem:[%s352 + $0x8] sm:$0xff]
        %v9545 = vld [vmem:[%s352 + $0x10] sm:$0xff]
        %v9546 = vld [vmem:[%s352 + $0x18] sm:$0xff]
        %v9547 = vld [vmem:[%s352 + $0x20] sm:$0xff]
        %v9548 = vld [vmem:[%s352 + $0x28] sm:$0xff]
        %v9549 = vld [vmem:[%s352 + $0x30] sm:$0xff]
        %v9550 = vld [vmem:[%s352 + $0x38] sm:$0xff]
        %v9551 = vld [vmem:[%s352 + $0x40] sm:$0xff]
        %v9552 = vld [vmem:[%s352 + $0x48] sm:$0xff]
        %v9553 = vld [vmem:[%s352 + $0x50] sm:$0xff]
        %v9554 = vld [vmem:[%s352 + $0x58] sm:$0xff]
        %v9555 = vld [vmem:[%s352 + $0x60] sm:$0xff]
        %v9556 = vld [vmem:[%s352 + $0x68] sm:$0xff]
        %v9557 = vld [vmem:[%s352 + $0x70] sm:$0xff]
        %v9558 = vld [vmem:[%s352 + $0x78] sm:$0xff]
        %v9559 = vld [vmem:[%s352 + $0x80] sm:$0xff]
        %v9560 = vld [vmem:[%s352 + $0x88] sm:$0xff]
        %v9561 = vld [vmem:[%s352 + $0x90] sm:$0xff]
        %v9562 = vld [vmem:[%s352 + $0x98] sm:$0xff]
        %v9563 = vld [vmem:[%s352 + $0xa0] sm:$0xff]
        %v9564 = vld [vmem:[%s352 + $0xa8] sm:$0xff]
        %v9565 = vld [vmem:[%s352 + $0xb0] sm:$0xff]
        %v9566 = vld [vmem:[%s352 + $0xb8] sm:$0xff]
        %v9567 = vld [vmem:[%s352 + $0xc0] sm:$0xff]
        %v9568 = vld [vmem:[%s352 + $0xc8] sm:$0xff]
        %v9569 = vld [vmem:[%s352 + $0xd0] sm:$0xff]
        %v9570 = vld [vmem:[%s352 + $0xd8] sm:$0xff]
        %v9571 = vld [vmem:[%s352 + $0xe0] sm:$0xff]
        %v9572 = vld [vmem:[%s352 + $0xe8] sm:$0xff]
        %v9573 = vld [vmem:[%s352 + $0xf0] sm:$0xff]
        %v9574 = vld [vmem:[%s352 + $0xf8] sm:$0xff]
        %v9575 = vld [vmem:[%s352 + $0x100] sm:$0xff]
        %v9576 = vld [vmem:[%s352 + $0x108] sm:$0xff]
        %v9577 = vld [vmem:[%s352 + $0x110] sm:$0xff]
        %v9578 = vld [vmem:[%s352 + $0x118] sm:$0xff]
        %v9579 = vld [vmem:[%s352 + $0x120] sm:$0xff]
        %v9580 = vld [vmem:[%s352 + $0x128] sm:$0xff]
        %v9581 = vld [vmem:[%s352 + $0x130] sm:$0xff]
        %v9582 = vld [vmem:[%s352 + $0x138] sm:$0xff]
        %v9583 = vld [vmem:[%s352 + $0x140] sm:$0xff]
        %v9584 = vld [vmem:[%s352 + $0x148] sm:$0xff]
        %v9585 = vld [vmem:[%s352 + $0x150] sm:$0xff]
        %v9586 = vld [vmem:[%s352 + $0x158] sm:$0xff]
        %v9587 = vld [vmem:[%s352 + $0x160] sm:$0xff]
        %v9588 = vld [vmem:[%s352 + $0x168] sm:$0xff]
        %v9589 = vld [vmem:[%s352 + $0x170] sm:$0xff]
        %v9590 = vld [vmem:[%s352 + $0x178] sm:$0xff]
        %v9591 = vld [vmem:[%s352 + $0x180] sm:$0xff]
        %v9592 = vld [vmem:[%s352 + $0x188] sm:$0xff]
        %v9593 = vld [vmem:[%s352 + $0x190] sm:$0xff]
        %v9594 = vld [vmem:[%s352 + $0x198] sm:$0xff]
        %v9595 = vld [vmem:[%s352 + $0x1a0] sm:$0xff]
        %v9596 = vld [vmem:[%s352 + $0x1a8] sm:$0xff]
        %v9597 = vld [vmem:[%s352 + $0x1b0] sm:$0xff]
        %v9598 = vld [vmem:[%s352 + $0x1b8] sm:$0xff]
        %v9599 = vld [vmem:[%s352 + $0x1c0] sm:$0xff]
        %v9600 = vld [vmem:[%s352 + $0x1c8] sm:$0xff]
        %v9601 = vld [vmem:[%s352 + $0x1d0] sm:$0xff]
        %v9602 = vld [vmem:[%s352 + $0x1d8] sm:$0xff]
        %v9603 = vld [vmem:[%s352 + $0x1e0] sm:$0xff]
        %v9604 = vld [vmem:[%s352 + $0x1e8] sm:$0xff]
        %v9605 = vld [vmem:[%s352 + $0x1f0] sm:$0xff]
        %v9606 = vld [vmem:[%s352 + $0x1f8] sm:$0xff]
        %v9607 = vld [vmem:[%s352 + $0x200] sm:$0xff]
        %v9608 = vld [vmem:[%s352 + $0x208] sm:$0xff]
        %v9609 = vld [vmem:[%s352 + $0x210] sm:$0xff]
        %v9610 = vld [vmem:[%s352 + $0x218] sm:$0xff]
        %v9611 = vld [vmem:[%s352 + $0x220] sm:$0xff]
        %v9612 = vld [vmem:[%s352 + $0x228] sm:$0xff]
        %v9613 = vld [vmem:[%s352 + $0x230] sm:$0xff]
        %v9614 = vld [vmem:[%s352 + $0x238] sm:$0xff]
        %v9615 = vld [vmem:[%s352 + $0x240] sm:$0xff]
        %v9616 = vld [vmem:[%s352 + $0x248] sm:$0xff]
        %v9617 = vld [vmem:[%s352 + $0x250] sm:$0xff]
        %v9618 = vld [vmem:[%s352 + $0x258] sm:$0xff]
        %v9619 = vld [vmem:[%s352 + $0x260] sm:$0xff]
        %v9620 = vld [vmem:[%s352 + $0x268] sm:$0xff]
        %v9621 = vld [vmem:[%s352 + $0x270] sm:$0xff]
        %v9622 = vld [vmem:[%s352 + $0x278] sm:$0xff]
        %v9623 = vld [vmem:[%s352 + $0x280] sm:$0xff]
        %v9624 = vld [vmem:[%s352 + $0x288] sm:$0xff]
        %v9625 = vld [vmem:[%s352 + $0x290] sm:$0xff]
        %v9626 = vld [vmem:[%s352 + $0x298] sm:$0xff]
        %v9627 = vld [vmem:[%s352 + $0x2a0] sm:$0xff]
        %v9628 = vld [vmem:[%s352 + $0x2a8] sm:$0xff]
        %v9629 = vld [vmem:[%s352 + $0x2b0] sm:$0xff]
        %v9630 = vld [vmem:[%s352 + $0x2b8] sm:$0xff]
        %v9631 = vld [vmem:[%s352 + $0x2c0] sm:$0xff]
        %v9632 = vld [vmem:[%s352 + $0x2c8] sm:$0xff]
        %v9633 = vld [vmem:[%s352 + $0x2d0] sm:$0xff]
        %v9634 = vld [vmem:[%s352 + $0x2d8] sm:$0xff]
        %v9635 = vld [vmem:[%s352 + $0x2e0] sm:$0xff]
        %v9636 = vld [vmem:[%s352 + $0x2e8] sm:$0xff]
        %v9637 = vld [vmem:[%s352 + $0x2f0] sm:$0xff]
        %v9638 = vld [vmem:[%s352 + $0x2f8] sm:$0xff]
        %v9639 = vld [vmem:[%s352 + $0x300] sm:$0xff]
        %v9640 = vld [vmem:[%s352 + $0x308] sm:$0xff]
        %v9641 = vld [vmem:[%s352 + $0x310] sm:$0xff]
        %v9642 = vld [vmem:[%s352 + $0x318] sm:$0xff]
        %v9643 = vld [vmem:[%s352 + $0x320] sm:$0xff]
        %v9644 = vld [vmem:[%s352 + $0x328] sm:$0xff]
        %v9645 = vld [vmem:[%s352 + $0x330] sm:$0xff]
        %v9646 = vld [vmem:[%s352 + $0x338] sm:$0xff]
        %v9647 = vld [vmem:[%s352 + $0x340] sm:$0xff]
        %v9648 = vld [vmem:[%s352 + $0x348] sm:$0xff]
        %v9649 = vld [vmem:[%s352 + $0x350] sm:$0xff]
        %v9650 = vld [vmem:[%s352 + $0x358] sm:$0xff]
        %v9651 = vld [vmem:[%s352 + $0x360] sm:$0xff]
        %v9652 = vld [vmem:[%s352 + $0x368] sm:$0xff]
        %v9653 = vld [vmem:[%s352 + $0x370] sm:$0xff]
        %v9654 = vld [vmem:[%s352 + $0x378] sm:$0xff]
        %v9655 = vld [vmem:[%s352 + $0x380] sm:$0xff]
        %v9656 = vld [vmem:[%s352 + $0x388] sm:$0xff]
        %v9657 = vld [vmem:[%s352 + $0x390] sm:$0xff]
        %v9658 = vld [vmem:[%s352 + $0x398] sm:$0xff]
        %v9659 = vld [vmem:[%s352 + $0x3a0] sm:$0xff]
        %v9660 = vld [vmem:[%s352 + $0x3a8] sm:$0xff]
        %v9661 = vld [vmem:[%s352 + $0x3b0] sm:$0xff]
        %v9662 = vld [vmem:[%s352 + $0x3b8] sm:$0xff]
        %v9663 = vld [vmem:[%s352 + $0x3c0] sm:$0xff]
        %v9664 = vld [vmem:[%s352 + $0x3c8] sm:$0xff]
        %v9665 = vld [vmem:[%s352 + $0x3d0] sm:$0xff]
        %v9666 = vld [vmem:[%s352 + $0x3d8] sm:$0xff]
        %v9667 = vld [vmem:[%s352 + $0x3e0] sm:$0xff]
        %v9668 = vld [vmem:[%s352 + $0x3e8] sm:$0xff]
        %v9669 = vld [vmem:[%s352 + $0x3f0] sm:$0xff]
        %v9670 = vld [vmem:[%s352 + $0x3f8] sm:$0xff]
        %v9671 = vld [vmem:[%s352 + $0x400] sm:$0xff]
        %v9672 = vld [vmem:[%s352 + $0x408] sm:$0xff]
        %v9673 = vld [vmem:[%s352 + $0x410] sm:$0xff]
        %v9674 = vld [vmem:[%s352 + $0x418] sm:$0xff]
        %v9675 = vld [vmem:[%s352 + $0x420] sm:$0xff]
        %v9676 = vld [vmem:[%s352 + $0x428] sm:$0xff]
        %v9677 = vld [vmem:[%s352 + $0x430] sm:$0xff]
        %v9678 = vld [vmem:[%s352 + $0x438] sm:$0xff]
        %v9679 = vld [vmem:[%s352 + $0x440] sm:$0xff]
        %v9680 = vld [vmem:[%s352 + $0x448] sm:$0xff]
        %v9681 = vld [vmem:[%s352 + $0x450] sm:$0xff]
        %v9682 = vld [vmem:[%s352 + $0x458] sm:$0xff]
        %v9683 = vld [vmem:[%s352 + $0x460] sm:$0xff]
        %v9684 = vld [vmem:[%s352 + $0x468] sm:$0xff]
        %v9685 = vld [vmem:[%s352 + $0x470] sm:$0xff]
        %v9686 = vld [vmem:[%s352 + $0x478] sm:$0xff]
        %v9687 = vld [vmem:[%s352 + $0x480] sm:$0xff]
        %v9688 = vld [vmem:[%s352 + $0x488] sm:$0xff]
        %v9689 = vld [vmem:[%s352 + $0x490] sm:$0xff]
        %v9690 = vld [vmem:[%s352 + $0x498] sm:$0xff]
        %v9691 = vld [vmem:[%s352 + $0x4a0] sm:$0xff]
        %v9692 = vld [vmem:[%s352 + $0x4a8] sm:$0xff]
        %v9693 = vld [vmem:[%s352 + $0x4b0] sm:$0xff]
        %v9694 = vld [vmem:[%s352 + $0x4b8] sm:$0xff]
        %v9695 = vld [vmem:[%s352 + $0x4c0] sm:$0xff]
        %v9696 = vld [vmem:[%s352 + $0x4c8] sm:$0xff]
        %v9697 = vld [vmem:[%s352 + $0x4d0] sm:$0xff]
        %v9698 = vld [vmem:[%s352 + $0x4d8] sm:$0xff]
        %v9699 = vld [vmem:[%s352 + $0x4e0] sm:$0xff]
        %v9700 = vld [vmem:[%s352 + $0x4e8] sm:$0xff]
        %v9701 = vld [vmem:[%s352 + $0x4f0] sm:$0xff]
        %v9702 = vld [vmem:[%s352 + $0x4f8] sm:$0xff]
        %v9703 = vld [vmem:[%s352 + $0x500] sm:$0xff]
        %v9704 = vld [vmem:[%s352 + $0x508] sm:$0xff]
        %v9705 = vld [vmem:[%s352 + $0x510] sm:$0xff]
        %v9706 = vld [vmem:[%s352 + $0x518] sm:$0xff]
        %v9707 = vld [vmem:[%s352 + $0x520] sm:$0xff]
        %v9708 = vld [vmem:[%s352 + $0x528] sm:$0xff]
        %v9709 = vld [vmem:[%s352 + $0x530] sm:$0xff]
        %v9710 = vld [vmem:[%s352 + $0x538] sm:$0xff]
        %v9711 = vld [vmem:[%s352 + $0x540] sm:$0xff]
        %v9712 = vld [vmem:[%s352 + $0x548] sm:$0xff]
        %v9713 = vld [vmem:[%s352 + $0x550] sm:$0xff]
        %v9714 = vld [vmem:[%s352 + $0x558] sm:$0xff]
        %v9715 = vld [vmem:[%s352 + $0x560] sm:$0xff]
        %v9716 = vld [vmem:[%s352 + $0x568] sm:$0xff]
        %v9717 = vld [vmem:[%s352 + $0x570] sm:$0xff]
        %v9718 = vld [vmem:[%s352 + $0x578] sm:$0xff]
        %v9719 = vld [vmem:[%s352 + $0x580] sm:$0xff]
        %v9720 = vld [vmem:[%s352 + $0x588] sm:$0xff]
        %v9721 = vld [vmem:[%s352 + $0x590] sm:$0xff]
        %v9722 = vld [vmem:[%s352 + $0x598] sm:$0xff]
        %v9723 = vld [vmem:[%s352 + $0x5a0] sm:$0xff]
        %v9724 = vld [vmem:[%s352 + $0x5a8] sm:$0xff]
        %v9725 = vld [vmem:[%s352 + $0x5b0] sm:$0xff]
        %v9726 = vld [vmem:[%s352 + $0x5b8] sm:$0xff]
        %v9727 = vld [vmem:[%s352 + $0x5c0] sm:$0xff]
        %v9728 = vld [vmem:[%s352 + $0x5c8] sm:$0xff]
        %v9729 = vld [vmem:[%s352 + $0x5d0] sm:$0xff]
        %v9730 = vld [vmem:[%s352 + $0x5d8] sm:$0xff]
        %v9731 = vld [vmem:[%s352 + $0x5e0] sm:$0xff]
        %v9732 = vld [vmem:[%s352 + $0x5e8] sm:$0xff]
        %v9733 = vld [vmem:[%s352 + $0x5f0] sm:$0xff]
        %v9734 = vld [vmem:[%s352 + $0x5f8] sm:$0xff]
        %v9735 = vld [vmem:[%s352 + $0x600] sm:$0xff]
        %v9736 = vld [vmem:[%s352 + $0x608] sm:$0xff]
        %v9737 = vld [vmem:[%s352 + $0x610] sm:$0xff]
        %v9738 = vld [vmem:[%s352 + $0x618] sm:$0xff]
        %v9739 = vld [vmem:[%s352 + $0x620] sm:$0xff]
        %v9740 = vld [vmem:[%s352 + $0x628] sm:$0xff]
        %v9741 = vld [vmem:[%s352 + $0x630] sm:$0xff]
        %v9742 = vld [vmem:[%s352 + $0x638] sm:$0xff]
        %v9743 = vld [vmem:[%s352 + $0x640] sm:$0xff]
        %v9744 = vld [vmem:[%s352 + $0x648] sm:$0xff]
        %v9745 = vld [vmem:[%s352 + $0x650] sm:$0xff]
        %v9746 = vld [vmem:[%s352 + $0x658] sm:$0xff]
        %v9747 = vld [vmem:[%s352 + $0x660] sm:$0xff]
        %v9748 = vld [vmem:[%s352 + $0x668] sm:$0xff]
        %v9749 = vld [vmem:[%s352 + $0x670] sm:$0xff]
        %v9750 = vld [vmem:[%s352 + $0x678] sm:$0xff]
        %v9751 = vld [vmem:[%s352 + $0x680] sm:$0xff]
        %v9752 = vld [vmem:[%s352 + $0x688] sm:$0xff]
        %v9753 = vld [vmem:[%s352 + $0x690] sm:$0xff]
        %v9754 = vld [vmem:[%s352 + $0x698] sm:$0xff]
        %v9755 = vld [vmem:[%s352 + $0x6a0] sm:$0xff]
        %v9756 = vld [vmem:[%s352 + $0x6a8] sm:$0xff]
        %v9757 = vld [vmem:[%s352 + $0x6b0] sm:$0xff]
        %v9758 = vld [vmem:[%s352 + $0x6b8] sm:$0xff]
        %v9759 = vld [vmem:[%s352 + $0x6c0] sm:$0xff]
        %v9760 = vld [vmem:[%s352 + $0x6c8] sm:$0xff]
        %v9761 = vld [vmem:[%s352 + $0x6d0] sm:$0xff]
        %v9762 = vld [vmem:[%s352 + $0x6d8] sm:$0xff]
        %v9763 = vld [vmem:[%s352 + $0x6e0] sm:$0xff]
        %v9764 = vld [vmem:[%s352 + $0x6e8] sm:$0xff]
        %v9765 = vld [vmem:[%s352 + $0x6f0] sm:$0xff]
        %v9766 = vld [vmem:[%s352 + $0x6f8] sm:$0xff]
        %v9767 = vld [vmem:[%s352 + $0x700] sm:$0xff]
        %v9768 = vld [vmem:[%s352 + $0x708] sm:$0xff]
        %v9769 = vld [vmem:[%s352 + $0x710] sm:$0xff]
        %v9770 = vld [vmem:[%s352 + $0x718] sm:$0xff]
        %v9771 = vld [vmem:[%s352 + $0x720] sm:$0xff]
        %v9772 = vld [vmem:[%s352 + $0x728] sm:$0xff]
        %v9773 = vld [vmem:[%s352 + $0x730] sm:$0xff]
        %v9774 = vld [vmem:[%s352 + $0x738] sm:$0xff]
        %v9775 = vld [vmem:[%s352 + $0x740] sm:$0xff]
        %v9776 = vld [vmem:[%s352 + $0x748] sm:$0xff]
        %v9777 = vld [vmem:[%s352 + $0x750] sm:$0xff]
        %v9778 = vld [vmem:[%s352 + $0x758] sm:$0xff]
        %v9779 = vld [vmem:[%s352 + $0x760] sm:$0xff]
        %v9780 = vld [vmem:[%s352 + $0x768] sm:$0xff]
        %v9781 = vld [vmem:[%s352 + $0x770] sm:$0xff]
        %v9782 = vld [vmem:[%s352 + $0x778] sm:$0xff]
        %v9783 = vld [vmem:[%s352 + $0x780] sm:$0xff]
        %v9784 = vld [vmem:[%s352 + $0x788] sm:$0xff]
        %v9785 = vld [vmem:[%s352 + $0x790] sm:$0xff]
        %v9786 = vld [vmem:[%s352 + $0x798] sm:$0xff]
        %v9787 = vld [vmem:[%s352 + $0x7a0] sm:$0xff]
        %v9788 = vld [vmem:[%s352 + $0x7a8] sm:$0xff]
        %v9789 = vld [vmem:[%s352 + $0x7b0] sm:$0xff]
        %v9790 = vld [vmem:[%s352 + $0x7b8] sm:$0xff]
        %v9791 = vld [vmem:[%s352 + $0x7c0] sm:$0xff]
        %v9792 = vld [vmem:[%s352 + $0x7c8] sm:$0xff]
        %v9793 = vld [vmem:[%s352 + $0x7d0] sm:$0xff]
        %v9794 = vld [vmem:[%s352 + $0x7d8] sm:$0xff]
        %v9795 = vld [vmem:[%s352 + $0x7e0] sm:$0xff]
        %v9796 = vld [vmem:[%s352 + $0x7e8] sm:$0xff]
        %v9797 = vld [vmem:[%s352 + $0x7f0] sm:$0xff]
        %v9798 = vld [vmem:[%s352 + $0x7f8] sm:$0xff]
        %v10055 = vunpack.c.l.b16 %v9543
        %v10056 = vunpack.c.h.b16 %v9543
        %v10057 = vunpack.c.l.b16 %v9544
        %v10058 = vunpack.c.h.b16 %v9544
        %v10059 = vunpack.c.l.b16 %v9545
        %v10060 = vunpack.c.h.b16 %v9545
        %v10061 = vunpack.c.l.b16 %v9546
        %v10062 = vunpack.c.h.b16 %v9546
        %v10063 = vunpack.c.l.b16 %v9547
        %v10064 = vunpack.c.h.b16 %v9547
        %v10065 = vunpack.c.l.b16 %v9548
        %v10066 = vunpack.c.h.b16 %v9548
        %v10067 = vunpack.c.l.b16 %v9549
        %v10068 = vunpack.c.h.b16 %v9549
        %v10069 = vunpack.c.l.b16 %v9550
        %v10070 = vunpack.c.h.b16 %v9550
        %v10071 = vunpack.c.l.b16 %v9551
        %v10072 = vunpack.c.h.b16 %v9551
        %v10073 = vunpack.c.l.b16 %v9552
        %v10074 = vunpack.c.h.b16 %v9552
        %v10075 = vunpack.c.l.b16 %v9553
        %v10076 = vunpack.c.h.b16 %v9553
        %v10077 = vunpack.c.l.b16 %v9554
        %v10078 = vunpack.c.h.b16 %v9554
        %v10079 = vunpack.c.l.b16 %v9555
        %v10080 = vunpack.c.h.b16 %v9555
        %v10081 = vunpack.c.l.b16 %v9556
        %v10082 = vunpack.c.h.b16 %v9556
        %v10083 = vunpack.c.l.b16 %v9557
        %v10084 = vunpack.c.h.b16 %v9557
        %v10085 = vunpack.c.l.b16 %v9558
        %v10086 = vunpack.c.h.b16 %v9558
        %v10087 = vunpack.c.l.b16 %v9559
        %v10088 = vunpack.c.h.b16 %v9559
        %v10089 = vunpack.c.l.b16 %v9560
        %v10090 = vunpack.c.h.b16 %v9560
        %v10091 = vunpack.c.l.b16 %v9561
        %v10092 = vunpack.c.h.b16 %v9561
        %v10093 = vunpack.c.l.b16 %v9562
        %v10094 = vunpack.c.h.b16 %v9562
        %v10095 = vunpack.c.l.b16 %v9563
        %v10096 = vunpack.c.h.b16 %v9563
        %v10097 = vunpack.c.l.b16 %v9564
        %v10098 = vunpack.c.h.b16 %v9564
        %v10099 = vunpack.c.l.b16 %v9565
        %v10100 = vunpack.c.h.b16 %v9565
        %v10101 = vunpack.c.l.b16 %v9566
        %v10102 = vunpack.c.h.b16 %v9566
        %v10103 = vunpack.c.l.b16 %v9567
        %v10104 = vunpack.c.h.b16 %v9567
        %v10105 = vunpack.c.l.b16 %v9568
        %v10106 = vunpack.c.h.b16 %v9568
        %v10107 = vunpack.c.l.b16 %v9569
        %v10108 = vunpack.c.h.b16 %v9569
        %v10109 = vunpack.c.l.b16 %v9570
        %v10110 = vunpack.c.h.b16 %v9570
        %v10111 = vunpack.c.l.b16 %v9571
        %v10112 = vunpack.c.h.b16 %v9571
        %v10113 = vunpack.c.l.b16 %v9572
        %v10114 = vunpack.c.h.b16 %v9572
        %v10115 = vunpack.c.l.b16 %v9573
        %v10116 = vunpack.c.h.b16 %v9573
        %v10117 = vunpack.c.l.b16 %v9574
        %v10118 = vunpack.c.h.b16 %v9574
        %v10119 = vunpack.c.l.b16 %v9575
        %v10120 = vunpack.c.h.b16 %v9575
        %v10121 = vunpack.c.l.b16 %v9576
        %v10122 = vunpack.c.h.b16 %v9576
        %v10123 = vunpack.c.l.b16 %v9577
        %v10124 = vunpack.c.h.b16 %v9577
        %v10125 = vunpack.c.l.b16 %v9578
        %v10126 = vunpack.c.h.b16 %v9578
        %v10127 = vunpack.c.l.b16 %v9579
        %v10128 = vunpack.c.h.b16 %v9579
        %v10129 = vunpack.c.l.b16 %v9580
        %v10130 = vunpack.c.h.b16 %v9580
        %v10131 = vunpack.c.l.b16 %v9581
        %v10132 = vunpack.c.h.b16 %v9581
        %v10133 = vunpack.c.l.b16 %v9582
        %v10134 = vunpack.c.h.b16 %v9582
        %v10135 = vunpack.c.l.b16 %v9583
        %v10136 = vunpack.c.h.b16 %v9583
        %v10137 = vunpack.c.l.b16 %v9584
        %v10138 = vunpack.c.h.b16 %v9584
        %v10139 = vunpack.c.l.b16 %v9585
        %v10140 = vunpack.c.h.b16 %v9585
        %v10141 = vunpack.c.l.b16 %v9586
        %v10142 = vunpack.c.h.b16 %v9586
        %v10143 = vunpack.c.l.b16 %v9587
        %v10144 = vunpack.c.h.b16 %v9587
        %v10145 = vunpack.c.l.b16 %v9588
        %v10146 = vunpack.c.h.b16 %v9588
        %v10147 = vunpack.c.l.b16 %v9589
        %v10148 = vunpack.c.h.b16 %v9589
        %v10149 = vunpack.c.l.b16 %v9590
        %v10150 = vunpack.c.h.b16 %v9590
        %v10151 = vunpack.c.l.b16 %v9591
        %v10152 = vunpack.c.h.b16 %v9591
        %v10153 = vunpack.c.l.b16 %v9592
        %v10154 = vunpack.c.h.b16 %v9592
        %v10155 = vunpack.c.l.b16 %v9593
        %v10156 = vunpack.c.h.b16 %v9593
        %v10157 = vunpack.c.l.b16 %v9594
        %v10158 = vunpack.c.h.b16 %v9594
        %v10159 = vunpack.c.l.b16 %v9595
        %v10160 = vunpack.c.h.b16 %v9595
        %v10161 = vunpack.c.l.b16 %v9596
        %v10162 = vunpack.c.h.b16 %v9596
        %v10163 = vunpack.c.l.b16 %v9597
        %v10164 = vunpack.c.h.b16 %v9597
        %v10165 = vunpack.c.l.b16 %v9598
        %v10166 = vunpack.c.h.b16 %v9598
        %v10167 = vunpack.c.l.b16 %v9599
        %v10168 = vunpack.c.h.b16 %v9599
        %v10169 = vunpack.c.l.b16 %v9600
        %v10170 = vunpack.c.h.b16 %v9600
        %v10171 = vunpack.c.l.b16 %v9601
        %v10172 = vunpack.c.h.b16 %v9601
        %v10173 = vunpack.c.l.b16 %v9602
        %v10174 = vunpack.c.h.b16 %v9602
        %v10175 = vunpack.c.l.b16 %v9603
        %v10176 = vunpack.c.h.b16 %v9603
        %v10177 = vunpack.c.l.b16 %v9604
        %v10178 = vunpack.c.h.b16 %v9604
        %v10179 = vunpack.c.l.b16 %v9605
        %v10180 = vunpack.c.h.b16 %v9605
        %v10181 = vunpack.c.l.b16 %v9606
        %v10182 = vunpack.c.h.b16 %v9606
        %v10183 = vunpack.c.l.b16 %v9607
        %v10184 = vunpack.c.h.b16 %v9607
        %v10185 = vunpack.c.l.b16 %v9608
        %v10186 = vunpack.c.h.b16 %v9608
        %v10187 = vunpack.c.l.b16 %v9609
        %v10188 = vunpack.c.h.b16 %v9609
        %v10189 = vunpack.c.l.b16 %v9610
        %v10190 = vunpack.c.h.b16 %v9610
        %v10191 = vunpack.c.l.b16 %v9611
        %v10192 = vunpack.c.h.b16 %v9611
        %v10193 = vunpack.c.l.b16 %v9612
        %v10194 = vunpack.c.h.b16 %v9612
        %v10195 = vunpack.c.l.b16 %v9613
        %v10196 = vunpack.c.h.b16 %v9613
        %v10197 = vunpack.c.l.b16 %v9614
        %v10198 = vunpack.c.h.b16 %v9614
        %v10199 = vunpack.c.l.b16 %v9615
        %v10200 = vunpack.c.h.b16 %v9615
        %v10201 = vunpack.c.l.b16 %v9616
        %v10202 = vunpack.c.h.b16 %v9616
        %v10203 = vunpack.c.l.b16 %v9617
        %v10204 = vunpack.c.h.b16 %v9617
        %v10205 = vunpack.c.l.b16 %v9618
        %v10206 = vunpack.c.h.b16 %v9618
        %v10207 = vunpack.c.l.b16 %v9619
        %v10208 = vunpack.c.h.b16 %v9619
        %v10209 = vunpack.c.l.b16 %v9620
        %v10210 = vunpack.c.h.b16 %v9620
        %v10211 = vunpack.c.l.b16 %v9621
        %v10212 = vunpack.c.h.b16 %v9621
        %v10213 = vunpack.c.l.b16 %v9622
        %v10214 = vunpack.c.h.b16 %v9622
        %v10215 = vunpack.c.l.b16 %v9623
        %v10216 = vunpack.c.h.b16 %v9623
        %v10217 = vunpack.c.l.b16 %v9624
        %v10218 = vunpack.c.h.b16 %v9624
        %v10219 = vunpack.c.l.b16 %v9625
        %v10220 = vunpack.c.h.b16 %v9625
        %v10221 = vunpack.c.l.b16 %v9626
        %v10222 = vunpack.c.h.b16 %v9626
        %v10223 = vunpack.c.l.b16 %v9627
        %v10224 = vunpack.c.h.b16 %v9627
        %v10225 = vunpack.c.l.b16 %v9628
        %v10226 = vunpack.c.h.b16 %v9628
        %v10227 = vunpack.c.l.b16 %v9629
        %v10228 = vunpack.c.h.b16 %v9629
        %v10229 = vunpack.c.l.b16 %v9630
        %v10230 = vunpack.c.h.b16 %v9630
        %v10231 = vunpack.c.l.b16 %v9631
        %v10232 = vunpack.c.h.b16 %v9631
        %v10233 = vunpack.c.l.b16 %v9632
        %v10234 = vunpack.c.h.b16 %v9632
        %v10235 = vunpack.c.l.b16 %v9633
        %v10236 = vunpack.c.h.b16 %v9633
        %v10237 = vunpack.c.l.b16 %v9634
        %v10238 = vunpack.c.h.b16 %v9634
        %v10239 = vunpack.c.l.b16 %v9635
        %v10240 = vunpack.c.h.b16 %v9635
        %v10241 = vunpack.c.l.b16 %v9636
        %v10242 = vunpack.c.h.b16 %v9636
        %v10243 = vunpack.c.l.b16 %v9637
        %v10244 = vunpack.c.h.b16 %v9637
        %v10245 = vunpack.c.l.b16 %v9638
        %v10246 = vunpack.c.h.b16 %v9638
        %v10247 = vunpack.c.l.b16 %v9639
        %v10248 = vunpack.c.h.b16 %v9639
        %v10249 = vunpack.c.l.b16 %v9640
        %v10250 = vunpack.c.h.b16 %v9640
        %v10251 = vunpack.c.l.b16 %v9641
        %v10252 = vunpack.c.h.b16 %v9641
        %v10253 = vunpack.c.l.b16 %v9642
        %v10254 = vunpack.c.h.b16 %v9642
        %v10255 = vunpack.c.l.b16 %v9643
        %v10256 = vunpack.c.h.b16 %v9643
        %v10257 = vunpack.c.l.b16 %v9644
        %v10258 = vunpack.c.h.b16 %v9644
        %v10259 = vunpack.c.l.b16 %v9645
        %v10260 = vunpack.c.h.b16 %v9645
        %v10261 = vunpack.c.l.b16 %v9646
        %v10262 = vunpack.c.h.b16 %v9646
        %v10263 = vunpack.c.l.b16 %v9647
        %v10264 = vunpack.c.h.b16 %v9647
        %v10265 = vunpack.c.l.b16 %v9648
        %v10266 = vunpack.c.h.b16 %v9648
        %v10267 = vunpack.c.l.b16 %v9649
        %v10268 = vunpack.c.h.b16 %v9649
        %v10269 = vunpack.c.l.b16 %v9650
        %v10270 = vunpack.c.h.b16 %v9650
        %v10271 = vunpack.c.l.b16 %v9651
        %v10272 = vunpack.c.h.b16 %v9651
        %v10273 = vunpack.c.l.b16 %v9652
        %v10274 = vunpack.c.h.b16 %v9652
        %v10275 = vunpack.c.l.b16 %v9653
        %v10276 = vunpack.c.h.b16 %v9653
        %v10277 = vunpack.c.l.b16 %v9654
        %v10278 = vunpack.c.h.b16 %v9654
        %v10279 = vunpack.c.l.b16 %v9655
        %v10280 = vunpack.c.h.b16 %v9655
        %v10281 = vunpack.c.l.b16 %v9656
        %v10282 = vunpack.c.h.b16 %v9656
        %v10283 = vunpack.c.l.b16 %v9657
        %v10284 = vunpack.c.h.b16 %v9657
        %v10285 = vunpack.c.l.b16 %v9658
        %v10286 = vunpack.c.h.b16 %v9658
        %v10287 = vunpack.c.l.b16 %v9659
        %v10288 = vunpack.c.h.b16 %v9659
        %v10289 = vunpack.c.l.b16 %v9660
        %v10290 = vunpack.c.h.b16 %v9660
        %v10291 = vunpack.c.l.b16 %v9661
        %v10292 = vunpack.c.h.b16 %v9661
        %v10293 = vunpack.c.l.b16 %v9662
        %v10294 = vunpack.c.h.b16 %v9662
        %v10295 = vunpack.c.l.b16 %v9663
        %v10296 = vunpack.c.h.b16 %v9663
        %v10297 = vunpack.c.l.b16 %v9664
        %v10298 = vunpack.c.h.b16 %v9664
        %v10299 = vunpack.c.l.b16 %v9665
        %v10300 = vunpack.c.h.b16 %v9665
        %v10301 = vunpack.c.l.b16 %v9666
        %v10302 = vunpack.c.h.b16 %v9666
        %v10303 = vunpack.c.l.b16 %v9667
        %v10304 = vunpack.c.h.b16 %v9667
        %v10305 = vunpack.c.l.b16 %v9668
        %v10306 = vunpack.c.h.b16 %v9668
        %v10307 = vunpack.c.l.b16 %v9669
        %v10308 = vunpack.c.h.b16 %v9669
        %v10309 = vunpack.c.l.b16 %v9670
        %v10310 = vunpack.c.h.b16 %v9670
        %v10311 = vunpack.c.l.b16 %v9671
        %v10312 = vunpack.c.h.b16 %v9671
        %v10313 = vunpack.c.l.b16 %v9672
        %v10314 = vunpack.c.h.b16 %v9672
        %v10315 = vunpack.c.l.b16 %v9673
        %v10316 = vunpack.c.h.b16 %v9673
        %v10317 = vunpack.c.l.b16 %v9674
        %v10318 = vunpack.c.h.b16 %v9674
        %v10319 = vunpack.c.l.b16 %v9675
        %v10320 = vunpack.c.h.b16 %v9675
        %v10321 = vunpack.c.l.b16 %v9676
        %v10322 = vunpack.c.h.b16 %v9676
        %v10323 = vunpack.c.l.b16 %v9677
        %v10324 = vunpack.c.h.b16 %v9677
        %v10325 = vunpack.c.l.b16 %v9678
        %v10326 = vunpack.c.h.b16 %v9678
        %v10327 = vunpack.c.l.b16 %v9679
        %v10328 = vunpack.c.h.b16 %v9679
        %v10329 = vunpack.c.l.b16 %v9680
        %v10330 = vunpack.c.h.b16 %v9680
        %v10331 = vunpack.c.l.b16 %v9681
        %v10332 = vunpack.c.h.b16 %v9681
        %v10333 = vunpack.c.l.b16 %v9682
        %v10334 = vunpack.c.h.b16 %v9682
        %v10335 = vunpack.c.l.b16 %v9683
        %v10336 = vunpack.c.h.b16 %v9683
        %v10337 = vunpack.c.l.b16 %v9684
        %v10338 = vunpack.c.h.b16 %v9684
        %v10339 = vunpack.c.l.b16 %v9685
        %v10340 = vunpack.c.h.b16 %v9685
        %v10341 = vunpack.c.l.b16 %v9686
        %v10342 = vunpack.c.h.b16 %v9686
        %v10343 = vunpack.c.l.b16 %v9687
        %v10344 = vunpack.c.h.b16 %v9687
        %v10345 = vunpack.c.l.b16 %v9688
        %v10346 = vunpack.c.h.b16 %v9688
        %v10347 = vunpack.c.l.b16 %v9689
        %v10348 = vunpack.c.h.b16 %v9689
        %v10349 = vunpack.c.l.b16 %v9690
        %v10350 = vunpack.c.h.b16 %v9690
        %v10351 = vunpack.c.l.b16 %v9691
        %v10352 = vunpack.c.h.b16 %v9691
        %v10353 = vunpack.c.l.b16 %v9692
        %v10354 = vunpack.c.h.b16 %v9692
        %v10355 = vunpack.c.l.b16 %v9693
        %v10356 = vunpack.c.h.b16 %v9693
        %v10357 = vunpack.c.l.b16 %v9694
        %v10358 = vunpack.c.h.b16 %v9694
        %v10359 = vunpack.c.l.b16 %v9695
        %v10360 = vunpack.c.h.b16 %v9695
        %v10361 = vunpack.c.l.b16 %v9696
        %v10362 = vunpack.c.h.b16 %v9696
        %v10363 = vunpack.c.l.b16 %v9697
        %v10364 = vunpack.c.h.b16 %v9697
        %v10365 = vunpack.c.l.b16 %v9698
        %v10366 = vunpack.c.h.b16 %v9698
        %v10367 = vunpack.c.l.b16 %v9699
        %v10368 = vunpack.c.h.b16 %v9699
        %v10369 = vunpack.c.l.b16 %v9700
        %v10370 = vunpack.c.h.b16 %v9700
        %v10371 = vunpack.c.l.b16 %v9701
        %v10372 = vunpack.c.h.b16 %v9701
        %v10373 = vunpack.c.l.b16 %v9702
        %v10374 = vunpack.c.h.b16 %v9702
        %v10375 = vunpack.c.l.b16 %v9703
        %v10376 = vunpack.c.h.b16 %v9703
        %v10377 = vunpack.c.l.b16 %v9704
        %v10378 = vunpack.c.h.b16 %v9704
        %v10379 = vunpack.c.l.b16 %v9705
        %v10380 = vunpack.c.h.b16 %v9705
        %v10381 = vunpack.c.l.b16 %v9706
        %v10382 = vunpack.c.h.b16 %v9706
        %v10383 = vunpack.c.l.b16 %v9707
        %v10384 = vunpack.c.h.b16 %v9707
        %v10385 = vunpack.c.l.b16 %v9708
        %v10386 = vunpack.c.h.b16 %v9708
        %v10387 = vunpack.c.l.b16 %v9709
        %v10388 = vunpack.c.h.b16 %v9709
        %v10389 = vunpack.c.l.b16 %v9710
        %v10390 = vunpack.c.h.b16 %v9710
        %v10391 = vunpack.c.l.b16 %v9711
        %v10392 = vunpack.c.h.b16 %v9711
        %v10393 = vunpack.c.l.b16 %v9712
        %v10394 = vunpack.c.h.b16 %v9712
        %v10395 = vunpack.c.l.b16 %v9713
        %v10396 = vunpack.c.h.b16 %v9713
        %v10397 = vunpack.c.l.b16 %v9714
        %v10398 = vunpack.c.h.b16 %v9714
        %v10399 = vunpack.c.l.b16 %v9715
        %v10400 = vunpack.c.h.b16 %v9715
        %v10401 = vunpack.c.l.b16 %v9716
        %v10402 = vunpack.c.h.b16 %v9716
        %v10403 = vunpack.c.l.b16 %v9717
        %v10404 = vunpack.c.h.b16 %v9717
        %v10405 = vunpack.c.l.b16 %v9718
        %v10406 = vunpack.c.h.b16 %v9718
        %v10407 = vunpack.c.l.b16 %v9719
        %v10408 = vunpack.c.h.b16 %v9719
        %v10409 = vunpack.c.l.b16 %v9720
        %v10410 = vunpack.c.h.b16 %v9720
        %v10411 = vunpack.c.l.b16 %v9721
        %v10412 = vunpack.c.h.b16 %v9721
        %v10413 = vunpack.c.l.b16 %v9722
        %v10414 = vunpack.c.h.b16 %v9722
        %v10415 = vunpack.c.l.b16 %v9723
        %v10416 = vunpack.c.h.b16 %v9723
        %v10417 = vunpack.c.l.b16 %v9724
        %v10418 = vunpack.c.h.b16 %v9724
        %v10419 = vunpack.c.l.b16 %v9725
        %v10420 = vunpack.c.h.b16 %v9725
        %v10421 = vunpack.c.l.b16 %v9726
        %v10422 = vunpack.c.h.b16 %v9726
        %v10423 = vunpack.c.l.b16 %v9727
        %v10424 = vunpack.c.h.b16 %v9727
        %v10425 = vunpack.c.l.b16 %v9728
        %v10426 = vunpack.c.h.b16 %v9728
        %v10427 = vunpack.c.l.b16 %v9729
        %v10428 = vunpack.c.h.b16 %v9729
        %v10429 = vunpack.c.l.b16 %v9730
        %v10430 = vunpack.c.h.b16 %v9730
        %v10431 = vunpack.c.l.b16 %v9731
        %v10432 = vunpack.c.h.b16 %v9731
        %v10433 = vunpack.c.l.b16 %v9732
        %v10434 = vunpack.c.h.b16 %v9732
        %v10435 = vunpack.c.l.b16 %v9733
        %v10436 = vunpack.c.h.b16 %v9733
        %v10437 = vunpack.c.l.b16 %v9734
        %v10438 = vunpack.c.h.b16 %v9734
        %v10439 = vunpack.c.l.b16 %v9735
        %v10440 = vunpack.c.h.b16 %v9735
        %v10441 = vunpack.c.l.b16 %v9736
        %v10442 = vunpack.c.h.b16 %v9736
        %v10443 = vunpack.c.l.b16 %v9737
        %v10444 = vunpack.c.h.b16 %v9737
        %v10445 = vunpack.c.l.b16 %v9738
        %v10446 = vunpack.c.h.b16 %v9738
        %v10447 = vunpack.c.l.b16 %v9739
        %v10448 = vunpack.c.h.b16 %v9739
        %v10449 = vunpack.c.l.b16 %v9740
        %v10450 = vunpack.c.h.b16 %v9740
        %v10451 = vunpack.c.l.b16 %v9741
        %v10452 = vunpack.c.h.b16 %v9741
        %v10453 = vunpack.c.l.b16 %v9742
        %v10454 = vunpack.c.h.b16 %v9742
        %v10455 = vunpack.c.l.b16 %v9743
        %v10456 = vunpack.c.h.b16 %v9743
        %v10457 = vunpack.c.l.b16 %v9744
        %v10458 = vunpack.c.h.b16 %v9744
        %v10459 = vunpack.c.l.b16 %v9745
        %v10460 = vunpack.c.h.b16 %v9745
        %v10461 = vunpack.c.l.b16 %v9746
        %v10462 = vunpack.c.h.b16 %v9746
        %v10463 = vunpack.c.l.b16 %v9747
        %v10464 = vunpack.c.h.b16 %v9747
        %v10465 = vunpack.c.l.b16 %v9748
        %v10466 = vunpack.c.h.b16 %v9748
        %v10467 = vunpack.c.l.b16 %v9749
        %v10468 = vunpack.c.h.b16 %v9749
        %v10469 = vunpack.c.l.b16 %v9750
        %v10470 = vunpack.c.h.b16 %v9750
        %v10471 = vunpack.c.l.b16 %v9751
        %v10472 = vunpack.c.h.b16 %v9751
        %v10473 = vunpack.c.l.b16 %v9752
        %v10474 = vunpack.c.h.b16 %v9752
        %v10475 = vunpack.c.l.b16 %v9753
        %v10476 = vunpack.c.h.b16 %v9753
        %v10477 = vunpack.c.l.b16 %v9754
        %v10478 = vunpack.c.h.b16 %v9754
        %v10479 = vunpack.c.l.b16 %v9755
        %v10480 = vunpack.c.h.b16 %v9755
        %v10481 = vunpack.c.l.b16 %v9756
        %v10482 = vunpack.c.h.b16 %v9756
        %v10483 = vunpack.c.l.b16 %v9757
        %v10484 = vunpack.c.h.b16 %v9757
        %v10485 = vunpack.c.l.b16 %v9758
        %v10486 = vunpack.c.h.b16 %v9758
        %v10487 = vunpack.c.l.b16 %v9759
        %v10488 = vunpack.c.h.b16 %v9759
        %v10489 = vunpack.c.l.b16 %v9760
        %v10490 = vunpack.c.h.b16 %v9760
        %v10491 = vunpack.c.l.b16 %v9761
        %v10492 = vunpack.c.h.b16 %v9761
        %v10493 = vunpack.c.l.b16 %v9762
        %v10494 = vunpack.c.h.b16 %v9762
        %v10495 = vunpack.c.l.b16 %v9763
        %v10496 = vunpack.c.h.b16 %v9763
        %v10497 = vunpack.c.l.b16 %v9764
        %v10498 = vunpack.c.h.b16 %v9764
        %v10499 = vunpack.c.l.b16 %v9765
        %v10500 = vunpack.c.h.b16 %v9765
        %v10501 = vunpack.c.l.b16 %v9766
        %v10502 = vunpack.c.h.b16 %v9766
        %v10503 = vunpack.c.l.b16 %v9767
        %v10504 = vunpack.c.h.b16 %v9767
        %v10505 = vunpack.c.l.b16 %v9768
        %v10506 = vunpack.c.h.b16 %v9768
        %v10507 = vunpack.c.l.b16 %v9769
        %v10508 = vunpack.c.h.b16 %v9769
        %v10509 = vunpack.c.l.b16 %v9770
        %v10510 = vunpack.c.h.b16 %v9770
        %v10511 = vunpack.c.l.b16 %v9771
        %v10512 = vunpack.c.h.b16 %v9771
        %v10513 = vunpack.c.l.b16 %v9772
        %v10514 = vunpack.c.h.b16 %v9772
        %v10515 = vunpack.c.l.b16 %v9773
        %v10516 = vunpack.c.h.b16 %v9773
        %v10517 = vunpack.c.l.b16 %v9774
        %v10518 = vunpack.c.h.b16 %v9774
        %v10519 = vunpack.c.l.b16 %v9775
        %v10520 = vunpack.c.h.b16 %v9775
        %v10521 = vunpack.c.l.b16 %v9776
        %v10522 = vunpack.c.h.b16 %v9776
        %v10523 = vunpack.c.l.b16 %v9777
        %v10524 = vunpack.c.h.b16 %v9777
        %v10525 = vunpack.c.l.b16 %v9778
        %v10526 = vunpack.c.h.b16 %v9778
        %v10527 = vunpack.c.l.b16 %v9779
        %v10528 = vunpack.c.h.b16 %v9779
        %v10529 = vunpack.c.l.b16 %v9780
        %v10530 = vunpack.c.h.b16 %v9780
        %v10531 = vunpack.c.l.b16 %v9781
        %v10532 = vunpack.c.h.b16 %v9781
        %v10533 = vunpack.c.l.b16 %v9782
        %v10534 = vunpack.c.h.b16 %v9782
        %v10535 = vunpack.c.l.b16 %v9783
        %v10536 = vunpack.c.h.b16 %v9783
        %v10537 = vunpack.c.l.b16 %v9784
        %v10538 = vunpack.c.h.b16 %v9784
        %v10539 = vunpack.c.l.b16 %v9785
        %v10540 = vunpack.c.h.b16 %v9785
        %v10541 = vunpack.c.l.b16 %v9786
        %v10542 = vunpack.c.h.b16 %v9786
        %v10543 = vunpack.c.l.b16 %v9787
        %v10544 = vunpack.c.h.b16 %v9787
        %v10545 = vunpack.c.l.b16 %v9788
        %v10546 = vunpack.c.h.b16 %v9788
        %v10547 = vunpack.c.l.b16 %v9789
        %v10548 = vunpack.c.h.b16 %v9789
        %v10549 = vunpack.c.l.b16 %v9790
        %v10550 = vunpack.c.h.b16 %v9790
        %v10551 = vunpack.c.l.b16 %v9791
        %v10552 = vunpack.c.h.b16 %v9791
        %v10553 = vunpack.c.l.b16 %v9792
        %v10554 = vunpack.c.h.b16 %v9792
        %v10555 = vunpack.c.l.b16 %v9793
        %v10556 = vunpack.c.h.b16 %v9793
        %v10557 = vunpack.c.l.b16 %v9794
        %v10558 = vunpack.c.h.b16 %v9794
        %v10559 = vunpack.c.l.b16 %v9795
        %v10560 = vunpack.c.h.b16 %v9795
        %v10561 = vunpack.c.l.b16 %v9796
        %v10562 = vunpack.c.h.b16 %v9796
        %v10563 = vunpack.c.l.b16 %v9797
        %v10564 = vunpack.c.h.b16 %v9797
        %v10565 = vunpack.c.l.b16 %v9798
        %v10566 = vunpack.c.h.b16 %v9798
        %v10567 = vpack.c.b16 %v10057, %v10055
        %v10568 = vpack.c.b16 %v10058, %v10056
        %v10569 = vpack.c.b16 %v10061, %v10059
        %v10570 = vpack.c.b16 %v10062, %v10060
        %v10571 = vpack.c.b16 %v10065, %v10063
        %v10572 = vpack.c.b16 %v10066, %v10064
        %v10573 = vpack.c.b16 %v10069, %v10067
        %v10574 = vpack.c.b16 %v10070, %v10068
        %v10575 = vpack.c.b16 %v10073, %v10071
        %v10576 = vpack.c.b16 %v10074, %v10072
        %v10577 = vpack.c.b16 %v10077, %v10075
        %v10578 = vpack.c.b16 %v10078, %v10076
        %v10579 = vpack.c.b16 %v10081, %v10079
        %v10580 = vpack.c.b16 %v10082, %v10080
        %v10581 = vpack.c.b16 %v10085, %v10083
        %v10582 = vpack.c.b16 %v10086, %v10084
        %v10583 = vpack.c.b16 %v10089, %v10087
        %v10584 = vpack.c.b16 %v10090, %v10088
        %v10585 = vpack.c.b16 %v10093, %v10091
        %v10586 = vpack.c.b16 %v10094, %v10092
        %v10587 = vpack.c.b16 %v10097, %v10095
        %v10588 = vpack.c.b16 %v10098, %v10096
        %v10589 = vpack.c.b16 %v10101, %v10099
        %v10590 = vpack.c.b16 %v10102, %v10100
        %v10591 = vpack.c.b16 %v10105, %v10103
        %v10592 = vpack.c.b16 %v10106, %v10104
        %v10593 = vpack.c.b16 %v10109, %v10107
        %v10594 = vpack.c.b16 %v10110, %v10108
        %v10595 = vpack.c.b16 %v10113, %v10111
        %v10596 = vpack.c.b16 %v10114, %v10112
        %v10597 = vpack.c.b16 %v10117, %v10115
        %v10598 = vpack.c.b16 %v10118, %v10116
        %v10599 = vpack.c.b16 %v10121, %v10119
        %v10600 = vpack.c.b16 %v10122, %v10120
        %v10601 = vpack.c.b16 %v10125, %v10123
        %v10602 = vpack.c.b16 %v10126, %v10124
        %v10603 = vpack.c.b16 %v10129, %v10127
        %v10604 = vpack.c.b16 %v10130, %v10128
        %v10605 = vpack.c.b16 %v10133, %v10131
        %v10606 = vpack.c.b16 %v10134, %v10132
        %v10607 = vpack.c.b16 %v10137, %v10135
        %v10608 = vpack.c.b16 %v10138, %v10136
        %v10609 = vpack.c.b16 %v10141, %v10139
        %v10610 = vpack.c.b16 %v10142, %v10140
        %v10611 = vpack.c.b16 %v10145, %v10143
        %v10612 = vpack.c.b16 %v10146, %v10144
        %v10613 = vpack.c.b16 %v10149, %v10147
        %v10614 = vpack.c.b16 %v10150, %v10148
        %v10615 = vpack.c.b16 %v10153, %v10151
        %v10616 = vpack.c.b16 %v10154, %v10152
        %v10617 = vpack.c.b16 %v10157, %v10155
        %v10618 = vpack.c.b16 %v10158, %v10156
        %v10619 = vpack.c.b16 %v10161, %v10159
        %v10620 = vpack.c.b16 %v10162, %v10160
        %v10621 = vpack.c.b16 %v10165, %v10163
        %v10622 = vpack.c.b16 %v10166, %v10164
        %v10623 = vpack.c.b16 %v10169, %v10167
        %v10624 = vpack.c.b16 %v10170, %v10168
        %v10625 = vpack.c.b16 %v10173, %v10171
        %v10626 = vpack.c.b16 %v10174, %v10172
        %v10627 = vpack.c.b16 %v10177, %v10175
        %v10628 = vpack.c.b16 %v10178, %v10176
        %v10629 = vpack.c.b16 %v10181, %v10179
        %v10630 = vpack.c.b16 %v10182, %v10180
        %v10631 = vpack.c.b16 %v10185, %v10183
        %v10632 = vpack.c.b16 %v10186, %v10184
        %v10633 = vpack.c.b16 %v10189, %v10187
        %v10634 = vpack.c.b16 %v10190, %v10188
        %v10635 = vpack.c.b16 %v10193, %v10191
        %v10636 = vpack.c.b16 %v10194, %v10192
        %v10637 = vpack.c.b16 %v10197, %v10195
        %v10638 = vpack.c.b16 %v10198, %v10196
        %v10639 = vpack.c.b16 %v10201, %v10199
        %v10640 = vpack.c.b16 %v10202, %v10200
        %v10641 = vpack.c.b16 %v10205, %v10203
        %v10642 = vpack.c.b16 %v10206, %v10204
        %v10643 = vpack.c.b16 %v10209, %v10207
        %v10644 = vpack.c.b16 %v10210, %v10208
        %v10645 = vpack.c.b16 %v10213, %v10211
        %v10646 = vpack.c.b16 %v10214, %v10212
        %v10647 = vpack.c.b16 %v10217, %v10215
        %v10648 = vpack.c.b16 %v10218, %v10216
        %v10649 = vpack.c.b16 %v10221, %v10219
        %v10650 = vpack.c.b16 %v10222, %v10220
        %v10651 = vpack.c.b16 %v10225, %v10223
        %v10652 = vpack.c.b16 %v10226, %v10224
        %v10653 = vpack.c.b16 %v10229, %v10227
        %v10654 = vpack.c.b16 %v10230, %v10228
        %v10655 = vpack.c.b16 %v10233, %v10231
        %v10656 = vpack.c.b16 %v10234, %v10232
        %v10657 = vpack.c.b16 %v10237, %v10235
        %v10658 = vpack.c.b16 %v10238, %v10236
        %v10659 = vpack.c.b16 %v10241, %v10239
        %v10660 = vpack.c.b16 %v10242, %v10240
        %v10661 = vpack.c.b16 %v10245, %v10243
        %v10662 = vpack.c.b16 %v10246, %v10244
        %v10663 = vpack.c.b16 %v10249, %v10247
        %v10664 = vpack.c.b16 %v10250, %v10248
        %v10665 = vpack.c.b16 %v10253, %v10251
        %v10666 = vpack.c.b16 %v10254, %v10252
        %v10667 = vpack.c.b16 %v10257, %v10255
        %v10668 = vpack.c.b16 %v10258, %v10256
        %v10669 = vpack.c.b16 %v10261, %v10259
        %v10670 = vpack.c.b16 %v10262, %v10260
        %v10671 = vpack.c.b16 %v10265, %v10263
        %v10672 = vpack.c.b16 %v10266, %v10264
        %v10673 = vpack.c.b16 %v10269, %v10267
        %v10674 = vpack.c.b16 %v10270, %v10268
        %v10675 = vpack.c.b16 %v10273, %v10271
        %v10676 = vpack.c.b16 %v10274, %v10272
        %v10677 = vpack.c.b16 %v10277, %v10275
        %v10678 = vpack.c.b16 %v10278, %v10276
        %v10679 = vpack.c.b16 %v10281, %v10279
        %v10680 = vpack.c.b16 %v10282, %v10280
        %v10681 = vpack.c.b16 %v10285, %v10283
        %v10682 = vpack.c.b16 %v10286, %v10284
        %v10683 = vpack.c.b16 %v10289, %v10287
        %v10684 = vpack.c.b16 %v10290, %v10288
        %v10685 = vpack.c.b16 %v10293, %v10291
        %v10686 = vpack.c.b16 %v10294, %v10292
        %v10687 = vpack.c.b16 %v10297, %v10295
        %v10688 = vpack.c.b16 %v10298, %v10296
        %v10689 = vpack.c.b16 %v10301, %v10299
        %v10690 = vpack.c.b16 %v10302, %v10300
        %v10691 = vpack.c.b16 %v10305, %v10303
        %v10692 = vpack.c.b16 %v10306, %v10304
        %v10693 = vpack.c.b16 %v10309, %v10307
        %v10694 = vpack.c.b16 %v10310, %v10308
        %v10695 = vpack.c.b16 %v10313, %v10311
        %v10696 = vpack.c.b16 %v10314, %v10312
        %v10697 = vpack.c.b16 %v10317, %v10315
        %v10698 = vpack.c.b16 %v10318, %v10316
        %v10699 = vpack.c.b16 %v10321, %v10319
        %v10700 = vpack.c.b16 %v10322, %v10320
        %v10701 = vpack.c.b16 %v10325, %v10323
        %v10702 = vpack.c.b16 %v10326, %v10324
        %v10703 = vpack.c.b16 %v10329, %v10327
        %v10704 = vpack.c.b16 %v10330, %v10328
        %v10705 = vpack.c.b16 %v10333, %v10331
        %v10706 = vpack.c.b16 %v10334, %v10332
        %v10707 = vpack.c.b16 %v10337, %v10335
        %v10708 = vpack.c.b16 %v10338, %v10336
        %v10709 = vpack.c.b16 %v10341, %v10339
        %v10710 = vpack.c.b16 %v10342, %v10340
        %v10711 = vpack.c.b16 %v10345, %v10343
        %v10712 = vpack.c.b16 %v10346, %v10344
        %v10713 = vpack.c.b16 %v10349, %v10347
        %v10714 = vpack.c.b16 %v10350, %v10348
        %v10715 = vpack.c.b16 %v10353, %v10351
        %v10716 = vpack.c.b16 %v10354, %v10352
        %v10717 = vpack.c.b16 %v10357, %v10355
        %v10718 = vpack.c.b16 %v10358, %v10356
        %v10719 = vpack.c.b16 %v10361, %v10359
        %v10720 = vpack.c.b16 %v10362, %v10360
        %v10721 = vpack.c.b16 %v10365, %v10363
        %v10722 = vpack.c.b16 %v10366, %v10364
        %v10723 = vpack.c.b16 %v10369, %v10367
        %v10724 = vpack.c.b16 %v10370, %v10368
        %v10725 = vpack.c.b16 %v10373, %v10371
        %v10726 = vpack.c.b16 %v10374, %v10372
        %v10727 = vpack.c.b16 %v10377, %v10375
        %v10728 = vpack.c.b16 %v10378, %v10376
        %v10729 = vpack.c.b16 %v10381, %v10379
        %v10730 = vpack.c.b16 %v10382, %v10380
        %v10731 = vpack.c.b16 %v10385, %v10383
        %v10732 = vpack.c.b16 %v10386, %v10384
        %v10733 = vpack.c.b16 %v10389, %v10387
        %v10734 = vpack.c.b16 %v10390, %v10388
        %v10735 = vpack.c.b16 %v10393, %v10391
        %v10736 = vpack.c.b16 %v10394, %v10392
        %v10737 = vpack.c.b16 %v10397, %v10395
        %v10738 = vpack.c.b16 %v10398, %v10396
        %v10739 = vpack.c.b16 %v10401, %v10399
        %v10740 = vpack.c.b16 %v10402, %v10400
        %v10741 = vpack.c.b16 %v10405, %v10403
        %v10742 = vpack.c.b16 %v10406, %v10404
        %v10743 = vpack.c.b16 %v10409, %v10407
        %v10744 = vpack.c.b16 %v10410, %v10408
        %v10745 = vpack.c.b16 %v10413, %v10411
        %v10746 = vpack.c.b16 %v10414, %v10412
        %v10747 = vpack.c.b16 %v10417, %v10415
        %v10748 = vpack.c.b16 %v10418, %v10416
        %v10749 = vpack.c.b16 %v10421, %v10419
        %v10750 = vpack.c.b16 %v10422, %v10420
        %v10751 = vpack.c.b16 %v10425, %v10423
        %v10752 = vpack.c.b16 %v10426, %v10424
        %v10753 = vpack.c.b16 %v10429, %v10427
        %v10754 = vpack.c.b16 %v10430, %v10428
        %v10755 = vpack.c.b16 %v10433, %v10431
        %v10756 = vpack.c.b16 %v10434, %v10432
        %v10757 = vpack.c.b16 %v10437, %v10435
        %v10758 = vpack.c.b16 %v10438, %v10436
        %v10759 = vpack.c.b16 %v10441, %v10439
        %v10760 = vpack.c.b16 %v10442, %v10440
        %v10761 = vpack.c.b16 %v10445, %v10443
        %v10762 = vpack.c.b16 %v10446, %v10444
        %v10763 = vpack.c.b16 %v10449, %v10447
        %v10764 = vpack.c.b16 %v10450, %v10448
        %v10765 = vpack.c.b16 %v10453, %v10451
        %v10766 = vpack.c.b16 %v10454, %v10452
        %v10767 = vpack.c.b16 %v10457, %v10455
        %v10768 = vpack.c.b16 %v10458, %v10456
        %v10769 = vpack.c.b16 %v10461, %v10459
        %v10770 = vpack.c.b16 %v10462, %v10460
        %v10771 = vpack.c.b16 %v10465, %v10463
        %v10772 = vpack.c.b16 %v10466, %v10464
        %v10773 = vpack.c.b16 %v10469, %v10467
        %v10774 = vpack.c.b16 %v10470, %v10468
        %v10775 = vpack.c.b16 %v10473, %v10471
        %v10776 = vpack.c.b16 %v10474, %v10472
        %v10777 = vpack.c.b16 %v10477, %v10475
        %v10778 = vpack.c.b16 %v10478, %v10476
        %v10779 = vpack.c.b16 %v10481, %v10479
        %v10780 = vpack.c.b16 %v10482, %v10480
        %v10781 = vpack.c.b16 %v10485, %v10483
        %v10782 = vpack.c.b16 %v10486, %v10484
        %v10783 = vpack.c.b16 %v10489, %v10487
        %v10784 = vpack.c.b16 %v10490, %v10488
        %v10785 = vpack.c.b16 %v10493, %v10491
        %v10786 = vpack.c.b16 %v10494, %v10492
        %v10787 = vpack.c.b16 %v10497, %v10495
        %v10788 = vpack.c.b16 %v10498, %v10496
        %v10789 = vpack.c.b16 %v10501, %v10499
        %v10790 = vpack.c.b16 %v10502, %v10500
        %v10791 = vpack.c.b16 %v10505, %v10503
        %v10792 = vpack.c.b16 %v10506, %v10504
        %v10793 = vpack.c.b16 %v10509, %v10507
        %v10794 = vpack.c.b16 %v10510, %v10508
        %v10795 = vpack.c.b16 %v10513, %v10511
        %v10796 = vpack.c.b16 %v10514, %v10512
        %v10797 = vpack.c.b16 %v10517, %v10515
        %v10798 = vpack.c.b16 %v10518, %v10516
        %v10799 = vpack.c.b16 %v10521, %v10519
        %v10800 = vpack.c.b16 %v10522, %v10520
        %v10801 = vpack.c.b16 %v10525, %v10523
        %v10802 = vpack.c.b16 %v10526, %v10524
        %v10803 = vpack.c.b16 %v10529, %v10527
        %v10804 = vpack.c.b16 %v10530, %v10528
        %v10805 = vpack.c.b16 %v10533, %v10531
        %v10806 = vpack.c.b16 %v10534, %v10532
        %v10807 = vpack.c.b16 %v10537, %v10535
        %v10808 = vpack.c.b16 %v10538, %v10536
        %v10809 = vpack.c.b16 %v10541, %v10539
        %v10810 = vpack.c.b16 %v10542, %v10540
        %v10811 = vpack.c.b16 %v10545, %v10543
        %v10812 = vpack.c.b16 %v10546, %v10544
        %v10813 = vpack.c.b16 %v10549, %v10547
        %v10814 = vpack.c.b16 %v10550, %v10548
        %v10815 = vpack.c.b16 %v10553, %v10551
        %v10816 = vpack.c.b16 %v10554, %v10552
        %v10817 = vpack.c.b16 %v10557, %v10555
        %v10818 = vpack.c.b16 %v10558, %v10556
        %v10819 = vpack.c.b16 %v10561, %v10559
        %v10820 = vpack.c.b16 %v10562, %v10560
        %v10821 = vpack.c.b16 %v10565, %v10563
        %v10822 = vpack.c.b16 %v10566, %v10564
        %11079 = vmatprep.subr.bf16.mxu0 %v10582
        %11080 = vmatpush1.bf16.msra.mxu0 %v10581
        %11081 = vmatprep.subr.bf16.mxu0 %v10580
        %11082 = vmatpush1.bf16.msra.mxu0 %v10579
        %11083 = vmatprep.subr.bf16.mxu0 %v10578
        %11084 = vmatpush1.bf16.msra.mxu0 %v10577
        %11085 = vmatprep.subr.bf16.mxu0 %v10576
        %11086 = vmatpush1.bf16.msra.mxu0 %v10575
        %11087 = vmatprep.subr.bf16.mxu0 %v10574
        %11088 = vmatpush1.bf16.msra.mxu0 %v10573
        %11089 = vmatprep.subr.bf16.mxu0 %v10572
        %11090 = vmatpush1.bf16.msra.mxu0 %v10571
        %11091 = vmatprep.subr.bf16.mxu0 %v10570
        %11092 = vmatpush1.bf16.msra.mxu0 %v10569
        %11093 = vmatprep.subr.bf16.mxu0 %v10568
        %11094 = vmatpush1.bf16.msra.mxu0 %v10567
        %11095 = vmatprep.subr.bf16.mxu0 %v10598
        %11096 = vmatpush2.bf16.msra.mxu0 %v10597
        %11097 = vmatprep.subr.bf16.mxu0 %v10596
        %11098 = vmatpush2.bf16.msra.mxu0 %v10595
        %11099 = vmatprep.subr.bf16.mxu0 %v10594
        %11100 = vmatpush2.bf16.msra.mxu0 %v10593
        %11101 = vmatprep.subr.bf16.mxu0 %v10592
        %11102 = vmatpush2.bf16.msra.mxu0 %v10591
        %11103 = vmatprep.subr.bf16.mxu0 %v10590
        %11104 = vmatpush2.bf16.msra.mxu0 %v10589
        %11105 = vmatprep.subr.bf16.mxu0 %v10588
        %11106 = vmatpush2.bf16.msra.mxu0 %v10587
        %11107 = vmatprep.subr.bf16.mxu0 %v10586
        %11108 = vmatpush2.bf16.msra.mxu0 %v10585
        %11109 = vmatprep.subr.bf16.mxu0 %v10584
        %11110 = vmatpush2.bf16.msra.mxu0 %v10583
        %11111 = vmatprep.mubr.bf16.mxu0 %v9528
        %11112 = vmatmul.mubr.bf16.gmra.mxu0 %v9527
        %v11113 = vpop.f32.mrf.mxu0
        %v11114 = vadd.f32 0.0, %v11113
        %v11115 = vpop.f32.mrf.mxu0
        %v11116 = vadd.f32 0.0, %v11115
        %v11117 = vpop.f32.mrf.mxu0
        %v11118 = vadd.f32 0.0, %v11117
        %v11119 = vpop.f32.mrf.mxu0
        %v11120 = vadd.f32 0.0, %v11119
        %11121 = vdwg.mxu0
        %11122 = vmatprep.subr.bf16.mxu0 %v10614
        %11123 = vmatpush1.bf16.msra.mxu0 %v10613
        %11124 = vmatprep.subr.bf16.mxu0 %v10612
        %11125 = vmatpush1.bf16.msra.mxu0 %v10611
        %11126 = vmatprep.subr.bf16.mxu0 %v10610
        %11127 = vmatpush1.bf16.msra.mxu0 %v10609
        %11128 = vmatprep.subr.bf16.mxu0 %v10608
        %11129 = vmatpush1.bf16.msra.mxu0 %v10607
        %11130 = vmatprep.subr.bf16.mxu0 %v10606
        %11131 = vmatpush1.bf16.msra.mxu0 %v10605
        %11132 = vmatprep.subr.bf16.mxu0 %v10604
        %11133 = vmatpush1.bf16.msra.mxu0 %v10603
        %11134 = vmatprep.subr.bf16.mxu0 %v10602
        %11135 = vmatpush1.bf16.msra.mxu0 %v10601
        %11136 = vmatprep.subr.bf16.mxu0 %v10600
        %11137 = vmatpush1.bf16.msra.mxu0 %v10599
        %11138 = vmatprep.subr.bf16.mxu0 %v10630
        %11139 = vmatpush2.bf16.msra.mxu0 %v10629
        %11140 = vmatprep.subr.bf16.mxu0 %v10628
        %11141 = vmatpush2.bf16.msra.mxu0 %v10627
        %11142 = vmatprep.subr.bf16.mxu0 %v10626
        %11143 = vmatpush2.bf16.msra.mxu0 %v10625
        %11144 = vmatprep.subr.bf16.mxu0 %v10624
        %11145 = vmatpush2.bf16.msra.mxu0 %v10623
        %11146 = vmatprep.subr.bf16.mxu0 %v10622
        %11147 = vmatpush2.bf16.msra.mxu0 %v10621
        %11148 = vmatprep.subr.bf16.mxu0 %v10620
        %11149 = vmatpush2.bf16.msra.mxu0 %v10619
        %11150 = vmatprep.subr.bf16.mxu0 %v10618
        %11151 = vmatpush2.bf16.msra.mxu0 %v10617
        %11152 = vmatprep.subr.bf16.mxu0 %v10616
        %11153 = vmatpush2.bf16.msra.mxu0 %v10615
        %11154 = vmatprep.mubr.bf16.mxu0 %v9530
        %11155 = vmatmul.mubr.bf16.gmra.mxu0 %v9529
        %v11156 = vpop.f32.mrf.mxu0
        %v11157 = vadd.f32 %v11114, %v11156
        %v11158 = vpop.f32.mrf.mxu0
        %v11159 = vadd.f32 %v11116, %v11158
        %v11160 = vpop.f32.mrf.mxu0
        %v11161 = vadd.f32 %v11118, %v11160
        %v11162 = vpop.f32.mrf.mxu0
        %v11163 = vadd.f32 %v11120, %v11162
        %11164 = vdwg.mxu0
        %11165 = vmatprep.subr.bf16.mxu0 %v10646
        %11166 = vmatpush1.bf16.msra.mxu0 %v10645
        %11167 = vmatprep.subr.bf16.mxu0 %v10644
        %11168 = vmatpush1.bf16.msra.mxu0 %v10643
        %11169 = vmatprep.subr.bf16.mxu0 %v10642
        %11170 = vmatpush1.bf16.msra.mxu0 %v10641
        %11171 = vmatprep.subr.bf16.mxu0 %v10640
        %11172 = vmatpush1.bf16.msra.mxu0 %v10639
        %11173 = vmatprep.subr.bf16.mxu0 %v10638
        %11174 = vmatpush1.bf16.msra.mxu0 %v10637
        %11175 = vmatprep.subr.bf16.mxu0 %v10636
        %11176 = vmatpush1.bf16.msra.mxu0 %v10635
        %11177 = vmatprep.subr.bf16.mxu0 %v10634
        %11178 = vmatpush1.bf16.msra.mxu0 %v10633
        %11179 = vmatprep.subr.bf16.mxu0 %v10632
        %11180 = vmatpush1.bf16.msra.mxu0 %v10631
        %11181 = vmatprep.subr.bf16.mxu0 %v10662
        %11182 = vmatpush2.bf16.msra.mxu0 %v10661
        %11183 = vmatprep.subr.bf16.mxu0 %v10660
        %11184 = vmatpush2.bf16.msra.mxu0 %v10659
        %11185 = vmatprep.subr.bf16.mxu0 %v10658
        %11186 = vmatpush2.bf16.msra.mxu0 %v10657
        %11187 = vmatprep.subr.bf16.mxu0 %v10656
        %11188 = vmatpush2.bf16.msra.mxu0 %v10655
        %11189 = vmatprep.subr.bf16.mxu0 %v10654
        %11190 = vmatpush2.bf16.msra.mxu0 %v10653
        %11191 = vmatprep.subr.bf16.mxu0 %v10652
        %11192 = vmatpush2.bf16.msra.mxu0 %v10651
        %11193 = vmatprep.subr.bf16.mxu0 %v10650
        %11194 = vmatpush2.bf16.msra.mxu0 %v10649
        %11195 = vmatprep.subr.bf16.mxu0 %v10648
        %11196 = vmatpush2.bf16.msra.mxu0 %v10647
        %11197 = vmatprep.mubr.bf16.mxu0 %v9532
        %11198 = vmatmul.mubr.bf16.gmra.mxu0 %v9531
        %v11199 = vpop.f32.mrf.mxu0
        %v11200 = vadd.f32 %v11157, %v11199
        %v11201 = vpop.f32.mrf.mxu0
        %v11202 = vadd.f32 %v11159, %v11201
        %v11203 = vpop.f32.mrf.mxu0
        %v11204 = vadd.f32 %v11161, %v11203
        %v11205 = vpop.f32.mrf.mxu0
        %v11206 = vadd.f32 %v11163, %v11205
        %11207 = vdwg.mxu0
        %11208 = vmatprep.subr.bf16.mxu0 %v10678
        %11209 = vmatpush1.bf16.msra.mxu0 %v10677
        %11210 = vmatprep.subr.bf16.mxu0 %v10676
        %11211 = vmatpush1.bf16.msra.mxu0 %v10675
        %11212 = vmatprep.subr.bf16.mxu0 %v10674
        %11213 = vmatpush1.bf16.msra.mxu0 %v10673
        %11214 = vmatprep.subr.bf16.mxu0 %v10672
        %11215 = vmatpush1.bf16.msra.mxu0 %v10671
        %11216 = vmatprep.subr.bf16.mxu0 %v10670
        %11217 = vmatpush1.bf16.msra.mxu0 %v10669
        %11218 = vmatprep.subr.bf16.mxu0 %v10668
        %11219 = vmatpush1.bf16.msra.mxu0 %v10667
        %11220 = vmatprep.subr.bf16.mxu0 %v10666
        %11221 = vmatpush1.bf16.msra.mxu0 %v10665
        %11222 = vmatprep.subr.bf16.mxu0 %v10664
        %11223 = vmatpush1.bf16.msra.mxu0 %v10663
        %11224 = vmatprep.subr.bf16.mxu0 %v10694
        %11225 = vmatpush2.bf16.msra.mxu0 %v10693
        %11226 = vmatprep.subr.bf16.mxu0 %v10692
        %11227 = vmatpush2.bf16.msra.mxu0 %v10691
        %11228 = vmatprep.subr.bf16.mxu0 %v10690
        %11229 = vmatpush2.bf16.msra.mxu0 %v10689
        %11230 = vmatprep.subr.bf16.mxu0 %v10688
        %11231 = vmatpush2.bf16.msra.mxu0 %v10687
        %11232 = vmatprep.subr.bf16.mxu0 %v10686
        %11233 = vmatpush2.bf16.msra.mxu0 %v10685
        %11234 = vmatprep.subr.bf16.mxu0 %v10684
        %11235 = vmatpush2.bf16.msra.mxu0 %v10683
        %11236 = vmatprep.subr.bf16.mxu0 %v10682
        %11237 = vmatpush2.bf16.msra.mxu0 %v10681
        %11238 = vmatprep.subr.bf16.mxu0 %v10680
        %11239 = vmatpush2.bf16.msra.mxu0 %v10679
        %11240 = vmatprep.mubr.bf16.mxu0 %v9534
        %11241 = vmatmul.mubr.bf16.gmra.mxu0 %v9533
        %v11242 = vpop.f32.mrf.mxu0
        %v11243 = vadd.f32 %v11200, %v11242
        %v11244 = vpop.f32.mrf.mxu0
        %v11245 = vadd.f32 %v11202, %v11244
        %v11246 = vpop.f32.mrf.mxu0
        %v11247 = vadd.f32 %v11204, %v11246
        %v11248 = vpop.f32.mrf.mxu0
        %v11249 = vadd.f32 %v11206, %v11248
        %11250 = vdwg.mxu0
        %11251 = vmatprep.subr.bf16.mxu0 %v10710
        %11252 = vmatpush1.bf16.msra.mxu0 %v10709
        %11253 = vmatprep.subr.bf16.mxu0 %v10708
        %11254 = vmatpush1.bf16.msra.mxu0 %v10707
        %11255 = vmatprep.subr.bf16.mxu0 %v10706
        %11256 = vmatpush1.bf16.msra.mxu0 %v10705
        %11257 = vmatprep.subr.bf16.mxu0 %v10704
        %11258 = vmatpush1.bf16.msra.mxu0 %v10703
        %11259 = vmatprep.subr.bf16.mxu0 %v10702
        %11260 = vmatpush1.bf16.msra.mxu0 %v10701
        %11261 = vmatprep.subr.bf16.mxu0 %v10700
        %11262 = vmatpush1.bf16.msra.mxu0 %v10699
        %11263 = vmatprep.subr.bf16.mxu0 %v10698
        %11264 = vmatpush1.bf16.msra.mxu0 %v10697
        %11265 = vmatprep.subr.bf16.mxu0 %v10696
        %11266 = vmatpush1.bf16.msra.mxu0 %v10695
        %11267 = vmatprep.subr.bf16.mxu0 %v10726
        %11268 = vmatpush2.bf16.msra.mxu0 %v10725
        %11269 = vmatprep.subr.bf16.mxu0 %v10724
        %11270 = vmatpush2.bf16.msra.mxu0 %v10723
        %11271 = vmatprep.subr.bf16.mxu0 %v10722
        %11272 = vmatpush2.bf16.msra.mxu0 %v10721
        %11273 = vmatprep.subr.bf16.mxu0 %v10720
        %11274 = vmatpush2.bf16.msra.mxu0 %v10719
        %11275 = vmatprep.subr.bf16.mxu0 %v10718
        %11276 = vmatpush2.bf16.msra.mxu0 %v10717
        %11277 = vmatprep.subr.bf16.mxu0 %v10716
        %11278 = vmatpush2.bf16.msra.mxu0 %v10715
        %11279 = vmatprep.subr.bf16.mxu0 %v10714
        %11280 = vmatpush2.bf16.msra.mxu0 %v10713
        %11281 = vmatprep.subr.bf16.mxu0 %v10712
        %11282 = vmatpush2.bf16.msra.mxu0 %v10711
        %11283 = vmatprep.mubr.bf16.mxu0 %v9536
        %11284 = vmatmul.mubr.bf16.gmra.mxu0 %v9535
        %v11285 = vpop.f32.mrf.mxu0
        %v11286 = vadd.f32 %v11243, %v11285
        %v11287 = vpop.f32.mrf.mxu0
        %v11288 = vadd.f32 %v11245, %v11287
        %v11289 = vpop.f32.mrf.mxu0
        %v11290 = vadd.f32 %v11247, %v11289
        %v11291 = vpop.f32.mrf.mxu0
        %v11292 = vadd.f32 %v11249, %v11291
        %11293 = vdwg.mxu0
        %11294 = vmatprep.subr.bf16.mxu0 %v10742
        %11295 = vmatpush1.bf16.msra.mxu0 %v10741
        %11296 = vmatprep.subr.bf16.mxu0 %v10740
        %11297 = vmatpush1.bf16.msra.mxu0 %v10739
        %11298 = vmatprep.subr.bf16.mxu0 %v10738
        %11299 = vmatpush1.bf16.msra.mxu0 %v10737
        %11300 = vmatprep.subr.bf16.mxu0 %v10736
        %11301 = vmatpush1.bf16.msra.mxu0 %v10735
        %11302 = vmatprep.subr.bf16.mxu0 %v10734
        %11303 = vmatpush1.bf16.msra.mxu0 %v10733
        %11304 = vmatprep.subr.bf16.mxu0 %v10732
        %11305 = vmatpush1.bf16.msra.mxu0 %v10731
        %11306 = vmatprep.subr.bf16.mxu0 %v10730
        %11307 = vmatpush1.bf16.msra.mxu0 %v10729
        %11308 = vmatprep.subr.bf16.mxu0 %v10728
        %11309 = vmatpush1.bf16.msra.mxu0 %v10727
        %11310 = vmatprep.subr.bf16.mxu0 %v10758
        %11311 = vmatpush2.bf16.msra.mxu0 %v10757
        %11312 = vmatprep.subr.bf16.mxu0 %v10756
        %11313 = vmatpush2.bf16.msra.mxu0 %v10755
        %11314 = vmatprep.subr.bf16.mxu0 %v10754
        %11315 = vmatpush2.bf16.msra.mxu0 %v10753
        %11316 = vmatprep.subr.bf16.mxu0 %v10752
        %11317 = vmatpush2.bf16.msra.mxu0 %v10751
        %11318 = vmatprep.subr.bf16.mxu0 %v10750
        %11319 = vmatpush2.bf16.msra.mxu0 %v10749
        %11320 = vmatprep.subr.bf16.mxu0 %v10748
        %11321 = vmatpush2.bf16.msra.mxu0 %v10747
        %11322 = vmatprep.subr.bf16.mxu0 %v10746
        %11323 = vmatpush2.bf16.msra.mxu0 %v10745
        %11324 = vmatprep.subr.bf16.mxu0 %v10744
        %11325 = vmatpush2.bf16.msra.mxu0 %v10743
        %11326 = vmatprep.mubr.bf16.mxu0 %v9538
        %11327 = vmatmul.mubr.bf16.gmra.mxu0 %v9537
        %v11328 = vpop.f32.mrf.mxu0
        %v11329 = vadd.f32 %v11286, %v11328
        %v11330 = vpop.f32.mrf.mxu0
        %v11331 = vadd.f32 %v11288, %v11330
        %v11332 = vpop.f32.mrf.mxu0
        %v11333 = vadd.f32 %v11290, %v11332
        %v11334 = vpop.f32.mrf.mxu0
        %v11335 = vadd.f32 %v11292, %v11334
        %11336 = vdwg.mxu0
        %11337 = vmatprep.subr.bf16.mxu0 %v10774
        %11338 = vmatpush1.bf16.msra.mxu0 %v10773
        %11339 = vmatprep.subr.bf16.mxu0 %v10772
        %11340 = vmatpush1.bf16.msra.mxu0 %v10771
        %11341 = vmatprep.subr.bf16.mxu0 %v10770
        %11342 = vmatpush1.bf16.msra.mxu0 %v10769
        %11343 = vmatprep.subr.bf16.mxu0 %v10768
        %11344 = vmatpush1.bf16.msra.mxu0 %v10767
        %11345 = vmatprep.subr.bf16.mxu0 %v10766
        %11346 = vmatpush1.bf16.msra.mxu0 %v10765
        %11347 = vmatprep.subr.bf16.mxu0 %v10764
        %11348 = vmatpush1.bf16.msra.mxu0 %v10763
        %11349 = vmatprep.subr.bf16.mxu0 %v10762
        %11350 = vmatpush1.bf16.msra.mxu0 %v10761
        %11351 = vmatprep.subr.bf16.mxu0 %v10760
        %11352 = vmatpush1.bf16.msra.mxu0 %v10759
        %11353 = vmatprep.subr.bf16.mxu0 %v10790
        %11354 = vmatpush2.bf16.msra.mxu0 %v10789
        %11355 = vmatprep.subr.bf16.mxu0 %v10788
        %11356 = vmatpush2.bf16.msra.mxu0 %v10787
        %11357 = vmatprep.subr.bf16.mxu0 %v10786
        %11358 = vmatpush2.bf16.msra.mxu0 %v10785
        %11359 = vmatprep.subr.bf16.mxu0 %v10784
        %11360 = vmatpush2.bf16.msra.mxu0 %v10783
        %11361 = vmatprep.subr.bf16.mxu0 %v10782
        %11362 = vmatpush2.bf16.msra.mxu0 %v10781
        %11363 = vmatprep.subr.bf16.mxu0 %v10780
        %11364 = vmatpush2.bf16.msra.mxu0 %v10779
        %11365 = vmatprep.subr.bf16.mxu0 %v10778
        %11366 = vmatpush2.bf16.msra.mxu0 %v10777
        %11367 = vmatprep.subr.bf16.mxu0 %v10776
        %11368 = vmatpush2.bf16.msra.mxu0 %v10775
        %11369 = vmatprep.mubr.bf16.mxu0 %v9540
        %11370 = vmatmul.mubr.bf16.gmra.mxu0 %v9539
        %v11371 = vpop.f32.mrf.mxu0
        %v11372 = vadd.f32 %v11329, %v11371
        %v11373 = vpop.f32.mrf.mxu0
        %v11374 = vadd.f32 %v11331, %v11373
        %v11375 = vpop.f32.mrf.mxu0
        %v11376 = vadd.f32 %v11333, %v11375
        %v11377 = vpop.f32.mrf.mxu0
        %v11378 = vadd.f32 %v11335, %v11377
        %11379 = vdwg.mxu0
        %11380 = vmatprep.subr.bf16.mxu0 %v10806
        %11381 = vmatpush1.bf16.msra.mxu0 %v10805
        %11382 = vmatprep.subr.bf16.mxu0 %v10804
        %11383 = vmatpush1.bf16.msra.mxu0 %v10803
        %11384 = vmatprep.subr.bf16.mxu0 %v10802
        %11385 = vmatpush1.bf16.msra.mxu0 %v10801
        %11386 = vmatprep.subr.bf16.mxu0 %v10800
        %11387 = vmatpush1.bf16.msra.mxu0 %v10799
        %11388 = vmatprep.subr.bf16.mxu0 %v10798
        %11389 = vmatpush1.bf16.msra.mxu0 %v10797
        %11390 = vmatprep.subr.bf16.mxu0 %v10796
        %11391 = vmatpush1.bf16.msra.mxu0 %v10795
        %11392 = vmatprep.subr.bf16.mxu0 %v10794
        %11393 = vmatpush1.bf16.msra.mxu0 %v10793
        %11394 = vmatprep.subr.bf16.mxu0 %v10792
        %11395 = vmatpush1.bf16.msra.mxu0 %v10791
        %11396 = vmatprep.subr.bf16.mxu0 %v10822
        %11397 = vmatpush2.bf16.msra.mxu0 %v10821
        %11398 = vmatprep.subr.bf16.mxu0 %v10820
        %11399 = vmatpush2.bf16.msra.mxu0 %v10819
        %11400 = vmatprep.subr.bf16.mxu0 %v10818
        %11401 = vmatpush2.bf16.msra.mxu0 %v10817
        %11402 = vmatprep.subr.bf16.mxu0 %v10816
        %11403 = vmatpush2.bf16.msra.mxu0 %v10815
        %11404 = vmatprep.subr.bf16.mxu0 %v10814
        %11405 = vmatpush2.bf16.msra.mxu0 %v10813
        %11406 = vmatprep.subr.bf16.mxu0 %v10812
        %11407 = vmatpush2.bf16.msra.mxu0 %v10811
        %11408 = vmatprep.subr.bf16.mxu0 %v10810
        %11409 = vmatpush2.bf16.msra.mxu0 %v10809
        %11410 = vmatprep.subr.bf16.mxu0 %v10808
        %11411 = vmatpush2.bf16.msra.mxu0 %v10807
        %11412 = vmatprep.mubr.bf16.mxu0 %v9542
        %11413 = vmatmul.mubr.bf16.gmra.mxu0 %v9541
        %v11414 = vpop.f32.mrf.mxu0
        %v11415 = vadd.f32 %v11372, %v11414
        %v11416 = vpop.f32.mrf.mxu0
        %v11417 = vadd.f32 %v11374, %v11416
        %v11418 = vpop.f32.mrf.mxu0
        %v11419 = vadd.f32 %v11376, %v11418
        %v11420 = vpop.f32.mrf.mxu0
        %v11421 = vadd.f32 %v11378, %v11420
        %11422 = vdwg.mxu0
        %v11423 = vadd.f32 %v9523, %v11415
        %v11424 = vadd.f32 %v9524, %v11417
        %v11425 = vadd.f32 %v9525, %v11419
        %v11426 = vadd.f32 %v9526, %v11421
        %11427 = vst [vmem:[#allocation2] sm:$0xff] %v11423
        %11428 = vst [vmem:[#allocation2 + $0x8] sm:$0xff] %v11424
        %11429 = vst [vmem:[#allocation2 + $0x10] sm:$0xff] %v11425
        %11430 = vst [vmem:[#allocation2 + $0x18] sm:$0xff] %v11426
        %p11431 = scmp.eq.s32.totalorder %s26, 1
        // Predicated region
        $region77: #{mlp_forward.1} parent=47 // pred_check
          %p11432 = pneg %p11431
        $region78: #{mlp_forward.1} parent=47 // pred_check_branch
          %11434 = sbr.rel (%p11432) target = $region80
        $region79: #{mlp_forward.1} parent=47 // pred_region
          %v11435 = vld [vmem:[#allocation2] sm:$0xff]
          %v11436 = vld [vmem:[#allocation2 + $0x8] sm:$0xff]
          %v11437 = vld [vmem:[#allocation2 + $0x10] sm:$0xff]
          %v11438 = vld [vmem:[#allocation2 + $0x18] sm:$0xff]
          %v11439 = vmax.f32 %v11435, 0.0
          %v11440 = vmax.f32 %v11436, 0.0
          %v11441 = vmax.f32 %v11437, 0.0
          %v11442 = vmax.f32 %v11438, 0.0
          %v11443 = vpack.c.bf16 %v11441, %v11439
          %v11444 = vpack.c.bf16 %v11442, %v11440
          %v11445 = vld [vmem:[#allocation10] sm:$0xf]
          %v11446 = vld [vmem:[#allocation10 + $0x4] sm:$0xf]
          %v11447 = vld [vmem:[#allocation10 + $0x8] sm:$0xf]
          %v11448 = vld [vmem:[#allocation10 + $0xc] sm:$0xf]
          %v11449 = vld [vmem:[#allocation10 + $0x10] sm:$0xf]
          %v11450 = vld [vmem:[#allocation10 + $0x14] sm:$0xf]
          %v11451 = vld [vmem:[#allocation10 + $0x18] sm:$0xf]
          %v11452 = vld [vmem:[#allocation10 + $0x1c] sm:$0xf]
          %v11453 = vld [vmem:[#allocation10 + $0x20] sm:$0xf]
          %v11454 = vld [vmem:[#allocation10 + $0x24] sm:$0xf]
          %v11455 = vld [vmem:[#allocation10 + $0x28] sm:$0xf]
          %v11456 = vld [vmem:[#allocation10 + $0x2c] sm:$0xf]
          %v11457 = vld [vmem:[#allocation10 + $0x30] sm:$0xf]
          %v11458 = vld [vmem:[#allocation10 + $0x34] sm:$0xf]
          %v11459 = vld [vmem:[#allocation10 + $0x38] sm:$0xf]
          %v11460 = vld [vmem:[#allocation10 + $0x3c] sm:$0xf]
          %v11461 = vld [vmem:[#allocation10 + $0x40] sm:$0xf]
          %v11462 = vld [vmem:[#allocation10 + $0x44] sm:$0xf]
          %v11463 = vld [vmem:[#allocation10 + $0x48] sm:$0xf]
          %v11464 = vld [vmem:[#allocation10 + $0x4c] sm:$0xf]
          %v11465 = vld [vmem:[#allocation10 + $0x50] sm:$0xf]
          %v11466 = vld [vmem:[#allocation10 + $0x54] sm:$0xf]
          %v11467 = vld [vmem:[#allocation10 + $0x58] sm:$0xf]
          %v11468 = vld [vmem:[#allocation10 + $0x5c] sm:$0xf]
          %v11469 = vld [vmem:[#allocation10 + $0x60] sm:$0xf]
          %v11470 = vld [vmem:[#allocation10 + $0x64] sm:$0xf]
          %v11471 = vld [vmem:[#allocation10 + $0x68] sm:$0xf]
          %v11472 = vld [vmem:[#allocation10 + $0x6c] sm:$0xf]
          %v11473 = vld [vmem:[#allocation10 + $0x70] sm:$0xf]
          %v11474 = vld [vmem:[#allocation10 + $0x74] sm:$0xf]
          %v11475 = vld [vmem:[#allocation10 + $0x78] sm:$0xf]
          %v11476 = vld [vmem:[#allocation10 + $0x7c] sm:$0xf]
          %v11477 = vld [vmem:[#allocation11] sm:$0x1]
          %v11479 = vlaneseq
          %v11480 = vshrl.u32 %v11479, 7
          %v11481 = vsub.s32 0, %v11480
          %v11482 = vrot.slane %v11477, %v11481
          %v11516 = vunpack.c.l.b16 %v11445
          %v11517 = vunpack.c.l.b16 %v11446
          %v11518 = vunpack.c.l.b16 %v11447
          %v11519 = vunpack.c.l.b16 %v11448
          %v11520 = vunpack.c.l.b16 %v11449
          %v11521 = vunpack.c.l.b16 %v11450
          %v11522 = vunpack.c.l.b16 %v11451
          %v11523 = vunpack.c.l.b16 %v11452
          %v11524 = vunpack.c.l.b16 %v11453
          %v11525 = vunpack.c.l.b16 %v11454
          %v11526 = vunpack.c.l.b16 %v11455
          %v11527 = vunpack.c.l.b16 %v11456
          %v11528 = vunpack.c.l.b16 %v11457
          %v11529 = vunpack.c.l.b16 %v11458
          %v11530 = vunpack.c.l.b16 %v11459
          %v11531 = vunpack.c.l.b16 %v11460
          %v11532 = vunpack.c.l.b16 %v11461
          %v11533 = vunpack.c.l.b16 %v11462
          %v11534 = vunpack.c.l.b16 %v11463
          %v11535 = vunpack.c.l.b16 %v11464
          %v11536 = vunpack.c.l.b16 %v11465
          %v11537 = vunpack.c.l.b16 %v11466
          %v11538 = vunpack.c.l.b16 %v11467
          %v11539 = vunpack.c.l.b16 %v11468
          %v11540 = vunpack.c.l.b16 %v11469
          %v11541 = vunpack.c.l.b16 %v11470
          %v11542 = vunpack.c.l.b16 %v11471
          %v11543 = vunpack.c.l.b16 %v11472
          %v11544 = vunpack.c.l.b16 %v11473
          %v11545 = vunpack.c.l.b16 %v11474
          %v11546 = vunpack.c.l.b16 %v11475
          %v11547 = vunpack.c.l.b16 %v11476
          %v11548 = vpack.c.b16 %v11517, %v11516
          %v11549 = vpack.c.b16 %v11519, %v11518
          %v11550 = vpack.c.b16 %v11521, %v11520
          %v11551 = vpack.c.b16 %v11523, %v11522
          %v11552 = vpack.c.b16 %v11525, %v11524
          %v11553 = vpack.c.b16 %v11527, %v11526
          %v11554 = vpack.c.b16 %v11529, %v11528
          %v11555 = vpack.c.b16 %v11531, %v11530
          %v11556 = vpack.c.b16 %v11533, %v11532
          %v11557 = vpack.c.b16 %v11535, %v11534
          %v11558 = vpack.c.b16 %v11537, %v11536
          %v11559 = vpack.c.b16 %v11539, %v11538
          %v11560 = vpack.c.b16 %v11541, %v11540
          %v11561 = vpack.c.b16 %v11543, %v11542
          %v11562 = vpack.c.b16 %v11545, %v11544
          %v11563 = vpack.c.b16 %v11547, %v11546
          %11580 = vmatprep.subr.bf16.mxu0 0
          %11581 = vmatpush1.bf16.msra.mxu0 %v11555
          %11582 = vmatprep.subr.bf16.mxu0 0
          %11583 = vmatpush1.bf16.msra.mxu0 %v11554
          %11584 = vmatprep.subr.bf16.mxu0 0
          %11585 = vmatpush1.bf16.msra.mxu0 %v11553
          %11586 = vmatprep.subr.bf16.mxu0 0
          %11587 = vmatpush1.bf16.msra.mxu0 %v11552
          %11588 = vmatprep.subr.bf16.mxu0 0
          %11589 = vmatpush1.bf16.msra.mxu0 %v11551
          %11590 = vmatprep.subr.bf16.mxu0 0
          %11591 = vmatpush1.bf16.msra.mxu0 %v11550
          %11592 = vmatprep.subr.bf16.mxu0 0
          %11593 = vmatpush1.bf16.msra.mxu0 %v11549
          %11594 = vmatprep.subr.bf16.mxu0 0
          %11595 = vmatpush1.bf16.msra.mxu0 %v11548
          %11596 = vmatprep.subr.bf16.mxu0 0
          %11597 = vmatpush2.bf16.msra.mxu0 %v11563
          %11598 = vmatprep.subr.bf16.mxu0 0
          %11599 = vmatpush2.bf16.msra.mxu0 %v11562
          %11600 = vmatprep.subr.bf16.mxu0 0
          %11601 = vmatpush2.bf16.msra.mxu0 %v11561
          %11602 = vmatprep.subr.bf16.mxu0 0
          %11603 = vmatpush2.bf16.msra.mxu0 %v11560
          %11604 = vmatprep.subr.bf16.mxu0 0
          %11605 = vmatpush2.bf16.msra.mxu0 %v11559
          %11606 = vmatprep.subr.bf16.mxu0 0
          %11607 = vmatpush2.bf16.msra.mxu0 %v11558
          %11608 = vmatprep.subr.bf16.mxu0 0
          %11609 = vmatpush2.bf16.msra.mxu0 %v11557
          %11610 = vmatprep.subr.bf16.mxu0 0
          %11611 = vmatpush2.bf16.msra.mxu0 %v11556
          %11612 = vmatprep.mubr.bf16.mxu0 %v11444
          %11613 = vmatmul.mubr.bf16.gmra.mxu0 %v11443
          %v11614 = vpop.f32.mrf.mxu0
          %v11615 = vadd.f32 %v11482, %v11614
          %v11616 = vpop.f32.mrf.mxu0
          %v11617 = vpop.f32.mrf.mxu0
          %v11618 = vadd.f32 %v11482, %v11617
          %v11619 = vpop.f32.mrf.mxu0
          %11620 = vdwg.mxu0
          %11621 = vmax.xlane.f32.xlu0 %v11615
          %v11622 = vpop.xlane.xlu0 %11621
          %11623 = vmax.xlane.f32.xlu0 %v11618
          %v11624 = vpop.xlane.xlu0 %11623
          %v11625 = vsub.f32 %v11615, %v11622
          %v11626 = vsub.f32 %v11618, %v11624
          %v11627 = vmul.f32 %v11625, 1.442695
          %v11628 = vpow.pop %v11627
          %v11629 = vmul.f32 %v11626, 1.442695
          %v11630 = vpow.pop %v11629
          %11631 = vadd.xlane.f32.xlu0 %v11628
          %v11632 = vpop.xlane.xlu0 %11631
          %11633 = vadd.xlane.f32.xlu0 %v11630
          %v11634 = vpop.xlane.xlu0 %11633
          %v11635 = vlog2.pop %v11632
          %v11636 = vmul.f32 %v11635, 0.6931472
          %v11637 = vlog2.pop %v11634
          %v11638 = vmul.f32 %v11637, 0.6931472
          %v11639 = vsub.f32 %v11625, %v11636
          %v11640 = vsub.f32 %v11626, %v11638
          %11641 = vst [vmem:[%s7] sm:$0xff] %v11639
          %11642 = vst [vmem:[%s7 + $0x8] sm:$0xff] %v11640
        $region80: #{mlp_forward.1} parent=47 // pred_fallthru
          _
        // Predicated region
        $region81: #{mlp_forward.1} parent=47 // pred_check
          %p11643 = pneg %p201
        $region82: #{mlp_forward.1} parent=47 // pred_check_branch
          %11645 = sbr.rel (%p11643) target = $region84
        $region83: #{mlp_forward.1} parent=47 // pred_region
          _
        $region84: #{mlp_forward.1} parent=47 // pred_fallthru
          _
        // Predicated region
        $region85: #{mlp_forward.1} parent=47 // pred_check
          %p11646 = pneg %p201
        $region86: #{mlp_forward.1} parent=47 // pred_check_branch
          %11648 = sbr.rel (%p11646) target = $region88
        $region87: #{mlp_forward.1} parent=47 // pred_region
          _
        $region88: #{mlp_forward.1} parent=47 // pred_fallthru
          _
      $region48: #{mlp_forward.1} parent=5 // pred_fallthru
        _
      %p11649 = scmp.le.s32.totalorder 2, %s21
      // Predicated region
      $region89: #{mlp_forward.1} parent=5 // pred_check
        %p11650 = pneg %p11649
      $region90: #{mlp_forward.1} parent=5 // pred_check_branch
        %11652 = sbr.rel (%p11650) target = $region92
      $region91: #{mlp_forward.1} parent=5 // pred_region
        %s11653 = ssub.s32 %s21, 2
      $region92: #{mlp_forward.1} parent=5 // pred_fallthru
        _
    $region6: #{mlp_forward.1} parent=1 // loop_footer
      %s25 = sadd.s32 1, %s21
    $region7: #{mlp_forward.1} parent=1 // loop_footer_branch
      %20 = sbr.rel target = $region3
    $region8: #{mlp_forward.1} parent=1 // loop_exit
      _
    %11654 = vsyncpa [#allocation4], 1
    %s11655 = scalar_lea.sflag [#allocation4], 1
    %11656 = vsyncpa %s11655, 1
    %11657 = vsyncpa [#allocation6], 1
    %s11658 = scalar_lea.sflag [#allocation6], 1
    %11659 = vsyncpa %s11658, 1
    %11660 = vsyncpa [#allocation9], 1
    %11661 = vsyncpa [#allocation12], 1

</llo_original>
